<compile_context>
chip_gen: v5e
topology: v5e:2x2
jax: 0.10.0
libtpu: 0.0.40
codegen_flags: <defaults>
</compile_context>

<pallas_src>
import functools

import numpy as np
import jax
import jax.numpy as jnp
from jax.experimental import pallas as pl
from jax.experimental.pallas import tpu as pltpu

BN_EPS = 1e-5


# ---------------------------------------------------------------------------
# In-kernel helpers
# ---------------------------------------------------------------------------
def _conv3x3_accum(xv, w, H, W, cin, cout, col_off=0):
    """3x3 stride-1 conv on an already spatially padded f32 value.

    xv : (H+2, >=W+2+col_off, cin) value (rows [0,H+2), tap cols start at col_off)
    w  : (9, cin, cout) value.
    Returns (H*W, cout) f32.
    """
    M = H * W
    acc = jnp.zeros((M, cout), jnp.float32)
    for ki in range(3):
        for kj in range(3):
            win = xv[ki:ki + H, col_off + kj:col_off + kj + W, :]
            acc = acc + jnp.dot(win.reshape(M, cin), w[ki * 3 + kj],
                                preferred_element_type=jnp.float32)
    return acc


def _resblock_s1_kernel(x_ref, w1_ref, b1_ref, w2_ref, b2_ref, o_ref,
                        hpad_ref, *, H, W, C):
    """stride=1, identity shortcut. One image per grid step, all VMEM-resident."""
    xv = x_ref[0].astype(jnp.float32)                  # (H+2, W+2, C)
    w1 = w1_ref[...].astype(jnp.float32)               # (9, C, C)  (BN1 folded)
    w2 = w2_ref[...].astype(jnp.float32)               # (9, C, C)  (BN2 folded)
    M = H * W

    # conv1 + BN1(shift) + ReLU
    h1 = _conv3x3_accum(xv, w1, H, W, C, C, col_off=0) + b1_ref[...]
    h1 = jnp.maximum(h1, 0.0)                          # (M, C) f32

    # Re-pad intermediate in VMEM: interior at col offset 8 (sublane-aligned).
    hpad_ref[...] = jnp.zeros(hpad_ref.shape, hpad_ref.dtype)
    hpad_ref[1:H + 1, 8:8 + W, :] = h1.reshape(H, W, C)
    hv = hpad_ref[...]                                 # (H+2, W+16, C) f32

    # conv2 + BN2(shift) + identity + ReLU  (fused epilogue)
    out = _conv3x3_accum(hv, w2, H, W, C, C, col_off=7) + b2_ref[...]
    out = out + xv[1:H + 1, 1:W + 1, :].reshape(M, C)  # identity shortcut
    o_ref[0] = jnp.maximum(out, 0.0).astype(o_ref.dtype)


def _resblock_s2_kernel(xp_ref, w1_ref, b1_ref, w2_ref, b2_ref, wd_ref, bd_ref,
                        o_ref, hpad_ref, *, OH, OW, Cin, Cout):
    """stride=2, 1x1-conv+BN shortcut, via space-to-depth parity planes."""
    xv = xp_ref[0].astype(jnp.float32)                 # (4, OH+1, OW+1, Cin)
    w1 = w1_ref[...].astype(jnp.float32)               # (9, Cin, Cout)
    w2 = w2_ref[...].astype(jnp.float32)               # (9, Cout, Cout)
    M = OH * OW

    # conv1 (3x3, stride 2): every tap is a contiguous slice of a parity plane.
    acc = jnp.zeros((M, Cout), jnp.float32)
    for ki in range(3):
        for kj in range(3):
            plane = 2 * (ki % 2) + (kj % 2)
            r0, c0 = ki // 2, kj // 2
            win = xv[plane, r0:r0 + OH, c0:c0 + OW, :].reshape(M, Cin)
            acc = acc + jnp.dot(win, w1[ki * 3 + kj],
                                preferred_element_type=jnp.float32)
    h1 = jnp.maximum(acc + b1_ref[...], 0.0)           # (M, Cout) f32

    hpad_ref[...] = jnp.zeros(hpad_ref.shape, hpad_ref.dtype)
    hpad_ref[1:OH + 1, 8:8 + OW, :] = h1.reshape(OH, OW, Cout)
    hv = hpad_ref[...]                                 # (OH+2, OW+16, Cout)

    out = _conv3x3_accum(hv, w2, OH, OW, Cout, Cout, col_off=7) + b2_ref[...]

    # 1x1 stride-2 downsample shortcut (conv + folded BN), fused in-kernel:
    # x(2i,2j) is parity plane (1,1) at index (i,j).
    ds_in = xv[3, 0:OH, 0:OW, :].reshape(M, Cin)
    identity = jnp.dot(ds_in, wd_ref[...].astype(jnp.float32),
                       preferred_element_type=jnp.float32) + bd_ref[...]

    o_ref[0] = jnp.maximum(out + identity, 0.0).astype(o_ref.dtype)


# ---------------------------------------------------------------------------
# Wrappers (one pallas_call per residual block)
# ---------------------------------------------------------------------------
def residual_block_identity(x, pk):
    """stride=1, shortcut=None.  x: (B, H, W, C) bf16 NHWC."""
    B, H, W, C = x.shape
    assert pk['w1'].shape[-1] == C, "identity shortcut needs in_c == out_c"
    x_pad = jnp.pad(x, ((0, 0), (1, 1), (1, 1), (0, 0)))
    kern = functools.partial(_resblock_s1_kernel, H=H, W=W, C=C)
    out = pl.pallas_call(
        kern,
        out_shape=jax.ShapeDtypeStruct((B, H * W, C), jnp.bfloat16),
        grid=(B,),
        in_specs=[
            pl.BlockSpec((1, H + 2, W + 2, C), lambda b: (b, 0, 0, 0)),
            pl.BlockSpec((9, C, C), lambda b: (0, 0, 0)),
            pl.BlockSpec((1, C), lambda b: (0, 0)),
            pl.BlockSpec((9, C, C), lambda b: (0, 0, 0)),
            pl.BlockSpec((1, C), lambda b: (0, 0)),
        ],
        out_specs=pl.BlockSpec((1, H * W, C), lambda b: (b, 0, 0)),
        scratch_shapes=[pltpu.VMEM((H + 2, W + 16, C), jnp.float32)],
        compiler_params=pltpu.CompilerParams(dimension_semantics=("parallel",)),
    )(x_pad, pk['w1'], pk['b1'], pk['w2'], pk['b2'])
    return out.reshape(B, H, W, C)


def residual_block_downsample(x, pk):
    """stride=2, conv1x1+BN shortcut.  x: (B, H, W, Cin) bf16 NHWC."""
    B, H, W, Cin = x.shape
    Cout = pk['w1'].shape[-1]
    assert H % 2 == 0 and W % 2 == 0
    OH, OW = H // 2, W // 2
    x_pad = jnp.pad(x, ((0, 0), (1, 1), (1, 1), (0, 0)))   # (B, H+2, W+2, Cin)
    # Space-to-depth parity planes (1x data reorg, NOT a 9x im2col slab):
    # makes every stride-2 tap a contiguous VMEM slice inside the kernel.
    planes = jnp.stack([x_pad[:, rp::2, cp::2, :]
                        for rp in (0, 1) for cp in (0, 1)],
                       axis=1)                              # (B, 4, OH+1, OW+1, Cin)
    kern = functools.partial(_resblock_s2_kernel, OH=OH, OW=OW, Cin=Cin, Cout=Cout)
    out = pl.pallas_call(
        kern,
        out_shape=jax.ShapeDtypeStruct((B, OH * OW, Cout), jnp.bfloat16),
        grid=(B,),
        in_specs=[
            pl.BlockSpec((1, 4, OH + 1, OW + 1, Cin), lambda b: (b, 0, 0, 0, 0)),
            pl.BlockSpec((9, Cin, Cout), lambda b: (0, 0, 0)),
            pl.BlockSpec((1, Cout), lambda b: (0, 0)),
            pl.BlockSpec((9, Cout, Cout), lambda b: (0, 0, 0)),
            pl.BlockSpec((1, Cout), lambda b: (0, 0)),
            pl.BlockSpec((Cin, Cout), lambda b: (0, 0)),
            pl.BlockSpec((1, Cout), lambda b: (0, 0)),
        ],
        out_specs=pl.BlockSpec((1, OH * OW, Cout), lambda b: (b, 0, 0)),
        scratch_shapes=[pltpu.VMEM((OH + 2, OW + 16, Cout), jnp.float32)],
        compiler_params=pltpu.CompilerParams(dimension_semantics=("parallel",)),
    )(planes, pk['w1'], pk['b1'], pk['w2'], pk['b2'], pk['wd'], pk['bd'])
    return out.reshape(B, OH, OW, Cout)


def model_forward(packed, x_nchw):
    x = jnp.transpose(x_nchw, (0, 2, 3, 1)).astype(jnp.bfloat16)   # NCHW->NHWC once
    x = residual_block_identity(x, packed['block1'])               # stride 1, no shortcut
    x = residual_block_downsample(x, packed['block2'])             # stride 2, conv shortcut
    return jnp.transpose(x, (0, 3, 1, 2)).astype(jnp.float32)      # NHWC->NCHW once


# ---------------------------------------------------------------------------
# One-time weight packing (BN folded, per-tap layout, bf16)
# ---------------------------------------------------------------------------
def _fold_bn(bn):
    scale = bn['gamma'] / jnp.sqrt(bn['var'] + BN_EPS)
    shift = bn['beta'] - bn['mean'] * scale
    return scale, shift


def pack_block_params(p):
    out = {}
    s1, sh1 = _fold_bn(p['bn1'])
    o1, c1, _, _ = p['conv1_w'].shape
    out['w1'] = (jnp.transpose(p['conv1_w'], (2, 3, 1, 0)).reshape(9, c1, o1)
                 * s1).astype(jnp.bfloat16)
    out['b1'] = sh1.reshape(1, o1).astype(jnp.float32)

    s2, sh2 = _fold_bn(p['bn2'])
    o2, c2, _, _ = p['conv2_w'].shape
    out['w2'] = (jnp.transpose(p['conv2_w'], (2, 3, 1, 0)).reshape(9, c2, o2)
                 * s2).astype(jnp.bfloat16)
    out['b2'] = sh2.reshape(1, o2).astype(jnp.float32)

    if 'ds_w' in p:
        sd, shd = _fold_bn(p['ds_bn'])
        od, cd, _, _ = p['ds_w'].shape
        out['wd'] = (p['ds_w'].reshape(od, cd).T * sd).astype(jnp.bfloat16)
        out['bd'] = shd.reshape(1, od).astype(jnp.float32)
    return out


# ---------------------------------------------------------------------------
# Pure-JAX reference with identical quantization points (bf16 weights/acts)
# ---------------------------------------------------------------------------
def _q(a):
    return a.astype(jnp.bfloat16).astype(jnp.float32)


def _ref_conv(x, w, scale, shift, stride, pad):
    w_folded = _q(w * scale[:, None, None, None])
    y = jax.lax.conv_general_dilated(
        x, w_folded, (stride, stride), [(pad, pad), (pad, pad)],
        dimension_numbers=('NCHW', 'OIHW', 'NCHW'),
        precision=jax.lax.Precision.HIGHEST)
    return y + shift[None, :, None, None]


def _ref_block(p, x, stride):
    s1, sh1 = _fold_bn(p['bn1'])
    s2, sh2 = _fold_bn(p['bn2'])
    h = jnp.maximum(_ref_conv(x, p['conv1_w'], s1, sh1, stride, 1), 0.0)
    out = _ref_conv(h, p['conv2_w'], s2, sh2, 1, 1)
    if 'ds_w' in p:
        sd, shd = _fold_bn(p['ds_bn'])
        identity = _ref_conv(x, p['ds_w'], sd, shd, stride, 0)
    else:
        identity = x
    return jnp.maximum(out + identity, 0.0)


def _ref_model(params, x):
    x = _q(x)
    x = _q(_ref_block(params['block1'], x, 1))
    x = _q(_ref_block(params['block2'], x, 2))
    return x


# ---------------------------------------------------------------------------
# Deterministic parameter construction
# ---------------------------------------------------------------------------
def _bn_params(key, c):
    k1, k2, k3, k4 = jax.random.split(key, 4)
    return {'gamma': jax.random.uniform(k1, (c,), jnp.float32, 0.8, 1.2),
            'beta': jax.random.normal(k2, (c,), jnp.float32) * 0.1,
            'mean': jax.random.normal(k3, (c,), jnp.float32) * 0.1,
            'var': jax.random.uniform(k4, (c,), jnp.float32, 0.8, 1.2)}


def _conv_weight(key, o, i, k):
    fan_out = o * k * k
    return (jax.random.normal(key, (o, i, k, k), jnp.float32)
            * np.sqrt(2.0 / fan_out))


def init_block_params(key, in_c, out_c, *, downsample):
    ks = jax.random.split(key, 6)
    p = {'conv1_w': _conv_weight(ks[0], out_c, in_c, 3),
         'bn1': _bn_params(ks[1], out_c),
         'conv2_w': _conv_weight(ks[2], out_c, out_c, 3),
         'bn2': _bn_params(ks[3], out_c)}
    if downsample:
        p['ds_w'] = _conv_weight(ks[4], out_c, in_c, 1)
        p['ds_bn'] = _bn_params(ks[5], out_c)
    return p


# ---------------------------------------------------------------------------
if __name__ == "__main__":
    key = jax.random.PRNGKey(0)
    kx, k1, k2 = jax.random.split(key, 3)

    B, C, H, W = 2, 4, 16, 16
    x = jax.random.normal(kx, (B, C, H, W), jnp.float32)

    params = {
        'block1': init_block_params(k1, C, C, downsample=False),      # shortcut=None
        'block2': init_block_params(k2, C, 2 * C, downsample=True),   # conv shortcut
    }
    # One-time weight packing, outside the per-forward path.
    packed = {'block1': pack_block_params(params['block1']),
              'block2': pack_block_params(params['block2'])}

    fwd = jax.jit(model_forward)
    out = jax.block_until_ready(fwd(packed, x))

    assert out.shape == (B, 2 * C, H // 2, W // 2), out.shape
    assert bool(jnp.all(jnp.isfinite(out)))

    ref = _ref_model(params, x)
    np.testing.assert_allclose(np.asarray(out), np.asarray(ref),
                               rtol=2e-2, atol=2e-2)
    print("KERNEL_OK")
</pallas_src>

<mosaic_0001>
module attributes {stable_mosaic.version = 11 : i64} {
  func.func @_resblock_s1_kernel(%arg0: i32, %arg1: memref<1x18x18x4xbf16, #tpu.memory_space<vmem>>, %arg2: memref<9x4x4xbf16, #tpu.memory_space<vmem>>, %arg3: memref<1x4xf32, #tpu.memory_space<vmem>>, %arg4: memref<9x4x4xbf16, #tpu.memory_space<vmem>>, %arg5: memref<1x4xf32, #tpu.memory_space<vmem>>, %arg6: memref<1x256x4xbf16, #tpu.memory_space<vmem>>, %arg7: memref<18x32x4xf32, #tpu.memory_space<vmem>>) attributes {dimension_semantics = [#tpu.dimension_semantics<parallel>], iteration_bounds = array<i64: 2>, scalar_prefetch = 0 : i64, scratch_operands = 1 : i64, tpu.core_type = #tpu.core_type<tc>, window_params = [{transform_indices = @transform_0, window_bounds = array<i64: 1, 18, 18, 4>}, {pipeline_mode = #tpu.pipeline_mode<synchronous>, transform_indices = @transform_1, window_bounds = array<i64: 9, 4, 4>}, {pipeline_mode = #tpu.pipeline_mode<synchronous>, transform_indices = @transform_2, window_bounds = array<i64: 1, 4>}, {pipeline_mode = #tpu.pipeline_mode<synchronous>, transform_indices = @transform_3, window_bounds = array<i64: 9, 4, 4>}, {pipeline_mode = #tpu.pipeline_mode<synchronous>, transform_indices = @transform_4, window_bounds = array<i64: 1, 4>}, {transform_indices = @transform_5, window_bounds = array<i64: 1, 256, 4>}]} {
    %c0 = arith.constant 0 : index
    %c0_0 = arith.constant 0 : index
    %c0_1 = arith.constant 0 : index
    %c0_2 = arith.constant 0 : index
    %0 = vector.load %arg1[%c0, %c0_0, %c0_1, %c0_2] : memref<1x18x18x4xbf16, #tpu.memory_space<vmem>>, vector<1x18x18x4xbf16>
    %1 = vector.shape_cast %0 : vector<1x18x18x4xbf16> to vector<18x18x4xbf16>
    %2 = arith.extf %1 : vector<18x18x4xbf16> to vector<18x18x4xf32>
    %c0_3 = arith.constant 0 : index
    %c0_4 = arith.constant 0 : index
    %c0_5 = arith.constant 0 : index
    %3 = vector.load %arg2[%c0_3, %c0_4, %c0_5] : memref<9x4x4xbf16, #tpu.memory_space<vmem>>, vector<9x4x4xbf16>
    %4 = arith.extf %3 : vector<9x4x4xbf16> to vector<9x4x4xf32>
    %c0_6 = arith.constant 0 : index
    %c0_7 = arith.constant 0 : index
    %c0_8 = arith.constant 0 : index
    %5 = vector.load %arg4[%c0_6, %c0_7, %c0_8] : memref<9x4x4xbf16, #tpu.memory_space<vmem>>, vector<9x4x4xbf16>
    %6 = arith.extf %5 : vector<9x4x4xbf16> to vector<9x4x4xf32>
    %cst = arith.constant 0.000000e+00 : f32
    %7 = vector.broadcast %cst : f32 to vector<256x4xf32>
    %8 = vector.extract_strided_slice %2 {offsets = [0, 0, 0], sizes = [16, 16, 4], strides = [1, 1, 1]} : vector<18x18x4xf32> to vector<16x16x4xf32>
    %9 = vector.shape_cast %8 : vector<16x16x4xf32> to vector<256x4xf32>
    %10 = vector.extract_strided_slice %4 {offsets = [0, 0, 0], sizes = [1, 4, 4], strides = [1, 1, 1]} : vector<9x4x4xf32> to vector<1x4x4xf32>
    %11 = vector.shape_cast %10 : vector<1x4x4xf32> to vector<4x4xf32>
    %cst_9 = arith.constant dense<0.000000e+00> : vector<256x4xf32>
    %12 = tpu.matmul %9, %11, %cst_9 {dimension_numbers = #tpu.dot_dimension_numbers<[1], [0], [0], [1], [0, 0, 1, 1], [], []>} : vector<256x4xf32>, vector<4x4xf32>, vector<256x4xf32> -> vector<256x4xf32>
    %13 = arith.addf %7, %12 : vector<256x4xf32>
    %14 = vector.extract_strided_slice %2 {offsets = [0, 1, 0], sizes = [16, 16, 4], strides = [1, 1, 1]} : vector<18x18x4xf32> to vector<16x16x4xf32>
    %15 = vector.shape_cast %14 : vector<16x16x4xf32> to vector<256x4xf32>
    %16 = vector.extract_strided_slice %4 {offsets = [1, 0, 0], sizes = [1, 4, 4], strides = [1, 1, 1]} : vector<9x4x4xf32> to vector<1x4x4xf32>
    %17 = vector.shape_cast %16 : vector<1x4x4xf32> to vector<4x4xf32>
    %cst_10 = arith.constant dense<0.000000e+00> : vector<256x4xf32>
    %18 = tpu.matmul %15, %17, %cst_10 {dimension_numbers = #tpu.dot_dimension_numbers<[1], [0], [0], [1], [0, 0, 1, 1], [], []>} : vector<256x4xf32>, vector<4x4xf32>, vector<256x4xf32> -> vector<256x4xf32>
    %19 = arith.addf %13, %18 : vector<256x4xf32>
    %20 = vector.extract_strided_slice %2 {offsets = [0, 2, 0], sizes = [16, 16, 4], strides = [1, 1, 1]} : vector<18x18x4xf32> to vector<16x16x4xf32>
    %21 = vector.shape_cast %20 : vector<16x16x4xf32> to vector<256x4xf32>
    %22 = vector.extract_strided_slice %4 {offsets = [2, 0, 0], sizes = [1, 4, 4], strides = [1, 1, 1]} : vector<9x4x4xf32> to vector<1x4x4xf32>
    %23 = vector.shape_cast %22 : vector<1x4x4xf32> to vector<4x4xf32>
    %cst_11 = arith.constant dense<0.000000e+00> : vector<256x4xf32>
    %24 = tpu.matmul %21, %23, %cst_11 {dimension_numbers = #tpu.dot_dimension_numbers<[1], [0], [0], [1], [0, 0, 1, 1], [], []>} : vector<256x4xf32>, vector<4x4xf32>, vector<256x4xf32> -> vector<256x4xf32>
    %25 = arith.addf %19, %24 : vector<256x4xf32>
    %26 = vector.extract_strided_slice %2 {offsets = [1, 0, 0], sizes = [16, 16, 4], strides = [1, 1, 1]} : vector<18x18x4xf32> to vector<16x16x4xf32>
    %27 = vector.shape_cast %26 : vector<16x16x4xf32> to vector<256x4xf32>
    %28 = vector.extract_strided_slice %4 {offsets = [3, 0, 0], sizes = [1, 4, 4], strides = [1, 1, 1]} : vector<9x4x4xf32> to vector<1x4x4xf32>
    %29 = vector.shape_cast %28 : vector<1x4x4xf32> to vector<4x4xf32>
    %cst_12 = arith.constant dense<0.000000e+00> : vector<256x4xf32>
    %30 = tpu.matmul %27, %29, %cst_12 {dimension_numbers = #tpu.dot_dimension_numbers<[1], [0], [0], [1], [0, 0, 1, 1], [], []>} : vector<256x4xf32>, vector<4x4xf32>, vector<256x4xf32> -> vector<256x4xf32>
    %31 = arith.addf %25, %30 : vector<256x4xf32>
    %32 = vector.extract_strided_slice %2 {offsets = [1, 1, 0], sizes = [16, 16, 4], strides = [1, 1, 1]} : vector<18x18x4xf32> to vector<16x16x4xf32>
    %33 = vector.shape_cast %32 : vector<16x16x4xf32> to vector<256x4xf32>
    %34 = vector.extract_strided_slice %4 {offsets = [4, 0, 0], sizes = [1, 4, 4], strides = [1, 1, 1]} : vector<9x4x4xf32> to vector<1x4x4xf32>
    %35 = vector.shape_cast %34 : vector<1x4x4xf32> to vector<4x4xf32>
    %cst_13 = arith.constant dense<0.000000e+00> : vector<256x4xf32>
    %36 = tpu.matmul %33, %35, %cst_13 {dimension_numbers = #tpu.dot_dimension_numbers<[1], [0], [0], [1], [0, 0, 1, 1], [], []>} : vector<256x4xf32>, vector<4x4xf32>, vector<256x4xf32> -> vector<256x4xf32>
    %37 = arith.addf %31, %36 : vector<256x4xf32>
    %38 = vector.extract_strided_slice %2 {offsets = [1, 2, 0], sizes = [16, 16, 4], strides = [1, 1, 1]} : vector<18x18x4xf32> to vector<16x16x4xf32>
    %39 = vector.shape_cast %38 : vector<16x16x4xf32> to vector<256x4xf32>
    %40 = vector.extract_strided_slice %4 {offsets = [5, 0, 0], sizes = [1, 4, 4], strides = [1, 1, 1]} : vector<9x4x4xf32> to vector<1x4x4xf32>
    %41 = vector.shape_cast %40 : vector<1x4x4xf32> to vector<4x4xf32>
    %cst_14 = arith.constant dense<0.000000e+00> : vector<256x4xf32>
    %42 = tpu.matmul %39, %41, %cst_14 {dimension_numbers = #tpu.dot_dimension_numbers<[1], [0], [0], [1], [0, 0, 1, 1], [], []>} : vector<256x4xf32>, vector<4x4xf32>, vector<256x4xf32> -> vector<256x4xf32>
    %43 = arith.addf %37, %42 : vector<256x4xf32>
    %44 = vector.extract_strided_slice %2 {offsets = [2, 0, 0], sizes = [16, 16, 4], strides = [1, 1, 1]} : vector<18x18x4xf32> to vector<16x16x4xf32>
    %45 = vector.shape_cast %44 : vector<16x16x4xf32> to vector<256x4xf32>
    %46 = vector.extract_strided_slice %4 {offsets = [6, 0, 0], sizes = [1, 4, 4], strides = [1, 1, 1]} : vector<9x4x4xf32> to vector<1x4x4xf32>
    %47 = vector.shape_cast %46 : vector<1x4x4xf32> to vector<4x4xf32>
    %cst_15 = arith.constant dense<0.000000e+00> : vector<256x4xf32>
    %48 = tpu.matmul %45, %47, %cst_15 {dimension_numbers = #tpu.dot_dimension_numbers<[1], [0], [0], [1], [0, 0, 1, 1], [], []>} : vector<256x4xf32>, vector<4x4xf32>, vector<256x4xf32> -> vector<256x4xf32>
    %49 = arith.addf %43, %48 : vector<256x4xf32>
    %50 = vector.extract_strided_slice %2 {offsets = [2, 1, 0], sizes = [16, 16, 4], strides = [1, 1, 1]} : vector<18x18x4xf32> to vector<16x16x4xf32>
    %51 = vector.shape_cast %50 : vector<16x16x4xf32> to vector<256x4xf32>
    %52 = vector.extract_strided_slice %4 {offsets = [7, 0, 0], sizes = [1, 4, 4], strides = [1, 1, 1]} : vector<9x4x4xf32> to vector<1x4x4xf32>
    %53 = vector.shape_cast %52 : vector<1x4x4xf32> to vector<4x4xf32>
    %cst_16 = arith.constant dense<0.000000e+00> : vector<256x4xf32>
    %54 = tpu.matmul %51, %53, %cst_16 {dimension_numbers = #tpu.dot_dimension_numbers<[1], [0], [0], [1], [0, 0, 1, 1], [], []>} : vector<256x4xf32>, vector<4x4xf32>, vector<256x4xf32> -> vector<256x4xf32>
    %55 = arith.addf %49, %54 : vector<256x4xf32>
    %56 = vector.extract_strided_slice %2 {offsets = [2, 2, 0], sizes = [16, 16, 4], strides = [1, 1, 1]} : vector<18x18x4xf32> to vector<16x16x4xf32>
    %57 = vector.shape_cast %56 : vector<16x16x4xf32> to vector<256x4xf32>
    %58 = vector.extract_strided_slice %4 {offsets = [8, 0, 0], sizes = [1, 4, 4], strides = [1, 1, 1]} : vector<9x4x4xf32> to vector<1x4x4xf32>
    %59 = vector.shape_cast %58 : vector<1x4x4xf32> to vector<4x4xf32>
    %cst_17 = arith.constant dense<0.000000e+00> : vector<256x4xf32>
    %60 = tpu.matmul %57, %59, %cst_17 {dimension_numbers = #tpu.dot_dimension_numbers<[1], [0], [0], [1], [0, 0, 1, 1], [], []>} : vector<256x4xf32>, vector<4x4xf32>, vector<256x4xf32> -> vector<256x4xf32>
    %61 = arith.addf %55, %60 : vector<256x4xf32>
    %c0_18 = arith.constant 0 : index
    %c0_19 = arith.constant 0 : index
    %62 = vector.load %arg3[%c0_18, %c0_19] : memref<1x4xf32, #tpu.memory_space<vmem>>, vector<1x4xf32>
    %63 = vector.broadcast %62 : vector<1x4xf32> to vector<256x4xf32>
    %64 = arith.addf %61, %63 : vector<256x4xf32>
    %cst_20 = arith.constant 0.000000e+00 : f32
    %65 = vector.broadcast %cst_20 : f32 to vector<256x4xf32>
    %66 = arith.maximumf %64, %65 : vector<256x4xf32>
    %cst_21 = arith.constant 0.000000e+00 : f32
    %67 = vector.broadcast %cst_21 : f32 to vector<18x32x4xf32>
    %c0_22 = arith.constant 0 : index
    %c0_23 = arith.constant 0 : index
    %c0_24 = arith.constant 0 : index
    %68 = vector.load %arg7[%c0_22, %c0_23, %c0_24] : memref<18x32x4xf32, #tpu.memory_space<vmem>>, vector<18x32x4xf32>
    tpu.vector_store %arg7[%c0_22, %c0_23, %c0_24], %67 {strides = array<i32>} : memref<18x32x4xf32, #tpu.memory_space<vmem>>, vector<18x32x4xf32>,
    %69 = vector.shape_cast %66 : vector<256x4xf32> to vector<16x16x4xf32>
    %c1 = arith.constant 1 : index
    %c8 = arith.constant 8 : index
    %c0_25 = arith.constant 0 : index
    %70 = vector.load %arg7[%c1, %c8, %c0_25] : memref<18x32x4xf32, #tpu.memory_space<vmem>>, vector<16x16x4xf32>
    tpu.vector_store %arg7[%c1, %c8, %c0_25], %69 {strides = array<i32>} : memref<18x32x4xf32, #tpu.memory_space<vmem>>, vector<16x16x4xf32>,
    %c0_26 = arith.constant 0 : index
    %c0_27 = arith.constant 0 : index
    %c0_28 = arith.constant 0 : index
    %71 = vector.load %arg7[%c0_26, %c0_27, %c0_28] : memref<18x32x4xf32, #tpu.memory_space<vmem>>, vector<18x32x4xf32>
    %cst_29 = arith.constant 0.000000e+00 : f32
    %72 = vector.broadcast %cst_29 : f32 to vector<256x4xf32>
    %73 = vector.extract_strided_slice %71 {offsets = [0, 7, 0], sizes = [16, 16, 4], strides = [1, 1, 1]} : vector<18x32x4xf32> to vector<16x16x4xf32>
    %74 = vector.shape_cast %73 : vector<16x16x4xf32> to vector<256x4xf32>
    %75 = vector.extract_strided_slice %6 {offsets = [0, 0, 0], sizes = [1, 4, 4], strides = [1, 1, 1]} : vector<9x4x4xf32> to vector<1x4x4xf32>
    %76 = vector.shape_cast %75 : vector<1x4x4xf32> to vector<4x4xf32>
    %cst_30 = arith.constant dense<0.000000e+00> : vector<256x4xf32>
    %77 = tpu.matmul %74, %76, %cst_30 {dimension_numbers = #tpu.dot_dimension_numbers<[1], [0], [0], [1], [0, 0, 1, 1], [], []>} : vector<256x4xf32>, vector<4x4xf32>, vector<256x4xf32> -> vector<256x4xf32>
    %78 = arith.addf %72, %77 : vector<256x4xf32>
    %79 = vector.extract_strided_slice %71 {offsets = [0, 8, 0], sizes = [16, 16, 4], strides = [1, 1, 1]} : vector<18x32x4xf32> to vector<16x16x4xf32>
    %80 = vector.shape_cast %79 : vector<16x16x4xf32> to vector<256x4xf32>
    %81 = vector.extract_strided_slice %6 {offsets = [1, 0, 0], sizes = [1, 4, 4], strides = [1, 1, 1]} : vector<9x4x4xf32> to vector<1x4x4xf32>
    %82 = vector.shape_cast %81 : vector<1x4x4xf32> to vector<4x4xf32>
    %cst_31 = arith.constant dense<0.000000e+00> : vector<256x4xf32>
    %83 = tpu.matmul %80, %82, %cst_31 {dimension_numbers = #tpu.dot_dimension_numbers<[1], [0], [0], [1], [0, 0, 1, 1], [], []>} : vector<256x4xf32>, vector<4x4xf32>, vector<256x4xf32> -> vector<256x4xf32>
    %84 = arith.addf %78, %83 : vector<256x4xf32>
    %85 = vector.extract_strided_slice %71 {offsets = [0, 9, 0], sizes = [16, 16, 4], strides = [1, 1, 1]} : vector<18x32x4xf32> to vector<16x16x4xf32>
    %86 = vector.shape_cast %85 : vector<16x16x4xf32> to vector<256x4xf32>
    %87 = vector.extract_strided_slice %6 {offsets = [2, 0, 0], sizes = [1, 4, 4], strides = [1, 1, 1]} : vector<9x4x4xf32> to vector<1x4x4xf32>
    %88 = vector.shape_cast %87 : vector<1x4x4xf32> to vector<4x4xf32>
    %cst_32 = arith.constant dense<0.000000e+00> : vector<256x4xf32>
    %89 = tpu.matmul %86, %88, %cst_32 {dimension_numbers = #tpu.dot_dimension_numbers<[1], [0], [0], [1], [0, 0, 1, 1], [], []>} : vector<256x4xf32>, vector<4x4xf32>, vector<256x4xf32> -> vector<256x4xf32>
    %90 = arith.addf %84, %89 : vector<256x4xf32>
    %91 = vector.extract_strided_slice %71 {offsets = [1, 7, 0], sizes = [16, 16, 4], strides = [1, 1, 1]} : vector<18x32x4xf32> to vector<16x16x4xf32>
    %92 = vector.shape_cast %91 : vector<16x16x4xf32> to vector<256x4xf32>
    %93 = vector.extract_strided_slice %6 {offsets = [3, 0, 0], sizes = [1, 4, 4], strides = [1, 1, 1]} : vector<9x4x4xf32> to vector<1x4x4xf32>
    %94 = vector.shape_cast %93 : vector<1x4x4xf32> to vector<4x4xf32>
    %cst_33 = arith.constant dense<0.000000e+00> : vector<256x4xf32>
    %95 = tpu.matmul %92, %94, %cst_33 {dimension_numbers = #tpu.dot_dimension_numbers<[1], [0], [0], [1], [0, 0, 1, 1], [], []>} : vector<256x4xf32>, vector<4x4xf32>, vector<256x4xf32> -> vector<256x4xf32>
    %96 = arith.addf %90, %95 : vector<256x4xf32>
    %97 = vector.extract_strided_slice %71 {offsets = [1, 8, 0], sizes = [16, 16, 4], strides = [1, 1, 1]} : vector<18x32x4xf32> to vector<16x16x4xf32>
    %98 = vector.shape_cast %97 : vector<16x16x4xf32> to vector<256x4xf32>
    %99 = vector.extract_strided_slice %6 {offsets = [4, 0, 0], sizes = [1, 4, 4], strides = [1, 1, 1]} : vector<9x4x4xf32> to vector<1x4x4xf32>
    %100 = vector.shape_cast %99 : vector<1x4x4xf32> to vector<4x4xf32>
    %cst_34 = arith.constant dense<0.000000e+00> : vector<256x4xf32>
    %101 = tpu.matmul %98, %100, %cst_34 {dimension_numbers = #tpu.dot_dimension_numbers<[1], [0], [0], [1], [0, 0, 1, 1], [], []>} : vector<256x4xf32>, vector<4x4xf32>, vector<256x4xf32> -> vector<256x4xf32>
    %102 = arith.addf %96, %101 : vector<256x4xf32>
    %103 = vector.extract_strided_slice %71 {offsets = [1, 9, 0], sizes = [16, 16, 4], strides = [1, 1, 1]} : vector<18x32x4xf32> to vector<16x16x4xf32>
    %104 = vector.shape_cast %103 : vector<16x16x4xf32> to vector<256x4xf32>
    %105 = vector.extract_strided_slice %6 {offsets = [5, 0, 0], sizes = [1, 4, 4], strides = [1, 1, 1]} : vector<9x4x4xf32> to vector<1x4x4xf32>
    %106 = vector.shape_cast %105 : vector<1x4x4xf32> to vector<4x4xf32>
    %cst_35 = arith.constant dense<0.000000e+00> : vector<256x4xf32>
    %107 = tpu.matmul %104, %106, %cst_35 {dimension_numbers = #tpu.dot_dimension_numbers<[1], [0], [0], [1], [0, 0, 1, 1], [], []>} : vector<256x4xf32>, vector<4x4xf32>, vector<256x4xf32> -> vector<256x4xf32>
    %108 = arith.addf %102, %107 : vector<256x4xf32>
    %109 = vector.extract_strided_slice %71 {offsets = [2, 7, 0], sizes = [16, 16, 4], strides = [1, 1, 1]} : vector<18x32x4xf32> to vector<16x16x4xf32>
    %110 = vector.shape_cast %109 : vector<16x16x4xf32> to vector<256x4xf32>
    %111 = vector.extract_strided_slice %6 {offsets = [6, 0, 0], sizes = [1, 4, 4], strides = [1, 1, 1]} : vector<9x4x4xf32> to vector<1x4x4xf32>
    %112 = vector.shape_cast %111 : vector<1x4x4xf32> to vector<4x4xf32>
    %cst_36 = arith.constant dense<0.000000e+00> : vector<256x4xf32>
    %113 = tpu.matmul %110, %112, %cst_36 {dimension_numbers = #tpu.dot_dimension_numbers<[1], [0], [0], [1], [0, 0, 1, 1], [], []>} : vector<256x4xf32>, vector<4x4xf32>, vector<256x4xf32> -> vector<256x4xf32>
    %114 = arith.addf %108, %113 : vector<256x4xf32>
    %115 = vector.extract_strided_slice %71 {offsets = [2, 8, 0], sizes = [16, 16, 4], strides = [1, 1, 1]} : vector<18x32x4xf32> to vector<16x16x4xf32>
    %116 = vector.shape_cast %115 : vector<16x16x4xf32> to vector<256x4xf32>
    %117 = vector.extract_strided_slice %6 {offsets = [7, 0, 0], sizes = [1, 4, 4], strides = [1, 1, 1]} : vector<9x4x4xf32> to vector<1x4x4xf32>
    %118 = vector.shape_cast %117 : vector<1x4x4xf32> to vector<4x4xf32>
    %cst_37 = arith.constant dense<0.000000e+00> : vector<256x4xf32>
    %119 = tpu.matmul %116, %118, %cst_37 {dimension_numbers = #tpu.dot_dimension_numbers<[1], [0], [0], [1], [0, 0, 1, 1], [], []>} : vector<256x4xf32>, vector<4x4xf32>, vector<256x4xf32> -> vector<256x4xf32>
    %120 = arith.addf %114, %119 : vector<256x4xf32>
    %121 = vector.extract_strided_slice %71 {offsets = [2, 9, 0], sizes = [16, 16, 4], strides = [1, 1, 1]} : vector<18x32x4xf32> to vector<16x16x4xf32>
    %122 = vector.shape_cast %121 : vector<16x16x4xf32> to vector<256x4xf32>
    %123 = vector.extract_strided_slice %6 {offsets = [8, 0, 0], sizes = [1, 4, 4], strides = [1, 1, 1]} : vector<9x4x4xf32> to vector<1x4x4xf32>
    %124 = vector.shape_cast %123 : vector<1x4x4xf32> to vector<4x4xf32>
    %cst_38 = arith.constant dense<0.000000e+00> : vector<256x4xf32>
    %125 = tpu.matmul %122, %124, %cst_38 {dimension_numbers = #tpu.dot_dimension_numbers<[1], [0], [0], [1], [0, 0, 1, 1], [], []>} : vector<256x4xf32>, vector<4x4xf32>, vector<256x4xf32> -> vector<256x4xf32>
    %126 = arith.addf %120, %125 : vector<256x4xf32>
    %c0_39 = arith.constant 0 : index
    %c0_40 = arith.constant 0 : index
    %127 = vector.load %arg5[%c0_39, %c0_40] : memref<1x4xf32, #tpu.memory_space<vmem>>, vector<1x4xf32>
    %128 = vector.broadcast %127 : vector<1x4xf32> to vector<256x4xf32>
    %129 = arith.addf %126, %128 : vector<256x4xf32>
    %130 = vector.extract_strided_slice %2 {offsets = [1, 1, 0], sizes = [16, 16, 4], strides = [1, 1, 1]} : vector<18x18x4xf32> to vector<16x16x4xf32>
    %131 = vector.shape_cast %130 : vector<16x16x4xf32> to vector<256x4xf32>
    %132 = arith.addf %129, %131 : vector<256x4xf32>
    %cst_41 = arith.constant 0.000000e+00 : f32
    %133 = vector.broadcast %cst_41 : f32 to vector<256x4xf32>
    %134 = arith.maximumf %132, %133 : vector<256x4xf32>
    %135 = arith.truncf %134 : vector<256x4xf32> to vector<256x4xbf16>
    %c0_42 = arith.constant 0 : index
    %c0_43 = arith.constant 0 : index
    %c0_44 = arith.constant 0 : index
    %136 = vector.load %arg6[%c0_42, %c0_43, %c0_44] : memref<1x256x4xbf16, #tpu.memory_space<vmem>>, vector<1x256x4xbf16>
    %137 = vector.shape_cast %136 : vector<1x256x4xbf16> to vector<256x4xbf16>
    %138 = vector.shape_cast %135 : vector<256x4xbf16> to vector<1x256x4xbf16>
    tpu.vector_store %arg6[%c0_42, %c0_43, %c0_44], %138 {strides = array<i32>} : memref<1x256x4xbf16, #tpu.memory_space<vmem>>, vector<1x256x4xbf16>,
    return
  }
  func.func @transform_0(%arg0: i32) -> (i32, i32, i32, i32) {
    %c0_i32 = arith.constant 0 : i32
    %c0_i32_0 = arith.constant 0 : i32
    %c0_i32_1 = arith.constant 0 : i32
    %c0_i32_2 = arith.constant 0 : i32
    return %arg0, %c0_i32, %c0_i32_0, %c0_i32_1 : i32, i32, i32, i32
  }
  func.func @transform_1(%arg0: i32) -> (i32, i32, i32) {
    %c0_i32 = arith.constant 0 : i32
    %c0_i32_0 = arith.constant 0 : i32
    %c0_i32_1 = arith.constant 0 : i32
    %c0_i32_2 = arith.constant 0 : i32
    return %c0_i32, %c0_i32_0, %c0_i32_1 : i32, i32, i32
  }
  func.func @transform_2(%arg0: i32) -> (i32, i32) {
    %c0_i32 = arith.constant 0 : i32
    %c0_i32_0 = arith.constant 0 : i32
    %c0_i32_1 = arith.constant 0 : i32
    return %c0_i32, %c0_i32_0 : i32, i32
  }
  func.func @transform_3(%arg0: i32) -> (i32, i32, i32) {
    %c0_i32 = arith.constant 0 : i32
    %c0_i32_0 = arith.constant 0 : i32
    %c0_i32_1 = arith.constant 0 : i32
    %c0_i32_2 = arith.constant 0 : i32
    return %c0_i32, %c0_i32_0, %c0_i32_1 : i32, i32, i32
  }
  func.func @transform_4(%arg0: i32) -> (i32, i32) {
    %c0_i32 = arith.constant 0 : i32
    %c0_i32_0 = arith.constant 0 : i32
    %c0_i32_1 = arith.constant 0 : i32
    return %c0_i32, %c0_i32_0 : i32, i32
  }
  func.func @transform_5(%arg0: i32) -> (i32, i32, i32) {
    %c0_i32 = arith.constant 0 : i32
    %c0_i32_0 = arith.constant 0 : i32
    %c0_i32_1 = arith.constant 0 : i32
    return %arg0, %c0_i32, %c0_i32_0 : i32, i32, i32
  }
}

module attributes {stable_mosaic.version = 11 : i64} {
  func.func @_resblock_s2_kernel(%arg0: i32, %arg1: memref<1x4x9x9x4xbf16, #tpu.memory_space<vmem>>, %arg2: memref<9x4x8xbf16, #tpu.memory_space<vmem>>, %arg3: memref<1x8xf32, #tpu.memory_space<vmem>>, %arg4: memref<9x8x8xbf16, #tpu.memory_space<vmem>>, %arg5: memref<1x8xf32, #tpu.memory_space<vmem>>, %arg6: memref<4x8xbf16, #tpu.memory_space<vmem>>, %arg7: memref<1x8xf32, #tpu.memory_space<vmem>>, %arg8: memref<1x64x8xbf16, #tpu.memory_space<vmem>>, %arg9: memref<10x24x8xf32, #tpu.memory_space<vmem>>) attributes {dimension_semantics = [#tpu.dimension_semantics<parallel>], iteration_bounds = array<i64: 2>, scalar_prefetch = 0 : i64, scratch_operands = 1 : i64, tpu.core_type = #tpu.core_type<tc>, window_params = [{transform_indices = @transform_0, window_bounds = array<i64: 1, 4, 9, 9, 4>}, {pipeline_mode = #tpu.pipeline_mode<synchronous>, transform_indices = @transform_1, window_bounds = array<i64: 9, 4, 8>}, {pipeline_mode = #tpu.pipeline_mode<synchronous>, transform_indices = @transform_2, window_bounds = array<i64: 1, 8>}, {pipeline_mode = #tpu.pipeline_mode<synchronous>, transform_indices = @transform_3, window_bounds = array<i64: 9, 8, 8>}, {pipeline_mode = #tpu.pipeline_mode<synchronous>, transform_indices = @transform_4, window_bounds = array<i64: 1, 8>}, {pipeline_mode = #tpu.pipeline_mode<synchronous>, transform_indices = @transform_5, window_bounds = array<i64: 4, 8>}, {pipeline_mode = #tpu.pipeline_mode<synchronous>, transform_indices = @transform_6, window_bounds = array<i64: 1, 8>}, {transform_indices = @transform_7, window_bounds = array<i64: 1, 64, 8>}]} {
    %c0 = arith.constant 0 : index
    %c0_0 = arith.constant 0 : index
    %c0_1 = arith.constant 0 : index
    %c0_2 = arith.constant 0 : index
    %c0_3 = arith.constant 0 : index
    %0 = vector.load %arg1[%c0, %c0_0, %c0_1, %c0_2, %c0_3] : memref<1x4x9x9x4xbf16, #tpu.memory_space<vmem>>, vector<1x4x9x9x4xbf16>
    %1 = vector.shape_cast %0 : vector<1x4x9x9x4xbf16> to vector<4x9x9x4xbf16>
    %2 = arith.extf %1 : vector<4x9x9x4xbf16> to vector<4x9x9x4xf32>
    %c0_4 = arith.constant 0 : index
    %c0_5 = arith.constant 0 : index
    %c0_6 = arith.constant 0 : index
    %3 = vector.load %arg2[%c0_4, %c0_5, %c0_6] : memref<9x4x8xbf16, #tpu.memory_space<vmem>>, vector<9x4x8xbf16>
    %4 = arith.extf %3 : vector<9x4x8xbf16> to vector<9x4x8xf32>
    %c0_7 = arith.constant 0 : index
    %c0_8 = arith.constant 0 : index
    %c0_9 = arith.constant 0 : index
    %5 = vector.load %arg4[%c0_7, %c0_8, %c0_9] : memref<9x8x8xbf16, #tpu.memory_space<vmem>>, vector<9x8x8xbf16>
    %6 = arith.extf %5 : vector<9x8x8xbf16> to vector<9x8x8xf32>
    %cst = arith.constant 0.000000e+00 : f32
    %7 = vector.broadcast %cst : f32 to vector<64x8xf32>
    %8 = vector.extract_strided_slice %2 {offsets = [0, 0, 0, 0], sizes = [1, 8, 8, 4], strides = [1, 1, 1, 1]} : vector<4x9x9x4xf32> to vector<1x8x8x4xf32>
    %9 = vector.shape_cast %8 : vector<1x8x8x4xf32> to vector<8x8x4xf32>
    %10 = vector.shape_cast %9 : vector<8x8x4xf32> to vector<64x4xf32>
    %11 = vector.extract_strided_slice %4 {offsets = [0, 0, 0], sizes = [1, 4, 8], strides = [1, 1, 1]} : vector<9x4x8xf32> to vector<1x4x8xf32>
    %12 = vector.shape_cast %11 : vector<1x4x8xf32> to vector<4x8xf32>
    %cst_10 = arith.constant dense<0.000000e+00> : vector<64x8xf32>
    %13 = tpu.matmul %10, %12, %cst_10 {dimension_numbers = #tpu.dot_dimension_numbers<[1], [0], [0], [1], [0, 0, 1, 1], [], []>} : vector<64x4xf32>, vector<4x8xf32>, vector<64x8xf32> -> vector<64x8xf32>
    %14 = arith.addf %7, %13 : vector<64x8xf32>
    %15 = vector.extract_strided_slice %2 {offsets = [1, 0, 0, 0], sizes = [1, 8, 8, 4], strides = [1, 1, 1, 1]} : vector<4x9x9x4xf32> to vector<1x8x8x4xf32>
    %16 = vector.shape_cast %15 : vector<1x8x8x4xf32> to vector<8x8x4xf32>
    %17 = vector.shape_cast %16 : vector<8x8x4xf32> to vector<64x4xf32>
    %18 = vector.extract_strided_slice %4 {offsets = [1, 0, 0], sizes = [1, 4, 8], strides = [1, 1, 1]} : vector<9x4x8xf32> to vector<1x4x8xf32>
    %19 = vector.shape_cast %18 : vector<1x4x8xf32> to vector<4x8xf32>
    %cst_11 = arith.constant dense<0.000000e+00> : vector<64x8xf32>
    %20 = tpu.matmul %17, %19, %cst_11 {dimension_numbers = #tpu.dot_dimension_numbers<[1], [0], [0], [1], [0, 0, 1, 1], [], []>} : vector<64x4xf32>, vector<4x8xf32>, vector<64x8xf32> -> vector<64x8xf32>
    %21 = arith.addf %14, %20 : vector<64x8xf32>
    %22 = vector.extract_strided_slice %2 {offsets = [0, 0, 1, 0], sizes = [1, 8, 8, 4], strides = [1, 1, 1, 1]} : vector<4x9x9x4xf32> to vector<1x8x8x4xf32>
    %23 = vector.shape_cast %22 : vector<1x8x8x4xf32> to vector<8x8x4xf32>
    %24 = vector.shape_cast %23 : vector<8x8x4xf32> to vector<64x4xf32>
    %25 = vector.extract_strided_slice %4 {offsets = [2, 0, 0], sizes = [1, 4, 8], strides = [1, 1, 1]} : vector<9x4x8xf32> to vector<1x4x8xf32>
    %26 = vector.shape_cast %25 : vector<1x4x8xf32> to vector<4x8xf32>
    %cst_12 = arith.constant dense<0.000000e+00> : vector<64x8xf32>
    %27 = tpu.matmul %24, %26, %cst_12 {dimension_numbers = #tpu.dot_dimension_numbers<[1], [0], [0], [1], [0, 0, 1, 1], [], []>} : vector<64x4xf32>, vector<4x8xf32>, vector<64x8xf32> -> vector<64x8xf32>
    %28 = arith.addf %21, %27 : vector<64x8xf32>
    %29 = vector.extract_strided_slice %2 {offsets = [2, 0, 0, 0], sizes = [1, 8, 8, 4], strides = [1, 1, 1, 1]} : vector<4x9x9x4xf32> to vector<1x8x8x4xf32>
    %30 = vector.shape_cast %29 : vector<1x8x8x4xf32> to vector<8x8x4xf32>
    %31 = vector.shape_cast %30 : vector<8x8x4xf32> to vector<64x4xf32>
    %32 = vector.extract_strided_slice %4 {offsets = [3, 0, 0], sizes = [1, 4, 8], strides = [1, 1, 1]} : vector<9x4x8xf32> to vector<1x4x8xf32>
    %33 = vector.shape_cast %32 : vector<1x4x8xf32> to vector<4x8xf32>
    %cst_13 = arith.constant dense<0.000000e+00> : vector<64x8xf32>
    %34 = tpu.matmul %31, %33, %cst_13 {dimension_numbers = #tpu.dot_dimension_numbers<[1], [0], [0], [1], [0, 0, 1, 1], [], []>} : vector<64x4xf32>, vector<4x8xf32>, vector<64x8xf32> -> vector<64x8xf32>
    %35 = arith.addf %28, %34 : vector<64x8xf32>
    %36 = vector.extract_strided_slice %2 {offsets = [3, 0, 0, 0], sizes = [1, 8, 8, 4], strides = [1, 1, 1, 1]} : vector<4x9x9x4xf32> to vector<1x8x8x4xf32>
    %37 = vector.shape_cast %36 : vector<1x8x8x4xf32> to vector<8x8x4xf32>
    %38 = vector.shape_cast %37 : vector<8x8x4xf32> to vector<64x4xf32>
    %39 = vector.extract_strided_slice %4 {offsets = [4, 0, 0], sizes = [1, 4, 8], strides = [1, 1, 1]} : vector<9x4x8xf32> to vector<1x4x8xf32>
    %40 = vector.shape_cast %39 : vector<1x4x8xf32> to vector<4x8xf32>
    %cst_14 = arith.constant dense<0.000000e+00> : vector<64x8xf32>
    %41 = tpu.matmul %38, %40, %cst_14 {dimension_numbers = #tpu.dot_dimension_numbers<[1], [0], [0], [1], [0, 0, 1, 1], [], []>} : vector<64x4xf32>, vector<4x8xf32>, vector<64x8xf32> -> vector<64x8xf32>
    %42 = arith.addf %35, %41 : vector<64x8xf32>
    %43 = vector.extract_strided_slice %2 {offsets = [2, 0, 1, 0], sizes = [1, 8, 8, 4], strides = [1, 1, 1, 1]} : vector<4x9x9x4xf32> to vector<1x8x8x4xf32>
    %44 = vector.shape_cast %43 : vector<1x8x8x4xf32> to vector<8x8x4xf32>
    %45 = vector.shape_cast %44 : vector<8x8x4xf32> to vector<64x4xf32>
    %46 = vector.extract_strided_slice %4 {offsets = [5, 0, 0], sizes = [1, 4, 8], strides = [1, 1, 1]} : vector<9x4x8xf32> to vector<1x4x8xf32>
    %47 = vector.shape_cast %46 : vector<1x4x8xf32> to vector<4x8xf32>
    %cst_15 = arith.constant dense<0.000000e+00> : vector<64x8xf32>
    %48 = tpu.matmul %45, %47, %cst_15 {dimension_numbers = #tpu.dot_dimension_numbers<[1], [0], [0], [1], [0, 0, 1, 1], [], []>} : vector<64x4xf32>, vector<4x8xf32>, vector<64x8xf32> -> vector<64x8xf32>
    %49 = arith.addf %42, %48 : vector<64x8xf32>
    %50 = vector.extract_strided_slice %2 {offsets = [0, 1, 0, 0], sizes = [1, 8, 8, 4], strides = [1, 1, 1, 1]} : vector<4x9x9x4xf32> to vector<1x8x8x4xf32>
    %51 = vector.shape_cast %50 : vector<1x8x8x4xf32> to vector<8x8x4xf32>
    %52 = vector.shape_cast %51 : vector<8x8x4xf32> to vector<64x4xf32>
    %53 = vector.extract_strided_slice %4 {offsets = [6, 0, 0], sizes = [1, 4, 8], strides = [1, 1, 1]} : vector<9x4x8xf32> to vector<1x4x8xf32>
    %54 = vector.shape_cast %53 : vector<1x4x8xf32> to vector<4x8xf32>
    %cst_16 = arith.constant dense<0.000000e+00> : vector<64x8xf32>
    %55 = tpu.matmul %52, %54, %cst_16 {dimension_numbers = #tpu.dot_dimension_numbers<[1], [0], [0], [1], [0, 0, 1, 1], [], []>} : vector<64x4xf32>, vector<4x8xf32>, vector<64x8xf32> -> vector<64x8xf32>
    %56 = arith.addf %49, %55 : vector<64x8xf32>
    %57 = vector.extract_strided_slice %2 {offsets = [1, 1, 0, 0], sizes = [1, 8, 8, 4], strides = [1, 1, 1, 1]} : vector<4x9x9x4xf32> to vector<1x8x8x4xf32>
    %58 = vector.shape_cast %57 : vector<1x8x8x4xf32> to vector<8x8x4xf32>
    %59 = vector.shape_cast %58 : vector<8x8x4xf32> to vector<64x4xf32>
    %60 = vector.extract_strided_slice %4 {offsets = [7, 0, 0], sizes = [1, 4, 8], strides = [1, 1, 1]} : vector<9x4x8xf32> to vector<1x4x8xf32>
    %61 = vector.shape_cast %60 : vector<1x4x8xf32> to vector<4x8xf32>
    %cst_17 = arith.constant dense<0.000000e+00> : vector<64x8xf32>
    %62 = tpu.matmul %59, %61, %cst_17 {dimension_numbers = #tpu.dot_dimension_numbers<[1], [0], [0], [1], [0, 0, 1, 1], [], []>} : vector<64x4xf32>, vector<4x8xf32>, vector<64x8xf32> -> vector<64x8xf32>
    %63 = arith.addf %56, %62 : vector<64x8xf32>
    %64 = vector.extract_strided_slice %2 {offsets = [0, 1, 1, 0], sizes = [1, 8, 8, 4], strides = [1, 1, 1, 1]} : vector<4x9x9x4xf32> to vector<1x8x8x4xf32>
    %65 = vector.shape_cast %64 : vector<1x8x8x4xf32> to vector<8x8x4xf32>
    %66 = vector.shape_cast %65 : vector<8x8x4xf32> to vector<64x4xf32>
    %67 = vector.extract_strided_slice %4 {offsets = [8, 0, 0], sizes = [1, 4, 8], strides = [1, 1, 1]} : vector<9x4x8xf32> to vector<1x4x8xf32>
    %68 = vector.shape_cast %67 : vector<1x4x8xf32> to vector<4x8xf32>
    %cst_18 = arith.constant dense<0.000000e+00> : vector<64x8xf32>
    %69 = tpu.matmul %66, %68, %cst_18 {dimension_numbers = #tpu.dot_dimension_numbers<[1], [0], [0], [1], [0, 0, 1, 1], [], []>} : vector<64x4xf32>, vector<4x8xf32>, vector<64x8xf32> -> vector<64x8xf32>
    %70 = arith.addf %63, %69 : vector<64x8xf32>
    %c0_19 = arith.constant 0 : index
    %c0_20 = arith.constant 0 : index
    %71 = vector.load %arg3[%c0_19, %c0_20] : memref<1x8xf32, #tpu.memory_space<vmem>>, vector<1x8xf32>
    %72 = vector.broadcast %71 : vector<1x8xf32> to vector<64x8xf32>
    %73 = arith.addf %70, %72 : vector<64x8xf32>
    %cst_21 = arith.constant 0.000000e+00 : f32
    %74 = vector.broadcast %cst_21 : f32 to vector<64x8xf32>
    %75 = arith.maximumf %73, %74 : vector<64x8xf32>
    %cst_22 = arith.constant 0.000000e+00 : f32
    %76 = vector.broadcast %cst_22 : f32 to vector<10x24x8xf32>
    %c0_23 = arith.constant 0 : index
    %c0_24 = arith.constant 0 : index
    %c0_25 = arith.constant 0 : index
    %77 = vector.load %arg9[%c0_23, %c0_24, %c0_25] : memref<10x24x8xf32, #tpu.memory_space<vmem>>, vector<10x24x8xf32>
    tpu.vector_store %arg9[%c0_23, %c0_24, %c0_25], %76 {strides = array<i32>} : memref<10x24x8xf32, #tpu.memory_space<vmem>>, vector<10x24x8xf32>,
    %78 = vector.shape_cast %75 : vector<64x8xf32> to vector<8x8x8xf32>
    %c1 = arith.constant 1 : index
    %c8 = arith.constant 8 : index
    %c0_26 = arith.constant 0 : index
    %79 = vector.load %arg9[%c1, %c8, %c0_26] : memref<10x24x8xf32, #tpu.memory_space<vmem>>, vector<8x8x8xf32>
    tpu.vector_store %arg9[%c1, %c8, %c0_26], %78 {strides = array<i32>} : memref<10x24x8xf32, #tpu.memory_space<vmem>>, vector<8x8x8xf32>,
    %c0_27 = arith.constant 0 : index
    %c0_28 = arith.constant 0 : index
    %c0_29 = arith.constant 0 : index
    %80 = vector.load %arg9[%c0_27, %c0_28, %c0_29] : memref<10x24x8xf32, #tpu.memory_space<vmem>>, vector<10x24x8xf32>
    %cst_30 = arith.constant 0.000000e+00 : f32
    %81 = vector.broadcast %cst_30 : f32 to vector<64x8xf32>
    %82 = vector.extract_strided_slice %80 {offsets = [0, 7, 0], sizes = [8, 8, 8], strides = [1, 1, 1]} : vector<10x24x8xf32> to vector<8x8x8xf32>
    %83 = vector.shape_cast %82 : vector<8x8x8xf32> to vector<64x8xf32>
    %84 = vector.extract_strided_slice %6 {offsets = [0, 0, 0], sizes = [1, 8, 8], strides = [1, 1, 1]} : vector<9x8x8xf32> to vector<1x8x8xf32>
    %85 = vector.shape_cast %84 : vector<1x8x8xf32> to vector<8x8xf32>
    %cst_31 = arith.constant dense<0.000000e+00> : vector<64x8xf32>
    %86 = tpu.matmul %83, %85, %cst_31 {dimension_numbers = #tpu.dot_dimension_numbers<[1], [0], [0], [1], [0, 0, 1, 1], [], []>} : vector<64x8xf32>, vector<8x8xf32>, vector<64x8xf32> -> vector<64x8xf32>
    %87 = arith.addf %81, %86 : vector<64x8xf32>
    %88 = vector.extract_strided_slice %80 {offsets = [0, 8, 0], sizes = [8, 8, 8], strides = [1, 1, 1]} : vector<10x24x8xf32> to vector<8x8x8xf32>
    %89 = vector.shape_cast %88 : vector<8x8x8xf32> to vector<64x8xf32>
    %90 = vector.extract_strided_slice %6 {offsets = [1, 0, 0], sizes = [1, 8, 8], strides = [1, 1, 1]} : vector<9x8x8xf32> to vector<1x8x8xf32>
    %91 = vector.shape_cast %90 : vector<1x8x8xf32> to vector<8x8xf32>
    %cst_32 = arith.constant dense<0.000000e+00> : vector<64x8xf32>
    %92 = tpu.matmul %89, %91, %cst_32 {dimension_numbers = #tpu.dot_dimension_numbers<[1], [0], [0], [1], [0, 0, 1, 1], [], []>} : vector<64x8xf32>, vector<8x8xf32>, vector<64x8xf32> -> vector<64x8xf32>
    %93 = arith.addf %87, %92 : vector<64x8xf32>
    %94 = vector.extract_strided_slice %80 {offsets = [0, 9, 0], sizes = [8, 8, 8], strides = [1, 1, 1]} : vector<10x24x8xf32> to vector<8x8x8xf32>
    %95 = vector.shape_cast %94 : vector<8x8x8xf32> to vector<64x8xf32>
    %96 = vector.extract_strided_slice %6 {offsets = [2, 0, 0], sizes = [1, 8, 8], strides = [1, 1, 1]} : vector<9x8x8xf32> to vector<1x8x8xf32>
    %97 = vector.shape_cast %96 : vector<1x8x8xf32> to vector<8x8xf32>
    %cst_33 = arith.constant dense<0.000000e+00> : vector<64x8xf32>
    %98 = tpu.matmul %95, %97, %cst_33 {dimension_numbers = #tpu.dot_dimension_numbers<[1], [0], [0], [1], [0, 0, 1, 1], [], []>} : vector<64x8xf32>, vector<8x8xf32>, vector<64x8xf32> -> vector<64x8xf32>
    %99 = arith.addf %93, %98 : vector<64x8xf32>
    %100 = vector.extract_strided_slice %80 {offsets = [1, 7, 0], sizes = [8, 8, 8], strides = [1, 1, 1]} : vector<10x24x8xf32> to vector<8x8x8xf32>
    %101 = vector.shape_cast %100 : vector<8x8x8xf32> to vector<64x8xf32>
    %102 = vector.extract_strided_slice %6 {offsets = [3, 0, 0], sizes = [1, 8, 8], strides = [1, 1, 1]} : vector<9x8x8xf32> to vector<1x8x8xf32>
    %103 = vector.shape_cast %102 : vector<1x8x8xf32> to vector<8x8xf32>
    %cst_34 = arith.constant dense<0.000000e+00> : vector<64x8xf32>
    %104 = tpu.matmul %101, %103, %cst_34 {dimension_numbers = #tpu.dot_dimension_numbers<[1], [0], [0], [1], [0, 0, 1, 1], [], []>} : vector<64x8xf32>, vector<8x8xf32>, vector<64x8xf32> -> vector<64x8xf32>
    %105 = arith.addf %99, %104 : vector<64x8xf32>
    %106 = vector.extract_strided_slice %80 {offsets = [1, 8, 0], sizes = [8, 8, 8], strides = [1, 1, 1]} : vector<10x24x8xf32> to vector<8x8x8xf32>
    %107 = vector.shape_cast %106 : vector<8x8x8xf32> to vector<64x8xf32>
    %108 = vector.extract_strided_slice %6 {offsets = [4, 0, 0], sizes = [1, 8, 8], strides = [1, 1, 1]} : vector<9x8x8xf32> to vector<1x8x8xf32>
    %109 = vector.shape_cast %108 : vector<1x8x8xf32> to vector<8x8xf32>
    %cst_35 = arith.constant dense<0.000000e+00> : vector<64x8xf32>
    %110 = tpu.matmul %107, %109, %cst_35 {dimension_numbers = #tpu.dot_dimension_numbers<[1], [0], [0], [1], [0, 0, 1, 1], [], []>} : vector<64x8xf32>, vector<8x8xf32>, vector<64x8xf32> -> vector<64x8xf32>
    %111 = arith.addf %105, %110 : vector<64x8xf32>
    %112 = vector.extract_strided_slice %80 {offsets = [1, 9, 0], sizes = [8, 8, 8], strides = [1, 1, 1]} : vector<10x24x8xf32> to vector<8x8x8xf32>
    %113 = vector.shape_cast %112 : vector<8x8x8xf32> to vector<64x8xf32>
    %114 = vector.extract_strided_slice %6 {offsets = [5, 0, 0], sizes = [1, 8, 8], strides = [1, 1, 1]} : vector<9x8x8xf32> to vector<1x8x8xf32>
    %115 = vector.shape_cast %114 : vector<1x8x8xf32> to vector<8x8xf32>
    %cst_36 = arith.constant dense<0.000000e+00> : vector<64x8xf32>
    %116 = tpu.matmul %113, %115, %cst_36 {dimension_numbers = #tpu.dot_dimension_numbers<[1], [0], [0], [1], [0, 0, 1, 1], [], []>} : vector<64x8xf32>, vector<8x8xf32>, vector<64x8xf32> -> vector<64x8xf32>
    %117 = arith.addf %111, %116 : vector<64x8xf32>
    %118 = vector.extract_strided_slice %80 {offsets = [2, 7, 0], sizes = [8, 8, 8], strides = [1, 1, 1]} : vector<10x24x8xf32> to vector<8x8x8xf32>
    %119 = vector.shape_cast %118 : vector<8x8x8xf32> to vector<64x8xf32>
    %120 = vector.extract_strided_slice %6 {offsets = [6, 0, 0], sizes = [1, 8, 8], strides = [1, 1, 1]} : vector<9x8x8xf32> to vector<1x8x8xf32>
    %121 = vector.shape_cast %120 : vector<1x8x8xf32> to vector<8x8xf32>
    %cst_37 = arith.constant dense<0.000000e+00> : vector<64x8xf32>
    %122 = tpu.matmul %119, %121, %cst_37 {dimension_numbers = #tpu.dot_dimension_numbers<[1], [0], [0], [1], [0, 0, 1, 1], [], []>} : vector<64x8xf32>, vector<8x8xf32>, vector<64x8xf32> -> vector<64x8xf32>
    %123 = arith.addf %117, %122 : vector<64x8xf32>
    %124 = vector.extract_strided_slice %80 {offsets = [2, 8, 0], sizes = [8, 8, 8], strides = [1, 1, 1]} : vector<10x24x8xf32> to vector<8x8x8xf32>
    %125 = vector.shape_cast %124 : vector<8x8x8xf32> to vector<64x8xf32>
    %126 = vector.extract_strided_slice %6 {offsets = [7, 0, 0], sizes = [1, 8, 8], strides = [1, 1, 1]} : vector<9x8x8xf32> to vector<1x8x8xf32>
    %127 = vector.shape_cast %126 : vector<1x8x8xf32> to vector<8x8xf32>
    %cst_38 = arith.constant dense<0.000000e+00> : vector<64x8xf32>
    %128 = tpu.matmul %125, %127, %cst_38 {dimension_numbers = #tpu.dot_dimension_numbers<[1], [0], [0], [1], [0, 0, 1, 1], [], []>} : vector<64x8xf32>, vector<8x8xf32>, vector<64x8xf32> -> vector<64x8xf32>
    %129 = arith.addf %123, %128 : vector<64x8xf32>
    %130 = vector.extract_strided_slice %80 {offsets = [2, 9, 0], sizes = [8, 8, 8], strides = [1, 1, 1]} : vector<10x24x8xf32> to vector<8x8x8xf32>
    %131 = vector.shape_cast %130 : vector<8x8x8xf32> to vector<64x8xf32>
    %132 = vector.extract_strided_slice %6 {offsets = [8, 0, 0], sizes = [1, 8, 8], strides = [1, 1, 1]} : vector<9x8x8xf32> to vector<1x8x8xf32>
    %133 = vector.shape_cast %132 : vector<1x8x8xf32> to vector<8x8xf32>
    %cst_39 = arith.constant dense<0.000000e+00> : vector<64x8xf32>
    %134 = tpu.matmul %131, %133, %cst_39 {dimension_numbers = #tpu.dot_dimension_numbers<[1], [0], [0], [1], [0, 0, 1, 1], [], []>} : vector<64x8xf32>, vector<8x8xf32>, vector<64x8xf32> -> vector<64x8xf32>
    %135 = arith.addf %129, %134 : vector<64x8xf32>
    %c0_40 = arith.constant 0 : index
    %c0_41 = arith.constant 0 : index
    %136 = vector.load %arg5[%c0_40, %c0_41] : memref<1x8xf32, #tpu.memory_space<vmem>>, vector<1x8xf32>
    %137 = vector.broadcast %136 : vector<1x8xf32> to vector<64x8xf32>
    %138 = arith.addf %135, %137 : vector<64x8xf32>
    %139 = vector.extract_strided_slice %2 {offsets = [3, 0, 0, 0], sizes = [1, 8, 8, 4], strides = [1, 1, 1, 1]} : vector<4x9x9x4xf32> to vector<1x8x8x4xf32>
    %140 = vector.shape_cast %139 : vector<1x8x8x4xf32> to vector<8x8x4xf32>
    %141 = vector.shape_cast %140 : vector<8x8x4xf32> to vector<64x4xf32>
    %c0_42 = arith.constant 0 : index
    %c0_43 = arith.constant 0 : index
    %142 = vector.load %arg6[%c0_42, %c0_43] : memref<4x8xbf16, #tpu.memory_space<vmem>>, vector<4x8xbf16>
    %143 = arith.extf %142 : vector<4x8xbf16> to vector<4x8xf32>
    %cst_44 = arith.constant dense<0.000000e+00> : vector<64x8xf32>
    %144 = tpu.matmul %141, %143, %cst_44 {dimension_numbers = #tpu.dot_dimension_numbers<[1], [0], [0], [1], [0, 0, 1, 1], [], []>} : vector<64x4xf32>, vector<4x8xf32>, vector<64x8xf32> -> vector<64x8xf32>
    %c0_45 = arith.constant 0 : index
    %c0_46 = arith.constant 0 : index
    %145 = vector.load %arg7[%c0_45, %c0_46] : memref<1x8xf32, #tpu.memory_space<vmem>>, vector<1x8xf32>
    %146 = vector.broadcast %145 : vector<1x8xf32> to vector<64x8xf32>
    %147 = arith.addf %144, %146 : vector<64x8xf32>
    %148 = arith.addf %138, %147 : vector<64x8xf32>
    %cst_47 = arith.constant 0.000000e+00 : f32
    %149 = vector.broadcast %cst_47 : f32 to vector<64x8xf32>
    %150 = arith.maximumf %148, %149 : vector<64x8xf32>
    %151 = arith.truncf %150 : vector<64x8xf32> to vector<64x8xbf16>
    %c0_48 = arith.constant 0 : index
    %c0_49 = arith.constant 0 : index
    %c0_50 = arith.constant 0 : index
    %152 = vector.load %arg8[%c0_48, %c0_49, %c0_50] : memref<1x64x8xbf16, #tpu.memory_space<vmem>>, vector<1x64x8xbf16>
    %153 = vector.shape_cast %152 : vector<1x64x8xbf16> to vector<64x8xbf16>
    %154 = vector.shape_cast %151 : vector<64x8xbf16> to vector<1x64x8xbf16>
    tpu.vector_store %arg8[%c0_48, %c0_49, %c0_50], %154 {strides = array<i32>} : memref<1x64x8xbf16, #tpu.memory_space<vmem>>, vector<1x64x8xbf16>,
    return
  }
  func.func @transform_0(%arg0: i32) -> (i32, i32, i32, i32, i32) {
    %c0_i32 = arith.constant 0 : i32
    %c0_i32_0 = arith.constant 0 : i32
    %c0_i32_1 = arith.constant 0 : i32
    %c0_i32_2 = arith.constant 0 : i32
    %c0_i32_3 = arith.constant 0 : i32
    return %arg0, %c0_i32, %c0_i32_0, %c0_i32_1, %c0_i32_2 : i32, i32, i32, i32, i32
  }
  func.func @transform_1(%arg0: i32) -> (i32, i32, i32) {
    %c0_i32 = arith.constant 0 : i32
    %c0_i32_0 = arith.constant 0 : i32
    %c0_i32_1 = arith.constant 0 : i32
    %c0_i32_2 = arith.constant 0 : i32
    return %c0_i32, %c0_i32_0, %c0_i32_1 : i32, i32, i32
  }
  func.func @transform_2(%arg0: i32) -> (i32, i32) {
    %c0_i32 = arith.constant 0 : i32
    %c0_i32_0 = arith.constant 0 : i32
    %c0_i32_1 = arith.constant 0 : i32
    return %c0_i32, %c0_i32_0 : i32, i32
  }
  func.func @transform_3(%arg0: i32) -> (i32, i32, i32) {
    %c0_i32 = arith.constant 0 : i32
    %c0_i32_0 = arith.constant 0 : i32
    %c0_i32_1 = arith.constant 0 : i32
    %c0_i32_2 = arith.constant 0 : i32
    return %c0_i32, %c0_i32_0, %c0_i32_1 : i32, i32, i32
  }
  func.func @transform_4(%arg0: i32) -> (i32, i32) {
    %c0_i32 = arith.constant 0 : i32
    %c0_i32_0 = arith.constant 0 : i32
    %c0_i32_1 = arith.constant 0 : i32
    return %c0_i32, %c0_i32_0 : i32, i32
  }
  func.func @transform_5(%arg0: i32) -> (i32, i32) {
    %c0_i32 = arith.constant 0 : i32
    %c0_i32_0 = arith.constant 0 : i32
    %c0_i32_1 = arith.constant 0 : i32
    return %c0_i32, %c0_i32_0 : i32, i32
  }
  func.func @transform_6(%arg0: i32) -> (i32, i32) {
    %c0_i32 = arith.constant 0 : i32
    %c0_i32_0 = arith.constant 0 : i32
    %c0_i32_1 = arith.constant 0 : i32
    return %c0_i32, %c0_i32_0 : i32, i32
  }
  func.func @transform_7(%arg0: i32) -> (i32, i32, i32) {
    %c0_i32 = arith.constant 0 : i32
    %c0_i32_0 = arith.constant 0 : i32
    %c0_i32_1 = arith.constant 0 : i32
    return %arg0, %c0_i32, %c0_i32_0 : i32, i32, i32
  }
}

</mosaic_0001>

<llo_original>
// kernel: model_forward.3
$region0: #{model_forward.3}
  #allocation0 [shape = 'u32[]', space=smem, size = 0x4, offset = 0x4, fixed_abs, tag = 'smem constant byte address 0x4 - core index']
  #allocation1 [shape = 'u32[72,128]{1,0:T(1,128)}', space=vmem, size = 0x9000, scoped, tag = 'internal scratch']
  #allocation2 [shape = 'f32[10,24,8]{2,1,0:T(8,128)}', space=vmem, size = 0x1e000, scoped, tag = 'scratch operand']
  %s0 = inlined_call_operand.vmem [shape: bf16[2,4,9,9,4], index: 0, kind: input, shape index: {}]
  %s1 = inlined_call_operand.vmem [shape: bf16[9,4,8], index: 1, kind: input, shape index: {}]
  %s2 = inlined_call_operand.vmem [shape: f32[1,8], index: 2, kind: input, shape index: {}]
  %s3 = inlined_call_operand.vmem [shape: bf16[9,8,8], index: 3, kind: input, shape index: {}]
  %s4 = inlined_call_operand.vmem [shape: f32[1,8], index: 4, kind: input, shape index: {}]
  %s5 = inlined_call_operand.vmem [shape: bf16[4,8], index: 5, kind: input, shape index: {}]
  %s6 = inlined_call_operand.vmem [shape: f32[1,8], index: 6, kind: input, shape index: {}]
  %s7 = inlined_call_operand.vmem [shape: bf16[2,64,8], index: 7, kind: output, shape index: {}]
  %s8 = sld [smem:[#allocation0]]
  $region61: #{model_forward.3} parent=0
    _
  %s10 = ssub.s32 1, %s8
  %s11 = scalar_select 0, %s10, %s8
  loop: start=0, step=1, limit=4
  $region2: #{model_forward.3} parent=0 // loop_pre_header
    _
  $region3: #{model_forward.3} parent=0 // loop_header
    %s13 = sphi 0, %s17
    %p14 = scmp.ge.s32.totalorder %s13, 4
    %s23 = sphi 0, %s25
    %s26 = sphi 0, %s23
    %s27 = sphi 0, %s26
    %s43 = sphi 0, %s27
    %s47 = sphi 0, %s47
    %s49 = sphi 0, %s47
    %s50 = sphi 0, %s49
    %s64 = sphi 0, %s50
    %s68 = sphi 0, %s68
    %s70 = sphi 0, %s68
    %s71 = sphi 0, %s70
    %s85 = sphi 0, %s71
    %s89 = sphi 0, %s89
    %s91 = sphi 0, %s89
    %s92 = sphi 0, %s91
    %s106 = sphi 0, %s92
    %s110 = sphi 0, %s110
    %s112 = sphi 0, %s110
    %s113 = sphi 0, %s112
    %s127 = sphi 0, %s113
    %s131 = sphi 0, %s131
    %s133 = sphi 0, %s131
    %s134 = sphi 0, %s133
    %s148 = sphi 0, %s134
    %s152 = sphi 0, %s152
    %s154 = sphi 0, %s152
    %s155 = sphi 0, %s154
    %s169 = sphi 0, %s155
    %s175 = sphi 0, %s177
    %s178 = sphi 0, %s175
    %s179 = sphi 0, %s178
    %s195 = sphi 0, %s179
  $region4: #{model_forward.3} parent=0 // loop_header_branch
    %16 = sbr.rel (%p14) target = $region8
  $region5: #{model_forward.3} parent=0 // loop_body
    %s18 = ssub.s32 %s13, 1
    %s19 = ssub.s32 %s13, 2
    %s20 = sadd.s32 %s13, 1
    %s21 = ssub.s32 %s13, %s20
    %p22 = scmp.eq.s32.totalorder %s21, 0
    %s24 = sadd.s32 %s23, 1
    %s25 = scalar_select %p22, %s23, %s24
    %p28 = pneg %p22
    %p29 = scmp.eq.s32.totalorder %s13, 1
    %p30 = por %p28, %p29
    %p31 = scmp.ne.s32.totalorder %s23, %s26
    %p32 = scmp.eq.s32.totalorder %s13, 0
    %p33 = por %p31, %p32
    %p34 = scmp.ne.s32.totalorder %s23, %s26
    %p35 = scmp.eq.s32.totalorder %s18, 1
    %p36 = por %p34, %p35
    %p37 = scmp.ne.s32.totalorder %s26, %s27
    %p38 = scmp.eq.s32.totalorder %s18, 0
    %p39 = por %p37, %p38
    %p40 = scmp.ne.s32.totalorder %s26, %s27
    %p41 = scmp.eq.s32.totalorder %s19, 1
    %p42 = por %p40, %p41
    %p44 = scmp.ne.s32.totalorder %s27, %s43
    %p45 = scmp.eq.s32.totalorder %s19, 0
    %p46 = por %p44, %p45
    %s48 = sadd.s32 %s47, 1
    %p51 = scmp.eq.s32.totalorder %s13, 1
    %p52 = scmp.ne.s32.totalorder %s47, %s49
    %p53 = scmp.eq.s32.totalorder %s13, 0
    %p54 = por %p52, %p53
    %p55 = scmp.ne.s32.totalorder %s47, %s49
    %p56 = scmp.eq.s32.totalorder %s18, 1
    %p57 = por %p55, %p56
    %p58 = scmp.ne.s32.totalorder %s49, %s50
    %p59 = scmp.eq.s32.totalorder %s18, 0
    %p60 = por %p58, %p59
    %p61 = scmp.ne.s32.totalorder %s49, %s50
    %p62 = scmp.eq.s32.totalorder %s19, 1
    %p63 = por %p61, %p62
    %p65 = scmp.ne.s32.totalorder %s50, %s64
    %p66 = scmp.eq.s32.totalorder %s19, 0
    %p67 = por %p65, %p66
    %s69 = sadd.s32 %s68, 1
    %p72 = scmp.eq.s32.totalorder %s13, 1
    %p73 = scmp.ne.s32.totalorder %s68, %s70
    %p74 = scmp.eq.s32.totalorder %s13, 0
    %p75 = por %p73, %p74
    %p76 = scmp.ne.s32.totalorder %s68, %s70
    %p77 = scmp.eq.s32.totalorder %s18, 1
    %p78 = por %p76, %p77
    %p79 = scmp.ne.s32.totalorder %s70, %s71
    %p80 = scmp.eq.s32.totalorder %s18, 0
    %p81 = por %p79, %p80
    %p82 = scmp.ne.s32.totalorder %s70, %s71
    %p83 = scmp.eq.s32.totalorder %s19, 1
    %p84 = por %p82, %p83
    %p86 = scmp.ne.s32.totalorder %s71, %s85
    %p87 = scmp.eq.s32.totalorder %s19, 0
    %p88 = por %p86, %p87
    %s90 = sadd.s32 %s89, 1
    %p93 = scmp.eq.s32.totalorder %s13, 1
    %p94 = scmp.ne.s32.totalorder %s89, %s91
    %p95 = scmp.eq.s32.totalorder %s13, 0
    %p96 = por %p94, %p95
    %p97 = scmp.ne.s32.totalorder %s89, %s91
    %p98 = scmp.eq.s32.totalorder %s18, 1
    %p99 = por %p97, %p98
    %p100 = scmp.ne.s32.totalorder %s91, %s92
    %p101 = scmp.eq.s32.totalorder %s18, 0
    %p102 = por %p100, %p101
    %p103 = scmp.ne.s32.totalorder %s91, %s92
    %p104 = scmp.eq.s32.totalorder %s19, 1
    %p105 = por %p103, %p104
    %p107 = scmp.ne.s32.totalorder %s92, %s106
    %p108 = scmp.eq.s32.totalorder %s19, 0
    %p109 = por %p107, %p108
    %s111 = sadd.s32 %s110, 1
    %p114 = scmp.eq.s32.totalorder %s13, 1
    %p115 = scmp.ne.s32.totalorder %s110, %s112
    %p116 = scmp.eq.s32.totalorder %s13, 0
    %p117 = por %p115, %p116
    %p118 = scmp.ne.s32.totalorder %s110, %s112
    %p119 = scmp.eq.s32.totalorder %s18, 1
    %p120 = por %p118, %p119
    %p121 = scmp.ne.s32.totalorder %s112, %s113
    %p122 = scmp.eq.s32.totalorder %s18, 0
    %p123 = por %p121, %p122
    %p124 = scmp.ne.s32.totalorder %s112, %s113
    %p125 = scmp.eq.s32.totalorder %s19, 1
    %p126 = por %p124, %p125
    %p128 = scmp.ne.s32.totalorder %s113, %s127
    %p129 = scmp.eq.s32.totalorder %s19, 0
    %p130 = por %p128, %p129
    %s132 = sadd.s32 %s131, 1
    %p135 = scmp.eq.s32.totalorder %s13, 1
    %p136 = scmp.ne.s32.totalorder %s131, %s133
    %p137 = scmp.eq.s32.totalorder %s13, 0
    %p138 = por %p136, %p137
    %p139 = scmp.ne.s32.totalorder %s131, %s133
    %p140 = scmp.eq.s32.totalorder %s18, 1
    %p141 = por %p139, %p140
    %p142 = scmp.ne.s32.totalorder %s133, %s134
    %p143 = scmp.eq.s32.totalorder %s18, 0
    %p144 = por %p142, %p143
    %p145 = scmp.ne.s32.totalorder %s133, %s134
    %p146 = scmp.eq.s32.totalorder %s19, 1
    %p147 = por %p145, %p146
    %p149 = scmp.ne.s32.totalorder %s134, %s148
    %p150 = scmp.eq.s32.totalorder %s19, 0
    %p151 = por %p149, %p150
    %s153 = sadd.s32 %s152, 1
    %p156 = scmp.eq.s32.totalorder %s13, 1
    %p157 = scmp.ne.s32.totalorder %s152, %s154
    %p158 = scmp.eq.s32.totalorder %s13, 0
    %p159 = por %p157, %p158
    %p160 = scmp.ne.s32.totalorder %s152, %s154
    %p161 = scmp.eq.s32.totalorder %s18, 1
    %p162 = por %p160, %p161
    %p163 = scmp.ne.s32.totalorder %s154, %s155
    %p164 = scmp.eq.s32.totalorder %s18, 0
    %p165 = por %p163, %p164
    %p166 = scmp.ne.s32.totalorder %s154, %s155
    %p167 = scmp.eq.s32.totalorder %s19, 1
    %p168 = por %p166, %p167
    %p170 = scmp.ne.s32.totalorder %s155, %s169
    %p171 = scmp.eq.s32.totalorder %s19, 0
    %p172 = por %p170, %p171
    %s173 = ssub.s32 %s13, %s20
    %p174 = scmp.eq.s32.totalorder %s173, 0
    %s176 = sadd.s32 %s175, 1
    %s177 = scalar_select %p174, %s175, %s176
    %p180 = pneg %p174
    %p181 = scmp.eq.s32.totalorder %s13, 1
    %p182 = por %p180, %p181
    %p183 = scmp.ne.s32.totalorder %s175, %s178
    %p184 = scmp.eq.s32.totalorder %s13, 0
    %p185 = por %p183, %p184
    %p186 = scmp.ne.s32.totalorder %s175, %s178
    %p187 = scmp.eq.s32.totalorder %s18, 1
    %p188 = por %p186, %p187
    %p189 = scmp.ne.s32.totalorder %s178, %s179
    %p190 = scmp.eq.s32.totalorder %s18, 0
    %p191 = por %p189, %p190
    %p192 = scmp.ne.s32.totalorder %s178, %s179
    %p193 = scmp.eq.s32.totalorder %s19, 1
    %p194 = por %p192, %p193
    %p196 = scmp.ne.s32.totalorder %s179, %s195
    %p197 = scmp.eq.s32.totalorder %s19, 0
    %p198 = por %p196, %p197
    %p199 = scmp.le.s32.totalorder 1, %s13
    %p200 = scmp.lt.s32.totalorder %s13, 3
    %p201 = pnand %p199, %p200
    %p202 = pneg %p201
    // Predicated region
    $region9: #{model_forward.3} parent=5 // pred_check
      _
    $region10: #{model_forward.3} parent=5 // pred_check_branch
      %204 = sbr.rel (%p201) target = $region12
    $region11: #{model_forward.3} parent=5 // pred_region
      %s205 = ssub.s32 %s13, 1
      // Predicated region
      $region13: #{model_forward.3} parent=11 // pred_check
        %p206 = pneg %p60
      $region14: #{model_forward.3} parent=11 // pred_check_branch
        %208 = sbr.rel (%p206) target = $region16
      $region15: #{model_forward.3} parent=11 // pred_region
        _
      $region16: #{model_forward.3} parent=11 // pred_fallthru
        _
      // Predicated region
      $region17: #{model_forward.3} parent=11 // pred_check
        %p209 = pneg %p81
      $region18: #{model_forward.3} parent=11 // pred_check_branch
        %211 = sbr.rel (%p209) target = $region20
      $region19: #{model_forward.3} parent=11 // pred_region
        _
      $region20: #{model_forward.3} parent=11 // pred_fallthru
        _
      // Predicated region
      $region21: #{model_forward.3} parent=11 // pred_check
        %p212 = pneg %p102
      $region22: #{model_forward.3} parent=11 // pred_check_branch
        %214 = sbr.rel (%p212) target = $region24
      $region23: #{model_forward.3} parent=11 // pred_region
        _
      $region24: #{model_forward.3} parent=11 // pred_fallthru
        _
      // Predicated region
      $region25: #{model_forward.3} parent=11 // pred_check
        %p215 = pneg %p123
      $region26: #{model_forward.3} parent=11 // pred_check_branch
        %217 = sbr.rel (%p215) target = $region28
      $region27: #{model_forward.3} parent=11 // pred_region
        _
      $region28: #{model_forward.3} parent=11 // pred_fallthru
        _
      // Predicated region
      $region29: #{model_forward.3} parent=11 // pred_check
        %p218 = pneg %p144
      $region30: #{model_forward.3} parent=11 // pred_check_branch
        %220 = sbr.rel (%p218) target = $region32
      $region31: #{model_forward.3} parent=11 // pred_region
        _
      $region32: #{model_forward.3} parent=11 // pred_fallthru
        _
      // Predicated region
      $region33: #{model_forward.3} parent=11 // pred_check
        %p221 = pneg %p165
      $region34: #{model_forward.3} parent=11 // pred_check_branch
        %223 = sbr.rel (%p221) target = $region36
      $region35: #{model_forward.3} parent=11 // pred_region
        _
      $region36: #{model_forward.3} parent=11 // pred_fallthru
        _
    $region12: #{model_forward.3} parent=5 // pred_fallthru
      _
    %p224 = scmp.lt.s32.totalorder %s13, 2
    // Predicated region
    $region37: #{model_forward.3} parent=5 // pred_check
      %p225 = pneg %p224
    $region38: #{model_forward.3} parent=5 // pred_check_branch
      %227 = sbr.rel (%p225) target = $region40
    $region39: #{model_forward.3} parent=5 // pred_region
      // Predicated region
      $region41: #{model_forward.3} parent=39 // pred_check
        %p228 = pneg %p33
      $region42: #{model_forward.3} parent=39 // pred_check_branch
        %230 = sbr.rel (%p228) target = $region44
      $region43: #{model_forward.3} parent=39 // pred_region
        %p231 = scmp.lt.s32.totalorder %s13, 1
        %s232 = scalar_select %p231, %s13, 1
        %s233 = smul.addr %s232, 72
        %s234 = smul.addr %s233, 4
        %s235 = scalar_lea.vmem %s0, %s234
      $region44: #{model_forward.3} parent=39 // pred_fallthru
        _
    $region40: #{model_forward.3} parent=5 // pred_fallthru
      _
    %p236 = scmp.le.s32.totalorder 1, %s13
    %p237 = scmp.lt.s32.totalorder %s13, 3
    %p238 = pnand %p236, %p237
    %p239 = pneg %p238
    // Predicated region
    $region45: #{model_forward.3} parent=5 // pred_check
      _
    $region46: #{model_forward.3} parent=5 // pred_check_branch
      %241 = sbr.rel (%p238) target = $region48
    $region47: #{model_forward.3} parent=5 // pred_region
      %s242 = ssub.s32 %s13, 1
      %p243 = scmp.lt.s32.totalorder %s18, 1
      %s244 = scalar_select %p243, %s18, 1
      %s245 = smul.addr %s244, 72
      %s246 = smul.addr %s245, 4
      %s247 = scalar_lea.vmem %s0, %s246
      %p248 = pneg %p39
      %p249 = pneg %p36
      %p250 = pneg %p60
      %p251 = pneg %p57
      %p252 = pneg %p81
      %p253 = pneg %p78
      %p254 = pneg %p102
      %p255 = pneg %p99
      %p256 = pneg %p123
      %p257 = pneg %p120
      %p258 = pneg %p144
      %p259 = pneg %p141
      %p260 = pneg %p165
      %p261 = pneg %p162
      %p262 = pneg %p191
      %p263 = pneg %p188
      %p264 = scmp.lt.s32.totalorder %s18, 1
      %s265 = scalar_select %p264, %s18, 1
      %s266 = smul.addr %s265, 8
      %s267 = smul.addr %s266, 4
      %s268 = scalar_lea.vmem %s7, %s267
      %p269 = scmp.lt.s32.totalorder %s18, 1
      %s270 = scalar_select %p269, %s18, 1
      %s271 = smul.addr %s270, 72
      %s272 = smul.addr %s271, 4
      %s273 = scalar_lea.vmem %s0, %s272
      %p274 = scmp.lt.s32.totalorder %s18, 1
      %s275 = scalar_select %p274, %s18, 1
      %s276 = smul.addr %s275, 8
      %s277 = smul.addr %s276, 4
      %s278 = scalar_lea.vmem %s7, %s277
      %v279 = vld [vmem:[%s273] sm:$0xf]
      %v280 = vld [vmem:[%s273 + $0x4] sm:$0x1]
      %v281 = vld [vmem:[%s273 + $0x8] sm:$0xf]
      %v282 = vld [vmem:[%s273 + $0xc] sm:$0x1]
      %v283 = vld [vmem:[%s273 + $0x10] sm:$0xf]
      %v284 = vld [vmem:[%s273 + $0x14] sm:$0x1]
      %v285 = vld [vmem:[%s273 + $0x18] sm:$0xf]
      %v286 = vld [vmem:[%s273 + $0x1c] sm:$0x1]
      %v287 = vld [vmem:[%s273 + $0x20] sm:$0xf]
      %v288 = vld [vmem:[%s273 + $0x24] sm:$0x1]
      %v289 = vld [vmem:[%s273 + $0x28] sm:$0xf]
      %v290 = vld [vmem:[%s273 + $0x2c] sm:$0x1]
      %v291 = vld [vmem:[%s273 + $0x30] sm:$0xf]
      %v292 = vld [vmem:[%s273 + $0x34] sm:$0x1]
      %v293 = vld [vmem:[%s273 + $0x38] sm:$0xf]
      %v294 = vld [vmem:[%s273 + $0x3c] sm:$0x1]
      %v295 = vld [vmem:[%s273 + $0x40] sm:$0xf]
      %v296 = vld [vmem:[%s273 + $0x44] sm:$0x1]
      %v297 = vld [vmem:[%s273 + $0x48] sm:$0xf]
      %v298 = vld [vmem:[%s273 + $0x50] sm:$0xf]
      %v299 = vld [vmem:[%s273 + $0x58] sm:$0xf]
      %v300 = vld [vmem:[%s273 + $0x60] sm:$0xf]
      %v301 = vld [vmem:[%s273 + $0x68] sm:$0xf]
      %v302 = vld [vmem:[%s273 + $0x70] sm:$0xf]
      %v303 = vld [vmem:[%s273 + $0x78] sm:$0xf]
      %v304 = vld [vmem:[%s273 + $0x80] sm:$0xf]
      %v305 = vld [vmem:[%s273 + $0x88] sm:$0xf]
      %v306 = vld [vmem:[%s273 + $0x90] sm:$0xf]
      %v307 = vld [vmem:[%s273 + $0x94] sm:$0x1]
      %v308 = vld [vmem:[%s273 + $0x98] sm:$0xf]
      %v309 = vld [vmem:[%s273 + $0x9c] sm:$0x1]
      %v310 = vld [vmem:[%s273 + $0xa0] sm:$0xf]
      %v311 = vld [vmem:[%s273 + $0xa4] sm:$0x1]
      %v312 = vld [vmem:[%s273 + $0xa8] sm:$0xf]
      %v313 = vld [vmem:[%s273 + $0xac] sm:$0x1]
      %v314 = vld [vmem:[%s273 + $0xb0] sm:$0xf]
      %v315 = vld [vmem:[%s273 + $0xb4] sm:$0x1]
      %v316 = vld [vmem:[%s273 + $0xb8] sm:$0xf]
      %v317 = vld [vmem:[%s273 + $0xbc] sm:$0x1]
      %v318 = vld [vmem:[%s273 + $0xc0] sm:$0xf]
      %v319 = vld [vmem:[%s273 + $0xc4] sm:$0x1]
      %v320 = vld [vmem:[%s273 + $0xc8] sm:$0xf]
      %v321 = vld [vmem:[%s273 + $0xcc] sm:$0x1]
      %v322 = vld [vmem:[%s273 + $0xd8] sm:$0xf]
      %v323 = vld [vmem:[%s273 + $0xe0] sm:$0xf]
      %v324 = vld [vmem:[%s273 + $0xe8] sm:$0xf]
      %v325 = vld [vmem:[%s273 + $0xf0] sm:$0xf]
      %v326 = vld [vmem:[%s273 + $0xf8] sm:$0xf]
      %v327 = vld [vmem:[%s273 + $0x100] sm:$0xf]
      %v328 = vld [vmem:[%s273 + $0x108] sm:$0xf]
      %v329 = vld [vmem:[%s273 + $0x110] sm:$0xf]
      %v330 = vunpack.c.l.bf16 %v279
      %v331 = vunpack.c.l.bf16 %v280
      %v332 = vunpack.c.l.bf16 %v281
      %v333 = vunpack.c.l.bf16 %v282
      %v334 = vunpack.c.l.bf16 %v283
      %v335 = vunpack.c.l.bf16 %v284
      %v336 = vunpack.c.l.bf16 %v285
      %v337 = vunpack.c.l.bf16 %v286
      %v338 = vunpack.c.l.bf16 %v287
      %v339 = vunpack.c.l.bf16 %v288
      %v340 = vunpack.c.l.bf16 %v289
      %v341 = vunpack.c.l.bf16 %v290
      %v342 = vunpack.c.l.bf16 %v291
      %v343 = vunpack.c.l.bf16 %v292
      %v344 = vunpack.c.l.bf16 %v293
      %v345 = vunpack.c.l.bf16 %v294
      %v346 = vunpack.c.l.bf16 %v295
      %v347 = vunpack.c.l.bf16 %v296
      %v348 = vunpack.c.l.bf16 %v297
      %v349 = vunpack.c.l.bf16 %v298
      %v350 = vunpack.c.l.bf16 %v299
      %v351 = vunpack.c.l.bf16 %v300
      %v352 = vunpack.c.l.bf16 %v301
      %v353 = vunpack.c.l.bf16 %v302
      %v354 = vunpack.c.l.bf16 %v303
      %v355 = vunpack.c.l.bf16 %v304
      %v356 = vunpack.c.l.bf16 %v305
      %v357 = vunpack.c.l.bf16 %v306
      %v358 = vunpack.c.l.bf16 %v307
      %v359 = vunpack.c.l.bf16 %v308
      %v360 = vunpack.c.l.bf16 %v309
      %v361 = vunpack.c.l.bf16 %v310
      %v362 = vunpack.c.l.bf16 %v311
      %v363 = vunpack.c.l.bf16 %v312
      %v364 = vunpack.c.l.bf16 %v313
      %v365 = vunpack.c.l.bf16 %v314
      %v366 = vunpack.c.l.bf16 %v315
      %v367 = vunpack.c.l.bf16 %v316
      %v368 = vunpack.c.l.bf16 %v317
      %v369 = vunpack.c.l.bf16 %v318
      %v370 = vunpack.c.l.bf16 %v319
      %v371 = vunpack.c.l.bf16 %v320
      %v372 = vunpack.c.l.bf16 %v321
      %v373 = vunpack.c.l.bf16 %v322
      %v374 = vunpack.c.l.bf16 %v323
      %v375 = vunpack.c.l.bf16 %v324
      %v376 = vunpack.c.l.bf16 %v325
      %v377 = vunpack.c.l.bf16 %v326
      %v378 = vunpack.c.l.bf16 %v327
      %v379 = vunpack.c.l.bf16 %v328
      %v380 = vunpack.c.l.bf16 %v329
      %v381 = vld [vmem:[%s1] sm:$0x3]
      %v382 = vld [vmem:[%s1 + $0x2] sm:$0x3]
      %v383 = vld [vmem:[%s1 + $0x4] sm:$0x3]
      %v384 = vld [vmem:[%s1 + $0x6] sm:$0x3]
      %v385 = vld [vmem:[%s1 + $0x8] sm:$0x3]
      %v386 = vld [vmem:[%s1 + $0xa] sm:$0x3]
      %v387 = vld [vmem:[%s1 + $0xc] sm:$0x3]
      %v388 = vld [vmem:[%s1 + $0xe] sm:$0x3]
      %v389 = vld [vmem:[%s1 + $0x10] sm:$0x3]
      %v390 = vunpack.c.l.bf16 %v381
      %v391 = vunpack.c.l.bf16 %v382
      %v392 = vunpack.c.l.bf16 %v383
      %v393 = vunpack.c.l.bf16 %v384
      %v394 = vunpack.c.l.bf16 %v385
      %v395 = vunpack.c.l.bf16 %v386
      %v396 = vunpack.c.l.bf16 %v387
      %v397 = vunpack.c.l.bf16 %v388
      %v398 = vunpack.c.l.bf16 %v389
      %v399 = vld [vmem:[%s3] sm:$0xf]
      %v400 = vld [vmem:[%s3 + $0x4] sm:$0xf]
      %v401 = vld [vmem:[%s3 + $0x8] sm:$0xf]
      %v402 = vld [vmem:[%s3 + $0xc] sm:$0xf]
      %v403 = vld [vmem:[%s3 + $0x10] sm:$0xf]
      %v404 = vld [vmem:[%s3 + $0x14] sm:$0xf]
      %v405 = vld [vmem:[%s3 + $0x18] sm:$0xf]
      %v406 = vld [vmem:[%s3 + $0x1c] sm:$0xf]
      %v407 = vld [vmem:[%s3 + $0x20] sm:$0xf]
      %v408 = vunpack.c.l.bf16 %v399
      %v409 = vunpack.c.l.bf16 %v400
      %v410 = vunpack.c.l.bf16 %v401
      %v411 = vunpack.c.l.bf16 %v402
      %v412 = vunpack.c.l.bf16 %v403
      %v413 = vunpack.c.l.bf16 %v404
      %v414 = vunpack.c.l.bf16 %v405
      %v415 = vunpack.c.l.bf16 %v406
      %v416 = vunpack.c.l.bf16 %v407
      %vm417 = vcmask 31744
      %v419 = vsel %vm417, %v348, 0
      %v422 = vsel %vm417, %v349, 0
      %v425 = vsel %vm417, %v350, 0
      %v428 = vsel %vm417, %v351, 0
      %v431 = vsel %vm417, %v352, 0
      %v434 = vsel %vm417, %v353, 0
      %v437 = vsel %vm417, %v354, 0
      %v440 = vsel %vm417, %v355, 0
      %vm442 = vcmask 1043456
      %v444 = vsel %vm442, %v391, 0
      %446 = vmatpush.msra.mxu0 0.0
      %447 = vmatpush.msra.mxu0 0.0
      %448 = vmatpush.msra.mxu0 0.0
      %449 = vmatpush.msra.mxu0 0.0
      %450 = vmatpush.msra.mxu0 0.0
      %451 = vmatpush.msra.mxu0 0.0
      %452 = vmatpush.msra.mxu0 0.0
      %453 = vmatpush.msra.mxu0 0.0
      %454 = vmatpush.msra.mxu0 0.0
      %455 = vmatpush.msra.mxu0 0.0
      %456 = vmatpush.msra.mxu0 0.0
      %457 = vmatpush.msra.mxu0 0.0
      %458 = vmatpush.msra.mxu0 0.0
      %459 = vmatpush.msra.mxu0 0.0
      %460 = vmatpush.msra.mxu0 0.0
      %461 = vmatpush.msra.mxu0 %v444
      %462 = vmatmul.f32.gmra.mxu0 %v419
      %v463 = vpop.f32.mrf.mxu0
      %v464 = vadd.f32 0.0, %v463
      %465 = vmatmul.f32.gmra.mxu0 %v422
      %v466 = vpop.f32.mrf.mxu0
      %v467 = vadd.f32 0.0, %v466
      %468 = vmatmul.f32.gmra.mxu0 %v425
      %v469 = vpop.f32.mrf.mxu0
      %v470 = vadd.f32 0.0, %v469
      %471 = vmatmul.f32.gmra.mxu0 %v428
      %v472 = vpop.f32.mrf.mxu0
      %v473 = vadd.f32 0.0, %v472
      %474 = vmatmul.f32.gmra.mxu0 %v431
      %v475 = vpop.f32.mrf.mxu0
      %v476 = vadd.f32 0.0, %v475
      %477 = vmatmul.f32.gmra.mxu0 %v434
      %v478 = vpop.f32.mrf.mxu0
      %v479 = vadd.f32 0.0, %v478
      %480 = vmatmul.f32.gmra.mxu0 %v437
      %v481 = vpop.f32.mrf.mxu0
      %v482 = vadd.f32 0.0, %v481
      %483 = vmatmul.f32.gmra.mxu0 %v440
      %v484 = vpop.f32.mrf.mxu0
      %v485 = vadd.f32 0.0, %v484
      %486 = vdwg.mxu0
      %v488 = vsel %vm417, %v330, 0
      %v491 = vsel %vm417, %v332, 0
      %v494 = vsel %vm417, %v334, 0
      %v497 = vsel %vm417, %v336, 0
      %v500 = vsel %vm417, %v338, 0
      %v503 = vsel %vm417, %v340, 0
      %v506 = vsel %vm417, %v342, 0
      %v509 = vsel %vm417, %v344, 0
      %v512 = vsel %vm442, %v390, 0
      %514 = vmatpush.msra.mxu0 0.0
      %515 = vmatpush.msra.mxu0 0.0
      %516 = vmatpush.msra.mxu0 0.0
      %517 = vmatpush.msra.mxu0 0.0
      %518 = vmatpush.msra.mxu0 0.0
      %519 = vmatpush.msra.mxu0 0.0
      %520 = vmatpush.msra.mxu0 0.0
      %521 = vmatpush.msra.mxu0 0.0
      %522 = vmatpush.msra.mxu0 0.0
      %523 = vmatpush.msra.mxu0 0.0
      %524 = vmatpush.msra.mxu0 0.0
      %525 = vmatpush.msra.mxu0 0.0
      %526 = vmatpush.msra.mxu0 0.0
      %527 = vmatpush.msra.mxu0 0.0
      %528 = vmatpush.msra.mxu0 0.0
      %529 = vmatpush.msra.mxu0 %v512
      %530 = vmatmul.f32.gmra.mxu0 %v488
      %v531 = vpop.f32.mrf.mxu0
      %v532 = vadd.f32 %v464, %v531
      %533 = vmatmul.f32.gmra.mxu0 %v491
      %v534 = vpop.f32.mrf.mxu0
      %v535 = vadd.f32 %v467, %v534
      %536 = vmatmul.f32.gmra.mxu0 %v494
      %v537 = vpop.f32.mrf.mxu0
      %v538 = vadd.f32 %v470, %v537
      %539 = vmatmul.f32.gmra.mxu0 %v497
      %v540 = vpop.f32.mrf.mxu0
      %v541 = vadd.f32 %v473, %v540
      %542 = vmatmul.f32.gmra.mxu0 %v500
      %v543 = vpop.f32.mrf.mxu0
      %v544 = vadd.f32 %v476, %v543
      %545 = vmatmul.f32.gmra.mxu0 %v503
      %v546 = vpop.f32.mrf.mxu0
      %v547 = vadd.f32 %v479, %v546
      %548 = vmatmul.f32.gmra.mxu0 %v506
      %v549 = vpop.f32.mrf.mxu0
      %v550 = vadd.f32 %v482, %v549
      %551 = vmatmul.f32.gmra.mxu0 %v509
      %v552 = vpop.f32.mrf.mxu0
      %v553 = vadd.f32 %v485, %v552
      %554 = vdwg.mxu0
      %vm563 = vcmask 1046528
      %v564 = vrot.slane %v330, 1
      %v565 = vrot.slane %v331, 1
      %v566 = vsel %vm563, %v564, %v565
      %v567 = vrot.slane %v332, 1
      %v568 = vrot.slane %v333, 1
      %v569 = vsel %vm563, %v567, %v568
      %v570 = vrot.slane %v334, 1
      %v571 = vrot.slane %v335, 1
      %v572 = vsel %vm563, %v570, %v571
      %v573 = vrot.slane %v336, 1
      %v574 = vrot.slane %v337, 1
      %v575 = vsel %vm563, %v573, %v574
      %v576 = vrot.slane %v338, 1
      %v577 = vrot.slane %v339, 1
      %v578 = vsel %vm563, %v576, %v577
      %v579 = vrot.slane %v340, 1
      %v580 = vrot.slane %v341, 1
      %v581 = vsel %vm563, %v579, %v580
      %v582 = vrot.slane %v342, 1
      %v583 = vrot.slane %v343, 1
      %v584 = vsel %vm563, %v582, %v583
      %v585 = vrot.slane %v344, 1
      %v586 = vrot.slane %v345, 1
      %v587 = vsel %vm563, %v585, %v586
      %v588 = vsel %vm417, %v566, 0
      %v590 = vsel %vm417, %v569, 0
      %v592 = vsel %vm417, %v572, 0
      %v594 = vsel %vm417, %v575, 0
      %v596 = vsel %vm417, %v578, 0
      %v598 = vsel %vm417, %v581, 0
      %v600 = vsel %vm417, %v584, 0
      %v602 = vsel %vm417, %v587, 0
      %v605 = vsel %vm442, %v392, 0
      %607 = vmatpush.msra.mxu0 0.0
      %608 = vmatpush.msra.mxu0 0.0
      %609 = vmatpush.msra.mxu0 0.0
      %610 = vmatpush.msra.mxu0 0.0
      %611 = vmatpush.msra.mxu0 0.0
      %612 = vmatpush.msra.mxu0 0.0
      %613 = vmatpush.msra.mxu0 0.0
      %614 = vmatpush.msra.mxu0 0.0
      %615 = vmatpush.msra.mxu0 0.0
      %616 = vmatpush.msra.mxu0 0.0
      %617 = vmatpush.msra.mxu0 0.0
      %618 = vmatpush.msra.mxu0 0.0
      %619 = vmatpush.msra.mxu0 0.0
      %620 = vmatpush.msra.mxu0 0.0
      %621 = vmatpush.msra.mxu0 0.0
      %622 = vmatpush.msra.mxu0 %v605
      %623 = vmatmul.f32.gmra.mxu0 %v588
      %v624 = vpop.f32.mrf.mxu0
      %v625 = vadd.f32 0.0, %v624
      %626 = vmatmul.f32.gmra.mxu0 %v590
      %v627 = vpop.f32.mrf.mxu0
      %v628 = vadd.f32 0.0, %v627
      %629 = vmatmul.f32.gmra.mxu0 %v592
      %v630 = vpop.f32.mrf.mxu0
      %v631 = vadd.f32 0.0, %v630
      %632 = vmatmul.f32.gmra.mxu0 %v594
      %v633 = vpop.f32.mrf.mxu0
      %v634 = vadd.f32 0.0, %v633
      %635 = vmatmul.f32.gmra.mxu0 %v596
      %v636 = vpop.f32.mrf.mxu0
      %v637 = vadd.f32 0.0, %v636
      %638 = vmatmul.f32.gmra.mxu0 %v598
      %v639 = vpop.f32.mrf.mxu0
      %v640 = vadd.f32 0.0, %v639
      %641 = vmatmul.f32.gmra.mxu0 %v600
      %v642 = vpop.f32.mrf.mxu0
      %v643 = vadd.f32 0.0, %v642
      %644 = vmatmul.f32.gmra.mxu0 %v602
      %v645 = vpop.f32.mrf.mxu0
      %v646 = vadd.f32 0.0, %v645
      %647 = vdwg.mxu0
      %v648 = vadd.f32 %v532, %v625
      %v649 = vadd.f32 %v535, %v628
      %v650 = vadd.f32 %v538, %v631
      %v651 = vadd.f32 %v541, %v634
      %v652 = vadd.f32 %v544, %v637
      %v653 = vadd.f32 %v547, %v640
      %v654 = vadd.f32 %v550, %v643
      %v655 = vadd.f32 %v553, %v646
      %v657 = vsel %vm417, %v357, 0
      %v660 = vsel %vm417, %v359, 0
      %v663 = vsel %vm417, %v361, 0
      %v666 = vsel %vm417, %v363, 0
      %v669 = vsel %vm417, %v365, 0
      %v672 = vsel %vm417, %v367, 0
      %v675 = vsel %vm417, %v369, 0
      %v678 = vsel %vm417, %v371, 0
      %v681 = vsel %vm442, %v393, 0
      %683 = vmatpush.msra.mxu0 0.0
      %684 = vmatpush.msra.mxu0 0.0
      %685 = vmatpush.msra.mxu0 0.0
      %686 = vmatpush.msra.mxu0 0.0
      %687 = vmatpush.msra.mxu0 0.0
      %688 = vmatpush.msra.mxu0 0.0
      %689 = vmatpush.msra.mxu0 0.0
      %690 = vmatpush.msra.mxu0 0.0
      %691 = vmatpush.msra.mxu0 0.0
      %692 = vmatpush.msra.mxu0 0.0
      %693 = vmatpush.msra.mxu0 0.0
      %694 = vmatpush.msra.mxu0 0.0
      %695 = vmatpush.msra.mxu0 0.0
      %696 = vmatpush.msra.mxu0 0.0
      %697 = vmatpush.msra.mxu0 0.0
      %698 = vmatpush.msra.mxu0 %v681
      %699 = vmatmul.f32.gmra.mxu0 %v657
      %v700 = vpop.f32.mrf.mxu0
      %v701 = vadd.f32 0.0, %v700
      %702 = vmatmul.f32.gmra.mxu0 %v660
      %v703 = vpop.f32.mrf.mxu0
      %v704 = vadd.f32 0.0, %v703
      %705 = vmatmul.f32.gmra.mxu0 %v663
      %v706 = vpop.f32.mrf.mxu0
      %v707 = vadd.f32 0.0, %v706
      %708 = vmatmul.f32.gmra.mxu0 %v666
      %v709 = vpop.f32.mrf.mxu0
      %v710 = vadd.f32 0.0, %v709
      %711 = vmatmul.f32.gmra.mxu0 %v669
      %v712 = vpop.f32.mrf.mxu0
      %v713 = vadd.f32 0.0, %v712
      %714 = vmatmul.f32.gmra.mxu0 %v672
      %v715 = vpop.f32.mrf.mxu0
      %v716 = vadd.f32 0.0, %v715
      %717 = vmatmul.f32.gmra.mxu0 %v675
      %v718 = vpop.f32.mrf.mxu0
      %v719 = vadd.f32 0.0, %v718
      %720 = vmatmul.f32.gmra.mxu0 %v678
      %v721 = vpop.f32.mrf.mxu0
      %v722 = vadd.f32 0.0, %v721
      %723 = vdwg.mxu0
      %v724 = vadd.f32 %v648, %v701
      %v725 = vadd.f32 %v649, %v704
      %v726 = vadd.f32 %v650, %v707
      %v727 = vadd.f32 %v651, %v710
      %v728 = vadd.f32 %v652, %v713
      %v729 = vadd.f32 %v653, %v716
      %v730 = vadd.f32 %v654, %v719
      %v731 = vadd.f32 %v655, %v722
      %v733 = vsel %vm417, %v373, 0
      %v736 = vsel %vm417, %v374, 0
      %v739 = vsel %vm417, %v375, 0
      %v742 = vsel %vm417, %v376, 0
      %v745 = vsel %vm417, %v377, 0
      %v748 = vsel %vm417, %v378, 0
      %v751 = vsel %vm417, %v379, 0
      %v754 = vsel %vm417, %v380, 0
      %v757 = vsel %vm442, %v394, 0
      %759 = vmatpush.msra.mxu0 0.0
      %760 = vmatpush.msra.mxu0 0.0
      %761 = vmatpush.msra.mxu0 0.0
      %762 = vmatpush.msra.mxu0 0.0
      %763 = vmatpush.msra.mxu0 0.0
      %764 = vmatpush.msra.mxu0 0.0
      %765 = vmatpush.msra.mxu0 0.0
      %766 = vmatpush.msra.mxu0 0.0
      %767 = vmatpush.msra.mxu0 0.0
      %768 = vmatpush.msra.mxu0 0.0
      %769 = vmatpush.msra.mxu0 0.0
      %770 = vmatpush.msra.mxu0 0.0
      %771 = vmatpush.msra.mxu0 0.0
      %772 = vmatpush.msra.mxu0 0.0
      %773 = vmatpush.msra.mxu0 0.0
      %774 = vmatpush.msra.mxu0 %v757
      %775 = vmatmul.f32.gmra.mxu0 %v733
      %v776 = vpop.f32.mrf.mxu0
      %v777 = vadd.f32 0.0, %v776
      %778 = vmatmul.f32.gmra.mxu0 %v736
      %v779 = vpop.f32.mrf.mxu0
      %v780 = vadd.f32 0.0, %v779
      %781 = vmatmul.f32.gmra.mxu0 %v739
      %v782 = vpop.f32.mrf.mxu0
      %v783 = vadd.f32 0.0, %v782
      %784 = vmatmul.f32.gmra.mxu0 %v742
      %v785 = vpop.f32.mrf.mxu0
      %v786 = vadd.f32 0.0, %v785
      %787 = vmatmul.f32.gmra.mxu0 %v745
      %v788 = vpop.f32.mrf.mxu0
      %v789 = vadd.f32 0.0, %v788
      %790 = vmatmul.f32.gmra.mxu0 %v748
      %v791 = vpop.f32.mrf.mxu0
      %v792 = vadd.f32 0.0, %v791
      %793 = vmatmul.f32.gmra.mxu0 %v751
      %v794 = vpop.f32.mrf.mxu0
      %v795 = vadd.f32 0.0, %v794
      %796 = vmatmul.f32.gmra.mxu0 %v754
      %v797 = vpop.f32.mrf.mxu0
      %v798 = vadd.f32 0.0, %v797
      %799 = vdwg.mxu0
      %v800 = vadd.f32 %v724, %v777
      %v801 = vadd.f32 %v725, %v780
      %v802 = vadd.f32 %v726, %v783
      %v803 = vadd.f32 %v727, %v786
      %v804 = vadd.f32 %v728, %v789
      %v805 = vadd.f32 %v729, %v792
      %v806 = vadd.f32 %v730, %v795
      %v807 = vadd.f32 %v731, %v798
      %v816 = vrot.slane %v357, 1
      %v817 = vrot.slane %v358, 1
      %v818 = vsel %vm563, %v816, %v817
      %v819 = vrot.slane %v359, 1
      %v820 = vrot.slane %v360, 1
      %v821 = vsel %vm563, %v819, %v820
      %v822 = vrot.slane %v361, 1
      %v823 = vrot.slane %v362, 1
      %v824 = vsel %vm563, %v822, %v823
      %v825 = vrot.slane %v363, 1
      %v826 = vrot.slane %v364, 1
      %v827 = vsel %vm563, %v825, %v826
      %v828 = vrot.slane %v365, 1
      %v829 = vrot.slane %v366, 1
      %v830 = vsel %vm563, %v828, %v829
      %v831 = vrot.slane %v367, 1
      %v832 = vrot.slane %v368, 1
      %v833 = vsel %vm563, %v831, %v832
      %v834 = vrot.slane %v369, 1
      %v835 = vrot.slane %v370, 1
      %v836 = vsel %vm563, %v834, %v835
      %v837 = vrot.slane %v371, 1
      %v838 = vrot.slane %v372, 1
      %v839 = vsel %vm563, %v837, %v838
      %v840 = vsel %vm417, %v818, 0
      %v842 = vsel %vm417, %v821, 0
      %v844 = vsel %vm417, %v824, 0
      %v846 = vsel %vm417, %v827, 0
      %v848 = vsel %vm417, %v830, 0
      %v850 = vsel %vm417, %v833, 0
      %v852 = vsel %vm417, %v836, 0
      %v854 = vsel %vm417, %v839, 0
      %v857 = vsel %vm442, %v395, 0
      %859 = vmatpush.msra.mxu0 0.0
      %860 = vmatpush.msra.mxu0 0.0
      %861 = vmatpush.msra.mxu0 0.0
      %862 = vmatpush.msra.mxu0 0.0
      %863 = vmatpush.msra.mxu0 0.0
      %864 = vmatpush.msra.mxu0 0.0
      %865 = vmatpush.msra.mxu0 0.0
      %866 = vmatpush.msra.mxu0 0.0
      %867 = vmatpush.msra.mxu0 0.0
      %868 = vmatpush.msra.mxu0 0.0
      %869 = vmatpush.msra.mxu0 0.0
      %870 = vmatpush.msra.mxu0 0.0
      %871 = vmatpush.msra.mxu0 0.0
      %872 = vmatpush.msra.mxu0 0.0
      %873 = vmatpush.msra.mxu0 0.0
      %874 = vmatpush.msra.mxu0 %v857
      %875 = vmatmul.f32.gmra.mxu0 %v840
      %v876 = vpop.f32.mrf.mxu0
      %v877 = vadd.f32 0.0, %v876
      %878 = vmatmul.f32.gmra.mxu0 %v842
      %v879 = vpop.f32.mrf.mxu0
      %v880 = vadd.f32 0.0, %v879
      %881 = vmatmul.f32.gmra.mxu0 %v844
      %v882 = vpop.f32.mrf.mxu0
      %v883 = vadd.f32 0.0, %v882
      %884 = vmatmul.f32.gmra.mxu0 %v846
      %v885 = vpop.f32.mrf.mxu0
      %v886 = vadd.f32 0.0, %v885
      %887 = vmatmul.f32.gmra.mxu0 %v848
      %v888 = vpop.f32.mrf.mxu0
      %v889 = vadd.f32 0.0, %v888
      %890 = vmatmul.f32.gmra.mxu0 %v850
      %v891 = vpop.f32.mrf.mxu0
      %v892 = vadd.f32 0.0, %v891
      %893 = vmatmul.f32.gmra.mxu0 %v852
      %v894 = vpop.f32.mrf.mxu0
      %v895 = vadd.f32 0.0, %v894
      %896 = vmatmul.f32.gmra.mxu0 %v854
      %v897 = vpop.f32.mrf.mxu0
      %v898 = vadd.f32 0.0, %v897
      %899 = vdwg.mxu0
      %v900 = vadd.f32 %v800, %v877
      %v901 = vadd.f32 %v801, %v880
      %v902 = vadd.f32 %v802, %v883
      %v903 = vadd.f32 %v803, %v886
      %v904 = vadd.f32 %v804, %v889
      %v905 = vadd.f32 %v805, %v892
      %v906 = vadd.f32 %v806, %v895
      %v907 = vadd.f32 %v807, %v898
      %v909 = vsel %vm417, %v346, 0
      %v912 = vsel %vm442, %v396, 0
      %914 = vmatpush.msra.mxu0 0.0
      %915 = vmatpush.msra.mxu0 0.0
      %916 = vmatpush.msra.mxu0 0.0
      %917 = vmatpush.msra.mxu0 0.0
      %918 = vmatpush.msra.mxu0 0.0
      %919 = vmatpush.msra.mxu0 0.0
      %920 = vmatpush.msra.mxu0 0.0
      %921 = vmatpush.msra.mxu0 0.0
      %922 = vmatpush.msra.mxu0 0.0
      %923 = vmatpush.msra.mxu0 0.0
      %924 = vmatpush.msra.mxu0 0.0
      %925 = vmatpush.msra.mxu0 0.0
      %926 = vmatpush.msra.mxu0 0.0
      %927 = vmatpush.msra.mxu0 0.0
      %928 = vmatpush.msra.mxu0 0.0
      %929 = vmatpush.msra.mxu0 %v912
      %930 = vmatmul.f32.gmra.mxu0 %v491
      %v931 = vpop.f32.mrf.mxu0
      %v932 = vadd.f32 0.0, %v931
      %933 = vmatmul.f32.gmra.mxu0 %v494
      %v934 = vpop.f32.mrf.mxu0
      %v935 = vadd.f32 0.0, %v934
      %936 = vmatmul.f32.gmra.mxu0 %v497
      %v937 = vpop.f32.mrf.mxu0
      %v938 = vadd.f32 0.0, %v937
      %939 = vmatmul.f32.gmra.mxu0 %v500
      %v940 = vpop.f32.mrf.mxu0
      %v941 = vadd.f32 0.0, %v940
      %942 = vmatmul.f32.gmra.mxu0 %v503
      %v943 = vpop.f32.mrf.mxu0
      %v944 = vadd.f32 0.0, %v943
      %945 = vmatmul.f32.gmra.mxu0 %v506
      %v946 = vpop.f32.mrf.mxu0
      %v947 = vadd.f32 0.0, %v946
      %948 = vmatmul.f32.gmra.mxu0 %v509
      %v949 = vpop.f32.mrf.mxu0
      %v950 = vadd.f32 0.0, %v949
      %951 = vmatmul.f32.gmra.mxu0 %v909
      %v952 = vpop.f32.mrf.mxu0
      %v953 = vadd.f32 0.0, %v952
      %954 = vdwg.mxu0
      %v955 = vadd.f32 %v900, %v932
      %v956 = vadd.f32 %v901, %v935
      %v957 = vadd.f32 %v902, %v938
      %v958 = vadd.f32 %v903, %v941
      %v959 = vadd.f32 %v904, %v944
      %v960 = vadd.f32 %v905, %v947
      %v961 = vadd.f32 %v906, %v950
      %v962 = vadd.f32 %v907, %v953
      %v964 = vsel %vm417, %v356, 0
      %v967 = vsel %vm442, %v397, 0
      %969 = vmatpush.msra.mxu0 0.0
      %970 = vmatpush.msra.mxu0 0.0
      %971 = vmatpush.msra.mxu0 0.0
      %972 = vmatpush.msra.mxu0 0.0
      %973 = vmatpush.msra.mxu0 0.0
      %974 = vmatpush.msra.mxu0 0.0
      %975 = vmatpush.msra.mxu0 0.0
      %976 = vmatpush.msra.mxu0 0.0
      %977 = vmatpush.msra.mxu0 0.0
      %978 = vmatpush.msra.mxu0 0.0
      %979 = vmatpush.msra.mxu0 0.0
      %980 = vmatpush.msra.mxu0 0.0
      %981 = vmatpush.msra.mxu0 0.0
      %982 = vmatpush.msra.mxu0 0.0
      %983 = vmatpush.msra.mxu0 0.0
      %984 = vmatpush.msra.mxu0 %v967
      %985 = vmatmul.f32.gmra.mxu0 %v422
      %v986 = vpop.f32.mrf.mxu0
      %v987 = vadd.f32 0.0, %v986
      %988 = vmatmul.f32.gmra.mxu0 %v425
      %v989 = vpop.f32.mrf.mxu0
      %v990 = vadd.f32 0.0, %v989
      %991 = vmatmul.f32.gmra.mxu0 %v428
      %v992 = vpop.f32.mrf.mxu0
      %v993 = vadd.f32 0.0, %v992
      %994 = vmatmul.f32.gmra.mxu0 %v431
      %v995 = vpop.f32.mrf.mxu0
      %v996 = vadd.f32 0.0, %v995
      %997 = vmatmul.f32.gmra.mxu0 %v434
      %v998 = vpop.f32.mrf.mxu0
      %v999 = vadd.f32 0.0, %v998
      %1000 = vmatmul.f32.gmra.mxu0 %v437
      %v1001 = vpop.f32.mrf.mxu0
      %v1002 = vadd.f32 0.0, %v1001
      %1003 = vmatmul.f32.gmra.mxu0 %v440
      %v1004 = vpop.f32.mrf.mxu0
      %v1005 = vadd.f32 0.0, %v1004
      %1006 = vmatmul.f32.gmra.mxu0 %v964
      %v1007 = vpop.f32.mrf.mxu0
      %v1008 = vadd.f32 0.0, %v1007
      %1009 = vdwg.mxu0
      %v1010 = vadd.f32 %v955, %v987
      %v1011 = vadd.f32 %v956, %v990
      %v1012 = vadd.f32 %v957, %v993
      %v1013 = vadd.f32 %v958, %v996
      %v1014 = vadd.f32 %v959, %v999
      %v1015 = vadd.f32 %v960, %v1002
      %v1016 = vadd.f32 %v961, %v1005
      %v1017 = vadd.f32 %v962, %v1008
      %v1019 = vrot.slane %v346, 1
      %v1020 = vrot.slane %v347, 1
      %v1021 = vsel %vm563, %v1019, %v1020
      %v1022 = vsel %vm417, %v1021, 0
      %v1025 = vsel %vm442, %v398, 0
      %1027 = vmatpush.msra.mxu0 0.0
      %1028 = vmatpush.msra.mxu0 0.0
      %1029 = vmatpush.msra.mxu0 0.0
      %1030 = vmatpush.msra.mxu0 0.0
      %1031 = vmatpush.msra.mxu0 0.0
      %1032 = vmatpush.msra.mxu0 0.0
      %1033 = vmatpush.msra.mxu0 0.0
      %1034 = vmatpush.msra.mxu0 0.0
      %1035 = vmatpush.msra.mxu0 0.0
      %1036 = vmatpush.msra.mxu0 0.0
      %1037 = vmatpush.msra.mxu0 0.0
      %1038 = vmatpush.msra.mxu0 0.0
      %1039 = vmatpush.msra.mxu0 0.0
      %1040 = vmatpush.msra.mxu0 0.0
      %1041 = vmatpush.msra.mxu0 0.0
      %1042 = vmatpush.msra.mxu0 %v1025
      %1043 = vmatmul.f32.gmra.mxu0 %v590
      %v1044 = vpop.f32.mrf.mxu0
      %v1045 = vadd.f32 0.0, %v1044
      %1046 = vmatmul.f32.gmra.mxu0 %v592
      %v1047 = vpop.f32.mrf.mxu0
      %v1048 = vadd.f32 0.0, %v1047
      %1049 = vmatmul.f32.gmra.mxu0 %v594
      %v1050 = vpop.f32.mrf.mxu0
      %v1051 = vadd.f32 0.0, %v1050
      %1052 = vmatmul.f32.gmra.mxu0 %v596
      %v1053 = vpop.f32.mrf.mxu0
      %v1054 = vadd.f32 0.0, %v1053
      %1055 = vmatmul.f32.gmra.mxu0 %v598
      %v1056 = vpop.f32.mrf.mxu0
      %v1057 = vadd.f32 0.0, %v1056
      %1058 = vmatmul.f32.gmra.mxu0 %v600
      %v1059 = vpop.f32.mrf.mxu0
      %v1060 = vadd.f32 0.0, %v1059
      %1061 = vmatmul.f32.gmra.mxu0 %v602
      %v1062 = vpop.f32.mrf.mxu0
      %v1063 = vadd.f32 0.0, %v1062
      %1064 = vmatmul.f32.gmra.mxu0 %v1022
      %v1065 = vpop.f32.mrf.mxu0
      %v1066 = vadd.f32 0.0, %v1065
      %1067 = vdwg.mxu0
      %v1068 = vadd.f32 %v1010, %v1045
      %v1069 = vadd.f32 %v1011, %v1048
      %v1070 = vadd.f32 %v1012, %v1051
      %v1071 = vadd.f32 %v1013, %v1054
      %v1072 = vadd.f32 %v1014, %v1057
      %v1073 = vadd.f32 %v1015, %v1060
      %v1074 = vadd.f32 %v1016, %v1063
      %v1075 = vadd.f32 %v1017, %v1066
      %v1076 = vld [vmem:[%s2] sm:$0x1]
      %v1078 = vperm.slane %v1076, 0
      %v1080 = vadd.f32 %v1068, %v1078
      %v1081 = vadd.f32 %v1069, %v1078
      %v1082 = vadd.f32 %v1070, %v1078
      %v1083 = vadd.f32 %v1071, %v1078
      %v1084 = vadd.f32 %v1072, %v1078
      %v1085 = vadd.f32 %v1073, %v1078
      %v1086 = vadd.f32 %v1074, %v1078
      %v1087 = vadd.f32 %v1075, %v1078
      %v1088 = vmax.f32 %v1080, 0.0
      %v1089 = vmax.f32 %v1081, 0.0
      %v1090 = vmax.f32 %v1082, 0.0
      %v1091 = vmax.f32 %v1083, 0.0
      %v1092 = vmax.f32 %v1084, 0.0
      %v1093 = vmax.f32 %v1085, 0.0
      %v1094 = vmax.f32 %v1086, 0.0
      %v1095 = vmax.f32 %v1087, 0.0
      %vm1096 = vcmask 64512
      %1097 = vst.msk [vmem:[#allocation2] sm:$0xff] %vm1096, 0.0
      %1098 = vst.msk [vmem:[#allocation2 + $0x8] sm:$0xff] %vm1096, 0.0
      %1099 = vst.msk [vmem:[#allocation2 + $0x10] sm:$0xff] %vm1096, 0.0
      %1100 = vst.msk [vmem:[#allocation2 + $0x18] sm:$0xff] %vm1096, 0.0
      %1101 = vst.msk [vmem:[#allocation2 + $0x20] sm:$0xff] %vm1096, 0.0
      %1102 = vst.msk [vmem:[#allocation2 + $0x28] sm:$0xff] %vm1096, 0.0
      %1103 = vst.msk [vmem:[#allocation2 + $0x30] sm:$0xff] %vm1096, 0.0
      %1104 = vst.msk [vmem:[#allocation2 + $0x38] sm:$0xff] %vm1096, 0.0
      %1105 = vst.msk [vmem:[#allocation2 + $0x40] sm:$0xff] %vm1096, 0.0
      %1106 = vst.msk [vmem:[#allocation2 + $0x48] sm:$0xff] %vm1096, 0.0
      %1107 = vst.msk [vmem:[#allocation2 + $0x50] sm:$0xff] %vm1096, 0.0
      %1108 = vst.msk [vmem:[#allocation2 + $0x58] sm:$0xff] %vm1096, 0.0
      %1109 = vst.msk [vmem:[#allocation2 + $0x60] sm:$0xff] %vm1096, 0.0
      %1110 = vst.msk [vmem:[#allocation2 + $0x68] sm:$0xff] %vm1096, 0.0
      %1111 = vst.msk [vmem:[#allocation2 + $0x70] sm:$0xff] %vm1096, 0.0
      %1112 = vst.msk [vmem:[#allocation2 + $0x78] sm:$0xff] %vm1096, 0.0
      %1113 = vst.msk [vmem:[#allocation2 + $0x80] sm:$0xff] %vm1096, 0.0
      %1114 = vst.msk [vmem:[#allocation2 + $0x88] sm:$0xff] %vm1096, 0.0
      %1115 = vst.msk [vmem:[#allocation2 + $0x90] sm:$0xff] %vm1096, 0.0
      %1116 = vst.msk [vmem:[#allocation2 + $0x98] sm:$0xff] %vm1096, 0.0
      %1117 = vst.msk [vmem:[#allocation2 + $0xa0] sm:$0xff] %vm1096, 0.0
      %1118 = vst.msk [vmem:[#allocation2 + $0xa8] sm:$0xff] %vm1096, 0.0
      %1119 = vst.msk [vmem:[#allocation2 + $0xb0] sm:$0xff] %vm1096, 0.0
      %1120 = vst.msk [vmem:[#allocation2 + $0xb8] sm:$0xff] %vm1096, 0.0
      %1121 = vst.msk [vmem:[#allocation2 + $0xc0] sm:$0xff] %vm1096, 0.0
      %1122 = vst.msk [vmem:[#allocation2 + $0xc8] sm:$0xff] %vm1096, 0.0
      %1123 = vst.msk [vmem:[#allocation2 + $0xd0] sm:$0xff] %vm1096, 0.0
      %1124 = vst.msk [vmem:[#allocation2 + $0xd8] sm:$0xff] %vm1096, 0.0
      %1125 = vst.msk [vmem:[#allocation2 + $0xe0] sm:$0xff] %vm1096, 0.0
      %1126 = vst.msk [vmem:[#allocation2 + $0xe8] sm:$0xff] %vm1096, 0.0
      %s1127 = scalar_lea.vmem [#allocation2], 24
      %1128 = vst.msk [vmem:[%s1127 + $0x8] sm:$0xff] %vm1096, %v1088
      %1129 = vst.msk [vmem:[%s1127 + $0x20] sm:$0xff] %vm1096, %v1089
      %1130 = vst.msk [vmem:[%s1127 + $0x38] sm:$0xff] %vm1096, %v1090
      %1131 = vst.msk [vmem:[%s1127 + $0x50] sm:$0xff] %vm1096, %v1091
      %1132 = vst.msk [vmem:[%s1127 + $0x68] sm:$0xff] %vm1096, %v1092
      %1133 = vst.msk [vmem:[%s1127 + $0x80] sm:$0xff] %vm1096, %v1093
      %1134 = vst.msk [vmem:[%s1127 + $0x98] sm:$0xff] %vm1096, %v1094
      %1135 = vst.msk [vmem:[%s1127 + $0xb0] sm:$0xff] %vm1096, %v1095
      %v1136 = vld [vmem:[#allocation2] sm:$0xff]
      %v1137 = vld [vmem:[#allocation2 + $0x8] sm:$0xff]
      %v1138 = vld [vmem:[#allocation2 + $0x10] sm:$0xff]
      %v1139 = vld [vmem:[#allocation2 + $0x18] sm:$0xff]
      %v1140 = vld [vmem:[#allocation2 + $0x20] sm:$0xff]
      %v1141 = vld [vmem:[#allocation2 + $0x28] sm:$0xff]
      %v1142 = vld [vmem:[#allocation2 + $0x30] sm:$0xff]
      %v1143 = vld [vmem:[#allocation2 + $0x38] sm:$0xff]
      %v1144 = vld [vmem:[#allocation2 + $0x40] sm:$0xff]
      %v1145 = vld [vmem:[#allocation2 + $0x48] sm:$0xff]
      %v1146 = vld [vmem:[#allocation2 + $0x50] sm:$0xff]
      %v1147 = vld [vmem:[#allocation2 + $0x58] sm:$0xff]
      %v1148 = vld [vmem:[#allocation2 + $0x60] sm:$0xff]
      %v1149 = vld [vmem:[#allocation2 + $0x68] sm:$0xff]
      %v1150 = vld [vmem:[#allocation2 + $0x70] sm:$0xff]
      %v1151 = vld [vmem:[#allocation2 + $0x78] sm:$0xff]
      %v1152 = vld [vmem:[#allocation2 + $0x80] sm:$0xff]
      %v1153 = vld [vmem:[#allocation2 + $0x88] sm:$0xff]
      %v1154 = vld [vmem:[#allocation2 + $0x90] sm:$0xff]
      %v1155 = vld [vmem:[#allocation2 + $0x98] sm:$0xff]
      %v1156 = vld [vmem:[#allocation2 + $0xa0] sm:$0xff]
      %v1157 = vld [vmem:[#allocation2 + $0xa8] sm:$0xff]
      %v1158 = vld [vmem:[#allocation2 + $0xb0] sm:$0xff]
      %v1159 = vld [vmem:[#allocation2 + $0xb8] sm:$0xff]
      %v1160 = vld [vmem:[#allocation2 + $0xc0] sm:$0xff]
      %v1161 = vld [vmem:[#allocation2 + $0xc8] sm:$0xff]
      %v1162 = vld [vmem:[#allocation2 + $0xd0] sm:$0xff]
      %v1163 = vld [vmem:[#allocation2 + $0xd8] sm:$0xff]
      %v1164 = vld [vmem:[#allocation2 + $0xe0] sm:$0xff]
      %v1165 = vld [vmem:[#allocation2 + $0xe8] sm:$0xff]
      %vm1182 = vcmask 1040384
      %v1183 = vrot.slane %v1136, 7
      %v1184 = vrot.slane %v1137, 7
      %v1185 = vsel %vm1182, %v1183, %v1184
      %v1186 = vrot.slane %v1139, 7
      %v1187 = vrot.slane %v1140, 7
      %v1188 = vsel %vm1182, %v1186, %v1187
      %v1189 = vrot.slane %v1142, 7
      %v1190 = vrot.slane %v1143, 7
      %v1191 = vsel %vm1182, %v1189, %v1190
      %v1192 = vrot.slane %v1145, 7
      %v1193 = vrot.slane %v1146, 7
      %v1194 = vsel %vm1182, %v1192, %v1193
      %v1195 = vrot.slane %v1148, 7
      %v1196 = vrot.slane %v1149, 7
      %v1197 = vsel %vm1182, %v1195, %v1196
      %v1198 = vrot.slane %v1151, 7
      %v1199 = vrot.slane %v1152, 7
      %v1200 = vsel %vm1182, %v1198, %v1199
      %v1201 = vrot.slane %v1154, 7
      %v1202 = vrot.slane %v1155, 7
      %v1203 = vsel %vm1182, %v1201, %v1202
      %v1204 = vrot.slane %v1157, 7
      %v1205 = vrot.slane %v1158, 7
      %v1206 = vsel %vm1182, %v1204, %v1205
      %v1207 = vsel %vm1096, %v1137, 0
      %v1209 = vsel %vm1096, %v1140, 0
      %v1211 = vsel %vm1096, %v1143, 0
      %v1213 = vsel %vm1096, %v1146, 0
      %v1215 = vsel %vm1096, %v1149, 0
      %v1217 = vsel %vm1096, %v1152, 0
      %v1219 = vsel %vm1096, %v1155, 0
      %v1221 = vsel %vm1096, %v1158, 0
      %1223 = vmatpush.msra.mxu0 0.0
      %1224 = vmatpush.msra.mxu0 0.0
      %1225 = vmatpush.msra.mxu0 0.0
      %1226 = vmatpush.msra.mxu0 0.0
      %1227 = vmatpush.msra.mxu0 0.0
      %1228 = vmatpush.msra.mxu0 0.0
      %1229 = vmatpush.msra.mxu0 0.0
      %1230 = vmatpush.msra.mxu0 0.0
      %1231 = vmatpush.msra.mxu0 0.0
      %1232 = vmatpush.msra.mxu0 0.0
      %1233 = vmatpush.msra.mxu0 0.0
      %1234 = vmatpush.msra.mxu0 0.0
      %1235 = vmatpush.msra.mxu0 0.0
      %1236 = vmatpush.msra.mxu0 0.0
      %1237 = vmatpush.msra.mxu0 0.0
      %1238 = vmatpush.msra.mxu0 %v409
      %1239 = vmatmul.f32.gmra.mxu0 %v1207
      %v1240 = vpop.f32.mrf.mxu0
      %v1241 = vadd.f32 0.0, %v1240
      %1242 = vmatmul.f32.gmra.mxu0 %v1209
      %v1243 = vpop.f32.mrf.mxu0
      %v1244 = vadd.f32 0.0, %v1243
      %1245 = vmatmul.f32.gmra.mxu0 %v1211
      %v1246 = vpop.f32.mrf.mxu0
      %v1247 = vadd.f32 0.0, %v1246
      %1248 = vmatmul.f32.gmra.mxu0 %v1213
      %v1249 = vpop.f32.mrf.mxu0
      %v1250 = vadd.f32 0.0, %v1249
      %1251 = vmatmul.f32.gmra.mxu0 %v1215
      %v1252 = vpop.f32.mrf.mxu0
      %v1253 = vadd.f32 0.0, %v1252
      %1254 = vmatmul.f32.gmra.mxu0 %v1217
      %v1255 = vpop.f32.mrf.mxu0
      %v1256 = vadd.f32 0.0, %v1255
      %1257 = vmatmul.f32.gmra.mxu0 %v1219
      %v1258 = vpop.f32.mrf.mxu0
      %v1259 = vadd.f32 0.0, %v1258
      %1260 = vmatmul.f32.gmra.mxu0 %v1221
      %v1261 = vpop.f32.mrf.mxu0
      %v1262 = vadd.f32 0.0, %v1261
      %1263 = vdwg.mxu0
      %v1264 = vsel %vm1096, %v1185, 0
      %v1266 = vsel %vm1096, %v1188, 0
      %v1268 = vsel %vm1096, %v1191, 0
      %v1270 = vsel %vm1096, %v1194, 0
      %v1272 = vsel %vm1096, %v1197, 0
      %v1274 = vsel %vm1096, %v1200, 0
      %v1276 = vsel %vm1096, %v1203, 0
      %v1278 = vsel %vm1096, %v1206, 0
      %1280 = vmatpush.msra.mxu0 0.0
      %1281 = vmatpush.msra.mxu0 0.0
      %1282 = vmatpush.msra.mxu0 0.0
      %1283 = vmatpush.msra.mxu0 0.0
      %1284 = vmatpush.msra.mxu0 0.0
      %1285 = vmatpush.msra.mxu0 0.0
      %1286 = vmatpush.msra.mxu0 0.0
      %1287 = vmatpush.msra.mxu0 0.0
      %1288 = vmatpush.msra.mxu0 0.0
      %1289 = vmatpush.msra.mxu0 0.0
      %1290 = vmatpush.msra.mxu0 0.0
      %1291 = vmatpush.msra.mxu0 0.0
      %1292 = vmatpush.msra.mxu0 0.0
      %1293 = vmatpush.msra.mxu0 0.0
      %1294 = vmatpush.msra.mxu0 0.0
      %1295 = vmatpush.msra.mxu0 %v408
      %1296 = vmatmul.f32.gmra.mxu0 %v1264
      %v1297 = vpop.f32.mrf.mxu0
      %v1298 = vadd.f32 %v1241, %v1297
      %1299 = vmatmul.f32.gmra.mxu0 %v1266
      %v1300 = vpop.f32.mrf.mxu0
      %v1301 = vadd.f32 %v1244, %v1300
      %1302 = vmatmul.f32.gmra.mxu0 %v1268
      %v1303 = vpop.f32.mrf.mxu0
      %v1304 = vadd.f32 %v1247, %v1303
      %1305 = vmatmul.f32.gmra.mxu0 %v1270
      %v1306 = vpop.f32.mrf.mxu0
      %v1307 = vadd.f32 %v1250, %v1306
      %1308 = vmatmul.f32.gmra.mxu0 %v1272
      %v1309 = vpop.f32.mrf.mxu0
      %v1310 = vadd.f32 %v1253, %v1309
      %1311 = vmatmul.f32.gmra.mxu0 %v1274
      %v1312 = vpop.f32.mrf.mxu0
      %v1313 = vadd.f32 %v1256, %v1312
      %1314 = vmatmul.f32.gmra.mxu0 %v1276
      %v1315 = vpop.f32.mrf.mxu0
      %v1316 = vadd.f32 %v1259, %v1315
      %1317 = vmatmul.f32.gmra.mxu0 %v1278
      %v1318 = vpop.f32.mrf.mxu0
      %v1319 = vadd.f32 %v1262, %v1318
      %1320 = vdwg.mxu0
      %v1329 = vrot.slane %v1137, 1
      %v1330 = vrot.slane %v1138, 1
      %v1331 = vsel %vm563, %v1329, %v1330
      %v1332 = vrot.slane %v1140, 1
      %v1333 = vrot.slane %v1141, 1
      %v1334 = vsel %vm563, %v1332, %v1333
      %v1335 = vrot.slane %v1143, 1
      %v1336 = vrot.slane %v1144, 1
      %v1337 = vsel %vm563, %v1335, %v1336
      %v1338 = vrot.slane %v1146, 1
      %v1339 = vrot.slane %v1147, 1
      %v1340 = vsel %vm563, %v1338, %v1339
      %v1341 = vrot.slane %v1149, 1
      %v1342 = vrot.slane %v1150, 1
      %v1343 = vsel %vm563, %v1341, %v1342
      %v1344 = vrot.slane %v1152, 1
      %v1345 = vrot.slane %v1153, 1
      %v1346 = vsel %vm563, %v1344, %v1345
      %v1347 = vrot.slane %v1155, 1
      %v1348 = vrot.slane %v1156, 1
      %v1349 = vsel %vm563, %v1347, %v1348
      %v1350 = vrot.slane %v1158, 1
      %v1351 = vrot.slane %v1159, 1
      %v1352 = vsel %vm563, %v1350, %v1351
      %v1353 = vsel %vm1096, %v1331, 0
      %v1355 = vsel %vm1096, %v1334, 0
      %v1357 = vsel %vm1096, %v1337, 0
      %v1359 = vsel %vm1096, %v1340, 0
      %v1361 = vsel %vm1096, %v1343, 0
      %v1363 = vsel %vm1096, %v1346, 0
      %v1365 = vsel %vm1096, %v1349, 0
      %v1367 = vsel %vm1096, %v1352, 0
      %1369 = vmatpush.msra.mxu0 0.0
      %1370 = vmatpush.msra.mxu0 0.0
      %1371 = vmatpush.msra.mxu0 0.0
      %1372 = vmatpush.msra.mxu0 0.0
      %1373 = vmatpush.msra.mxu0 0.0
      %1374 = vmatpush.msra.mxu0 0.0
      %1375 = vmatpush.msra.mxu0 0.0
      %1376 = vmatpush.msra.mxu0 0.0
      %1377 = vmatpush.msra.mxu0 0.0
      %1378 = vmatpush.msra.mxu0 0.0
      %1379 = vmatpush.msra.mxu0 0.0
      %1380 = vmatpush.msra.mxu0 0.0
      %1381 = vmatpush.msra.mxu0 0.0
      %1382 = vmatpush.msra.mxu0 0.0
      %1383 = vmatpush.msra.mxu0 0.0
      %1384 = vmatpush.msra.mxu0 %v410
      %1385 = vmatmul.f32.gmra.mxu0 %v1353
      %v1386 = vpop.f32.mrf.mxu0
      %v1387 = vadd.f32 0.0, %v1386
      %1388 = vmatmul.f32.gmra.mxu0 %v1355
      %v1389 = vpop.f32.mrf.mxu0
      %v1390 = vadd.f32 0.0, %v1389
      %1391 = vmatmul.f32.gmra.mxu0 %v1357
      %v1392 = vpop.f32.mrf.mxu0
      %v1393 = vadd.f32 0.0, %v1392
      %1394 = vmatmul.f32.gmra.mxu0 %v1359
      %v1395 = vpop.f32.mrf.mxu0
      %v1396 = vadd.f32 0.0, %v1395
      %1397 = vmatmul.f32.gmra.mxu0 %v1361
      %v1398 = vpop.f32.mrf.mxu0
      %v1399 = vadd.f32 0.0, %v1398
      %1400 = vmatmul.f32.gmra.mxu0 %v1363
      %v1401 = vpop.f32.mrf.mxu0
      %v1402 = vadd.f32 0.0, %v1401
      %1403 = vmatmul.f32.gmra.mxu0 %v1365
      %v1404 = vpop.f32.mrf.mxu0
      %v1405 = vadd.f32 0.0, %v1404
      %1406 = vmatmul.f32.gmra.mxu0 %v1367
      %v1407 = vpop.f32.mrf.mxu0
      %v1408 = vadd.f32 0.0, %v1407
      %1409 = vdwg.mxu0
      %v1410 = vadd.f32 %v1298, %v1387
      %v1411 = vadd.f32 %v1301, %v1390
      %v1412 = vadd.f32 %v1304, %v1393
      %v1413 = vadd.f32 %v1307, %v1396
      %v1414 = vadd.f32 %v1310, %v1399
      %v1415 = vadd.f32 %v1313, %v1402
      %v1416 = vadd.f32 %v1316, %v1405
      %v1417 = vadd.f32 %v1319, %v1408
      %v1420 = vrot.slane %v1160, 7
      %v1421 = vrot.slane %v1161, 7
      %v1422 = vsel %vm1182, %v1420, %v1421
      %v1423 = vsel %vm1096, %v1422, 0
      %1425 = vmatpush.msra.mxu0 0.0
      %1426 = vmatpush.msra.mxu0 0.0
      %1427 = vmatpush.msra.mxu0 0.0
      %1428 = vmatpush.msra.mxu0 0.0
      %1429 = vmatpush.msra.mxu0 0.0
      %1430 = vmatpush.msra.mxu0 0.0
      %1431 = vmatpush.msra.mxu0 0.0
      %1432 = vmatpush.msra.mxu0 0.0
      %1433 = vmatpush.msra.mxu0 0.0
      %1434 = vmatpush.msra.mxu0 0.0
      %1435 = vmatpush.msra.mxu0 0.0
      %1436 = vmatpush.msra.mxu0 0.0
      %1437 = vmatpush.msra.mxu0 0.0
      %1438 = vmatpush.msra.mxu0 0.0
      %1439 = vmatpush.msra.mxu0 0.0
      %1440 = vmatpush.msra.mxu0 %v411
      %1441 = vmatmul.f32.gmra.mxu0 %v1266
      %v1442 = vpop.f32.mrf.mxu0
      %v1443 = vadd.f32 0.0, %v1442
      %1444 = vmatmul.f32.gmra.mxu0 %v1268
      %v1445 = vpop.f32.mrf.mxu0
      %v1446 = vadd.f32 0.0, %v1445
      %1447 = vmatmul.f32.gmra.mxu0 %v1270
      %v1448 = vpop.f32.mrf.mxu0
      %v1449 = vadd.f32 0.0, %v1448
      %1450 = vmatmul.f32.gmra.mxu0 %v1272
      %v1451 = vpop.f32.mrf.mxu0
      %v1452 = vadd.f32 0.0, %v1451
      %1453 = vmatmul.f32.gmra.mxu0 %v1274
      %v1454 = vpop.f32.mrf.mxu0
      %v1455 = vadd.f32 0.0, %v1454
      %1456 = vmatmul.f32.gmra.mxu0 %v1276
      %v1457 = vpop.f32.mrf.mxu0
      %v1458 = vadd.f32 0.0, %v1457
      %1459 = vmatmul.f32.gmra.mxu0 %v1278
      %v1460 = vpop.f32.mrf.mxu0
      %v1461 = vadd.f32 0.0, %v1460
      %1462 = vmatmul.f32.gmra.mxu0 %v1423
      %v1463 = vpop.f32.mrf.mxu0
      %v1464 = vadd.f32 0.0, %v1463
      %1465 = vdwg.mxu0
      %v1466 = vadd.f32 %v1410, %v1443
      %v1467 = vadd.f32 %v1411, %v1446
      %v1468 = vadd.f32 %v1412, %v1449
      %v1469 = vadd.f32 %v1413, %v1452
      %v1470 = vadd.f32 %v1414, %v1455
      %v1471 = vadd.f32 %v1415, %v1458
      %v1472 = vadd.f32 %v1416, %v1461
      %v1473 = vadd.f32 %v1417, %v1464
      %v1474 = vsel %vm1096, %v1161, 0
      %1476 = vmatpush.msra.mxu0 0.0
      %1477 = vmatpush.msra.mxu0 0.0
      %1478 = vmatpush.msra.mxu0 0.0
      %1479 = vmatpush.msra.mxu0 0.0
      %1480 = vmatpush.msra.mxu0 0.0
      %1481 = vmatpush.msra.mxu0 0.0
      %1482 = vmatpush.msra.mxu0 0.0
      %1483 = vmatpush.msra.mxu0 0.0
      %1484 = vmatpush.msra.mxu0 0.0
      %1485 = vmatpush.msra.mxu0 0.0
      %1486 = vmatpush.msra.mxu0 0.0
      %1487 = vmatpush.msra.mxu0 0.0
      %1488 = vmatpush.msra.mxu0 0.0
      %1489 = vmatpush.msra.mxu0 0.0
      %1490 = vmatpush.msra.mxu0 0.0
      %1491 = vmatpush.msra.mxu0 %v412
      %1492 = vmatmul.f32.gmra.mxu0 %v1209
      %v1493 = vpop.f32.mrf.mxu0
      %v1494 = vadd.f32 0.0, %v1493
      %1495 = vmatmul.f32.gmra.mxu0 %v1211
      %v1496 = vpop.f32.mrf.mxu0
      %v1497 = vadd.f32 0.0, %v1496
      %1498 = vmatmul.f32.gmra.mxu0 %v1213
      %v1499 = vpop.f32.mrf.mxu0
      %v1500 = vadd.f32 0.0, %v1499
      %1501 = vmatmul.f32.gmra.mxu0 %v1215
      %v1502 = vpop.f32.mrf.mxu0
      %v1503 = vadd.f32 0.0, %v1502
      %1504 = vmatmul.f32.gmra.mxu0 %v1217
      %v1505 = vpop.f32.mrf.mxu0
      %v1506 = vadd.f32 0.0, %v1505
      %1507 = vmatmul.f32.gmra.mxu0 %v1219
      %v1508 = vpop.f32.mrf.mxu0
      %v1509 = vadd.f32 0.0, %v1508
      %1510 = vmatmul.f32.gmra.mxu0 %v1221
      %v1511 = vpop.f32.mrf.mxu0
      %v1512 = vadd.f32 0.0, %v1511
      %1513 = vmatmul.f32.gmra.mxu0 %v1474
      %v1514 = vpop.f32.mrf.mxu0
      %v1515 = vadd.f32 0.0, %v1514
      %1516 = vdwg.mxu0
      %v1517 = vadd.f32 %v1466, %v1494
      %v1518 = vadd.f32 %v1467, %v1497
      %v1519 = vadd.f32 %v1468, %v1500
      %v1520 = vadd.f32 %v1469, %v1503
      %v1521 = vadd.f32 %v1470, %v1506
      %v1522 = vadd.f32 %v1471, %v1509
      %v1523 = vadd.f32 %v1472, %v1512
      %v1524 = vadd.f32 %v1473, %v1515
      %v1526 = vrot.slane %v1161, 1
      %v1527 = vrot.slane %v1162, 1
      %v1528 = vsel %vm563, %v1526, %v1527
      %v1529 = vsel %vm1096, %v1528, 0
      %1531 = vmatpush.msra.mxu0 0.0
      %1532 = vmatpush.msra.mxu0 0.0
      %1533 = vmatpush.msra.mxu0 0.0
      %1534 = vmatpush.msra.mxu0 0.0
      %1535 = vmatpush.msra.mxu0 0.0
      %1536 = vmatpush.msra.mxu0 0.0
      %1537 = vmatpush.msra.mxu0 0.0
      %1538 = vmatpush.msra.mxu0 0.0
      %1539 = vmatpush.msra.mxu0 0.0
      %1540 = vmatpush.msra.mxu0 0.0
      %1541 = vmatpush.msra.mxu0 0.0
      %1542 = vmatpush.msra.mxu0 0.0
      %1543 = vmatpush.msra.mxu0 0.0
      %1544 = vmatpush.msra.mxu0 0.0
      %1545 = vmatpush.msra.mxu0 0.0
      %1546 = vmatpush.msra.mxu0 %v413
      %1547 = vmatmul.f32.gmra.mxu0 %v1355
      %v1548 = vpop.f32.mrf.mxu0
      %v1549 = vadd.f32 0.0, %v1548
      %1550 = vmatmul.f32.gmra.mxu0 %v1357
      %v1551 = vpop.f32.mrf.mxu0
      %v1552 = vadd.f32 0.0, %v1551
      %1553 = vmatmul.f32.gmra.mxu0 %v1359
      %v1554 = vpop.f32.mrf.mxu0
      %v1555 = vadd.f32 0.0, %v1554
      %1556 = vmatmul.f32.gmra.mxu0 %v1361
      %v1557 = vpop.f32.mrf.mxu0
      %v1558 = vadd.f32 0.0, %v1557
      %1559 = vmatmul.f32.gmra.mxu0 %v1363
      %v1560 = vpop.f32.mrf.mxu0
      %v1561 = vadd.f32 0.0, %v1560
      %1562 = vmatmul.f32.gmra.mxu0 %v1365
      %v1563 = vpop.f32.mrf.mxu0
      %v1564 = vadd.f32 0.0, %v1563
      %1565 = vmatmul.f32.gmra.mxu0 %v1367
      %v1566 = vpop.f32.mrf.mxu0
      %v1567 = vadd.f32 0.0, %v1566
      %1568 = vmatmul.f32.gmra.mxu0 %v1529
      %v1569 = vpop.f32.mrf.mxu0
      %v1570 = vadd.f32 0.0, %v1569
      %1571 = vdwg.mxu0
      %v1572 = vadd.f32 %v1517, %v1549
      %v1573 = vadd.f32 %v1518, %v1552
      %v1574 = vadd.f32 %v1519, %v1555
      %v1575 = vadd.f32 %v1520, %v1558
      %v1576 = vadd.f32 %v1521, %v1561
      %v1577 = vadd.f32 %v1522, %v1564
      %v1578 = vadd.f32 %v1523, %v1567
      %v1579 = vadd.f32 %v1524, %v1570
      %v1582 = vrot.slane %v1163, 7
      %v1583 = vrot.slane %v1164, 7
      %v1584 = vsel %vm1182, %v1582, %v1583
      %v1585 = vsel %vm1096, %v1584, 0
      %1587 = vmatpush.msra.mxu0 0.0
      %1588 = vmatpush.msra.mxu0 0.0
      %1589 = vmatpush.msra.mxu0 0.0
      %1590 = vmatpush.msra.mxu0 0.0
      %1591 = vmatpush.msra.mxu0 0.0
      %1592 = vmatpush.msra.mxu0 0.0
      %1593 = vmatpush.msra.mxu0 0.0
      %1594 = vmatpush.msra.mxu0 0.0
      %1595 = vmatpush.msra.mxu0 0.0
      %1596 = vmatpush.msra.mxu0 0.0
      %1597 = vmatpush.msra.mxu0 0.0
      %1598 = vmatpush.msra.mxu0 0.0
      %1599 = vmatpush.msra.mxu0 0.0
      %1600 = vmatpush.msra.mxu0 0.0
      %1601 = vmatpush.msra.mxu0 0.0
      %1602 = vmatpush.msra.mxu0 %v414
      %1603 = vmatmul.f32.gmra.mxu0 %v1268
      %v1604 = vpop.f32.mrf.mxu0
      %v1605 = vadd.f32 0.0, %v1604
      %1606 = vmatmul.f32.gmra.mxu0 %v1270
      %v1607 = vpop.f32.mrf.mxu0
      %v1608 = vadd.f32 0.0, %v1607
      %1609 = vmatmul.f32.gmra.mxu0 %v1272
      %v1610 = vpop.f32.mrf.mxu0
      %v1611 = vadd.f32 0.0, %v1610
      %1612 = vmatmul.f32.gmra.mxu0 %v1274
      %v1613 = vpop.f32.mrf.mxu0
      %v1614 = vadd.f32 0.0, %v1613
      %1615 = vmatmul.f32.gmra.mxu0 %v1276
      %v1616 = vpop.f32.mrf.mxu0
      %v1617 = vadd.f32 0.0, %v1616
      %1618 = vmatmul.f32.gmra.mxu0 %v1278
      %v1619 = vpop.f32.mrf.mxu0
      %v1620 = vadd.f32 0.0, %v1619
      %1621 = vmatmul.f32.gmra.mxu0 %v1423
      %v1622 = vpop.f32.mrf.mxu0
      %v1623 = vadd.f32 0.0, %v1622
      %1624 = vmatmul.f32.gmra.mxu0 %v1585
      %v1625 = vpop.f32.mrf.mxu0
      %v1626 = vadd.f32 0.0, %v1625
      %1627 = vdwg.mxu0
      %v1628 = vadd.f32 %v1572, %v1605
      %v1629 = vadd.f32 %v1573, %v1608
      %v1630 = vadd.f32 %v1574, %v1611
      %v1631 = vadd.f32 %v1575, %v1614
      %v1632 = vadd.f32 %v1576, %v1617
      %v1633 = vadd.f32 %v1577, %v1620
      %v1634 = vadd.f32 %v1578, %v1623
      %v1635 = vadd.f32 %v1579, %v1626
      %v1636 = vsel %vm1096, %v1164, 0
      %1638 = vmatpush.msra.mxu0 0.0
      %1639 = vmatpush.msra.mxu0 0.0
      %1640 = vmatpush.msra.mxu0 0.0
      %1641 = vmatpush.msra.mxu0 0.0
      %1642 = vmatpush.msra.mxu0 0.0
      %1643 = vmatpush.msra.mxu0 0.0
      %1644 = vmatpush.msra.mxu0 0.0
      %1645 = vmatpush.msra.mxu0 0.0
      %1646 = vmatpush.msra.mxu0 0.0
      %1647 = vmatpush.msra.mxu0 0.0
      %1648 = vmatpush.msra.mxu0 0.0
      %1649 = vmatpush.msra.mxu0 0.0
      %1650 = vmatpush.msra.mxu0 0.0
      %1651 = vmatpush.msra.mxu0 0.0
      %1652 = vmatpush.msra.mxu0 0.0
      %1653 = vmatpush.msra.mxu0 %v415
      %1654 = vmatmul.f32.gmra.mxu0 %v1211
      %v1655 = vpop.f32.mrf.mxu0
      %v1656 = vadd.f32 0.0, %v1655
      %1657 = vmatmul.f32.gmra.mxu0 %v1213
      %v1658 = vpop.f32.mrf.mxu0
      %v1659 = vadd.f32 0.0, %v1658
      %1660 = vmatmul.f32.gmra.mxu0 %v1215
      %v1661 = vpop.f32.mrf.mxu0
      %v1662 = vadd.f32 0.0, %v1661
      %1663 = vmatmul.f32.gmra.mxu0 %v1217
      %v1664 = vpop.f32.mrf.mxu0
      %v1665 = vadd.f32 0.0, %v1664
      %1666 = vmatmul.f32.gmra.mxu0 %v1219
      %v1667 = vpop.f32.mrf.mxu0
      %v1668 = vadd.f32 0.0, %v1667
      %1669 = vmatmul.f32.gmra.mxu0 %v1221
      %v1670 = vpop.f32.mrf.mxu0
      %v1671 = vadd.f32 0.0, %v1670
      %1672 = vmatmul.f32.gmra.mxu0 %v1474
      %v1673 = vpop.f32.mrf.mxu0
      %v1674 = vadd.f32 0.0, %v1673
      %1675 = vmatmul.f32.gmra.mxu0 %v1636
      %v1676 = vpop.f32.mrf.mxu0
      %v1677 = vadd.f32 0.0, %v1676
      %1678 = vdwg.mxu0
      %v1679 = vadd.f32 %v1628, %v1656
      %v1680 = vadd.f32 %v1629, %v1659
      %v1681 = vadd.f32 %v1630, %v1662
      %v1682 = vadd.f32 %v1631, %v1665
      %v1683 = vadd.f32 %v1632, %v1668
      %v1684 = vadd.f32 %v1633, %v1671
      %v1685 = vadd.f32 %v1634, %v1674
      %v1686 = vadd.f32 %v1635, %v1677
      %v1688 = vrot.slane %v1164, 1
      %v1689 = vrot.slane %v1165, 1
      %v1690 = vsel %vm563, %v1688, %v1689
      %v1691 = vsel %vm1096, %v1690, 0
      %1693 = vmatpush.msra.mxu0 0.0
      %1694 = vmatpush.msra.mxu0 0.0
      %1695 = vmatpush.msra.mxu0 0.0
      %1696 = vmatpush.msra.mxu0 0.0
      %1697 = vmatpush.msra.mxu0 0.0
      %1698 = vmatpush.msra.mxu0 0.0
      %1699 = vmatpush.msra.mxu0 0.0
      %1700 = vmatpush.msra.mxu0 0.0
      %1701 = vmatpush.msra.mxu0 0.0
      %1702 = vmatpush.msra.mxu0 0.0
      %1703 = vmatpush.msra.mxu0 0.0
      %1704 = vmatpush.msra.mxu0 0.0
      %1705 = vmatpush.msra.mxu0 0.0
      %1706 = vmatpush.msra.mxu0 0.0
      %1707 = vmatpush.msra.mxu0 0.0
      %1708 = vmatpush.msra.mxu0 %v416
      %1709 = vmatmul.f32.gmra.mxu0 %v1357
      %v1710 = vpop.f32.mrf.mxu0
      %v1711 = vadd.f32 0.0, %v1710
      %1712 = vmatmul.f32.gmra.mxu0 %v1359
      %v1713 = vpop.f32.mrf.mxu0
      %v1714 = vadd.f32 0.0, %v1713
      %1715 = vmatmul.f32.gmra.mxu0 %v1361
      %v1716 = vpop.f32.mrf.mxu0
      %v1717 = vadd.f32 0.0, %v1716
      %1718 = vmatmul.f32.gmra.mxu0 %v1363
      %v1719 = vpop.f32.mrf.mxu0
      %v1720 = vadd.f32 0.0, %v1719
      %1721 = vmatmul.f32.gmra.mxu0 %v1365
      %v1722 = vpop.f32.mrf.mxu0
      %v1723 = vadd.f32 0.0, %v1722
      %1724 = vmatmul.f32.gmra.mxu0 %v1367
      %v1725 = vpop.f32.mrf.mxu0
      %v1726 = vadd.f32 0.0, %v1725
      %1727 = vmatmul.f32.gmra.mxu0 %v1529
      %v1728 = vpop.f32.mrf.mxu0
      %v1729 = vadd.f32 0.0, %v1728
      %1730 = vmatmul.f32.gmra.mxu0 %v1691
      %v1731 = vpop.f32.mrf.mxu0
      %v1732 = vadd.f32 0.0, %v1731
      %1733 = vdwg.mxu0
      %v1734 = vadd.f32 %v1679, %v1711
      %v1735 = vadd.f32 %v1680, %v1714
      %v1736 = vadd.f32 %v1681, %v1717
      %v1737 = vadd.f32 %v1682, %v1720
      %v1738 = vadd.f32 %v1683, %v1723
      %v1739 = vadd.f32 %v1684, %v1726
      %v1740 = vadd.f32 %v1685, %v1729
      %v1741 = vadd.f32 %v1686, %v1732
      %v1742 = vld [vmem:[%s4] sm:$0x1]
      %v1744 = vperm.slane %v1742, 0
      %v1746 = vadd.f32 %v1734, %v1744
      %v1747 = vadd.f32 %v1735, %v1744
      %v1748 = vadd.f32 %v1736, %v1744
      %v1749 = vadd.f32 %v1737, %v1744
      %v1750 = vadd.f32 %v1738, %v1744
      %v1751 = vadd.f32 %v1739, %v1744
      %v1752 = vadd.f32 %v1740, %v1744
      %v1753 = vadd.f32 %v1741, %v1744
      %v1754 = vld [vmem:[%s5] sm:$0x3]
      %v1755 = vunpack.c.l.bf16 %v1754
      %v1756 = vld [vmem:[%s6] sm:$0x1]
      %v1758 = vperm.slane %v1756, 0
      %v1761 = vsel %vm442, %v1755, 0
      %1763 = vmatpush.msra.mxu0 0.0
      %1764 = vmatpush.msra.mxu0 0.0
      %1765 = vmatpush.msra.mxu0 0.0
      %1766 = vmatpush.msra.mxu0 0.0
      %1767 = vmatpush.msra.mxu0 0.0
      %1768 = vmatpush.msra.mxu0 0.0
      %1769 = vmatpush.msra.mxu0 0.0
      %1770 = vmatpush.msra.mxu0 0.0
      %1771 = vmatpush.msra.mxu0 0.0
      %1772 = vmatpush.msra.mxu0 0.0
      %1773 = vmatpush.msra.mxu0 0.0
      %1774 = vmatpush.msra.mxu0 0.0
      %1775 = vmatpush.msra.mxu0 0.0
      %1776 = vmatpush.msra.mxu0 0.0
      %1777 = vmatpush.msra.mxu0 0.0
      %1778 = vmatpush.msra.mxu0 %v1761
      %1779 = vmatmul.f32.gmra.mxu0 %v733
      %v1780 = vpop.f32.mrf.mxu0
      %v1781 = vadd.f32 %v1758, %v1780
      %1782 = vmatmul.f32.gmra.mxu0 %v736
      %v1783 = vpop.f32.mrf.mxu0
      %v1784 = vadd.f32 %v1758, %v1783
      %1785 = vmatmul.f32.gmra.mxu0 %v739
      %v1786 = vpop.f32.mrf.mxu0
      %v1787 = vadd.f32 %v1758, %v1786
      %1788 = vmatmul.f32.gmra.mxu0 %v742
      %v1789 = vpop.f32.mrf.mxu0
      %v1790 = vadd.f32 %v1758, %v1789
      %1791 = vmatmul.f32.gmra.mxu0 %v745
      %v1792 = vpop.f32.mrf.mxu0
      %v1793 = vadd.f32 %v1758, %v1792
      %1794 = vmatmul.f32.gmra.mxu0 %v748
      %v1795 = vpop.f32.mrf.mxu0
      %v1796 = vadd.f32 %v1758, %v1795
      %1797 = vmatmul.f32.gmra.mxu0 %v751
      %v1798 = vpop.f32.mrf.mxu0
      %v1799 = vadd.f32 %v1758, %v1798
      %1800 = vmatmul.f32.gmra.mxu0 %v754
      %v1801 = vpop.f32.mrf.mxu0
      %v1802 = vadd.f32 %v1758, %v1801
      %1803 = vdwg.mxu0
      %v1804 = vadd.f32 %v1746, %v1781
      %v1805 = vadd.f32 %v1747, %v1784
      %v1806 = vadd.f32 %v1748, %v1787
      %v1807 = vadd.f32 %v1749, %v1790
      %v1808 = vadd.f32 %v1750, %v1793
      %v1809 = vadd.f32 %v1751, %v1796
      %v1810 = vadd.f32 %v1752, %v1799
      %v1811 = vadd.f32 %v1753, %v1802
      %v1812 = vmax.f32 %v1804, 0.0
      %v1813 = vmax.f32 %v1805, 0.0
      %v1814 = vmax.f32 %v1806, 0.0
      %v1815 = vmax.f32 %v1807, 0.0
      %v1816 = vmax.f32 %v1808, 0.0
      %v1817 = vmax.f32 %v1809, 0.0
      %v1818 = vmax.f32 %v1810, 0.0
      %v1819 = vmax.f32 %v1811, 0.0
      %v1820 = vpack.c.bf16 %v1812, %v1812
      %v1821 = vpack.c.bf16 %v1813, %v1813
      %v1822 = vpack.c.bf16 %v1814, %v1814
      %v1823 = vpack.c.bf16 %v1815, %v1815
      %v1824 = vpack.c.bf16 %v1816, %v1816
      %v1825 = vpack.c.bf16 %v1817, %v1817
      %v1826 = vpack.c.bf16 %v1818, %v1818
      %v1827 = vpack.c.bf16 %v1819, %v1819
      %vm1828 = vcmask 60416
      %1829 = vst.msk [vmem:[%s278] sm:$0xf] %vm1828, %v1820
      %1830 = vst.msk [vmem:[%s278 + $0x4] sm:$0xf] %vm1828, %v1821
      %1831 = vst.msk [vmem:[%s278 + $0x8] sm:$0xf] %vm1828, %v1822
      %1832 = vst.msk [vmem:[%s278 + $0xc] sm:$0xf] %vm1828, %v1823
      %1833 = vst.msk [vmem:[%s278 + $0x10] sm:$0xf] %vm1828, %v1824
      %1834 = vst.msk [vmem:[%s278 + $0x14] sm:$0xf] %vm1828, %v1825
      %1835 = vst.msk [vmem:[%s278 + $0x18] sm:$0xf] %vm1828, %v1826
      %1836 = vst.msk [vmem:[%s278 + $0x1c] sm:$0xf] %vm1828, %v1827
      %p1837 = scmp.lt.s32.totalorder %s18, 1
      %s1838 = scalar_select %p1837, %s18, 1
      %s1839 = smul.addr %s1838, 8
      %s1840 = smul.addr %s1839, 4
      %s1841 = scalar_lea.vmem %s7, %s1840
      // Predicated region
      $region49: #{model_forward.3} parent=47 // pred_check
        %p1842 = pneg %p188
      $region50: #{model_forward.3} parent=47 // pred_check_branch
        %1844 = sbr.rel (%p1842) target = $region52
      $region51: #{model_forward.3} parent=47 // pred_region
        _
      $region52: #{model_forward.3} parent=47 // pred_fallthru
        _
    $region48: #{model_forward.3} parent=5 // pred_fallthru
      _
    %p1845 = scmp.le.s32.totalorder 2, %s13
    // Predicated region
    $region53: #{model_forward.3} parent=5 // pred_check
      %p1846 = pneg %p1845
    $region54: #{model_forward.3} parent=5 // pred_check_branch
      %1848 = sbr.rel (%p1846) target = $region56
    $region55: #{model_forward.3} parent=5 // pred_region
      %s1849 = ssub.s32 %s13, 2
      // Predicated region
      $region57: #{model_forward.3} parent=55 // pred_check
        %p1850 = pneg %p194
      $region58: #{model_forward.3} parent=55 // pred_check_branch
        %1852 = sbr.rel (%p1850) target = $region60
      $region59: #{model_forward.3} parent=55 // pred_region
        %p1853 = scmp.lt.s32.totalorder %s19, 1
        %s1854 = scalar_select %p1853, %s19, 1
        %s1855 = smul.addr %s1854, 8
        %s1856 = smul.addr %s1855, 4
        %s1857 = scalar_lea.vmem %s7, %s1856
      $region60: #{model_forward.3} parent=55 // pred_fallthru
        _
    $region56: #{model_forward.3} parent=5 // pred_fallthru
      _
  $region6: #{model_forward.3} parent=0 // loop_footer
    %s17 = sadd.s32 1, %s13
  $region7: #{model_forward.3} parent=0 // loop_footer_branch
    %12 = sbr.rel target = $region3
  $region8: #{model_forward.3} parent=0 // loop_exit
    _

// kernel: model_forward.2
$region0: #{model_forward.2}
  #allocation0 [shape = 'u32[]', space=smem, size = 0x4, offset = 0x4, fixed_abs, tag = 'smem constant byte address 0x4 - core index']
  #allocation1 [shape = 'u32[72,128]{1,0:T(1,128)}', space=vmem, size = 0x9000, scoped, tag = 'internal scratch']
  #allocation2 [shape = 'f32[18,32,4]{2,1,0:T(8,128)}', space=vmem, size = 0x48000, scoped, tag = 'scratch operand']
  %s0 = inlined_call_operand.vmem [shape: bf16[2,18,18,4], index: 0, kind: input, shape index: {}]
  %s1 = inlined_call_operand.vmem [shape: bf16[9,4,4], index: 1, kind: input, shape index: {}]
  %s2 = inlined_call_operand.vmem [shape: f32[1,4], index: 2, kind: input, shape index: {}]
  %s3 = inlined_call_operand.vmem [shape: bf16[9,4,4], index: 3, kind: input, shape index: {}]
  %s4 = inlined_call_operand.vmem [shape: f32[1,4], index: 4, kind: input, shape index: {}]
  %s5 = inlined_call_operand.vmem [shape: bf16[2,256,4], index: 5, kind: output, shape index: {}]
  %s6 = sld [smem:[#allocation0]]
  $region53: #{model_forward.2} parent=0
    _
  %s8 = ssub.s32 1, %s6
  %s9 = scalar_select 0, %s8, %s6
  loop: start=0, step=1, limit=4
  $region2: #{model_forward.2} parent=0 // loop_pre_header
    _
  $region3: #{model_forward.2} parent=0 // loop_header
    %s11 = sphi 0, %s15
    %p12 = scmp.ge.s32.totalorder %s11, 4
    %s21 = sphi 0, %s23
    %s24 = sphi 0, %s21
    %s25 = sphi 0, %s24
    %s41 = sphi 0, %s25
    %s45 = sphi 0, %s45
    %s47 = sphi 0, %s45
    %s48 = sphi 0, %s47
    %s62 = sphi 0, %s48
    %s66 = sphi 0, %s66
    %s68 = sphi 0, %s66
    %s69 = sphi 0, %s68
    %s83 = sphi 0, %s69
    %s87 = sphi 0, %s87
    %s89 = sphi 0, %s87
    %s90 = sphi 0, %s89
    %s104 = sphi 0, %s90
    %s108 = sphi 0, %s108
    %s110 = sphi 0, %s108
    %s111 = sphi 0, %s110
    %s125 = sphi 0, %s111
    %s131 = sphi 0, %s133
    %s134 = sphi 0, %s131
    %s135 = sphi 0, %s134
    %s151 = sphi 0, %s135
  $region4: #{model_forward.2} parent=0 // loop_header_branch
    %14 = sbr.rel (%p12) target = $region8
  $region5: #{model_forward.2} parent=0 // loop_body
    %s16 = ssub.s32 %s11, 1
    %s17 = ssub.s32 %s11, 2
    %s18 = sadd.s32 %s11, 1
    %s19 = ssub.s32 %s11, %s18
    %p20 = scmp.eq.s32.totalorder %s19, 0
    %s22 = sadd.s32 %s21, 1
    %s23 = scalar_select %p20, %s21, %s22
    %p26 = pneg %p20
    %p27 = scmp.eq.s32.totalorder %s11, 1
    %p28 = por %p26, %p27
    %p29 = scmp.ne.s32.totalorder %s21, %s24
    %p30 = scmp.eq.s32.totalorder %s11, 0
    %p31 = por %p29, %p30
    %p32 = scmp.ne.s32.totalorder %s21, %s24
    %p33 = scmp.eq.s32.totalorder %s16, 1
    %p34 = por %p32, %p33
    %p35 = scmp.ne.s32.totalorder %s24, %s25
    %p36 = scmp.eq.s32.totalorder %s16, 0
    %p37 = por %p35, %p36
    %p38 = scmp.ne.s32.totalorder %s24, %s25
    %p39 = scmp.eq.s32.totalorder %s17, 1
    %p40 = por %p38, %p39
    %p42 = scmp.ne.s32.totalorder %s25, %s41
    %p43 = scmp.eq.s32.totalorder %s17, 0
    %p44 = por %p42, %p43
    %s46 = sadd.s32 %s45, 1
    %p49 = scmp.eq.s32.totalorder %s11, 1
    %p50 = scmp.ne.s32.totalorder %s45, %s47
    %p51 = scmp.eq.s32.totalorder %s11, 0
    %p52 = por %p50, %p51
    %p53 = scmp.ne.s32.totalorder %s45, %s47
    %p54 = scmp.eq.s32.totalorder %s16, 1
    %p55 = por %p53, %p54
    %p56 = scmp.ne.s32.totalorder %s47, %s48
    %p57 = scmp.eq.s32.totalorder %s16, 0
    %p58 = por %p56, %p57
    %p59 = scmp.ne.s32.totalorder %s47, %s48
    %p60 = scmp.eq.s32.totalorder %s17, 1
    %p61 = por %p59, %p60
    %p63 = scmp.ne.s32.totalorder %s48, %s62
    %p64 = scmp.eq.s32.totalorder %s17, 0
    %p65 = por %p63, %p64
    %s67 = sadd.s32 %s66, 1
    %p70 = scmp.eq.s32.totalorder %s11, 1
    %p71 = scmp.ne.s32.totalorder %s66, %s68
    %p72 = scmp.eq.s32.totalorder %s11, 0
    %p73 = por %p71, %p72
    %p74 = scmp.ne.s32.totalorder %s66, %s68
    %p75 = scmp.eq.s32.totalorder %s16, 1
    %p76 = por %p74, %p75
    %p77 = scmp.ne.s32.totalorder %s68, %s69
    %p78 = scmp.eq.s32.totalorder %s16, 0
    %p79 = por %p77, %p78
    %p80 = scmp.ne.s32.totalorder %s68, %s69
    %p81 = scmp.eq.s32.totalorder %s17, 1
    %p82 = por %p80, %p81
    %p84 = scmp.ne.s32.totalorder %s69, %s83
    %p85 = scmp.eq.s32.totalorder %s17, 0
    %p86 = por %p84, %p85
    %s88 = sadd.s32 %s87, 1
    %p91 = scmp.eq.s32.totalorder %s11, 1
    %p92 = scmp.ne.s32.totalorder %s87, %s89
    %p93 = scmp.eq.s32.totalorder %s11, 0
    %p94 = por %p92, %p93
    %p95 = scmp.ne.s32.totalorder %s87, %s89
    %p96 = scmp.eq.s32.totalorder %s16, 1
    %p97 = por %p95, %p96
    %p98 = scmp.ne.s32.totalorder %s89, %s90
    %p99 = scmp.eq.s32.totalorder %s16, 0
    %p100 = por %p98, %p99
    %p101 = scmp.ne.s32.totalorder %s89, %s90
    %p102 = scmp.eq.s32.totalorder %s17, 1
    %p103 = por %p101, %p102
    %p105 = scmp.ne.s32.totalorder %s90, %s104
    %p106 = scmp.eq.s32.totalorder %s17, 0
    %p107 = por %p105, %p106
    %s109 = sadd.s32 %s108, 1
    %p112 = scmp.eq.s32.totalorder %s11, 1
    %p113 = scmp.ne.s32.totalorder %s108, %s110
    %p114 = scmp.eq.s32.totalorder %s11, 0
    %p115 = por %p113, %p114
    %p116 = scmp.ne.s32.totalorder %s108, %s110
    %p117 = scmp.eq.s32.totalorder %s16, 1
    %p118 = por %p116, %p117
    %p119 = scmp.ne.s32.totalorder %s110, %s111
    %p120 = scmp.eq.s32.totalorder %s16, 0
    %p121 = por %p119, %p120
    %p122 = scmp.ne.s32.totalorder %s110, %s111
    %p123 = scmp.eq.s32.totalorder %s17, 1
    %p124 = por %p122, %p123
    %p126 = scmp.ne.s32.totalorder %s111, %s125
    %p127 = scmp.eq.s32.totalorder %s17, 0
    %p128 = por %p126, %p127
    %s129 = ssub.s32 %s11, %s18
    %p130 = scmp.eq.s32.totalorder %s129, 0
    %s132 = sadd.s32 %s131, 1
    %s133 = scalar_select %p130, %s131, %s132
    %p136 = pneg %p130
    %p137 = scmp.eq.s32.totalorder %s11, 1
    %p138 = por %p136, %p137
    %p139 = scmp.ne.s32.totalorder %s131, %s134
    %p140 = scmp.eq.s32.totalorder %s11, 0
    %p141 = por %p139, %p140
    %p142 = scmp.ne.s32.totalorder %s131, %s134
    %p143 = scmp.eq.s32.totalorder %s16, 1
    %p144 = por %p142, %p143
    %p145 = scmp.ne.s32.totalorder %s134, %s135
    %p146 = scmp.eq.s32.totalorder %s16, 0
    %p147 = por %p145, %p146
    %p148 = scmp.ne.s32.totalorder %s134, %s135
    %p149 = scmp.eq.s32.totalorder %s17, 1
    %p150 = por %p148, %p149
    %p152 = scmp.ne.s32.totalorder %s135, %s151
    %p153 = scmp.eq.s32.totalorder %s17, 0
    %p154 = por %p152, %p153
    %p155 = scmp.le.s32.totalorder 1, %s11
    %p156 = scmp.lt.s32.totalorder %s11, 3
    %p157 = pnand %p155, %p156
    %p158 = pneg %p157
    // Predicated region
    $region9: #{model_forward.2} parent=5 // pred_check
      _
    $region10: #{model_forward.2} parent=5 // pred_check_branch
      %160 = sbr.rel (%p157) target = $region12
    $region11: #{model_forward.2} parent=5 // pred_region
      %s161 = ssub.s32 %s11, 1
      // Predicated region
      $region13: #{model_forward.2} parent=11 // pred_check
        %p162 = pneg %p58
      $region14: #{model_forward.2} parent=11 // pred_check_branch
        %164 = sbr.rel (%p162) target = $region16
      $region15: #{model_forward.2} parent=11 // pred_region
        _
      $region16: #{model_forward.2} parent=11 // pred_fallthru
        _
      // Predicated region
      $region17: #{model_forward.2} parent=11 // pred_check
        %p165 = pneg %p79
      $region18: #{model_forward.2} parent=11 // pred_check_branch
        %167 = sbr.rel (%p165) target = $region20
      $region19: #{model_forward.2} parent=11 // pred_region
        _
      $region20: #{model_forward.2} parent=11 // pred_fallthru
        _
      // Predicated region
      $region21: #{model_forward.2} parent=11 // pred_check
        %p168 = pneg %p100
      $region22: #{model_forward.2} parent=11 // pred_check_branch
        %170 = sbr.rel (%p168) target = $region24
      $region23: #{model_forward.2} parent=11 // pred_region
        _
      $region24: #{model_forward.2} parent=11 // pred_fallthru
        _
      // Predicated region
      $region25: #{model_forward.2} parent=11 // pred_check
        %p171 = pneg %p121
      $region26: #{model_forward.2} parent=11 // pred_check_branch
        %173 = sbr.rel (%p171) target = $region28
      $region27: #{model_forward.2} parent=11 // pred_region
        _
      $region28: #{model_forward.2} parent=11 // pred_fallthru
        _
    $region12: #{model_forward.2} parent=5 // pred_fallthru
      _
    %p174 = scmp.lt.s32.totalorder %s11, 2
    // Predicated region
    $region29: #{model_forward.2} parent=5 // pred_check
      %p175 = pneg %p174
    $region30: #{model_forward.2} parent=5 // pred_check_branch
      %177 = sbr.rel (%p175) target = $region32
    $region31: #{model_forward.2} parent=5 // pred_region
      // Predicated region
      $region33: #{model_forward.2} parent=31 // pred_check
        %p178 = pneg %p31
      $region34: #{model_forward.2} parent=31 // pred_check_branch
        %180 = sbr.rel (%p178) target = $region36
      $region35: #{model_forward.2} parent=31 // pred_region
        %p181 = scmp.lt.s32.totalorder %s11, 1
        %s182 = scalar_select %p181, %s11, 1
        %s183 = smul.addr %s182, 54
        %s184 = smul.addr %s183, 4
        %s185 = scalar_lea.vmem %s0, %s184
      $region36: #{model_forward.2} parent=31 // pred_fallthru
        _
    $region32: #{model_forward.2} parent=5 // pred_fallthru
      _
    %p186 = scmp.le.s32.totalorder 1, %s11
    %p187 = scmp.lt.s32.totalorder %s11, 3
    %p188 = pnand %p186, %p187
    %p189 = pneg %p188
    // Predicated region
    $region37: #{model_forward.2} parent=5 // pred_check
      _
    $region38: #{model_forward.2} parent=5 // pred_check_branch
      %191 = sbr.rel (%p188) target = $region40
    $region39: #{model_forward.2} parent=5 // pred_region
      %s192 = ssub.s32 %s11, 1
      %p193 = scmp.lt.s32.totalorder %s16, 1
      %s194 = scalar_select %p193, %s16, 1
      %s195 = smul.addr %s194, 54
      %s196 = smul.addr %s195, 4
      %s197 = scalar_lea.vmem %s0, %s196
      %p198 = pneg %p37
      %p199 = pneg %p34
      %p200 = pneg %p58
      %p201 = pneg %p55
      %p202 = pneg %p79
      %p203 = pneg %p76
      %p204 = pneg %p100
      %p205 = pneg %p97
      %p206 = pneg %p121
      %p207 = pneg %p118
      %p208 = pneg %p147
      %p209 = pneg %p144
      %p210 = scmp.lt.s32.totalorder %s16, 1
      %s211 = scalar_select %p210, %s16, 1
      %s212 = smul.addr %s211, 32
      %s213 = smul.addr %s212, 4
      %s214 = scalar_lea.vmem %s5, %s213
      %p215 = scmp.lt.s32.totalorder %s16, 1
      %s216 = scalar_select %p215, %s16, 1
      %s217 = smul.addr %s216, 54
      %s218 = smul.addr %s217, 4
      %s219 = scalar_lea.vmem %s0, %s218
      %p220 = scmp.lt.s32.totalorder %s16, 1
      %s221 = scalar_select %p220, %s16, 1
      %s222 = smul.addr %s221, 32
      %s223 = smul.addr %s222, 4
      %s224 = scalar_lea.vmem %s5, %s223
      %v225 = vld [vmem:[%s219] sm:$0xf]
      %v226 = vld [vmem:[%s219 + $0x4] sm:$0xf]
      %v227 = vld [vmem:[%s219 + $0x8] sm:$0x1]
      %v228 = vld [vmem:[%s219 + $0xc] sm:$0xf]
      %v229 = vld [vmem:[%s219 + $0x10] sm:$0xf]
      %v230 = vld [vmem:[%s219 + $0x14] sm:$0x1]
      %v231 = vld [vmem:[%s219 + $0x18] sm:$0xf]
      %v232 = vld [vmem:[%s219 + $0x1c] sm:$0xf]
      %v233 = vld [vmem:[%s219 + $0x20] sm:$0x1]
      %v234 = vld [vmem:[%s219 + $0x24] sm:$0xf]
      %v235 = vld [vmem:[%s219 + $0x28] sm:$0xf]
      %v236 = vld [vmem:[%s219 + $0x2c] sm:$0x1]
      %v237 = vld [vmem:[%s219 + $0x30] sm:$0xf]
      %v238 = vld [vmem:[%s219 + $0x34] sm:$0xf]
      %v239 = vld [vmem:[%s219 + $0x38] sm:$0x1]
      %v240 = vld [vmem:[%s219 + $0x3c] sm:$0xf]
      %v241 = vld [vmem:[%s219 + $0x40] sm:$0xf]
      %v242 = vld [vmem:[%s219 + $0x44] sm:$0x1]
      %v243 = vld [vmem:[%s219 + $0x48] sm:$0xf]
      %v244 = vld [vmem:[%s219 + $0x4c] sm:$0xf]
      %v245 = vld [vmem:[%s219 + $0x50] sm:$0x1]
      %v246 = vld [vmem:[%s219 + $0x54] sm:$0xf]
      %v247 = vld [vmem:[%s219 + $0x58] sm:$0xf]
      %v248 = vld [vmem:[%s219 + $0x5c] sm:$0x1]
      %v249 = vld [vmem:[%s219 + $0x60] sm:$0xf]
      %v250 = vld [vmem:[%s219 + $0x64] sm:$0xf]
      %v251 = vld [vmem:[%s219 + $0x68] sm:$0x1]
      %v252 = vld [vmem:[%s219 + $0x6c] sm:$0xf]
      %v253 = vld [vmem:[%s219 + $0x70] sm:$0xf]
      %v254 = vld [vmem:[%s219 + $0x74] sm:$0x1]
      %v255 = vld [vmem:[%s219 + $0x78] sm:$0xf]
      %v256 = vld [vmem:[%s219 + $0x7c] sm:$0xf]
      %v257 = vld [vmem:[%s219 + $0x80] sm:$0x1]
      %v258 = vld [vmem:[%s219 + $0x84] sm:$0xf]
      %v259 = vld [vmem:[%s219 + $0x88] sm:$0xf]
      %v260 = vld [vmem:[%s219 + $0x8c] sm:$0x1]
      %v261 = vld [vmem:[%s219 + $0x90] sm:$0xf]
      %v262 = vld [vmem:[%s219 + $0x94] sm:$0xf]
      %v263 = vld [vmem:[%s219 + $0x98] sm:$0x1]
      %v264 = vld [vmem:[%s219 + $0x9c] sm:$0xf]
      %v265 = vld [vmem:[%s219 + $0xa0] sm:$0xf]
      %v266 = vld [vmem:[%s219 + $0xa4] sm:$0x1]
      %v267 = vld [vmem:[%s219 + $0xa8] sm:$0xf]
      %v268 = vld [vmem:[%s219 + $0xac] sm:$0xf]
      %v269 = vld [vmem:[%s219 + $0xb0] sm:$0x1]
      %v270 = vld [vmem:[%s219 + $0xb4] sm:$0xf]
      %v271 = vld [vmem:[%s219 + $0xb8] sm:$0xf]
      %v272 = vld [vmem:[%s219 + $0xbc] sm:$0x1]
      %v273 = vld [vmem:[%s219 + $0xc0] sm:$0xf]
      %v274 = vld [vmem:[%s219 + $0xc4] sm:$0xf]
      %v275 = vld [vmem:[%s219 + $0xc8] sm:$0x1]
      %v276 = vld [vmem:[%s219 + $0xcc] sm:$0xf]
      %v277 = vld [vmem:[%s219 + $0xd0] sm:$0xf]
      %v278 = vld [vmem:[%s219 + $0xd4] sm:$0x1]
      %v279 = vunpack.c.l.bf16 %v225
      %v280 = vunpack.c.l.bf16 %v226
      %v281 = vunpack.c.l.bf16 %v227
      %v282 = vunpack.c.l.bf16 %v228
      %v283 = vunpack.c.l.bf16 %v229
      %v284 = vunpack.c.l.bf16 %v230
      %v285 = vunpack.c.l.bf16 %v231
      %v286 = vunpack.c.l.bf16 %v232
      %v287 = vunpack.c.l.bf16 %v233
      %v288 = vunpack.c.l.bf16 %v234
      %v289 = vunpack.c.l.bf16 %v235
      %v290 = vunpack.c.l.bf16 %v236
      %v291 = vunpack.c.l.bf16 %v237
      %v292 = vunpack.c.l.bf16 %v238
      %v293 = vunpack.c.l.bf16 %v239
      %v294 = vunpack.c.l.bf16 %v240
      %v295 = vunpack.c.l.bf16 %v241
      %v296 = vunpack.c.l.bf16 %v242
      %v297 = vunpack.c.l.bf16 %v243
      %v298 = vunpack.c.l.bf16 %v244
      %v299 = vunpack.c.l.bf16 %v245
      %v300 = vunpack.c.l.bf16 %v246
      %v301 = vunpack.c.l.bf16 %v247
      %v302 = vunpack.c.l.bf16 %v248
      %v303 = vunpack.c.l.bf16 %v249
      %v304 = vunpack.c.l.bf16 %v250
      %v305 = vunpack.c.l.bf16 %v251
      %v306 = vunpack.c.l.bf16 %v252
      %v307 = vunpack.c.l.bf16 %v253
      %v308 = vunpack.c.l.bf16 %v254
      %v309 = vunpack.c.l.bf16 %v255
      %v310 = vunpack.c.l.bf16 %v256
      %v311 = vunpack.c.l.bf16 %v257
      %v312 = vunpack.c.l.bf16 %v258
      %v313 = vunpack.c.l.bf16 %v259
      %v314 = vunpack.c.l.bf16 %v260
      %v315 = vunpack.c.l.bf16 %v261
      %v316 = vunpack.c.l.bf16 %v262
      %v317 = vunpack.c.l.bf16 %v263
      %v318 = vunpack.c.l.bf16 %v264
      %v319 = vunpack.c.l.bf16 %v265
      %v320 = vunpack.c.l.bf16 %v266
      %v321 = vunpack.c.l.bf16 %v267
      %v322 = vunpack.c.l.bf16 %v268
      %v323 = vunpack.c.l.bf16 %v269
      %v324 = vunpack.c.l.bf16 %v270
      %v325 = vunpack.c.l.bf16 %v271
      %v326 = vunpack.c.l.bf16 %v272
      %v327 = vunpack.c.l.bf16 %v273
      %v328 = vunpack.c.l.bf16 %v274
      %v329 = vunpack.c.l.bf16 %v275
      %v330 = vunpack.c.l.bf16 %v276
      %v331 = vunpack.c.l.bf16 %v277
      %v332 = vunpack.c.l.bf16 %v278
      %v333 = vld [vmem:[%s1] sm:$0x3]
      %v334 = vld [vmem:[%s1 + $0x2] sm:$0x3]
      %v335 = vld [vmem:[%s1 + $0x4] sm:$0x3]
      %v336 = vld [vmem:[%s1 + $0x6] sm:$0x3]
      %v337 = vld [vmem:[%s1 + $0x8] sm:$0x3]
      %v338 = vld [vmem:[%s1 + $0xa] sm:$0x3]
      %v339 = vld [vmem:[%s1 + $0xc] sm:$0x3]
      %v340 = vld [vmem:[%s1 + $0xe] sm:$0x3]
      %v341 = vld [vmem:[%s1 + $0x10] sm:$0x3]
      %v342 = vunpack.c.l.bf16 %v333
      %v343 = vunpack.c.l.bf16 %v334
      %v344 = vunpack.c.l.bf16 %v335
      %v345 = vunpack.c.l.bf16 %v336
      %v346 = vunpack.c.l.bf16 %v337
      %v347 = vunpack.c.l.bf16 %v338
      %v348 = vunpack.c.l.bf16 %v339
      %v349 = vunpack.c.l.bf16 %v340
      %v350 = vunpack.c.l.bf16 %v341
      %v351 = vld [vmem:[%s3] sm:$0x3]
      %v352 = vld [vmem:[%s3 + $0x2] sm:$0x3]
      %v353 = vld [vmem:[%s3 + $0x4] sm:$0x3]
      %v354 = vld [vmem:[%s3 + $0x6] sm:$0x3]
      %v355 = vld [vmem:[%s3 + $0x8] sm:$0x3]
      %v356 = vld [vmem:[%s3 + $0xa] sm:$0x3]
      %v357 = vld [vmem:[%s3 + $0xc] sm:$0x3]
      %v358 = vld [vmem:[%s3 + $0xe] sm:$0x3]
      %v359 = vld [vmem:[%s3 + $0x10] sm:$0x3]
      %v360 = vunpack.c.l.bf16 %v351
      %v361 = vunpack.c.l.bf16 %v352
      %v362 = vunpack.c.l.bf16 %v353
      %v363 = vunpack.c.l.bf16 %v354
      %v364 = vunpack.c.l.bf16 %v355
      %v365 = vunpack.c.l.bf16 %v356
      %v366 = vunpack.c.l.bf16 %v357
      %v367 = vunpack.c.l.bf16 %v358
      %v368 = vunpack.c.l.bf16 %v359
      %vm417 = vcmask 1046528
      %v418 = vrot.slane %v279, 1
      %v419 = vrot.slane %v280, 1
      %v420 = vsel %vm417, %v418, %v419
      %v421 = vrot.slane %v281, 1
      %v422 = vsel %vm417, %v419, %v421
      %v423 = vrot.slane %v282, 1
      %v424 = vrot.slane %v283, 1
      %v425 = vsel %vm417, %v423, %v424
      %v426 = vrot.slane %v284, 1
      %v427 = vsel %vm417, %v424, %v426
      %v428 = vrot.slane %v285, 1
      %v429 = vrot.slane %v286, 1
      %v430 = vsel %vm417, %v428, %v429
      %v431 = vrot.slane %v287, 1
      %v432 = vsel %vm417, %v429, %v431
      %v433 = vrot.slane %v288, 1
      %v434 = vrot.slane %v289, 1
      %v435 = vsel %vm417, %v433, %v434
      %v436 = vrot.slane %v290, 1
      %v437 = vsel %vm417, %v434, %v436
      %v438 = vrot.slane %v291, 1
      %v439 = vrot.slane %v292, 1
      %v440 = vsel %vm417, %v438, %v439
      %v441 = vrot.slane %v293, 1
      %v442 = vsel %vm417, %v439, %v441
      %v443 = vrot.slane %v294, 1
      %v444 = vrot.slane %v295, 1
      %v445 = vsel %vm417, %v443, %v444
      %v446 = vrot.slane %v296, 1
      %v447 = vsel %vm417, %v444, %v446
      %v448 = vrot.slane %v297, 1
      %v449 = vrot.slane %v298, 1
      %v450 = vsel %vm417, %v448, %v449
      %v451 = vrot.slane %v299, 1
      %v452 = vsel %vm417, %v449, %v451
      %v453 = vrot.slane %v300, 1
      %v454 = vrot.slane %v301, 1
      %v455 = vsel %vm417, %v453, %v454
      %v456 = vrot.slane %v302, 1
      %v457 = vsel %vm417, %v454, %v456
      %v458 = vrot.slane %v303, 1
      %v459 = vrot.slane %v304, 1
      %v460 = vsel %vm417, %v458, %v459
      %v461 = vrot.slane %v305, 1
      %v462 = vsel %vm417, %v459, %v461
      %v463 = vrot.slane %v306, 1
      %v464 = vrot.slane %v307, 1
      %v465 = vsel %vm417, %v463, %v464
      %v466 = vrot.slane %v308, 1
      %v467 = vsel %vm417, %v464, %v466
      %v468 = vrot.slane %v309, 1
      %v469 = vrot.slane %v310, 1
      %v470 = vsel %vm417, %v468, %v469
      %v471 = vrot.slane %v311, 1
      %v472 = vsel %vm417, %v469, %v471
      %v473 = vrot.slane %v312, 1
      %v474 = vrot.slane %v313, 1
      %v475 = vsel %vm417, %v473, %v474
      %v476 = vrot.slane %v314, 1
      %v477 = vsel %vm417, %v474, %v476
      %v478 = vrot.slane %v315, 1
      %v479 = vrot.slane %v316, 1
      %v480 = vsel %vm417, %v478, %v479
      %v481 = vrot.slane %v317, 1
      %v482 = vsel %vm417, %v479, %v481
      %v483 = vrot.slane %v318, 1
      %v484 = vrot.slane %v319, 1
      %v485 = vsel %vm417, %v483, %v484
      %v486 = vrot.slane %v320, 1
      %v487 = vsel %vm417, %v484, %v486
      %v488 = vrot.slane %v321, 1
      %v489 = vrot.slane %v322, 1
      %v490 = vsel %vm417, %v488, %v489
      %v491 = vrot.slane %v323, 1
      %v492 = vsel %vm417, %v489, %v491
      %v493 = vrot.slane %v324, 1
      %v494 = vrot.slane %v325, 1
      %v495 = vsel %vm417, %v493, %v494
      %v496 = vrot.slane %v326, 1
      %v497 = vsel %vm417, %v494, %v496
      %vm498 = vcmask 31744
      %v499 = vsel %vm498, %v420, 0
      %v501 = vsel %vm498, %v422, 0
      %v503 = vsel %vm498, %v425, 0
      %v505 = vsel %vm498, %v427, 0
      %v507 = vsel %vm498, %v430, 0
      %v509 = vsel %vm498, %v432, 0
      %v511 = vsel %vm498, %v435, 0
      %v513 = vsel %vm498, %v437, 0
      %v515 = vsel %vm498, %v440, 0
      %v517 = vsel %vm498, %v442, 0
      %v519 = vsel %vm498, %v445, 0
      %v521 = vsel %vm498, %v447, 0
      %v523 = vsel %vm498, %v450, 0
      %v525 = vsel %vm498, %v452, 0
      %v527 = vsel %vm498, %v455, 0
      %v529 = vsel %vm498, %v457, 0
      %v531 = vsel %vm498, %v460, 0
      %v533 = vsel %vm498, %v462, 0
      %v535 = vsel %vm498, %v465, 0
      %v537 = vsel %vm498, %v467, 0
      %v539 = vsel %vm498, %v470, 0
      %v541 = vsel %vm498, %v472, 0
      %v543 = vsel %vm498, %v475, 0
      %v545 = vsel %vm498, %v477, 0
      %v547 = vsel %vm498, %v480, 0
      %v549 = vsel %vm498, %v482, 0
      %v551 = vsel %vm498, %v485, 0
      %v553 = vsel %vm498, %v487, 0
      %v555 = vsel %vm498, %v490, 0
      %v557 = vsel %vm498, %v492, 0
      %v559 = vsel %vm498, %v495, 0
      %v561 = vsel %vm498, %v497, 0
      %vm563 = vcmask 1043456
      %v565 = vsel %vm563, %v343, 0
      %567 = vmatpush.msra.mxu0 0.0
      %568 = vmatpush.msra.mxu0 0.0
      %569 = vmatpush.msra.mxu0 0.0
      %570 = vmatpush.msra.mxu0 0.0
      %571 = vmatpush.msra.mxu0 0.0
      %572 = vmatpush.msra.mxu0 0.0
      %573 = vmatpush.msra.mxu0 0.0
      %574 = vmatpush.msra.mxu0 0.0
      %575 = vmatpush.msra.mxu0 0.0
      %576 = vmatpush.msra.mxu0 0.0
      %577 = vmatpush.msra.mxu0 0.0
      %578 = vmatpush.msra.mxu0 0.0
      %579 = vmatpush.msra.mxu0 0.0
      %580 = vmatpush.msra.mxu0 0.0
      %581 = vmatpush.msra.mxu0 0.0
      %582 = vmatpush.msra.mxu0 %v565
      %583 = vmatmul.f32.gmra.mxu0 %v499
      %v584 = vpop.f32.mrf.mxu0
      %v585 = vadd.f32 0.0, %v584
      %586 = vmatmul.f32.gmra.mxu0 %v501
      %v587 = vpop.f32.mrf.mxu0
      %v588 = vadd.f32 0.0, %v587
      %589 = vmatmul.f32.gmra.mxu0 %v503
      %v590 = vpop.f32.mrf.mxu0
      %v591 = vadd.f32 0.0, %v590
      %592 = vmatmul.f32.gmra.mxu0 %v505
      %v593 = vpop.f32.mrf.mxu0
      %v594 = vadd.f32 0.0, %v593
      %595 = vmatmul.f32.gmra.mxu0 %v507
      %v596 = vpop.f32.mrf.mxu0
      %v597 = vadd.f32 0.0, %v596
      %598 = vmatmul.f32.gmra.mxu0 %v509
      %v599 = vpop.f32.mrf.mxu0
      %v600 = vadd.f32 0.0, %v599
      %601 = vmatmul.f32.gmra.mxu0 %v511
      %v602 = vpop.f32.mrf.mxu0
      %v603 = vadd.f32 0.0, %v602
      %604 = vmatmul.f32.gmra.mxu0 %v513
      %v605 = vpop.f32.mrf.mxu0
      %v606 = vadd.f32 0.0, %v605
      %607 = vmatmul.f32.gmra.mxu0 %v515
      %v608 = vpop.f32.mrf.mxu0
      %v609 = vadd.f32 0.0, %v608
      %610 = vmatmul.f32.gmra.mxu0 %v517
      %v611 = vpop.f32.mrf.mxu0
      %v612 = vadd.f32 0.0, %v611
      %613 = vmatmul.f32.gmra.mxu0 %v519
      %v614 = vpop.f32.mrf.mxu0
      %v615 = vadd.f32 0.0, %v614
      %616 = vmatmul.f32.gmra.mxu0 %v521
      %v617 = vpop.f32.mrf.mxu0
      %v618 = vadd.f32 0.0, %v617
      %619 = vmatmul.f32.gmra.mxu0 %v523
      %v620 = vpop.f32.mrf.mxu0
      %v621 = vadd.f32 0.0, %v620
      %622 = vmatmul.f32.gmra.mxu0 %v525
      %v623 = vpop.f32.mrf.mxu0
      %v624 = vadd.f32 0.0, %v623
      %625 = vmatmul.f32.gmra.mxu0 %v527
      %v626 = vpop.f32.mrf.mxu0
      %v627 = vadd.f32 0.0, %v626
      %628 = vmatmul.f32.gmra.mxu0 %v529
      %v629 = vpop.f32.mrf.mxu0
      %v630 = vadd.f32 0.0, %v629
      %631 = vmatmul.f32.gmra.mxu0 %v531
      %v632 = vpop.f32.mrf.mxu0
      %v633 = vadd.f32 0.0, %v632
      %634 = vmatmul.f32.gmra.mxu0 %v533
      %v635 = vpop.f32.mrf.mxu0
      %v636 = vadd.f32 0.0, %v635
      %637 = vmatmul.f32.gmra.mxu0 %v535
      %v638 = vpop.f32.mrf.mxu0
      %v639 = vadd.f32 0.0, %v638
      %640 = vmatmul.f32.gmra.mxu0 %v537
      %v641 = vpop.f32.mrf.mxu0
      %v642 = vadd.f32 0.0, %v641
      %643 = vmatmul.f32.gmra.mxu0 %v539
      %v644 = vpop.f32.mrf.mxu0
      %v645 = vadd.f32 0.0, %v644
      %646 = vmatmul.f32.gmra.mxu0 %v541
      %v647 = vpop.f32.mrf.mxu0
      %v648 = vadd.f32 0.0, %v647
      %649 = vmatmul.f32.gmra.mxu0 %v543
      %v650 = vpop.f32.mrf.mxu0
      %v651 = vadd.f32 0.0, %v650
      %652 = vmatmul.f32.gmra.mxu0 %v545
      %v653 = vpop.f32.mrf.mxu0
      %v654 = vadd.f32 0.0, %v653
      %655 = vmatmul.f32.gmra.mxu0 %v547
      %v656 = vpop.f32.mrf.mxu0
      %v657 = vadd.f32 0.0, %v656
      %658 = vmatmul.f32.gmra.mxu0 %v549
      %v659 = vpop.f32.mrf.mxu0
      %v660 = vadd.f32 0.0, %v659
      %661 = vmatmul.f32.gmra.mxu0 %v551
      %v662 = vpop.f32.mrf.mxu0
      %v663 = vadd.f32 0.0, %v662
      %664 = vmatmul.f32.gmra.mxu0 %v553
      %v665 = vpop.f32.mrf.mxu0
      %v666 = vadd.f32 0.0, %v665
      %667 = vmatmul.f32.gmra.mxu0 %v555
      %v668 = vpop.f32.mrf.mxu0
      %v669 = vadd.f32 0.0, %v668
      %670 = vmatmul.f32.gmra.mxu0 %v557
      %v671 = vpop.f32.mrf.mxu0
      %v672 = vadd.f32 0.0, %v671
      %673 = vmatmul.f32.gmra.mxu0 %v559
      %v674 = vpop.f32.mrf.mxu0
      %v675 = vadd.f32 0.0, %v674
      %676 = vmatmul.f32.gmra.mxu0 %v561
      %v677 = vpop.f32.mrf.mxu0
      %v678 = vadd.f32 0.0, %v677
      %679 = vdwg.mxu0
      %v680 = vsel %vm498, %v279, 0
      %v682 = vsel %vm498, %v280, 0
      %v684 = vsel %vm498, %v282, 0
      %v686 = vsel %vm498, %v283, 0
      %v688 = vsel %vm498, %v285, 0
      %v690 = vsel %vm498, %v286, 0
      %v692 = vsel %vm498, %v288, 0
      %v694 = vsel %vm498, %v289, 0
      %v696 = vsel %vm498, %v291, 0
      %v698 = vsel %vm498, %v292, 0
      %v700 = vsel %vm498, %v294, 0
      %v702 = vsel %vm498, %v295, 0
      %v704 = vsel %vm498, %v297, 0
      %v706 = vsel %vm498, %v298, 0
      %v708 = vsel %vm498, %v300, 0
      %v710 = vsel %vm498, %v301, 0
      %v712 = vsel %vm498, %v303, 0
      %v714 = vsel %vm498, %v304, 0
      %v716 = vsel %vm498, %v306, 0
      %v718 = vsel %vm498, %v307, 0
      %v720 = vsel %vm498, %v309, 0
      %v722 = vsel %vm498, %v310, 0
      %v724 = vsel %vm498, %v312, 0
      %v726 = vsel %vm498, %v313, 0
      %v728 = vsel %vm498, %v315, 0
      %v730 = vsel %vm498, %v316, 0
      %v732 = vsel %vm498, %v318, 0
      %v734 = vsel %vm498, %v319, 0
      %v736 = vsel %vm498, %v321, 0
      %v738 = vsel %vm498, %v322, 0
      %v740 = vsel %vm498, %v324, 0
      %v742 = vsel %vm498, %v325, 0
      %v745 = vsel %vm563, %v342, 0
      %747 = vmatpush.msra.mxu0 0.0
      %748 = vmatpush.msra.mxu0 0.0
      %749 = vmatpush.msra.mxu0 0.0
      %750 = vmatpush.msra.mxu0 0.0
      %751 = vmatpush.msra.mxu0 0.0
      %752 = vmatpush.msra.mxu0 0.0
      %753 = vmatpush.msra.mxu0 0.0
      %754 = vmatpush.msra.mxu0 0.0
      %755 = vmatpush.msra.mxu0 0.0
      %756 = vmatpush.msra.mxu0 0.0
      %757 = vmatpush.msra.mxu0 0.0
      %758 = vmatpush.msra.mxu0 0.0
      %759 = vmatpush.msra.mxu0 0.0
      %760 = vmatpush.msra.mxu0 0.0
      %761 = vmatpush.msra.mxu0 0.0
      %762 = vmatpush.msra.mxu0 %v745
      %763 = vmatmul.f32.gmra.mxu0 %v680
      %v764 = vpop.f32.mrf.mxu0
      %v765 = vadd.f32 %v585, %v764
      %766 = vmatmul.f32.gmra.mxu0 %v682
      %v767 = vpop.f32.mrf.mxu0
      %v768 = vadd.f32 %v588, %v767
      %769 = vmatmul.f32.gmra.mxu0 %v684
      %v770 = vpop.f32.mrf.mxu0
      %v771 = vadd.f32 %v591, %v770
      %772 = vmatmul.f32.gmra.mxu0 %v686
      %v773 = vpop.f32.mrf.mxu0
      %v774 = vadd.f32 %v594, %v773
      %775 = vmatmul.f32.gmra.mxu0 %v688
      %v776 = vpop.f32.mrf.mxu0
      %v777 = vadd.f32 %v597, %v776
      %778 = vmatmul.f32.gmra.mxu0 %v690
      %v779 = vpop.f32.mrf.mxu0
      %v780 = vadd.f32 %v600, %v779
      %781 = vmatmul.f32.gmra.mxu0 %v692
      %v782 = vpop.f32.mrf.mxu0
      %v783 = vadd.f32 %v603, %v782
      %784 = vmatmul.f32.gmra.mxu0 %v694
      %v785 = vpop.f32.mrf.mxu0
      %v786 = vadd.f32 %v606, %v785
      %787 = vmatmul.f32.gmra.mxu0 %v696
      %v788 = vpop.f32.mrf.mxu0
      %v789 = vadd.f32 %v609, %v788
      %790 = vmatmul.f32.gmra.mxu0 %v698
      %v791 = vpop.f32.mrf.mxu0
      %v792 = vadd.f32 %v612, %v791
      %793 = vmatmul.f32.gmra.mxu0 %v700
      %v794 = vpop.f32.mrf.mxu0
      %v795 = vadd.f32 %v615, %v794
      %796 = vmatmul.f32.gmra.mxu0 %v702
      %v797 = vpop.f32.mrf.mxu0
      %v798 = vadd.f32 %v618, %v797
      %799 = vmatmul.f32.gmra.mxu0 %v704
      %v800 = vpop.f32.mrf.mxu0
      %v801 = vadd.f32 %v621, %v800
      %802 = vmatmul.f32.gmra.mxu0 %v706
      %v803 = vpop.f32.mrf.mxu0
      %v804 = vadd.f32 %v624, %v803
      %805 = vmatmul.f32.gmra.mxu0 %v708
      %v806 = vpop.f32.mrf.mxu0
      %v807 = vadd.f32 %v627, %v806
      %808 = vmatmul.f32.gmra.mxu0 %v710
      %v809 = vpop.f32.mrf.mxu0
      %v810 = vadd.f32 %v630, %v809
      %811 = vmatmul.f32.gmra.mxu0 %v712
      %v812 = vpop.f32.mrf.mxu0
      %v813 = vadd.f32 %v633, %v812
      %814 = vmatmul.f32.gmra.mxu0 %v714
      %v815 = vpop.f32.mrf.mxu0
      %v816 = vadd.f32 %v636, %v815
      %817 = vmatmul.f32.gmra.mxu0 %v716
      %v818 = vpop.f32.mrf.mxu0
      %v819 = vadd.f32 %v639, %v818
      %820 = vmatmul.f32.gmra.mxu0 %v718
      %v821 = vpop.f32.mrf.mxu0
      %v822 = vadd.f32 %v642, %v821
      %823 = vmatmul.f32.gmra.mxu0 %v720
      %v824 = vpop.f32.mrf.mxu0
      %v825 = vadd.f32 %v645, %v824
      %826 = vmatmul.f32.gmra.mxu0 %v722
      %v827 = vpop.f32.mrf.mxu0
      %v828 = vadd.f32 %v648, %v827
      %829 = vmatmul.f32.gmra.mxu0 %v724
      %v830 = vpop.f32.mrf.mxu0
      %v831 = vadd.f32 %v651, %v830
      %832 = vmatmul.f32.gmra.mxu0 %v726
      %v833 = vpop.f32.mrf.mxu0
      %v834 = vadd.f32 %v654, %v833
      %835 = vmatmul.f32.gmra.mxu0 %v728
      %v836 = vpop.f32.mrf.mxu0
      %v837 = vadd.f32 %v657, %v836
      %838 = vmatmul.f32.gmra.mxu0 %v730
      %v839 = vpop.f32.mrf.mxu0
      %v840 = vadd.f32 %v660, %v839
      %841 = vmatmul.f32.gmra.mxu0 %v732
      %v842 = vpop.f32.mrf.mxu0
      %v843 = vadd.f32 %v663, %v842
      %844 = vmatmul.f32.gmra.mxu0 %v734
      %v845 = vpop.f32.mrf.mxu0
      %v846 = vadd.f32 %v666, %v845
      %847 = vmatmul.f32.gmra.mxu0 %v736
      %v848 = vpop.f32.mrf.mxu0
      %v849 = vadd.f32 %v669, %v848
      %850 = vmatmul.f32.gmra.mxu0 %v738
      %v851 = vpop.f32.mrf.mxu0
      %v852 = vadd.f32 %v672, %v851
      %853 = vmatmul.f32.gmra.mxu0 %v740
      %v854 = vpop.f32.mrf.mxu0
      %v855 = vadd.f32 %v675, %v854
      %856 = vmatmul.f32.gmra.mxu0 %v742
      %v857 = vpop.f32.mrf.mxu0
      %v858 = vadd.f32 %v678, %v857
      %859 = vdwg.mxu0
      %vm860 = vcmask 1045504
      %v861 = vrot.slane %v279, 2
      %v862 = vrot.slane %v280, 2
      %v863 = vsel %vm860, %v861, %v862
      %v864 = vrot.slane %v281, 2
      %v865 = vsel %vm860, %v862, %v864
      %v866 = vrot.slane %v282, 2
      %v867 = vrot.slane %v283, 2
      %v868 = vsel %vm860, %v866, %v867
      %v869 = vrot.slane %v284, 2
      %v870 = vsel %vm860, %v867, %v869
      %v871 = vrot.slane %v285, 2
      %v872 = vrot.slane %v286, 2
      %v873 = vsel %vm860, %v871, %v872
      %v874 = vrot.slane %v287, 2
      %v875 = vsel %vm860, %v872, %v874
      %v876 = vrot.slane %v288, 2
      %v877 = vrot.slane %v289, 2
      %v878 = vsel %vm860, %v876, %v877
      %v879 = vrot.slane %v290, 2
      %v880 = vsel %vm860, %v877, %v879
      %v881 = vrot.slane %v291, 2
      %v882 = vrot.slane %v292, 2
      %v883 = vsel %vm860, %v881, %v882
      %v884 = vrot.slane %v293, 2
      %v885 = vsel %vm860, %v882, %v884
      %v886 = vrot.slane %v294, 2
      %v887 = vrot.slane %v295, 2
      %v888 = vsel %vm860, %v886, %v887
      %v889 = vrot.slane %v296, 2
      %v890 = vsel %vm860, %v887, %v889
      %v891 = vrot.slane %v297, 2
      %v892 = vrot.slane %v298, 2
      %v893 = vsel %vm860, %v891, %v892
      %v894 = vrot.slane %v299, 2
      %v895 = vsel %vm860, %v892, %v894
      %v896 = vrot.slane %v300, 2
      %v897 = vrot.slane %v301, 2
      %v898 = vsel %vm860, %v896, %v897
      %v899 = vrot.slane %v302, 2
      %v900 = vsel %vm860, %v897, %v899
      %v901 = vrot.slane %v303, 2
      %v902 = vrot.slane %v304, 2
      %v903 = vsel %vm860, %v901, %v902
      %v904 = vrot.slane %v305, 2
      %v905 = vsel %vm860, %v902, %v904
      %v906 = vrot.slane %v306, 2
      %v907 = vrot.slane %v307, 2
      %v908 = vsel %vm860, %v906, %v907
      %v909 = vrot.slane %v308, 2
      %v910 = vsel %vm860, %v907, %v909
      %v911 = vrot.slane %v309, 2
      %v912 = vrot.slane %v310, 2
      %v913 = vsel %vm860, %v911, %v912
      %v914 = vrot.slane %v311, 2
      %v915 = vsel %vm860, %v912, %v914
      %v916 = vrot.slane %v312, 2
      %v917 = vrot.slane %v313, 2
      %v918 = vsel %vm860, %v916, %v917
      %v919 = vrot.slane %v314, 2
      %v920 = vsel %vm860, %v917, %v919
      %v921 = vrot.slane %v315, 2
      %v922 = vrot.slane %v316, 2
      %v923 = vsel %vm860, %v921, %v922
      %v924 = vrot.slane %v317, 2
      %v925 = vsel %vm860, %v922, %v924
      %v926 = vrot.slane %v318, 2
      %v927 = vrot.slane %v319, 2
      %v928 = vsel %vm860, %v926, %v927
      %v929 = vrot.slane %v320, 2
      %v930 = vsel %vm860, %v927, %v929
      %v931 = vrot.slane %v321, 2
      %v932 = vrot.slane %v322, 2
      %v933 = vsel %vm860, %v931, %v932
      %v934 = vrot.slane %v323, 2
      %v935 = vsel %vm860, %v932, %v934
      %v936 = vrot.slane %v324, 2
      %v937 = vrot.slane %v325, 2
      %v938 = vsel %vm860, %v936, %v937
      %v939 = vrot.slane %v326, 2
      %v940 = vsel %vm860, %v937, %v939
      %v941 = vsel %vm498, %v863, 0
      %v943 = vsel %vm498, %v865, 0
      %v945 = vsel %vm498, %v868, 0
      %v947 = vsel %vm498, %v870, 0
      %v949 = vsel %vm498, %v873, 0
      %v951 = vsel %vm498, %v875, 0
      %v953 = vsel %vm498, %v878, 0
      %v955 = vsel %vm498, %v880, 0
      %v957 = vsel %vm498, %v883, 0
      %v959 = vsel %vm498, %v885, 0
      %v961 = vsel %vm498, %v888, 0
      %v963 = vsel %vm498, %v890, 0
      %v965 = vsel %vm498, %v893, 0
      %v967 = vsel %vm498, %v895, 0
      %v969 = vsel %vm498, %v898, 0
      %v971 = vsel %vm498, %v900, 0
      %v973 = vsel %vm498, %v903, 0
      %v975 = vsel %vm498, %v905, 0
      %v977 = vsel %vm498, %v908, 0
      %v979 = vsel %vm498, %v910, 0
      %v981 = vsel %vm498, %v913, 0
      %v983 = vsel %vm498, %v915, 0
      %v985 = vsel %vm498, %v918, 0
      %v987 = vsel %vm498, %v920, 0
      %v989 = vsel %vm498, %v923, 0
      %v991 = vsel %vm498, %v925, 0
      %v993 = vsel %vm498, %v928, 0
      %v995 = vsel %vm498, %v930, 0
      %v997 = vsel %vm498, %v933, 0
      %v999 = vsel %vm498, %v935, 0
      %v1001 = vsel %vm498, %v938, 0
      %v1003 = vsel %vm498, %v940, 0
      %v1006 = vsel %vm563, %v344, 0
      %1008 = vmatpush.msra.mxu0 0.0
      %1009 = vmatpush.msra.mxu0 0.0
      %1010 = vmatpush.msra.mxu0 0.0
      %1011 = vmatpush.msra.mxu0 0.0
      %1012 = vmatpush.msra.mxu0 0.0
      %1013 = vmatpush.msra.mxu0 0.0
      %1014 = vmatpush.msra.mxu0 0.0
      %1015 = vmatpush.msra.mxu0 0.0
      %1016 = vmatpush.msra.mxu0 0.0
      %1017 = vmatpush.msra.mxu0 0.0
      %1018 = vmatpush.msra.mxu0 0.0
      %1019 = vmatpush.msra.mxu0 0.0
      %1020 = vmatpush.msra.mxu0 0.0
      %1021 = vmatpush.msra.mxu0 0.0
      %1022 = vmatpush.msra.mxu0 0.0
      %1023 = vmatpush.msra.mxu0 %v1006
      %1024 = vmatmul.f32.gmra.mxu0 %v941
      %v1025 = vpop.f32.mrf.mxu0
      %v1026 = vadd.f32 0.0, %v1025
      %1027 = vmatmul.f32.gmra.mxu0 %v943
      %v1028 = vpop.f32.mrf.mxu0
      %v1029 = vadd.f32 0.0, %v1028
      %1030 = vmatmul.f32.gmra.mxu0 %v945
      %v1031 = vpop.f32.mrf.mxu0
      %v1032 = vadd.f32 0.0, %v1031
      %1033 = vmatmul.f32.gmra.mxu0 %v947
      %v1034 = vpop.f32.mrf.mxu0
      %v1035 = vadd.f32 0.0, %v1034
      %1036 = vmatmul.f32.gmra.mxu0 %v949
      %v1037 = vpop.f32.mrf.mxu0
      %v1038 = vadd.f32 0.0, %v1037
      %1039 = vmatmul.f32.gmra.mxu0 %v951
      %v1040 = vpop.f32.mrf.mxu0
      %v1041 = vadd.f32 0.0, %v1040
      %1042 = vmatmul.f32.gmra.mxu0 %v953
      %v1043 = vpop.f32.mrf.mxu0
      %v1044 = vadd.f32 0.0, %v1043
      %1045 = vmatmul.f32.gmra.mxu0 %v955
      %v1046 = vpop.f32.mrf.mxu0
      %v1047 = vadd.f32 0.0, %v1046
      %1048 = vmatmul.f32.gmra.mxu0 %v957
      %v1049 = vpop.f32.mrf.mxu0
      %v1050 = vadd.f32 0.0, %v1049
      %1051 = vmatmul.f32.gmra.mxu0 %v959
      %v1052 = vpop.f32.mrf.mxu0
      %v1053 = vadd.f32 0.0, %v1052
      %1054 = vmatmul.f32.gmra.mxu0 %v961
      %v1055 = vpop.f32.mrf.mxu0
      %v1056 = vadd.f32 0.0, %v1055
      %1057 = vmatmul.f32.gmra.mxu0 %v963
      %v1058 = vpop.f32.mrf.mxu0
      %v1059 = vadd.f32 0.0, %v1058
      %1060 = vmatmul.f32.gmra.mxu0 %v965
      %v1061 = vpop.f32.mrf.mxu0
      %v1062 = vadd.f32 0.0, %v1061
      %1063 = vmatmul.f32.gmra.mxu0 %v967
      %v1064 = vpop.f32.mrf.mxu0
      %v1065 = vadd.f32 0.0, %v1064
      %1066 = vmatmul.f32.gmra.mxu0 %v969
      %v1067 = vpop.f32.mrf.mxu0
      %v1068 = vadd.f32 0.0, %v1067
      %1069 = vmatmul.f32.gmra.mxu0 %v971
      %v1070 = vpop.f32.mrf.mxu0
      %v1071 = vadd.f32 0.0, %v1070
      %1072 = vmatmul.f32.gmra.mxu0 %v973
      %v1073 = vpop.f32.mrf.mxu0
      %v1074 = vadd.f32 0.0, %v1073
      %1075 = vmatmul.f32.gmra.mxu0 %v975
      %v1076 = vpop.f32.mrf.mxu0
      %v1077 = vadd.f32 0.0, %v1076
      %1078 = vmatmul.f32.gmra.mxu0 %v977
      %v1079 = vpop.f32.mrf.mxu0
      %v1080 = vadd.f32 0.0, %v1079
      %1081 = vmatmul.f32.gmra.mxu0 %v979
      %v1082 = vpop.f32.mrf.mxu0
      %v1083 = vadd.f32 0.0, %v1082
      %1084 = vmatmul.f32.gmra.mxu0 %v981
      %v1085 = vpop.f32.mrf.mxu0
      %v1086 = vadd.f32 0.0, %v1085
      %1087 = vmatmul.f32.gmra.mxu0 %v983
      %v1088 = vpop.f32.mrf.mxu0
      %v1089 = vadd.f32 0.0, %v1088
      %1090 = vmatmul.f32.gmra.mxu0 %v985
      %v1091 = vpop.f32.mrf.mxu0
      %v1092 = vadd.f32 0.0, %v1091
      %1093 = vmatmul.f32.gmra.mxu0 %v987
      %v1094 = vpop.f32.mrf.mxu0
      %v1095 = vadd.f32 0.0, %v1094
      %1096 = vmatmul.f32.gmra.mxu0 %v989
      %v1097 = vpop.f32.mrf.mxu0
      %v1098 = vadd.f32 0.0, %v1097
      %1099 = vmatmul.f32.gmra.mxu0 %v991
      %v1100 = vpop.f32.mrf.mxu0
      %v1101 = vadd.f32 0.0, %v1100
      %1102 = vmatmul.f32.gmra.mxu0 %v993
      %v1103 = vpop.f32.mrf.mxu0
      %v1104 = vadd.f32 0.0, %v1103
      %1105 = vmatmul.f32.gmra.mxu0 %v995
      %v1106 = vpop.f32.mrf.mxu0
      %v1107 = vadd.f32 0.0, %v1106
      %1108 = vmatmul.f32.gmra.mxu0 %v997
      %v1109 = vpop.f32.mrf.mxu0
      %v1110 = vadd.f32 0.0, %v1109
      %1111 = vmatmul.f32.gmra.mxu0 %v999
      %v1112 = vpop.f32.mrf.mxu0
      %v1113 = vadd.f32 0.0, %v1112
      %1114 = vmatmul.f32.gmra.mxu0 %v1001
      %v1115 = vpop.f32.mrf.mxu0
      %v1116 = vadd.f32 0.0, %v1115
      %1117 = vmatmul.f32.gmra.mxu0 %v1003
      %v1118 = vpop.f32.mrf.mxu0
      %v1119 = vadd.f32 0.0, %v1118
      %1120 = vdwg.mxu0
      %v1121 = vadd.f32 %v765, %v1026
      %v1122 = vadd.f32 %v768, %v1029
      %v1123 = vadd.f32 %v771, %v1032
      %v1124 = vadd.f32 %v774, %v1035
      %v1125 = vadd.f32 %v777, %v1038
      %v1126 = vadd.f32 %v780, %v1041
      %v1127 = vadd.f32 %v783, %v1044
      %v1128 = vadd.f32 %v786, %v1047
      %v1129 = vadd.f32 %v789, %v1050
      %v1130 = vadd.f32 %v792, %v1053
      %v1131 = vadd.f32 %v795, %v1056
      %v1132 = vadd.f32 %v798, %v1059
      %v1133 = vadd.f32 %v801, %v1062
      %v1134 = vadd.f32 %v804, %v1065
      %v1135 = vadd.f32 %v807, %v1068
      %v1136 = vadd.f32 %v810, %v1071
      %v1137 = vadd.f32 %v813, %v1074
      %v1138 = vadd.f32 %v816, %v1077
      %v1139 = vadd.f32 %v819, %v1080
      %v1140 = vadd.f32 %v822, %v1083
      %v1141 = vadd.f32 %v825, %v1086
      %v1142 = vadd.f32 %v828, %v1089
      %v1143 = vadd.f32 %v831, %v1092
      %v1144 = vadd.f32 %v834, %v1095
      %v1145 = vadd.f32 %v837, %v1098
      %v1146 = vadd.f32 %v840, %v1101
      %v1147 = vadd.f32 %v843, %v1104
      %v1148 = vadd.f32 %v846, %v1107
      %v1149 = vadd.f32 %v849, %v1110
      %v1150 = vadd.f32 %v852, %v1113
      %v1151 = vadd.f32 %v855, %v1116
      %v1152 = vadd.f32 %v858, %v1119
      %v1154 = vsel %vm498, %v327, 0
      %v1157 = vsel %vm498, %v328, 0
      %v1160 = vsel %vm563, %v345, 0
      %1162 = vmatpush.msra.mxu0 0.0
      %1163 = vmatpush.msra.mxu0 0.0
      %1164 = vmatpush.msra.mxu0 0.0
      %1165 = vmatpush.msra.mxu0 0.0
      %1166 = vmatpush.msra.mxu0 0.0
      %1167 = vmatpush.msra.mxu0 0.0
      %1168 = vmatpush.msra.mxu0 0.0
      %1169 = vmatpush.msra.mxu0 0.0
      %1170 = vmatpush.msra.mxu0 0.0
      %1171 = vmatpush.msra.mxu0 0.0
      %1172 = vmatpush.msra.mxu0 0.0
      %1173 = vmatpush.msra.mxu0 0.0
      %1174 = vmatpush.msra.mxu0 0.0
      %1175 = vmatpush.msra.mxu0 0.0
      %1176 = vmatpush.msra.mxu0 0.0
      %1177 = vmatpush.msra.mxu0 %v1160
      %1178 = vmatmul.f32.gmra.mxu0 %v684
      %v1179 = vpop.f32.mrf.mxu0
      %v1180 = vadd.f32 0.0, %v1179
      %1181 = vmatmul.f32.gmra.mxu0 %v686
      %v1182 = vpop.f32.mrf.mxu0
      %v1183 = vadd.f32 0.0, %v1182
      %1184 = vmatmul.f32.gmra.mxu0 %v688
      %v1185 = vpop.f32.mrf.mxu0
      %v1186 = vadd.f32 0.0, %v1185
      %1187 = vmatmul.f32.gmra.mxu0 %v690
      %v1188 = vpop.f32.mrf.mxu0
      %v1189 = vadd.f32 0.0, %v1188
      %1190 = vmatmul.f32.gmra.mxu0 %v692
      %v1191 = vpop.f32.mrf.mxu0
      %v1192 = vadd.f32 0.0, %v1191
      %1193 = vmatmul.f32.gmra.mxu0 %v694
      %v1194 = vpop.f32.mrf.mxu0
      %v1195 = vadd.f32 0.0, %v1194
      %1196 = vmatmul.f32.gmra.mxu0 %v696
      %v1197 = vpop.f32.mrf.mxu0
      %v1198 = vadd.f32 0.0, %v1197
      %1199 = vmatmul.f32.gmra.mxu0 %v698
      %v1200 = vpop.f32.mrf.mxu0
      %v1201 = vadd.f32 0.0, %v1200
      %1202 = vmatmul.f32.gmra.mxu0 %v700
      %v1203 = vpop.f32.mrf.mxu0
      %v1204 = vadd.f32 0.0, %v1203
      %1205 = vmatmul.f32.gmra.mxu0 %v702
      %v1206 = vpop.f32.mrf.mxu0
      %v1207 = vadd.f32 0.0, %v1206
      %1208 = vmatmul.f32.gmra.mxu0 %v704
      %v1209 = vpop.f32.mrf.mxu0
      %v1210 = vadd.f32 0.0, %v1209
      %1211 = vmatmul.f32.gmra.mxu0 %v706
      %v1212 = vpop.f32.mrf.mxu0
      %v1213 = vadd.f32 0.0, %v1212
      %1214 = vmatmul.f32.gmra.mxu0 %v708
      %v1215 = vpop.f32.mrf.mxu0
      %v1216 = vadd.f32 0.0, %v1215
      %1217 = vmatmul.f32.gmra.mxu0 %v710
      %v1218 = vpop.f32.mrf.mxu0
      %v1219 = vadd.f32 0.0, %v1218
      %1220 = vmatmul.f32.gmra.mxu0 %v712
      %v1221 = vpop.f32.mrf.mxu0
      %v1222 = vadd.f32 0.0, %v1221
      %1223 = vmatmul.f32.gmra.mxu0 %v714
      %v1224 = vpop.f32.mrf.mxu0
      %v1225 = vadd.f32 0.0, %v1224
      %1226 = vmatmul.f32.gmra.mxu0 %v716
      %v1227 = vpop.f32.mrf.mxu0
      %v1228 = vadd.f32 0.0, %v1227
      %1229 = vmatmul.f32.gmra.mxu0 %v718
      %v1230 = vpop.f32.mrf.mxu0
      %v1231 = vadd.f32 0.0, %v1230
      %1232 = vmatmul.f32.gmra.mxu0 %v720
      %v1233 = vpop.f32.mrf.mxu0
      %v1234 = vadd.f32 0.0, %v1233
      %1235 = vmatmul.f32.gmra.mxu0 %v722
      %v1236 = vpop.f32.mrf.mxu0
      %v1237 = vadd.f32 0.0, %v1236
      %1238 = vmatmul.f32.gmra.mxu0 %v724
      %v1239 = vpop.f32.mrf.mxu0
      %v1240 = vadd.f32 0.0, %v1239
      %1241 = vmatmul.f32.gmra.mxu0 %v726
      %v1242 = vpop.f32.mrf.mxu0
      %v1243 = vadd.f32 0.0, %v1242
      %1244 = vmatmul.f32.gmra.mxu0 %v728
      %v1245 = vpop.f32.mrf.mxu0
      %v1246 = vadd.f32 0.0, %v1245
      %1247 = vmatmul.f32.gmra.mxu0 %v730
      %v1248 = vpop.f32.mrf.mxu0
      %v1249 = vadd.f32 0.0, %v1248
      %1250 = vmatmul.f32.gmra.mxu0 %v732
      %v1251 = vpop.f32.mrf.mxu0
      %v1252 = vadd.f32 0.0, %v1251
      %1253 = vmatmul.f32.gmra.mxu0 %v734
      %v1254 = vpop.f32.mrf.mxu0
      %v1255 = vadd.f32 0.0, %v1254
      %1256 = vmatmul.f32.gmra.mxu0 %v736
      %v1257 = vpop.f32.mrf.mxu0
      %v1258 = vadd.f32 0.0, %v1257
      %1259 = vmatmul.f32.gmra.mxu0 %v738
      %v1260 = vpop.f32.mrf.mxu0
      %v1261 = vadd.f32 0.0, %v1260
      %1262 = vmatmul.f32.gmra.mxu0 %v740
      %v1263 = vpop.f32.mrf.mxu0
      %v1264 = vadd.f32 0.0, %v1263
      %1265 = vmatmul.f32.gmra.mxu0 %v742
      %v1266 = vpop.f32.mrf.mxu0
      %v1267 = vadd.f32 0.0, %v1266
      %1268 = vmatmul.f32.gmra.mxu0 %v1154
      %v1269 = vpop.f32.mrf.mxu0
      %v1270 = vadd.f32 0.0, %v1269
      %1271 = vmatmul.f32.gmra.mxu0 %v1157
      %v1272 = vpop.f32.mrf.mxu0
      %v1273 = vadd.f32 0.0, %v1272
      %1274 = vdwg.mxu0
      %v1275 = vadd.f32 %v1121, %v1180
      %v1276 = vadd.f32 %v1122, %v1183
      %v1277 = vadd.f32 %v1123, %v1186
      %v1278 = vadd.f32 %v1124, %v1189
      %v1279 = vadd.f32 %v1125, %v1192
      %v1280 = vadd.f32 %v1126, %v1195
      %v1281 = vadd.f32 %v1127, %v1198
      %v1282 = vadd.f32 %v1128, %v1201
      %v1283 = vadd.f32 %v1129, %v1204
      %v1284 = vadd.f32 %v1130, %v1207
      %v1285 = vadd.f32 %v1131, %v1210
      %v1286 = vadd.f32 %v1132, %v1213
      %v1287 = vadd.f32 %v1133, %v1216
      %v1288 = vadd.f32 %v1134, %v1219
      %v1289 = vadd.f32 %v1135, %v1222
      %v1290 = vadd.f32 %v1136, %v1225
      %v1291 = vadd.f32 %v1137, %v1228
      %v1292 = vadd.f32 %v1138, %v1231
      %v1293 = vadd.f32 %v1139, %v1234
      %v1294 = vadd.f32 %v1140, %v1237
      %v1295 = vadd.f32 %v1141, %v1240
      %v1296 = vadd.f32 %v1142, %v1243
      %v1297 = vadd.f32 %v1143, %v1246
      %v1298 = vadd.f32 %v1144, %v1249
      %v1299 = vadd.f32 %v1145, %v1252
      %v1300 = vadd.f32 %v1146, %v1255
      %v1301 = vadd.f32 %v1147, %v1258
      %v1302 = vadd.f32 %v1148, %v1261
      %v1303 = vadd.f32 %v1149, %v1264
      %v1304 = vadd.f32 %v1150, %v1267
      %v1305 = vadd.f32 %v1151, %v1270
      %v1306 = vadd.f32 %v1152, %v1273
      %v1308 = vrot.slane %v327, 1
      %v1309 = vrot.slane %v328, 1
      %v1310 = vsel %vm417, %v1308, %v1309
      %v1311 = vrot.slane %v329, 1
      %v1312 = vsel %vm417, %v1309, %v1311
      %v1345 = vsel %vm498, %v1310, 0
      %v1347 = vsel %vm498, %v1312, 0
      %v1350 = vsel %vm563, %v346, 0
      %1352 = vmatpush.msra.mxu0 0.0
      %1353 = vmatpush.msra.mxu0 0.0
      %1354 = vmatpush.msra.mxu0 0.0
      %1355 = vmatpush.msra.mxu0 0.0
      %1356 = vmatpush.msra.mxu0 0.0
      %1357 = vmatpush.msra.mxu0 0.0
      %1358 = vmatpush.msra.mxu0 0.0
      %1359 = vmatpush.msra.mxu0 0.0
      %1360 = vmatpush.msra.mxu0 0.0
      %1361 = vmatpush.msra.mxu0 0.0
      %1362 = vmatpush.msra.mxu0 0.0
      %1363 = vmatpush.msra.mxu0 0.0
      %1364 = vmatpush.msra.mxu0 0.0
      %1365 = vmatpush.msra.mxu0 0.0
      %1366 = vmatpush.msra.mxu0 0.0
      %1367 = vmatpush.msra.mxu0 %v1350
      %1368 = vmatmul.f32.gmra.mxu0 %v503
      %v1369 = vpop.f32.mrf.mxu0
      %v1370 = vadd.f32 0.0, %v1369
      %1371 = vmatmul.f32.gmra.mxu0 %v505
      %v1372 = vpop.f32.mrf.mxu0
      %v1373 = vadd.f32 0.0, %v1372
      %1374 = vmatmul.f32.gmra.mxu0 %v507
      %v1375 = vpop.f32.mrf.mxu0
      %v1376 = vadd.f32 0.0, %v1375
      %1377 = vmatmul.f32.gmra.mxu0 %v509
      %v1378 = vpop.f32.mrf.mxu0
      %v1379 = vadd.f32 0.0, %v1378
      %1380 = vmatmul.f32.gmra.mxu0 %v511
      %v1381 = vpop.f32.mrf.mxu0
      %v1382 = vadd.f32 0.0, %v1381
      %1383 = vmatmul.f32.gmra.mxu0 %v513
      %v1384 = vpop.f32.mrf.mxu0
      %v1385 = vadd.f32 0.0, %v1384
      %1386 = vmatmul.f32.gmra.mxu0 %v515
      %v1387 = vpop.f32.mrf.mxu0
      %v1388 = vadd.f32 0.0, %v1387
      %1389 = vmatmul.f32.gmra.mxu0 %v517
      %v1390 = vpop.f32.mrf.mxu0
      %v1391 = vadd.f32 0.0, %v1390
      %1392 = vmatmul.f32.gmra.mxu0 %v519
      %v1393 = vpop.f32.mrf.mxu0
      %v1394 = vadd.f32 0.0, %v1393
      %1395 = vmatmul.f32.gmra.mxu0 %v521
      %v1396 = vpop.f32.mrf.mxu0
      %v1397 = vadd.f32 0.0, %v1396
      %1398 = vmatmul.f32.gmra.mxu0 %v523
      %v1399 = vpop.f32.mrf.mxu0
      %v1400 = vadd.f32 0.0, %v1399
      %1401 = vmatmul.f32.gmra.mxu0 %v525
      %v1402 = vpop.f32.mrf.mxu0
      %v1403 = vadd.f32 0.0, %v1402
      %1404 = vmatmul.f32.gmra.mxu0 %v527
      %v1405 = vpop.f32.mrf.mxu0
      %v1406 = vadd.f32 0.0, %v1405
      %1407 = vmatmul.f32.gmra.mxu0 %v529
      %v1408 = vpop.f32.mrf.mxu0
      %v1409 = vadd.f32 0.0, %v1408
      %1410 = vmatmul.f32.gmra.mxu0 %v531
      %v1411 = vpop.f32.mrf.mxu0
      %v1412 = vadd.f32 0.0, %v1411
      %1413 = vmatmul.f32.gmra.mxu0 %v533
      %v1414 = vpop.f32.mrf.mxu0
      %v1415 = vadd.f32 0.0, %v1414
      %1416 = vmatmul.f32.gmra.mxu0 %v535
      %v1417 = vpop.f32.mrf.mxu0
      %v1418 = vadd.f32 0.0, %v1417
      %1419 = vmatmul.f32.gmra.mxu0 %v537
      %v1420 = vpop.f32.mrf.mxu0
      %v1421 = vadd.f32 0.0, %v1420
      %1422 = vmatmul.f32.gmra.mxu0 %v539
      %v1423 = vpop.f32.mrf.mxu0
      %v1424 = vadd.f32 0.0, %v1423
      %1425 = vmatmul.f32.gmra.mxu0 %v541
      %v1426 = vpop.f32.mrf.mxu0
      %v1427 = vadd.f32 0.0, %v1426
      %1428 = vmatmul.f32.gmra.mxu0 %v543
      %v1429 = vpop.f32.mrf.mxu0
      %v1430 = vadd.f32 0.0, %v1429
      %1431 = vmatmul.f32.gmra.mxu0 %v545
      %v1432 = vpop.f32.mrf.mxu0
      %v1433 = vadd.f32 0.0, %v1432
      %1434 = vmatmul.f32.gmra.mxu0 %v547
      %v1435 = vpop.f32.mrf.mxu0
      %v1436 = vadd.f32 0.0, %v1435
      %1437 = vmatmul.f32.gmra.mxu0 %v549
      %v1438 = vpop.f32.mrf.mxu0
      %v1439 = vadd.f32 0.0, %v1438
      %1440 = vmatmul.f32.gmra.mxu0 %v551
      %v1441 = vpop.f32.mrf.mxu0
      %v1442 = vadd.f32 0.0, %v1441
      %1443 = vmatmul.f32.gmra.mxu0 %v553
      %v1444 = vpop.f32.mrf.mxu0
      %v1445 = vadd.f32 0.0, %v1444
      %1446 = vmatmul.f32.gmra.mxu0 %v555
      %v1447 = vpop.f32.mrf.mxu0
      %v1448 = vadd.f32 0.0, %v1447
      %1449 = vmatmul.f32.gmra.mxu0 %v557
      %v1450 = vpop.f32.mrf.mxu0
      %v1451 = vadd.f32 0.0, %v1450
      %1452 = vmatmul.f32.gmra.mxu0 %v559
      %v1453 = vpop.f32.mrf.mxu0
      %v1454 = vadd.f32 0.0, %v1453
      %1455 = vmatmul.f32.gmra.mxu0 %v561
      %v1456 = vpop.f32.mrf.mxu0
      %v1457 = vadd.f32 0.0, %v1456
      %1458 = vmatmul.f32.gmra.mxu0 %v1345
      %v1459 = vpop.f32.mrf.mxu0
      %v1460 = vadd.f32 0.0, %v1459
      %1461 = vmatmul.f32.gmra.mxu0 %v1347
      %v1462 = vpop.f32.mrf.mxu0
      %v1463 = vadd.f32 0.0, %v1462
      %1464 = vdwg.mxu0
      %v1465 = vadd.f32 %v1275, %v1370
      %v1466 = vadd.f32 %v1276, %v1373
      %v1467 = vadd.f32 %v1277, %v1376
      %v1468 = vadd.f32 %v1278, %v1379
      %v1469 = vadd.f32 %v1279, %v1382
      %v1470 = vadd.f32 %v1280, %v1385
      %v1471 = vadd.f32 %v1281, %v1388
      %v1472 = vadd.f32 %v1282, %v1391
      %v1473 = vadd.f32 %v1283, %v1394
      %v1474 = vadd.f32 %v1284, %v1397
      %v1475 = vadd.f32 %v1285, %v1400
      %v1476 = vadd.f32 %v1286, %v1403
      %v1477 = vadd.f32 %v1287, %v1406
      %v1478 = vadd.f32 %v1288, %v1409
      %v1479 = vadd.f32 %v1289, %v1412
      %v1480 = vadd.f32 %v1290, %v1415
      %v1481 = vadd.f32 %v1291, %v1418
      %v1482 = vadd.f32 %v1292, %v1421
      %v1483 = vadd.f32 %v1293, %v1424
      %v1484 = vadd.f32 %v1294, %v1427
      %v1485 = vadd.f32 %v1295, %v1430
      %v1486 = vadd.f32 %v1296, %v1433
      %v1487 = vadd.f32 %v1297, %v1436
      %v1488 = vadd.f32 %v1298, %v1439
      %v1489 = vadd.f32 %v1299, %v1442
      %v1490 = vadd.f32 %v1300, %v1445
      %v1491 = vadd.f32 %v1301, %v1448
      %v1492 = vadd.f32 %v1302, %v1451
      %v1493 = vadd.f32 %v1303, %v1454
      %v1494 = vadd.f32 %v1304, %v1457
      %v1495 = vadd.f32 %v1305, %v1460
      %v1496 = vadd.f32 %v1306, %v1463
      %v1497 = vrot.slane %v327, 2
      %v1498 = vrot.slane %v328, 2
      %v1499 = vsel %vm860, %v1497, %v1498
      %v1500 = vrot.slane %v329, 2
      %v1501 = vsel %vm860, %v1498, %v1500
      %v1502 = vsel %vm498, %v1499, 0
      %v1504 = vsel %vm498, %v1501, 0
      %v1507 = vsel %vm563, %v347, 0
      %1509 = vmatpush.msra.mxu0 0.0
      %1510 = vmatpush.msra.mxu0 0.0
      %1511 = vmatpush.msra.mxu0 0.0
      %1512 = vmatpush.msra.mxu0 0.0
      %1513 = vmatpush.msra.mxu0 0.0
      %1514 = vmatpush.msra.mxu0 0.0
      %1515 = vmatpush.msra.mxu0 0.0
      %1516 = vmatpush.msra.mxu0 0.0
      %1517 = vmatpush.msra.mxu0 0.0
      %1518 = vmatpush.msra.mxu0 0.0
      %1519 = vmatpush.msra.mxu0 0.0
      %1520 = vmatpush.msra.mxu0 0.0
      %1521 = vmatpush.msra.mxu0 0.0
      %1522 = vmatpush.msra.mxu0 0.0
      %1523 = vmatpush.msra.mxu0 0.0
      %1524 = vmatpush.msra.mxu0 %v1507
      %1525 = vmatmul.f32.gmra.mxu0 %v945
      %v1526 = vpop.f32.mrf.mxu0
      %v1527 = vadd.f32 0.0, %v1526
      %1528 = vmatmul.f32.gmra.mxu0 %v947
      %v1529 = vpop.f32.mrf.mxu0
      %v1530 = vadd.f32 0.0, %v1529
      %1531 = vmatmul.f32.gmra.mxu0 %v949
      %v1532 = vpop.f32.mrf.mxu0
      %v1533 = vadd.f32 0.0, %v1532
      %1534 = vmatmul.f32.gmra.mxu0 %v951
      %v1535 = vpop.f32.mrf.mxu0
      %v1536 = vadd.f32 0.0, %v1535
      %1537 = vmatmul.f32.gmra.mxu0 %v953
      %v1538 = vpop.f32.mrf.mxu0
      %v1539 = vadd.f32 0.0, %v1538
      %1540 = vmatmul.f32.gmra.mxu0 %v955
      %v1541 = vpop.f32.mrf.mxu0
      %v1542 = vadd.f32 0.0, %v1541
      %1543 = vmatmul.f32.gmra.mxu0 %v957
      %v1544 = vpop.f32.mrf.mxu0
      %v1545 = vadd.f32 0.0, %v1544
      %1546 = vmatmul.f32.gmra.mxu0 %v959
      %v1547 = vpop.f32.mrf.mxu0
      %v1548 = vadd.f32 0.0, %v1547
      %1549 = vmatmul.f32.gmra.mxu0 %v961
      %v1550 = vpop.f32.mrf.mxu0
      %v1551 = vadd.f32 0.0, %v1550
      %1552 = vmatmul.f32.gmra.mxu0 %v963
      %v1553 = vpop.f32.mrf.mxu0
      %v1554 = vadd.f32 0.0, %v1553
      %1555 = vmatmul.f32.gmra.mxu0 %v965
      %v1556 = vpop.f32.mrf.mxu0
      %v1557 = vadd.f32 0.0, %v1556
      %1558 = vmatmul.f32.gmra.mxu0 %v967
      %v1559 = vpop.f32.mrf.mxu0
      %v1560 = vadd.f32 0.0, %v1559
      %1561 = vmatmul.f32.gmra.mxu0 %v969
      %v1562 = vpop.f32.mrf.mxu0
      %v1563 = vadd.f32 0.0, %v1562
      %1564 = vmatmul.f32.gmra.mxu0 %v971
      %v1565 = vpop.f32.mrf.mxu0
      %v1566 = vadd.f32 0.0, %v1565
      %1567 = vmatmul.f32.gmra.mxu0 %v973
      %v1568 = vpop.f32.mrf.mxu0
      %v1569 = vadd.f32 0.0, %v1568
      %1570 = vmatmul.f32.gmra.mxu0 %v975
      %v1571 = vpop.f32.mrf.mxu0
      %v1572 = vadd.f32 0.0, %v1571
      %1573 = vmatmul.f32.gmra.mxu0 %v977
      %v1574 = vpop.f32.mrf.mxu0
      %v1575 = vadd.f32 0.0, %v1574
      %1576 = vmatmul.f32.gmra.mxu0 %v979
      %v1577 = vpop.f32.mrf.mxu0
      %v1578 = vadd.f32 0.0, %v1577
      %1579 = vmatmul.f32.gmra.mxu0 %v981
      %v1580 = vpop.f32.mrf.mxu0
      %v1581 = vadd.f32 0.0, %v1580
      %1582 = vmatmul.f32.gmra.mxu0 %v983
      %v1583 = vpop.f32.mrf.mxu0
      %v1584 = vadd.f32 0.0, %v1583
      %1585 = vmatmul.f32.gmra.mxu0 %v985
      %v1586 = vpop.f32.mrf.mxu0
      %v1587 = vadd.f32 0.0, %v1586
      %1588 = vmatmul.f32.gmra.mxu0 %v987
      %v1589 = vpop.f32.mrf.mxu0
      %v1590 = vadd.f32 0.0, %v1589
      %1591 = vmatmul.f32.gmra.mxu0 %v989
      %v1592 = vpop.f32.mrf.mxu0
      %v1593 = vadd.f32 0.0, %v1592
      %1594 = vmatmul.f32.gmra.mxu0 %v991
      %v1595 = vpop.f32.mrf.mxu0
      %v1596 = vadd.f32 0.0, %v1595
      %1597 = vmatmul.f32.gmra.mxu0 %v993
      %v1598 = vpop.f32.mrf.mxu0
      %v1599 = vadd.f32 0.0, %v1598
      %1600 = vmatmul.f32.gmra.mxu0 %v995
      %v1601 = vpop.f32.mrf.mxu0
      %v1602 = vadd.f32 0.0, %v1601
      %1603 = vmatmul.f32.gmra.mxu0 %v997
      %v1604 = vpop.f32.mrf.mxu0
      %v1605 = vadd.f32 0.0, %v1604
      %1606 = vmatmul.f32.gmra.mxu0 %v999
      %v1607 = vpop.f32.mrf.mxu0
      %v1608 = vadd.f32 0.0, %v1607
      %1609 = vmatmul.f32.gmra.mxu0 %v1001
      %v1610 = vpop.f32.mrf.mxu0
      %v1611 = vadd.f32 0.0, %v1610
      %1612 = vmatmul.f32.gmra.mxu0 %v1003
      %v1613 = vpop.f32.mrf.mxu0
      %v1614 = vadd.f32 0.0, %v1613
      %1615 = vmatmul.f32.gmra.mxu0 %v1502
      %v1616 = vpop.f32.mrf.mxu0
      %v1617 = vadd.f32 0.0, %v1616
      %1618 = vmatmul.f32.gmra.mxu0 %v1504
      %v1619 = vpop.f32.mrf.mxu0
      %v1620 = vadd.f32 0.0, %v1619
      %1621 = vdwg.mxu0
      %v1622 = vadd.f32 %v1465, %v1527
      %v1623 = vadd.f32 %v1466, %v1530
      %v1624 = vadd.f32 %v1467, %v1533
      %v1625 = vadd.f32 %v1468, %v1536
      %v1626 = vadd.f32 %v1469, %v1539
      %v1627 = vadd.f32 %v1470, %v1542
      %v1628 = vadd.f32 %v1471, %v1545
      %v1629 = vadd.f32 %v1472, %v1548
      %v1630 = vadd.f32 %v1473, %v1551
      %v1631 = vadd.f32 %v1474, %v1554
      %v1632 = vadd.f32 %v1475, %v1557
      %v1633 = vadd.f32 %v1476, %v1560
      %v1634 = vadd.f32 %v1477, %v1563
      %v1635 = vadd.f32 %v1478, %v1566
      %v1636 = vadd.f32 %v1479, %v1569
      %v1637 = vadd.f32 %v1480, %v1572
      %v1638 = vadd.f32 %v1481, %v1575
      %v1639 = vadd.f32 %v1482, %v1578
      %v1640 = vadd.f32 %v1483, %v1581
      %v1641 = vadd.f32 %v1484, %v1584
      %v1642 = vadd.f32 %v1485, %v1587
      %v1643 = vadd.f32 %v1486, %v1590
      %v1644 = vadd.f32 %v1487, %v1593
      %v1645 = vadd.f32 %v1488, %v1596
      %v1646 = vadd.f32 %v1489, %v1599
      %v1647 = vadd.f32 %v1490, %v1602
      %v1648 = vadd.f32 %v1491, %v1605
      %v1649 = vadd.f32 %v1492, %v1608
      %v1650 = vadd.f32 %v1493, %v1611
      %v1651 = vadd.f32 %v1494, %v1614
      %v1652 = vadd.f32 %v1495, %v1617
      %v1653 = vadd.f32 %v1496, %v1620
      %v1655 = vsel %vm498, %v330, 0
      %v1658 = vsel %vm498, %v331, 0
      %v1661 = vsel %vm563, %v348, 0
      %1663 = vmatpush.msra.mxu0 0.0
      %1664 = vmatpush.msra.mxu0 0.0
      %1665 = vmatpush.msra.mxu0 0.0
      %1666 = vmatpush.msra.mxu0 0.0
      %1667 = vmatpush.msra.mxu0 0.0
      %1668 = vmatpush.msra.mxu0 0.0
      %1669 = vmatpush.msra.mxu0 0.0
      %1670 = vmatpush.msra.mxu0 0.0
      %1671 = vmatpush.msra.mxu0 0.0
      %1672 = vmatpush.msra.mxu0 0.0
      %1673 = vmatpush.msra.mxu0 0.0
      %1674 = vmatpush.msra.mxu0 0.0
      %1675 = vmatpush.msra.mxu0 0.0
      %1676 = vmatpush.msra.mxu0 0.0
      %1677 = vmatpush.msra.mxu0 0.0
      %1678 = vmatpush.msra.mxu0 %v1661
      %1679 = vmatmul.f32.gmra.mxu0 %v688
      %v1680 = vpop.f32.mrf.mxu0
      %v1681 = vadd.f32 0.0, %v1680
      %1682 = vmatmul.f32.gmra.mxu0 %v690
      %v1683 = vpop.f32.mrf.mxu0
      %v1684 = vadd.f32 0.0, %v1683
      %1685 = vmatmul.f32.gmra.mxu0 %v692
      %v1686 = vpop.f32.mrf.mxu0
      %v1687 = vadd.f32 0.0, %v1686
      %1688 = vmatmul.f32.gmra.mxu0 %v694
      %v1689 = vpop.f32.mrf.mxu0
      %v1690 = vadd.f32 0.0, %v1689
      %1691 = vmatmul.f32.gmra.mxu0 %v696
      %v1692 = vpop.f32.mrf.mxu0
      %v1693 = vadd.f32 0.0, %v1692
      %1694 = vmatmul.f32.gmra.mxu0 %v698
      %v1695 = vpop.f32.mrf.mxu0
      %v1696 = vadd.f32 0.0, %v1695
      %1697 = vmatmul.f32.gmra.mxu0 %v700
      %v1698 = vpop.f32.mrf.mxu0
      %v1699 = vadd.f32 0.0, %v1698
      %1700 = vmatmul.f32.gmra.mxu0 %v702
      %v1701 = vpop.f32.mrf.mxu0
      %v1702 = vadd.f32 0.0, %v1701
      %1703 = vmatmul.f32.gmra.mxu0 %v704
      %v1704 = vpop.f32.mrf.mxu0
      %v1705 = vadd.f32 0.0, %v1704
      %1706 = vmatmul.f32.gmra.mxu0 %v706
      %v1707 = vpop.f32.mrf.mxu0
      %v1708 = vadd.f32 0.0, %v1707
      %1709 = vmatmul.f32.gmra.mxu0 %v708
      %v1710 = vpop.f32.mrf.mxu0
      %v1711 = vadd.f32 0.0, %v1710
      %1712 = vmatmul.f32.gmra.mxu0 %v710
      %v1713 = vpop.f32.mrf.mxu0
      %v1714 = vadd.f32 0.0, %v1713
      %1715 = vmatmul.f32.gmra.mxu0 %v712
      %v1716 = vpop.f32.mrf.mxu0
      %v1717 = vadd.f32 0.0, %v1716
      %1718 = vmatmul.f32.gmra.mxu0 %v714
      %v1719 = vpop.f32.mrf.mxu0
      %v1720 = vadd.f32 0.0, %v1719
      %1721 = vmatmul.f32.gmra.mxu0 %v716
      %v1722 = vpop.f32.mrf.mxu0
      %v1723 = vadd.f32 0.0, %v1722
      %1724 = vmatmul.f32.gmra.mxu0 %v718
      %v1725 = vpop.f32.mrf.mxu0
      %v1726 = vadd.f32 0.0, %v1725
      %1727 = vmatmul.f32.gmra.mxu0 %v720
      %v1728 = vpop.f32.mrf.mxu0
      %v1729 = vadd.f32 0.0, %v1728
      %1730 = vmatmul.f32.gmra.mxu0 %v722
      %v1731 = vpop.f32.mrf.mxu0
      %v1732 = vadd.f32 0.0, %v1731
      %1733 = vmatmul.f32.gmra.mxu0 %v724
      %v1734 = vpop.f32.mrf.mxu0
      %v1735 = vadd.f32 0.0, %v1734
      %1736 = vmatmul.f32.gmra.mxu0 %v726
      %v1737 = vpop.f32.mrf.mxu0
      %v1738 = vadd.f32 0.0, %v1737
      %1739 = vmatmul.f32.gmra.mxu0 %v728
      %v1740 = vpop.f32.mrf.mxu0
      %v1741 = vadd.f32 0.0, %v1740
      %1742 = vmatmul.f32.gmra.mxu0 %v730
      %v1743 = vpop.f32.mrf.mxu0
      %v1744 = vadd.f32 0.0, %v1743
      %1745 = vmatmul.f32.gmra.mxu0 %v732
      %v1746 = vpop.f32.mrf.mxu0
      %v1747 = vadd.f32 0.0, %v1746
      %1748 = vmatmul.f32.gmra.mxu0 %v734
      %v1749 = vpop.f32.mrf.mxu0
      %v1750 = vadd.f32 0.0, %v1749
      %1751 = vmatmul.f32.gmra.mxu0 %v736
      %v1752 = vpop.f32.mrf.mxu0
      %v1753 = vadd.f32 0.0, %v1752
      %1754 = vmatmul.f32.gmra.mxu0 %v738
      %v1755 = vpop.f32.mrf.mxu0
      %v1756 = vadd.f32 0.0, %v1755
      %1757 = vmatmul.f32.gmra.mxu0 %v740
      %v1758 = vpop.f32.mrf.mxu0
      %v1759 = vadd.f32 0.0, %v1758
      %1760 = vmatmul.f32.gmra.mxu0 %v742
      %v1761 = vpop.f32.mrf.mxu0
      %v1762 = vadd.f32 0.0, %v1761
      %1763 = vmatmul.f32.gmra.mxu0 %v1154
      %v1764 = vpop.f32.mrf.mxu0
      %v1765 = vadd.f32 0.0, %v1764
      %1766 = vmatmul.f32.gmra.mxu0 %v1157
      %v1767 = vpop.f32.mrf.mxu0
      %v1768 = vadd.f32 0.0, %v1767
      %1769 = vmatmul.f32.gmra.mxu0 %v1655
      %v1770 = vpop.f32.mrf.mxu0
      %v1771 = vadd.f32 0.0, %v1770
      %1772 = vmatmul.f32.gmra.mxu0 %v1658
      %v1773 = vpop.f32.mrf.mxu0
      %v1774 = vadd.f32 0.0, %v1773
      %1775 = vdwg.mxu0
      %v1776 = vadd.f32 %v1622, %v1681
      %v1777 = vadd.f32 %v1623, %v1684
      %v1778 = vadd.f32 %v1624, %v1687
      %v1779 = vadd.f32 %v1625, %v1690
      %v1780 = vadd.f32 %v1626, %v1693
      %v1781 = vadd.f32 %v1627, %v1696
      %v1782 = vadd.f32 %v1628, %v1699
      %v1783 = vadd.f32 %v1629, %v1702
      %v1784 = vadd.f32 %v1630, %v1705
      %v1785 = vadd.f32 %v1631, %v1708
      %v1786 = vadd.f32 %v1632, %v1711
      %v1787 = vadd.f32 %v1633, %v1714
      %v1788 = vadd.f32 %v1634, %v1717
      %v1789 = vadd.f32 %v1635, %v1720
      %v1790 = vadd.f32 %v1636, %v1723
      %v1791 = vadd.f32 %v1637, %v1726
      %v1792 = vadd.f32 %v1638, %v1729
      %v1793 = vadd.f32 %v1639, %v1732
      %v1794 = vadd.f32 %v1640, %v1735
      %v1795 = vadd.f32 %v1641, %v1738
      %v1796 = vadd.f32 %v1642, %v1741
      %v1797 = vadd.f32 %v1643, %v1744
      %v1798 = vadd.f32 %v1644, %v1747
      %v1799 = vadd.f32 %v1645, %v1750
      %v1800 = vadd.f32 %v1646, %v1753
      %v1801 = vadd.f32 %v1647, %v1756
      %v1802 = vadd.f32 %v1648, %v1759
      %v1803 = vadd.f32 %v1649, %v1762
      %v1804 = vadd.f32 %v1650, %v1765
      %v1805 = vadd.f32 %v1651, %v1768
      %v1806 = vadd.f32 %v1652, %v1771
      %v1807 = vadd.f32 %v1653, %v1774
      %v1809 = vrot.slane %v330, 1
      %v1810 = vrot.slane %v331, 1
      %v1811 = vsel %vm417, %v1809, %v1810
      %v1812 = vrot.slane %v332, 1
      %v1813 = vsel %vm417, %v1810, %v1812
      %v1814 = vsel %vm498, %v1811, 0
      %v1816 = vsel %vm498, %v1813, 0
      %v1819 = vsel %vm563, %v349, 0
      %1821 = vmatpush.msra.mxu0 0.0
      %1822 = vmatpush.msra.mxu0 0.0
      %1823 = vmatpush.msra.mxu0 0.0
      %1824 = vmatpush.msra.mxu0 0.0
      %1825 = vmatpush.msra.mxu0 0.0
      %1826 = vmatpush.msra.mxu0 0.0
      %1827 = vmatpush.msra.mxu0 0.0
      %1828 = vmatpush.msra.mxu0 0.0
      %1829 = vmatpush.msra.mxu0 0.0
      %1830 = vmatpush.msra.mxu0 0.0
      %1831 = vmatpush.msra.mxu0 0.0
      %1832 = vmatpush.msra.mxu0 0.0
      %1833 = vmatpush.msra.mxu0 0.0
      %1834 = vmatpush.msra.mxu0 0.0
      %1835 = vmatpush.msra.mxu0 0.0
      %1836 = vmatpush.msra.mxu0 %v1819
      %1837 = vmatmul.f32.gmra.mxu0 %v507
      %v1838 = vpop.f32.mrf.mxu0
      %v1839 = vadd.f32 0.0, %v1838
      %1840 = vmatmul.f32.gmra.mxu0 %v509
      %v1841 = vpop.f32.mrf.mxu0
      %v1842 = vadd.f32 0.0, %v1841
      %1843 = vmatmul.f32.gmra.mxu0 %v511
      %v1844 = vpop.f32.mrf.mxu0
      %v1845 = vadd.f32 0.0, %v1844
      %1846 = vmatmul.f32.gmra.mxu0 %v513
      %v1847 = vpop.f32.mrf.mxu0
      %v1848 = vadd.f32 0.0, %v1847
      %1849 = vmatmul.f32.gmra.mxu0 %v515
      %v1850 = vpop.f32.mrf.mxu0
      %v1851 = vadd.f32 0.0, %v1850
      %1852 = vmatmul.f32.gmra.mxu0 %v517
      %v1853 = vpop.f32.mrf.mxu0
      %v1854 = vadd.f32 0.0, %v1853
      %1855 = vmatmul.f32.gmra.mxu0 %v519
      %v1856 = vpop.f32.mrf.mxu0
      %v1857 = vadd.f32 0.0, %v1856
      %1858 = vmatmul.f32.gmra.mxu0 %v521
      %v1859 = vpop.f32.mrf.mxu0
      %v1860 = vadd.f32 0.0, %v1859
      %1861 = vmatmul.f32.gmra.mxu0 %v523
      %v1862 = vpop.f32.mrf.mxu0
      %v1863 = vadd.f32 0.0, %v1862
      %1864 = vmatmul.f32.gmra.mxu0 %v525
      %v1865 = vpop.f32.mrf.mxu0
      %v1866 = vadd.f32 0.0, %v1865
      %1867 = vmatmul.f32.gmra.mxu0 %v527
      %v1868 = vpop.f32.mrf.mxu0
      %v1869 = vadd.f32 0.0, %v1868
      %1870 = vmatmul.f32.gmra.mxu0 %v529
      %v1871 = vpop.f32.mrf.mxu0
      %v1872 = vadd.f32 0.0, %v1871
      %1873 = vmatmul.f32.gmra.mxu0 %v531
      %v1874 = vpop.f32.mrf.mxu0
      %v1875 = vadd.f32 0.0, %v1874
      %1876 = vmatmul.f32.gmra.mxu0 %v533
      %v1877 = vpop.f32.mrf.mxu0
      %v1878 = vadd.f32 0.0, %v1877
      %1879 = vmatmul.f32.gmra.mxu0 %v535
      %v1880 = vpop.f32.mrf.mxu0
      %v1881 = vadd.f32 0.0, %v1880
      %1882 = vmatmul.f32.gmra.mxu0 %v537
      %v1883 = vpop.f32.mrf.mxu0
      %v1884 = vadd.f32 0.0, %v1883
      %1885 = vmatmul.f32.gmra.mxu0 %v539
      %v1886 = vpop.f32.mrf.mxu0
      %v1887 = vadd.f32 0.0, %v1886
      %1888 = vmatmul.f32.gmra.mxu0 %v541
      %v1889 = vpop.f32.mrf.mxu0
      %v1890 = vadd.f32 0.0, %v1889
      %1891 = vmatmul.f32.gmra.mxu0 %v543
      %v1892 = vpop.f32.mrf.mxu0
      %v1893 = vadd.f32 0.0, %v1892
      %1894 = vmatmul.f32.gmra.mxu0 %v545
      %v1895 = vpop.f32.mrf.mxu0
      %v1896 = vadd.f32 0.0, %v1895
      %1897 = vmatmul.f32.gmra.mxu0 %v547
      %v1898 = vpop.f32.mrf.mxu0
      %v1899 = vadd.f32 0.0, %v1898
      %1900 = vmatmul.f32.gmra.mxu0 %v549
      %v1901 = vpop.f32.mrf.mxu0
      %v1902 = vadd.f32 0.0, %v1901
      %1903 = vmatmul.f32.gmra.mxu0 %v551
      %v1904 = vpop.f32.mrf.mxu0
      %v1905 = vadd.f32 0.0, %v1904
      %1906 = vmatmul.f32.gmra.mxu0 %v553
      %v1907 = vpop.f32.mrf.mxu0
      %v1908 = vadd.f32 0.0, %v1907
      %1909 = vmatmul.f32.gmra.mxu0 %v555
      %v1910 = vpop.f32.mrf.mxu0
      %v1911 = vadd.f32 0.0, %v1910
      %1912 = vmatmul.f32.gmra.mxu0 %v557
      %v1913 = vpop.f32.mrf.mxu0
      %v1914 = vadd.f32 0.0, %v1913
      %1915 = vmatmul.f32.gmra.mxu0 %v559
      %v1916 = vpop.f32.mrf.mxu0
      %v1917 = vadd.f32 0.0, %v1916
      %1918 = vmatmul.f32.gmra.mxu0 %v561
      %v1919 = vpop.f32.mrf.mxu0
      %v1920 = vadd.f32 0.0, %v1919
      %1921 = vmatmul.f32.gmra.mxu0 %v1345
      %v1922 = vpop.f32.mrf.mxu0
      %v1923 = vadd.f32 0.0, %v1922
      %1924 = vmatmul.f32.gmra.mxu0 %v1347
      %v1925 = vpop.f32.mrf.mxu0
      %v1926 = vadd.f32 0.0, %v1925
      %1927 = vmatmul.f32.gmra.mxu0 %v1814
      %v1928 = vpop.f32.mrf.mxu0
      %v1929 = vadd.f32 0.0, %v1928
      %1930 = vmatmul.f32.gmra.mxu0 %v1816
      %v1931 = vpop.f32.mrf.mxu0
      %v1932 = vadd.f32 0.0, %v1931
      %1933 = vdwg.mxu0
      %v1934 = vadd.f32 %v1776, %v1839
      %v1935 = vadd.f32 %v1777, %v1842
      %v1936 = vadd.f32 %v1778, %v1845
      %v1937 = vadd.f32 %v1779, %v1848
      %v1938 = vadd.f32 %v1780, %v1851
      %v1939 = vadd.f32 %v1781, %v1854
      %v1940 = vadd.f32 %v1782, %v1857
      %v1941 = vadd.f32 %v1783, %v1860
      %v1942 = vadd.f32 %v1784, %v1863
      %v1943 = vadd.f32 %v1785, %v1866
      %v1944 = vadd.f32 %v1786, %v1869
      %v1945 = vadd.f32 %v1787, %v1872
      %v1946 = vadd.f32 %v1788, %v1875
      %v1947 = vadd.f32 %v1789, %v1878
      %v1948 = vadd.f32 %v1790, %v1881
      %v1949 = vadd.f32 %v1791, %v1884
      %v1950 = vadd.f32 %v1792, %v1887
      %v1951 = vadd.f32 %v1793, %v1890
      %v1952 = vadd.f32 %v1794, %v1893
      %v1953 = vadd.f32 %v1795, %v1896
      %v1954 = vadd.f32 %v1796, %v1899
      %v1955 = vadd.f32 %v1797, %v1902
      %v1956 = vadd.f32 %v1798, %v1905
      %v1957 = vadd.f32 %v1799, %v1908
      %v1958 = vadd.f32 %v1800, %v1911
      %v1959 = vadd.f32 %v1801, %v1914
      %v1960 = vadd.f32 %v1802, %v1917
      %v1961 = vadd.f32 %v1803, %v1920
      %v1962 = vadd.f32 %v1804, %v1923
      %v1963 = vadd.f32 %v1805, %v1926
      %v1964 = vadd.f32 %v1806, %v1929
      %v1965 = vadd.f32 %v1807, %v1932
      %v1966 = vrot.slane %v330, 2
      %v1967 = vrot.slane %v331, 2
      %v1968 = vsel %vm860, %v1966, %v1967
      %v1969 = vrot.slane %v332, 2
      %v1970 = vsel %vm860, %v1967, %v1969
      %v1971 = vsel %vm498, %v1968, 0
      %v1973 = vsel %vm498, %v1970, 0
      %v1976 = vsel %vm563, %v350, 0
      %1978 = vmatpush.msra.mxu0 0.0
      %1979 = vmatpush.msra.mxu0 0.0
      %1980 = vmatpush.msra.mxu0 0.0
      %1981 = vmatpush.msra.mxu0 0.0
      %1982 = vmatpush.msra.mxu0 0.0
      %1983 = vmatpush.msra.mxu0 0.0
      %1984 = vmatpush.msra.mxu0 0.0
      %1985 = vmatpush.msra.mxu0 0.0
      %1986 = vmatpush.msra.mxu0 0.0
      %1987 = vmatpush.msra.mxu0 0.0
      %1988 = vmatpush.msra.mxu0 0.0
      %1989 = vmatpush.msra.mxu0 0.0
      %1990 = vmatpush.msra.mxu0 0.0
      %1991 = vmatpush.msra.mxu0 0.0
      %1992 = vmatpush.msra.mxu0 0.0
      %1993 = vmatpush.msra.mxu0 %v1976
      %1994 = vmatmul.f32.gmra.mxu0 %v949
      %v1995 = vpop.f32.mrf.mxu0
      %v1996 = vadd.f32 0.0, %v1995
      %1997 = vmatmul.f32.gmra.mxu0 %v951
      %v1998 = vpop.f32.mrf.mxu0
      %v1999 = vadd.f32 0.0, %v1998
      %2000 = vmatmul.f32.gmra.mxu0 %v953
      %v2001 = vpop.f32.mrf.mxu0
      %v2002 = vadd.f32 0.0, %v2001
      %2003 = vmatmul.f32.gmra.mxu0 %v955
      %v2004 = vpop.f32.mrf.mxu0
      %v2005 = vadd.f32 0.0, %v2004
      %2006 = vmatmul.f32.gmra.mxu0 %v957
      %v2007 = vpop.f32.mrf.mxu0
      %v2008 = vadd.f32 0.0, %v2007
      %2009 = vmatmul.f32.gmra.mxu0 %v959
      %v2010 = vpop.f32.mrf.mxu0
      %v2011 = vadd.f32 0.0, %v2010
      %2012 = vmatmul.f32.gmra.mxu0 %v961
      %v2013 = vpop.f32.mrf.mxu0
      %v2014 = vadd.f32 0.0, %v2013
      %2015 = vmatmul.f32.gmra.mxu0 %v963
      %v2016 = vpop.f32.mrf.mxu0
      %v2017 = vadd.f32 0.0, %v2016
      %2018 = vmatmul.f32.gmra.mxu0 %v965
      %v2019 = vpop.f32.mrf.mxu0
      %v2020 = vadd.f32 0.0, %v2019
      %2021 = vmatmul.f32.gmra.mxu0 %v967
      %v2022 = vpop.f32.mrf.mxu0
      %v2023 = vadd.f32 0.0, %v2022
      %2024 = vmatmul.f32.gmra.mxu0 %v969
      %v2025 = vpop.f32.mrf.mxu0
      %v2026 = vadd.f32 0.0, %v2025
      %2027 = vmatmul.f32.gmra.mxu0 %v971
      %v2028 = vpop.f32.mrf.mxu0
      %v2029 = vadd.f32 0.0, %v2028
      %2030 = vmatmul.f32.gmra.mxu0 %v973
      %v2031 = vpop.f32.mrf.mxu0
      %v2032 = vadd.f32 0.0, %v2031
      %2033 = vmatmul.f32.gmra.mxu0 %v975
      %v2034 = vpop.f32.mrf.mxu0
      %v2035 = vadd.f32 0.0, %v2034
      %2036 = vmatmul.f32.gmra.mxu0 %v977
      %v2037 = vpop.f32.mrf.mxu0
      %v2038 = vadd.f32 0.0, %v2037
      %2039 = vmatmul.f32.gmra.mxu0 %v979
      %v2040 = vpop.f32.mrf.mxu0
      %v2041 = vadd.f32 0.0, %v2040
      %2042 = vmatmul.f32.gmra.mxu0 %v981
      %v2043 = vpop.f32.mrf.mxu0
      %v2044 = vadd.f32 0.0, %v2043
      %2045 = vmatmul.f32.gmra.mxu0 %v983
      %v2046 = vpop.f32.mrf.mxu0
      %v2047 = vadd.f32 0.0, %v2046
      %2048 = vmatmul.f32.gmra.mxu0 %v985
      %v2049 = vpop.f32.mrf.mxu0
      %v2050 = vadd.f32 0.0, %v2049
      %2051 = vmatmul.f32.gmra.mxu0 %v987
      %v2052 = vpop.f32.mrf.mxu0
      %v2053 = vadd.f32 0.0, %v2052
      %2054 = vmatmul.f32.gmra.mxu0 %v989
      %v2055 = vpop.f32.mrf.mxu0
      %v2056 = vadd.f32 0.0, %v2055
      %2057 = vmatmul.f32.gmra.mxu0 %v991
      %v2058 = vpop.f32.mrf.mxu0
      %v2059 = vadd.f32 0.0, %v2058
      %2060 = vmatmul.f32.gmra.mxu0 %v993
      %v2061 = vpop.f32.mrf.mxu0
      %v2062 = vadd.f32 0.0, %v2061
      %2063 = vmatmul.f32.gmra.mxu0 %v995
      %v2064 = vpop.f32.mrf.mxu0
      %v2065 = vadd.f32 0.0, %v2064
      %2066 = vmatmul.f32.gmra.mxu0 %v997
      %v2067 = vpop.f32.mrf.mxu0
      %v2068 = vadd.f32 0.0, %v2067
      %2069 = vmatmul.f32.gmra.mxu0 %v999
      %v2070 = vpop.f32.mrf.mxu0
      %v2071 = vadd.f32 0.0, %v2070
      %2072 = vmatmul.f32.gmra.mxu0 %v1001
      %v2073 = vpop.f32.mrf.mxu0
      %v2074 = vadd.f32 0.0, %v2073
      %2075 = vmatmul.f32.gmra.mxu0 %v1003
      %v2076 = vpop.f32.mrf.mxu0
      %v2077 = vadd.f32 0.0, %v2076
      %2078 = vmatmul.f32.gmra.mxu0 %v1502
      %v2079 = vpop.f32.mrf.mxu0
      %v2080 = vadd.f32 0.0, %v2079
      %2081 = vmatmul.f32.gmra.mxu0 %v1504
      %v2082 = vpop.f32.mrf.mxu0
      %v2083 = vadd.f32 0.0, %v2082
      %2084 = vmatmul.f32.gmra.mxu0 %v1971
      %v2085 = vpop.f32.mrf.mxu0
      %v2086 = vadd.f32 0.0, %v2085
      %2087 = vmatmul.f32.gmra.mxu0 %v1973
      %v2088 = vpop.f32.mrf.mxu0
      %v2089 = vadd.f32 0.0, %v2088
      %2090 = vdwg.mxu0
      %v2091 = vadd.f32 %v1934, %v1996
      %v2092 = vadd.f32 %v1935, %v1999
      %v2093 = vadd.f32 %v1936, %v2002
      %v2094 = vadd.f32 %v1937, %v2005
      %v2095 = vadd.f32 %v1938, %v2008
      %v2096 = vadd.f32 %v1939, %v2011
      %v2097 = vadd.f32 %v1940, %v2014
      %v2098 = vadd.f32 %v1941, %v2017
      %v2099 = vadd.f32 %v1942, %v2020
      %v2100 = vadd.f32 %v1943, %v2023
      %v2101 = vadd.f32 %v1944, %v2026
      %v2102 = vadd.f32 %v1945, %v2029
      %v2103 = vadd.f32 %v1946, %v2032
      %v2104 = vadd.f32 %v1947, %v2035
      %v2105 = vadd.f32 %v1948, %v2038
      %v2106 = vadd.f32 %v1949, %v2041
      %v2107 = vadd.f32 %v1950, %v2044
      %v2108 = vadd.f32 %v1951, %v2047
      %v2109 = vadd.f32 %v1952, %v2050
      %v2110 = vadd.f32 %v1953, %v2053
      %v2111 = vadd.f32 %v1954, %v2056
      %v2112 = vadd.f32 %v1955, %v2059
      %v2113 = vadd.f32 %v1956, %v2062
      %v2114 = vadd.f32 %v1957, %v2065
      %v2115 = vadd.f32 %v1958, %v2068
      %v2116 = vadd.f32 %v1959, %v2071
      %v2117 = vadd.f32 %v1960, %v2074
      %v2118 = vadd.f32 %v1961, %v2077
      %v2119 = vadd.f32 %v1962, %v2080
      %v2120 = vadd.f32 %v1963, %v2083
      %v2121 = vadd.f32 %v1964, %v2086
      %v2122 = vadd.f32 %v1965, %v2089
      %v2123 = vld [vmem:[%s2] sm:$0x1]
      %v2125 = vperm.slane %v2123, 0
      %v2127 = vadd.f32 %v2091, %v2125
      %v2128 = vadd.f32 %v2092, %v2125
      %v2129 = vadd.f32 %v2093, %v2125
      %v2130 = vadd.f32 %v2094, %v2125
      %v2131 = vadd.f32 %v2095, %v2125
      %v2132 = vadd.f32 %v2096, %v2125
      %v2133 = vadd.f32 %v2097, %v2125
      %v2134 = vadd.f32 %v2098, %v2125
      %v2135 = vadd.f32 %v2099, %v2125
      %v2136 = vadd.f32 %v2100, %v2125
      %v2137 = vadd.f32 %v2101, %v2125
      %v2138 = vadd.f32 %v2102, %v2125
      %v2139 = vadd.f32 %v2103, %v2125
      %v2140 = vadd.f32 %v2104, %v2125
      %v2141 = vadd.f32 %v2105, %v2125
      %v2142 = vadd.f32 %v2106, %v2125
      %v2143 = vadd.f32 %v2107, %v2125
      %v2144 = vadd.f32 %v2108, %v2125
      %v2145 = vadd.f32 %v2109, %v2125
      %v2146 = vadd.f32 %v2110, %v2125
      %v2147 = vadd.f32 %v2111, %v2125
      %v2148 = vadd.f32 %v2112, %v2125
      %v2149 = vadd.f32 %v2113, %v2125
      %v2150 = vadd.f32 %v2114, %v2125
      %v2151 = vadd.f32 %v2115, %v2125
      %v2152 = vadd.f32 %v2116, %v2125
      %v2153 = vadd.f32 %v2117, %v2125
      %v2154 = vadd.f32 %v2118, %v2125
      %v2155 = vadd.f32 %v2119, %v2125
      %v2156 = vadd.f32 %v2120, %v2125
      %v2157 = vadd.f32 %v2121, %v2125
      %v2158 = vadd.f32 %v2122, %v2125
      %v2159 = vmax.f32 %v2127, 0.0
      %v2160 = vmax.f32 %v2128, 0.0
      %v2161 = vmax.f32 %v2129, 0.0
      %v2162 = vmax.f32 %v2130, 0.0
      %v2163 = vmax.f32 %v2131, 0.0
      %v2164 = vmax.f32 %v2132, 0.0
      %v2165 = vmax.f32 %v2133, 0.0
      %v2166 = vmax.f32 %v2134, 0.0
      %v2167 = vmax.f32 %v2135, 0.0
      %v2168 = vmax.f32 %v2136, 0.0
      %v2169 = vmax.f32 %v2137, 0.0
      %v2170 = vmax.f32 %v2138, 0.0
      %v2171 = vmax.f32 %v2139, 0.0
      %v2172 = vmax.f32 %v2140, 0.0
      %v2173 = vmax.f32 %v2141, 0.0
      %v2174 = vmax.f32 %v2142, 0.0
      %v2175 = vmax.f32 %v2143, 0.0
      %v2176 = vmax.f32 %v2144, 0.0
      %v2177 = vmax.f32 %v2145, 0.0
      %v2178 = vmax.f32 %v2146, 0.0
      %v2179 = vmax.f32 %v2147, 0.0
      %v2180 = vmax.f32 %v2148, 0.0
      %v2181 = vmax.f32 %v2149, 0.0
      %v2182 = vmax.f32 %v2150, 0.0
      %v2183 = vmax.f32 %v2151, 0.0
      %v2184 = vmax.f32 %v2152, 0.0
      %v2185 = vmax.f32 %v2153, 0.0
      %v2186 = vmax.f32 %v2154, 0.0
      %v2187 = vmax.f32 %v2155, 0.0
      %v2188 = vmax.f32 %v2156, 0.0
      %v2189 = vmax.f32 %v2157, 0.0
      %v2190 = vmax.f32 %v2158, 0.0
      %2191 = vst.msk [vmem:[#allocation2] sm:$0xff] %vm498, 0.0
      %2192 = vst.msk [vmem:[#allocation2 + $0x8] sm:$0xff] %vm498, 0.0
      %2193 = vst.msk [vmem:[#allocation2 + $0x10] sm:$0xff] %vm498, 0.0
      %2194 = vst.msk [vmem:[#allocation2 + $0x18] sm:$0xff] %vm498, 0.0
      %2195 = vst.msk [vmem:[#allocation2 + $0x20] sm:$0xff] %vm498, 0.0
      %2196 = vst.msk [vmem:[#allocation2 + $0x28] sm:$0xff] %vm498, 0.0
      %2197 = vst.msk [vmem:[#allocation2 + $0x30] sm:$0xff] %vm498, 0.0
      %2198 = vst.msk [vmem:[#allocation2 + $0x38] sm:$0xff] %vm498, 0.0
      %2199 = vst.msk [vmem:[#allocation2 + $0x40] sm:$0xff] %vm498, 0.0
      %2200 = vst.msk [vmem:[#allocation2 + $0x48] sm:$0xff] %vm498, 0.0
      %2201 = vst.msk [vmem:[#allocation2 + $0x50] sm:$0xff] %vm498, 0.0
      %2202 = vst.msk [vmem:[#allocation2 + $0x58] sm:$0xff] %vm498, 0.0
      %2203 = vst.msk [vmem:[#allocation2 + $0x60] sm:$0xff] %vm498, 0.0
      %2204 = vst.msk [vmem:[#allocation2 + $0x68] sm:$0xff] %vm498, 0.0
      %2205 = vst.msk [vmem:[#allocation2 + $0x70] sm:$0xff] %vm498, 0.0
      %2206 = vst.msk [vmem:[#allocation2 + $0x78] sm:$0xff] %vm498, 0.0
      %2207 = vst.msk [vmem:[#allocation2 + $0x80] sm:$0xff] %vm498, 0.0
      %2208 = vst.msk [vmem:[#allocation2 + $0x88] sm:$0xff] %vm498, 0.0
      %2209 = vst.msk [vmem:[#allocation2 + $0x90] sm:$0xff] %vm498, 0.0
      %2210 = vst.msk [vmem:[#allocation2 + $0x98] sm:$0xff] %vm498, 0.0
      %2211 = vst.msk [vmem:[#allocation2 + $0xa0] sm:$0xff] %vm498, 0.0
      %2212 = vst.msk [vmem:[#allocation2 + $0xa8] sm:$0xff] %vm498, 0.0
      %2213 = vst.msk [vmem:[#allocation2 + $0xb0] sm:$0xff] %vm498, 0.0
      %2214 = vst.msk [vmem:[#allocation2 + $0xb8] sm:$0xff] %vm498, 0.0
      %2215 = vst.msk [vmem:[#allocation2 + $0xc0] sm:$0xff] %vm498, 0.0
      %2216 = vst.msk [vmem:[#allocation2 + $0xc8] sm:$0xff] %vm498, 0.0
      %2217 = vst.msk [vmem:[#allocation2 + $0xd0] sm:$0xff] %vm498, 0.0
      %2218 = vst.msk [vmem:[#allocation2 + $0xd8] sm:$0xff] %vm498, 0.0
      %2219 = vst.msk [vmem:[#allocation2 + $0xe0] sm:$0xff] %vm498, 0.0
      %2220 = vst.msk [vmem:[#allocation2 + $0xe8] sm:$0xff] %vm498, 0.0
      %2221 = vst.msk [vmem:[#allocation2 + $0xf0] sm:$0xff] %vm498, 0.0
      %2222 = vst.msk [vmem:[#allocation2 + $0xf8] sm:$0xff] %vm498, 0.0
      %2223 = vst.msk [vmem:[#allocation2 + $0x100] sm:$0xff] %vm498, 0.0
      %2224 = vst.msk [vmem:[#allocation2 + $0x108] sm:$0xff] %vm498, 0.0
      %2225 = vst.msk [vmem:[#allocation2 + $0x110] sm:$0xff] %vm498, 0.0
      %2226 = vst.msk [vmem:[#allocation2 + $0x118] sm:$0xff] %vm498, 0.0
      %2227 = vst.msk [vmem:[#allocation2 + $0x120] sm:$0xff] %vm498, 0.0
      %2228 = vst.msk [vmem:[#allocation2 + $0x128] sm:$0xff] %vm498, 0.0
      %2229 = vst.msk [vmem:[#allocation2 + $0x130] sm:$0xff] %vm498, 0.0
      %2230 = vst.msk [vmem:[#allocation2 + $0x138] sm:$0xff] %vm498, 0.0
      %2231 = vst.msk [vmem:[#allocation2 + $0x140] sm:$0xff] %vm498, 0.0
      %2232 = vst.msk [vmem:[#allocation2 + $0x148] sm:$0xff] %vm498, 0.0
      %2233 = vst.msk [vmem:[#allocation2 + $0x150] sm:$0xff] %vm498, 0.0
      %2234 = vst.msk [vmem:[#allocation2 + $0x158] sm:$0xff] %vm498, 0.0
      %2235 = vst.msk [vmem:[#allocation2 + $0x160] sm:$0xff] %vm498, 0.0
      %2236 = vst.msk [vmem:[#allocation2 + $0x168] sm:$0xff] %vm498, 0.0
      %2237 = vst.msk [vmem:[#allocation2 + $0x170] sm:$0xff] %vm498, 0.0
      %2238 = vst.msk [vmem:[#allocation2 + $0x178] sm:$0xff] %vm498, 0.0
      %2239 = vst.msk [vmem:[#allocation2 + $0x180] sm:$0xff] %vm498, 0.0
      %2240 = vst.msk [vmem:[#allocation2 + $0x188] sm:$0xff] %vm498, 0.0
      %2241 = vst.msk [vmem:[#allocation2 + $0x190] sm:$0xff] %vm498, 0.0
      %2242 = vst.msk [vmem:[#allocation2 + $0x198] sm:$0xff] %vm498, 0.0
      %2243 = vst.msk [vmem:[#allocation2 + $0x1a0] sm:$0xff] %vm498, 0.0
      %2244 = vst.msk [vmem:[#allocation2 + $0x1a8] sm:$0xff] %vm498, 0.0
      %2245 = vst.msk [vmem:[#allocation2 + $0x1b0] sm:$0xff] %vm498, 0.0
      %2246 = vst.msk [vmem:[#allocation2 + $0x1b8] sm:$0xff] %vm498, 0.0
      %2247 = vst.msk [vmem:[#allocation2 + $0x1c0] sm:$0xff] %vm498, 0.0
      %2248 = vst.msk [vmem:[#allocation2 + $0x1c8] sm:$0xff] %vm498, 0.0
      %2249 = vst.msk [vmem:[#allocation2 + $0x1d0] sm:$0xff] %vm498, 0.0
      %2250 = vst.msk [vmem:[#allocation2 + $0x1d8] sm:$0xff] %vm498, 0.0
      %2251 = vst.msk [vmem:[#allocation2 + $0x1e0] sm:$0xff] %vm498, 0.0
      %2252 = vst.msk [vmem:[#allocation2 + $0x1e8] sm:$0xff] %vm498, 0.0
      %2253 = vst.msk [vmem:[#allocation2 + $0x1f0] sm:$0xff] %vm498, 0.0
      %2254 = vst.msk [vmem:[#allocation2 + $0x1f8] sm:$0xff] %vm498, 0.0
      %2255 = vst.msk [vmem:[#allocation2 + $0x200] sm:$0xff] %vm498, 0.0
      %2256 = vst.msk [vmem:[#allocation2 + $0x208] sm:$0xff] %vm498, 0.0
      %2257 = vst.msk [vmem:[#allocation2 + $0x210] sm:$0xff] %vm498, 0.0
      %2258 = vst.msk [vmem:[#allocation2 + $0x218] sm:$0xff] %vm498, 0.0
      %2259 = vst.msk [vmem:[#allocation2 + $0x220] sm:$0xff] %vm498, 0.0
      %2260 = vst.msk [vmem:[#allocation2 + $0x228] sm:$0xff] %vm498, 0.0
      %2261 = vst.msk [vmem:[#allocation2 + $0x230] sm:$0xff] %vm498, 0.0
      %2262 = vst.msk [vmem:[#allocation2 + $0x238] sm:$0xff] %vm498, 0.0
      %s2263 = scalar_lea.vmem [#allocation2], 32
      %2264 = vst.msk [vmem:[%s2263 + $0x8] sm:$0xff] %vm498, %v2159
      %2265 = vst.msk [vmem:[%s2263 + $0x10] sm:$0xff] %vm498, %v2160
      %2266 = vst.msk [vmem:[%s2263 + $0x28] sm:$0xff] %vm498, %v2161
      %2267 = vst.msk [vmem:[%s2263 + $0x30] sm:$0xff] %vm498, %v2162
      %2268 = vst.msk [vmem:[%s2263 + $0x48] sm:$0xff] %vm498, %v2163
      %2269 = vst.msk [vmem:[%s2263 + $0x50] sm:$0xff] %vm498, %v2164
      %2270 = vst.msk [vmem:[%s2263 + $0x68] sm:$0xff] %vm498, %v2165
      %2271 = vst.msk [vmem:[%s2263 + $0x70] sm:$0xff] %vm498, %v2166
      %2272 = vst.msk [vmem:[%s2263 + $0x88] sm:$0xff] %vm498, %v2167
      %2273 = vst.msk [vmem:[%s2263 + $0x90] sm:$0xff] %vm498, %v2168
      %2274 = vst.msk [vmem:[%s2263 + $0xa8] sm:$0xff] %vm498, %v2169
      %2275 = vst.msk [vmem:[%s2263 + $0xb0] sm:$0xff] %vm498, %v2170
      %2276 = vst.msk [vmem:[%s2263 + $0xc8] sm:$0xff] %vm498, %v2171
      %2277 = vst.msk [vmem:[%s2263 + $0xd0] sm:$0xff] %vm498, %v2172
      %2278 = vst.msk [vmem:[%s2263 + $0xe8] sm:$0xff] %vm498, %v2173
      %2279 = vst.msk [vmem:[%s2263 + $0xf0] sm:$0xff] %vm498, %v2174
      %2280 = vst.msk [vmem:[%s2263 + $0x108] sm:$0xff] %vm498, %v2175
      %2281 = vst.msk [vmem:[%s2263 + $0x110] sm:$0xff] %vm498, %v2176
      %2282 = vst.msk [vmem:[%s2263 + $0x128] sm:$0xff] %vm498, %v2177
      %2283 = vst.msk [vmem:[%s2263 + $0x130] sm:$0xff] %vm498, %v2178
      %2284 = vst.msk [vmem:[%s2263 + $0x148] sm:$0xff] %vm498, %v2179
      %2285 = vst.msk [vmem:[%s2263 + $0x150] sm:$0xff] %vm498, %v2180
      %2286 = vst.msk [vmem:[%s2263 + $0x168] sm:$0xff] %vm498, %v2181
      %2287 = vst.msk [vmem:[%s2263 + $0x170] sm:$0xff] %vm498, %v2182
      %2288 = vst.msk [vmem:[%s2263 + $0x188] sm:$0xff] %vm498, %v2183
      %2289 = vst.msk [vmem:[%s2263 + $0x190] sm:$0xff] %vm498, %v2184
      %2290 = vst.msk [vmem:[%s2263 + $0x1a8] sm:$0xff] %vm498, %v2185
      %2291 = vst.msk [vmem:[%s2263 + $0x1b0] sm:$0xff] %vm498, %v2186
      %2292 = vst.msk [vmem:[%s2263 + $0x1c8] sm:$0xff] %vm498, %v2187
      %2293 = vst.msk [vmem:[%s2263 + $0x1d0] sm:$0xff] %vm498, %v2188
      %2294 = vst.msk [vmem:[%s2263 + $0x1e8] sm:$0xff] %vm498, %v2189
      %2295 = vst.msk [vmem:[%s2263 + $0x1f0] sm:$0xff] %vm498, %v2190
      %v2296 = vld [vmem:[#allocation2] sm:$0xff]
      %v2297 = vld [vmem:[#allocation2 + $0x8] sm:$0xff]
      %v2298 = vld [vmem:[#allocation2 + $0x10] sm:$0xff]
      %v2299 = vld [vmem:[#allocation2 + $0x18] sm:$0xff]
      %v2300 = vld [vmem:[#allocation2 + $0x20] sm:$0xff]
      %v2301 = vld [vmem:[#allocation2 + $0x28] sm:$0xff]
      %v2302 = vld [vmem:[#allocation2 + $0x30] sm:$0xff]
      %v2303 = vld [vmem:[#allocation2 + $0x38] sm:$0xff]
      %v2304 = vld [vmem:[#allocation2 + $0x40] sm:$0xff]
      %v2305 = vld [vmem:[#allocation2 + $0x48] sm:$0xff]
      %v2306 = vld [vmem:[#allocation2 + $0x50] sm:$0xff]
      %v2307 = vld [vmem:[#allocation2 + $0x58] sm:$0xff]
      %v2308 = vld [vmem:[#allocation2 + $0x60] sm:$0xff]
      %v2309 = vld [vmem:[#allocation2 + $0x68] sm:$0xff]
      %v2310 = vld [vmem:[#allocation2 + $0x70] sm:$0xff]
      %v2311 = vld [vmem:[#allocation2 + $0x78] sm:$0xff]
      %v2312 = vld [vmem:[#allocation2 + $0x80] sm:$0xff]
      %v2313 = vld [vmem:[#allocation2 + $0x88] sm:$0xff]
      %v2314 = vld [vmem:[#allocation2 + $0x90] sm:$0xff]
      %v2315 = vld [vmem:[#allocation2 + $0x98] sm:$0xff]
      %v2316 = vld [vmem:[#allocation2 + $0xa0] sm:$0xff]
      %v2317 = vld [vmem:[#allocation2 + $0xa8] sm:$0xff]
      %v2318 = vld [vmem:[#allocation2 + $0xb0] sm:$0xff]
      %v2319 = vld [vmem:[#allocation2 + $0xb8] sm:$0xff]
      %v2320 = vld [vmem:[#allocation2 + $0xc0] sm:$0xff]
      %v2321 = vld [vmem:[#allocation2 + $0xc8] sm:$0xff]
      %v2322 = vld [vmem:[#allocation2 + $0xd0] sm:$0xff]
      %v2323 = vld [vmem:[#allocation2 + $0xd8] sm:$0xff]
      %v2324 = vld [vmem:[#allocation2 + $0xe0] sm:$0xff]
      %v2325 = vld [vmem:[#allocation2 + $0xe8] sm:$0xff]
      %v2326 = vld [vmem:[#allocation2 + $0xf0] sm:$0xff]
      %v2327 = vld [vmem:[#allocation2 + $0xf8] sm:$0xff]
      %v2328 = vld [vmem:[#allocation2 + $0x100] sm:$0xff]
      %v2329 = vld [vmem:[#allocation2 + $0x108] sm:$0xff]
      %v2330 = vld [vmem:[#allocation2 + $0x110] sm:$0xff]
      %v2331 = vld [vmem:[#allocation2 + $0x118] sm:$0xff]
      %v2332 = vld [vmem:[#allocation2 + $0x120] sm:$0xff]
      %v2333 = vld [vmem:[#allocation2 + $0x128] sm:$0xff]
      %v2334 = vld [vmem:[#allocation2 + $0x130] sm:$0xff]
      %v2335 = vld [vmem:[#allocation2 + $0x138] sm:$0xff]
      %v2336 = vld [vmem:[#allocation2 + $0x140] sm:$0xff]
      %v2337 = vld [vmem:[#allocation2 + $0x148] sm:$0xff]
      %v2338 = vld [vmem:[#allocation2 + $0x150] sm:$0xff]
      %v2339 = vld [vmem:[#allocation2 + $0x158] sm:$0xff]
      %v2340 = vld [vmem:[#allocation2 + $0x160] sm:$0xff]
      %v2341 = vld [vmem:[#allocation2 + $0x168] sm:$0xff]
      %v2342 = vld [vmem:[#allocation2 + $0x170] sm:$0xff]
      %v2343 = vld [vmem:[#allocation2 + $0x178] sm:$0xff]
      %v2344 = vld [vmem:[#allocation2 + $0x180] sm:$0xff]
      %v2345 = vld [vmem:[#allocation2 + $0x188] sm:$0xff]
      %v2346 = vld [vmem:[#allocation2 + $0x190] sm:$0xff]
      %v2347 = vld [vmem:[#allocation2 + $0x198] sm:$0xff]
      %v2348 = vld [vmem:[#allocation2 + $0x1a0] sm:$0xff]
      %v2349 = vld [vmem:[#allocation2 + $0x1a8] sm:$0xff]
      %v2350 = vld [vmem:[#allocation2 + $0x1b0] sm:$0xff]
      %v2351 = vld [vmem:[#allocation2 + $0x1b8] sm:$0xff]
      %v2352 = vld [vmem:[#allocation2 + $0x1c0] sm:$0xff]
      %v2353 = vld [vmem:[#allocation2 + $0x1c8] sm:$0xff]
      %v2354 = vld [vmem:[#allocation2 + $0x1d0] sm:$0xff]
      %v2355 = vld [vmem:[#allocation2 + $0x1d8] sm:$0xff]
      %v2356 = vld [vmem:[#allocation2 + $0x1e0] sm:$0xff]
      %v2357 = vld [vmem:[#allocation2 + $0x1e8] sm:$0xff]
      %v2358 = vld [vmem:[#allocation2 + $0x1f0] sm:$0xff]
      %v2359 = vld [vmem:[#allocation2 + $0x1f8] sm:$0xff]
      %v2360 = vld [vmem:[#allocation2 + $0x200] sm:$0xff]
      %v2361 = vld [vmem:[#allocation2 + $0x208] sm:$0xff]
      %v2362 = vld [vmem:[#allocation2 + $0x210] sm:$0xff]
      %v2363 = vld [vmem:[#allocation2 + $0x218] sm:$0xff]
      %v2364 = vld [vmem:[#allocation2 + $0x220] sm:$0xff]
      %v2365 = vld [vmem:[#allocation2 + $0x228] sm:$0xff]
      %v2366 = vld [vmem:[#allocation2 + $0x230] sm:$0xff]
      %v2367 = vld [vmem:[#allocation2 + $0x238] sm:$0xff]
      %vm2416 = vcmask 1040384
      %v2417 = vrot.slane %v2296, 7
      %v2418 = vrot.slane %v2297, 7
      %v2419 = vsel %vm2416, %v2417, %v2418
      %v2420 = vrot.slane %v2298, 7
      %v2421 = vsel %vm2416, %v2418, %v2420
      %v2422 = vrot.slane %v2300, 7
      %v2423 = vrot.slane %v2301, 7
      %v2424 = vsel %vm2416, %v2422, %v2423
      %v2425 = vrot.slane %v2302, 7
      %v2426 = vsel %vm2416, %v2423, %v2425
      %v2427 = vrot.slane %v2304, 7
      %v2428 = vrot.slane %v2305, 7
      %v2429 = vsel %vm2416, %v2427, %v2428
      %v2430 = vrot.slane %v2306, 7
      %v2431 = vsel %vm2416, %v2428, %v2430
      %v2432 = vrot.slane %v2308, 7
      %v2433 = vrot.slane %v2309, 7
      %v2434 = vsel %vm2416, %v2432, %v2433
      %v2435 = vrot.slane %v2310, 7
      %v2436 = vsel %vm2416, %v2433, %v2435
      %v2437 = vrot.slane %v2312, 7
      %v2438 = vrot.slane %v2313, 7
      %v2439 = vsel %vm2416, %v2437, %v2438
      %v2440 = vrot.slane %v2314, 7
      %v2441 = vsel %vm2416, %v2438, %v2440
      %v2442 = vrot.slane %v2316, 7
      %v2443 = vrot.slane %v2317, 7
      %v2444 = vsel %vm2416, %v2442, %v2443
      %v2445 = vrot.slane %v2318, 7
      %v2446 = vsel %vm2416, %v2443, %v2445
      %v2447 = vrot.slane %v2320, 7
      %v2448 = vrot.slane %v2321, 7
      %v2449 = vsel %vm2416, %v2447, %v2448
      %v2450 = vrot.slane %v2322, 7
      %v2451 = vsel %vm2416, %v2448, %v2450
      %v2452 = vrot.slane %v2324, 7
      %v2453 = vrot.slane %v2325, 7
      %v2454 = vsel %vm2416, %v2452, %v2453
      %v2455 = vrot.slane %v2326, 7
      %v2456 = vsel %vm2416, %v2453, %v2455
      %v2457 = vrot.slane %v2328, 7
      %v2458 = vrot.slane %v2329, 7
      %v2459 = vsel %vm2416, %v2457, %v2458
      %v2460 = vrot.slane %v2330, 7
      %v2461 = vsel %vm2416, %v2458, %v2460
      %v2462 = vrot.slane %v2332, 7
      %v2463 = vrot.slane %v2333, 7
      %v2464 = vsel %vm2416, %v2462, %v2463
      %v2465 = vrot.slane %v2334, 7
      %v2466 = vsel %vm2416, %v2463, %v2465
      %v2467 = vrot.slane %v2336, 7
      %v2468 = vrot.slane %v2337, 7
      %v2469 = vsel %vm2416, %v2467, %v2468
      %v2470 = vrot.slane %v2338, 7
      %v2471 = vsel %vm2416, %v2468, %v2470
      %v2472 = vrot.slane %v2340, 7
      %v2473 = vrot.slane %v2341, 7
      %v2474 = vsel %vm2416, %v2472, %v2473
      %v2475 = vrot.slane %v2342, 7
      %v2476 = vsel %vm2416, %v2473, %v2475
      %v2477 = vrot.slane %v2344, 7
      %v2478 = vrot.slane %v2345, 7
      %v2479 = vsel %vm2416, %v2477, %v2478
      %v2480 = vrot.slane %v2346, 7
      %v2481 = vsel %vm2416, %v2478, %v2480
      %v2482 = vrot.slane %v2348, 7
      %v2483 = vrot.slane %v2349, 7
      %v2484 = vsel %vm2416, %v2482, %v2483
      %v2485 = vrot.slane %v2350, 7
      %v2486 = vsel %vm2416, %v2483, %v2485
      %v2487 = vrot.slane %v2352, 7
      %v2488 = vrot.slane %v2353, 7
      %v2489 = vsel %vm2416, %v2487, %v2488
      %v2490 = vrot.slane %v2354, 7
      %v2491 = vsel %vm2416, %v2488, %v2490
      %v2492 = vrot.slane %v2356, 7
      %v2493 = vrot.slane %v2357, 7
      %v2494 = vsel %vm2416, %v2492, %v2493
      %v2495 = vrot.slane %v2358, 7
      %v2496 = vsel %vm2416, %v2493, %v2495
      %v2497 = vsel %vm498, %v2297, 0
      %v2499 = vsel %vm498, %v2298, 0
      %v2501 = vsel %vm498, %v2301, 0
      %v2503 = vsel %vm498, %v2302, 0
      %v2505 = vsel %vm498, %v2305, 0
      %v2507 = vsel %vm498, %v2306, 0
      %v2509 = vsel %vm498, %v2309, 0
      %v2511 = vsel %vm498, %v2310, 0
      %v2513 = vsel %vm498, %v2313, 0
      %v2515 = vsel %vm498, %v2314, 0
      %v2517 = vsel %vm498, %v2317, 0
      %v2519 = vsel %vm498, %v2318, 0
      %v2521 = vsel %vm498, %v2321, 0
      %v2523 = vsel %vm498, %v2322, 0
      %v2525 = vsel %vm498, %v2325, 0
      %v2527 = vsel %vm498, %v2326, 0
      %v2529 = vsel %vm498, %v2329, 0
      %v2531 = vsel %vm498, %v2330, 0
      %v2533 = vsel %vm498, %v2333, 0
      %v2535 = vsel %vm498, %v2334, 0
      %v2537 = vsel %vm498, %v2337, 0
      %v2539 = vsel %vm498, %v2338, 0
      %v2541 = vsel %vm498, %v2341, 0
      %v2543 = vsel %vm498, %v2342, 0
      %v2545 = vsel %vm498, %v2345, 0
      %v2547 = vsel %vm498, %v2346, 0
      %v2549 = vsel %vm498, %v2349, 0
      %v2551 = vsel %vm498, %v2350, 0
      %v2553 = vsel %vm498, %v2353, 0
      %v2555 = vsel %vm498, %v2354, 0
      %v2557 = vsel %vm498, %v2357, 0
      %v2559 = vsel %vm498, %v2358, 0
      %v2562 = vsel %vm563, %v361, 0
      %2564 = vmatpush.msra.mxu0 0.0
      %2565 = vmatpush.msra.mxu0 0.0
      %2566 = vmatpush.msra.mxu0 0.0
      %2567 = vmatpush.msra.mxu0 0.0
      %2568 = vmatpush.msra.mxu0 0.0
      %2569 = vmatpush.msra.mxu0 0.0
      %2570 = vmatpush.msra.mxu0 0.0
      %2571 = vmatpush.msra.mxu0 0.0
      %2572 = vmatpush.msra.mxu0 0.0
      %2573 = vmatpush.msra.mxu0 0.0
      %2574 = vmatpush.msra.mxu0 0.0
      %2575 = vmatpush.msra.mxu0 0.0
      %2576 = vmatpush.msra.mxu0 0.0
      %2577 = vmatpush.msra.mxu0 0.0
      %2578 = vmatpush.msra.mxu0 0.0
      %2579 = vmatpush.msra.mxu0 %v2562
      %2580 = vmatmul.f32.gmra.mxu0 %v2497
      %v2581 = vpop.f32.mrf.mxu0
      %v2582 = vadd.f32 0.0, %v2581
      %2583 = vmatmul.f32.gmra.mxu0 %v2499
      %v2584 = vpop.f32.mrf.mxu0
      %v2585 = vadd.f32 0.0, %v2584
      %2586 = vmatmul.f32.gmra.mxu0 %v2501
      %v2587 = vpop.f32.mrf.mxu0
      %v2588 = vadd.f32 0.0, %v2587
      %2589 = vmatmul.f32.gmra.mxu0 %v2503
      %v2590 = vpop.f32.mrf.mxu0
      %v2591 = vadd.f32 0.0, %v2590
      %2592 = vmatmul.f32.gmra.mxu0 %v2505
      %v2593 = vpop.f32.mrf.mxu0
      %v2594 = vadd.f32 0.0, %v2593
      %2595 = vmatmul.f32.gmra.mxu0 %v2507
      %v2596 = vpop.f32.mrf.mxu0
      %v2597 = vadd.f32 0.0, %v2596
      %2598 = vmatmul.f32.gmra.mxu0 %v2509
      %v2599 = vpop.f32.mrf.mxu0
      %v2600 = vadd.f32 0.0, %v2599
      %2601 = vmatmul.f32.gmra.mxu0 %v2511
      %v2602 = vpop.f32.mrf.mxu0
      %v2603 = vadd.f32 0.0, %v2602
      %2604 = vmatmul.f32.gmra.mxu0 %v2513
      %v2605 = vpop.f32.mrf.mxu0
      %v2606 = vadd.f32 0.0, %v2605
      %2607 = vmatmul.f32.gmra.mxu0 %v2515
      %v2608 = vpop.f32.mrf.mxu0
      %v2609 = vadd.f32 0.0, %v2608
      %2610 = vmatmul.f32.gmra.mxu0 %v2517
      %v2611 = vpop.f32.mrf.mxu0
      %v2612 = vadd.f32 0.0, %v2611
      %2613 = vmatmul.f32.gmra.mxu0 %v2519
      %v2614 = vpop.f32.mrf.mxu0
      %v2615 = vadd.f32 0.0, %v2614
      %2616 = vmatmul.f32.gmra.mxu0 %v2521
      %v2617 = vpop.f32.mrf.mxu0
      %v2618 = vadd.f32 0.0, %v2617
      %2619 = vmatmul.f32.gmra.mxu0 %v2523
      %v2620 = vpop.f32.mrf.mxu0
      %v2621 = vadd.f32 0.0, %v2620
      %2622 = vmatmul.f32.gmra.mxu0 %v2525
      %v2623 = vpop.f32.mrf.mxu0
      %v2624 = vadd.f32 0.0, %v2623
      %2625 = vmatmul.f32.gmra.mxu0 %v2527
      %v2626 = vpop.f32.mrf.mxu0
      %v2627 = vadd.f32 0.0, %v2626
      %2628 = vmatmul.f32.gmra.mxu0 %v2529
      %v2629 = vpop.f32.mrf.mxu0
      %v2630 = vadd.f32 0.0, %v2629
      %2631 = vmatmul.f32.gmra.mxu0 %v2531
      %v2632 = vpop.f32.mrf.mxu0
      %v2633 = vadd.f32 0.0, %v2632
      %2634 = vmatmul.f32.gmra.mxu0 %v2533
      %v2635 = vpop.f32.mrf.mxu0
      %v2636 = vadd.f32 0.0, %v2635
      %2637 = vmatmul.f32.gmra.mxu0 %v2535
      %v2638 = vpop.f32.mrf.mxu0
      %v2639 = vadd.f32 0.0, %v2638
      %2640 = vmatmul.f32.gmra.mxu0 %v2537
      %v2641 = vpop.f32.mrf.mxu0
      %v2642 = vadd.f32 0.0, %v2641
      %2643 = vmatmul.f32.gmra.mxu0 %v2539
      %v2644 = vpop.f32.mrf.mxu0
      %v2645 = vadd.f32 0.0, %v2644
      %2646 = vmatmul.f32.gmra.mxu0 %v2541
      %v2647 = vpop.f32.mrf.mxu0
      %v2648 = vadd.f32 0.0, %v2647
      %2649 = vmatmul.f32.gmra.mxu0 %v2543
      %v2650 = vpop.f32.mrf.mxu0
      %v2651 = vadd.f32 0.0, %v2650
      %2652 = vmatmul.f32.gmra.mxu0 %v2545
      %v2653 = vpop.f32.mrf.mxu0
      %v2654 = vadd.f32 0.0, %v2653
      %2655 = vmatmul.f32.gmra.mxu0 %v2547
      %v2656 = vpop.f32.mrf.mxu0
      %v2657 = vadd.f32 0.0, %v2656
      %2658 = vmatmul.f32.gmra.mxu0 %v2549
      %v2659 = vpop.f32.mrf.mxu0
      %v2660 = vadd.f32 0.0, %v2659
      %2661 = vmatmul.f32.gmra.mxu0 %v2551
      %v2662 = vpop.f32.mrf.mxu0
      %v2663 = vadd.f32 0.0, %v2662
      %2664 = vmatmul.f32.gmra.mxu0 %v2553
      %v2665 = vpop.f32.mrf.mxu0
      %v2666 = vadd.f32 0.0, %v2665
      %2667 = vmatmul.f32.gmra.mxu0 %v2555
      %v2668 = vpop.f32.mrf.mxu0
      %v2669 = vadd.f32 0.0, %v2668
      %2670 = vmatmul.f32.gmra.mxu0 %v2557
      %v2671 = vpop.f32.mrf.mxu0
      %v2672 = vadd.f32 0.0, %v2671
      %2673 = vmatmul.f32.gmra.mxu0 %v2559
      %v2674 = vpop.f32.mrf.mxu0
      %v2675 = vadd.f32 0.0, %v2674
      %2676 = vdwg.mxu0
      %v2677 = vsel %vm498, %v2419, 0
      %v2679 = vsel %vm498, %v2421, 0
      %v2681 = vsel %vm498, %v2424, 0
      %v2683 = vsel %vm498, %v2426, 0
      %v2685 = vsel %vm498, %v2429, 0
      %v2687 = vsel %vm498, %v2431, 0
      %v2689 = vsel %vm498, %v2434, 0
      %v2691 = vsel %vm498, %v2436, 0
      %v2693 = vsel %vm498, %v2439, 0
      %v2695 = vsel %vm498, %v2441, 0
      %v2697 = vsel %vm498, %v2444, 0
      %v2699 = vsel %vm498, %v2446, 0
      %v2701 = vsel %vm498, %v2449, 0
      %v2703 = vsel %vm498, %v2451, 0
      %v2705 = vsel %vm498, %v2454, 0
      %v2707 = vsel %vm498, %v2456, 0
      %v2709 = vsel %vm498, %v2459, 0
      %v2711 = vsel %vm498, %v2461, 0
      %v2713 = vsel %vm498, %v2464, 0
      %v2715 = vsel %vm498, %v2466, 0
      %v2717 = vsel %vm498, %v2469, 0
      %v2719 = vsel %vm498, %v2471, 0
      %v2721 = vsel %vm498, %v2474, 0
      %v2723 = vsel %vm498, %v2476, 0
      %v2725 = vsel %vm498, %v2479, 0
      %v2727 = vsel %vm498, %v2481, 0
      %v2729 = vsel %vm498, %v2484, 0
      %v2731 = vsel %vm498, %v2486, 0
      %v2733 = vsel %vm498, %v2489, 0
      %v2735 = vsel %vm498, %v2491, 0
      %v2737 = vsel %vm498, %v2494, 0
      %v2739 = vsel %vm498, %v2496, 0
      %v2742 = vsel %vm563, %v360, 0
      %2744 = vmatpush.msra.mxu0 0.0
      %2745 = vmatpush.msra.mxu0 0.0
      %2746 = vmatpush.msra.mxu0 0.0
      %2747 = vmatpush.msra.mxu0 0.0
      %2748 = vmatpush.msra.mxu0 0.0
      %2749 = vmatpush.msra.mxu0 0.0
      %2750 = vmatpush.msra.mxu0 0.0
      %2751 = vmatpush.msra.mxu0 0.0
      %2752 = vmatpush.msra.mxu0 0.0
      %2753 = vmatpush.msra.mxu0 0.0
      %2754 = vmatpush.msra.mxu0 0.0
      %2755 = vmatpush.msra.mxu0 0.0
      %2756 = vmatpush.msra.mxu0 0.0
      %2757 = vmatpush.msra.mxu0 0.0
      %2758 = vmatpush.msra.mxu0 0.0
      %2759 = vmatpush.msra.mxu0 %v2742
      %2760 = vmatmul.f32.gmra.mxu0 %v2677
      %v2761 = vpop.f32.mrf.mxu0
      %v2762 = vadd.f32 %v2582, %v2761
      %2763 = vmatmul.f32.gmra.mxu0 %v2679
      %v2764 = vpop.f32.mrf.mxu0
      %v2765 = vadd.f32 %v2585, %v2764
      %2766 = vmatmul.f32.gmra.mxu0 %v2681
      %v2767 = vpop.f32.mrf.mxu0
      %v2768 = vadd.f32 %v2588, %v2767
      %2769 = vmatmul.f32.gmra.mxu0 %v2683
      %v2770 = vpop.f32.mrf.mxu0
      %v2771 = vadd.f32 %v2591, %v2770
      %2772 = vmatmul.f32.gmra.mxu0 %v2685
      %v2773 = vpop.f32.mrf.mxu0
      %v2774 = vadd.f32 %v2594, %v2773
      %2775 = vmatmul.f32.gmra.mxu0 %v2687
      %v2776 = vpop.f32.mrf.mxu0
      %v2777 = vadd.f32 %v2597, %v2776
      %2778 = vmatmul.f32.gmra.mxu0 %v2689
      %v2779 = vpop.f32.mrf.mxu0
      %v2780 = vadd.f32 %v2600, %v2779
      %2781 = vmatmul.f32.gmra.mxu0 %v2691
      %v2782 = vpop.f32.mrf.mxu0
      %v2783 = vadd.f32 %v2603, %v2782
      %2784 = vmatmul.f32.gmra.mxu0 %v2693
      %v2785 = vpop.f32.mrf.mxu0
      %v2786 = vadd.f32 %v2606, %v2785
      %2787 = vmatmul.f32.gmra.mxu0 %v2695
      %v2788 = vpop.f32.mrf.mxu0
      %v2789 = vadd.f32 %v2609, %v2788
      %2790 = vmatmul.f32.gmra.mxu0 %v2697
      %v2791 = vpop.f32.mrf.mxu0
      %v2792 = vadd.f32 %v2612, %v2791
      %2793 = vmatmul.f32.gmra.mxu0 %v2699
      %v2794 = vpop.f32.mrf.mxu0
      %v2795 = vadd.f32 %v2615, %v2794
      %2796 = vmatmul.f32.gmra.mxu0 %v2701
      %v2797 = vpop.f32.mrf.mxu0
      %v2798 = vadd.f32 %v2618, %v2797
      %2799 = vmatmul.f32.gmra.mxu0 %v2703
      %v2800 = vpop.f32.mrf.mxu0
      %v2801 = vadd.f32 %v2621, %v2800
      %2802 = vmatmul.f32.gmra.mxu0 %v2705
      %v2803 = vpop.f32.mrf.mxu0
      %v2804 = vadd.f32 %v2624, %v2803
      %2805 = vmatmul.f32.gmra.mxu0 %v2707
      %v2806 = vpop.f32.mrf.mxu0
      %v2807 = vadd.f32 %v2627, %v2806
      %2808 = vmatmul.f32.gmra.mxu0 %v2709
      %v2809 = vpop.f32.mrf.mxu0
      %v2810 = vadd.f32 %v2630, %v2809
      %2811 = vmatmul.f32.gmra.mxu0 %v2711
      %v2812 = vpop.f32.mrf.mxu0
      %v2813 = vadd.f32 %v2633, %v2812
      %2814 = vmatmul.f32.gmra.mxu0 %v2713
      %v2815 = vpop.f32.mrf.mxu0
      %v2816 = vadd.f32 %v2636, %v2815
      %2817 = vmatmul.f32.gmra.mxu0 %v2715
      %v2818 = vpop.f32.mrf.mxu0
      %v2819 = vadd.f32 %v2639, %v2818
      %2820 = vmatmul.f32.gmra.mxu0 %v2717
      %v2821 = vpop.f32.mrf.mxu0
      %v2822 = vadd.f32 %v2642, %v2821
      %2823 = vmatmul.f32.gmra.mxu0 %v2719
      %v2824 = vpop.f32.mrf.mxu0
      %v2825 = vadd.f32 %v2645, %v2824
      %2826 = vmatmul.f32.gmra.mxu0 %v2721
      %v2827 = vpop.f32.mrf.mxu0
      %v2828 = vadd.f32 %v2648, %v2827
      %2829 = vmatmul.f32.gmra.mxu0 %v2723
      %v2830 = vpop.f32.mrf.mxu0
      %v2831 = vadd.f32 %v2651, %v2830
      %2832 = vmatmul.f32.gmra.mxu0 %v2725
      %v2833 = vpop.f32.mrf.mxu0
      %v2834 = vadd.f32 %v2654, %v2833
      %2835 = vmatmul.f32.gmra.mxu0 %v2727
      %v2836 = vpop.f32.mrf.mxu0
      %v2837 = vadd.f32 %v2657, %v2836
      %2838 = vmatmul.f32.gmra.mxu0 %v2729
      %v2839 = vpop.f32.mrf.mxu0
      %v2840 = vadd.f32 %v2660, %v2839
      %2841 = vmatmul.f32.gmra.mxu0 %v2731
      %v2842 = vpop.f32.mrf.mxu0
      %v2843 = vadd.f32 %v2663, %v2842
      %2844 = vmatmul.f32.gmra.mxu0 %v2733
      %v2845 = vpop.f32.mrf.mxu0
      %v2846 = vadd.f32 %v2666, %v2845
      %2847 = vmatmul.f32.gmra.mxu0 %v2735
      %v2848 = vpop.f32.mrf.mxu0
      %v2849 = vadd.f32 %v2669, %v2848
      %2850 = vmatmul.f32.gmra.mxu0 %v2737
      %v2851 = vpop.f32.mrf.mxu0
      %v2852 = vadd.f32 %v2672, %v2851
      %2853 = vmatmul.f32.gmra.mxu0 %v2739
      %v2854 = vpop.f32.mrf.mxu0
      %v2855 = vadd.f32 %v2675, %v2854
      %2856 = vdwg.mxu0
      %v2873 = vrot.slane %v2297, 1
      %v2874 = vrot.slane %v2298, 1
      %v2875 = vsel %vm417, %v2873, %v2874
      %v2876 = vrot.slane %v2299, 1
      %v2877 = vsel %vm417, %v2874, %v2876
      %v2878 = vrot.slane %v2301, 1
      %v2879 = vrot.slane %v2302, 1
      %v2880 = vsel %vm417, %v2878, %v2879
      %v2881 = vrot.slane %v2303, 1
      %v2882 = vsel %vm417, %v2879, %v2881
      %v2883 = vrot.slane %v2305, 1
      %v2884 = vrot.slane %v2306, 1
      %v2885 = vsel %vm417, %v2883, %v2884
      %v2886 = vrot.slane %v2307, 1
      %v2887 = vsel %vm417, %v2884, %v2886
      %v2888 = vrot.slane %v2309, 1
      %v2889 = vrot.slane %v2310, 1
      %v2890 = vsel %vm417, %v2888, %v2889
      %v2891 = vrot.slane %v2311, 1
      %v2892 = vsel %vm417, %v2889, %v2891
      %v2893 = vrot.slane %v2313, 1
      %v2894 = vrot.slane %v2314, 1
      %v2895 = vsel %vm417, %v2893, %v2894
      %v2896 = vrot.slane %v2315, 1
      %v2897 = vsel %vm417, %v2894, %v2896
      %v2898 = vrot.slane %v2317, 1
      %v2899 = vrot.slane %v2318, 1
      %v2900 = vsel %vm417, %v2898, %v2899
      %v2901 = vrot.slane %v2319, 1
      %v2902 = vsel %vm417, %v2899, %v2901
      %v2903 = vrot.slane %v2321, 1
      %v2904 = vrot.slane %v2322, 1
      %v2905 = vsel %vm417, %v2903, %v2904
      %v2906 = vrot.slane %v2323, 1
      %v2907 = vsel %vm417, %v2904, %v2906
      %v2908 = vrot.slane %v2325, 1
      %v2909 = vrot.slane %v2326, 1
      %v2910 = vsel %vm417, %v2908, %v2909
      %v2911 = vrot.slane %v2327, 1
      %v2912 = vsel %vm417, %v2909, %v2911
      %v2913 = vrot.slane %v2329, 1
      %v2914 = vrot.slane %v2330, 1
      %v2915 = vsel %vm417, %v2913, %v2914
      %v2916 = vrot.slane %v2331, 1
      %v2917 = vsel %vm417, %v2914, %v2916
      %v2918 = vrot.slane %v2333, 1
      %v2919 = vrot.slane %v2334, 1
      %v2920 = vsel %vm417, %v2918, %v2919
      %v2921 = vrot.slane %v2335, 1
      %v2922 = vsel %vm417, %v2919, %v2921
      %v2923 = vrot.slane %v2337, 1
      %v2924 = vrot.slane %v2338, 1
      %v2925 = vsel %vm417, %v2923, %v2924
      %v2926 = vrot.slane %v2339, 1
      %v2927 = vsel %vm417, %v2924, %v2926
      %v2928 = vrot.slane %v2341, 1
      %v2929 = vrot.slane %v2342, 1
      %v2930 = vsel %vm417, %v2928, %v2929
      %v2931 = vrot.slane %v2343, 1
      %v2932 = vsel %vm417, %v2929, %v2931
      %v2933 = vrot.slane %v2345, 1
      %v2934 = vrot.slane %v2346, 1
      %v2935 = vsel %vm417, %v2933, %v2934
      %v2936 = vrot.slane %v2347, 1
      %v2937 = vsel %vm417, %v2934, %v2936
      %v2938 = vrot.slane %v2349, 1
      %v2939 = vrot.slane %v2350, 1
      %v2940 = vsel %vm417, %v2938, %v2939
      %v2941 = vrot.slane %v2351, 1
      %v2942 = vsel %vm417, %v2939, %v2941
      %v2943 = vrot.slane %v2353, 1
      %v2944 = vrot.slane %v2354, 1
      %v2945 = vsel %vm417, %v2943, %v2944
      %v2946 = vrot.slane %v2355, 1
      %v2947 = vsel %vm417, %v2944, %v2946
      %v2948 = vrot.slane %v2357, 1
      %v2949 = vrot.slane %v2358, 1
      %v2950 = vsel %vm417, %v2948, %v2949
      %v2951 = vrot.slane %v2359, 1
      %v2952 = vsel %vm417, %v2949, %v2951
      %v2953 = vsel %vm498, %v2875, 0
      %v2955 = vsel %vm498, %v2877, 0
      %v2957 = vsel %vm498, %v2880, 0
      %v2959 = vsel %vm498, %v2882, 0
      %v2961 = vsel %vm498, %v2885, 0
      %v2963 = vsel %vm498, %v2887, 0
      %v2965 = vsel %vm498, %v2890, 0
      %v2967 = vsel %vm498, %v2892, 0
      %v2969 = vsel %vm498, %v2895, 0
      %v2971 = vsel %vm498, %v2897, 0
      %v2973 = vsel %vm498, %v2900, 0
      %v2975 = vsel %vm498, %v2902, 0
      %v2977 = vsel %vm498, %v2905, 0
      %v2979 = vsel %vm498, %v2907, 0
      %v2981 = vsel %vm498, %v2910, 0
      %v2983 = vsel %vm498, %v2912, 0
      %v2985 = vsel %vm498, %v2915, 0
      %v2987 = vsel %vm498, %v2917, 0
      %v2989 = vsel %vm498, %v2920, 0
      %v2991 = vsel %vm498, %v2922, 0
      %v2993 = vsel %vm498, %v2925, 0
      %v2995 = vsel %vm498, %v2927, 0
      %v2997 = vsel %vm498, %v2930, 0
      %v2999 = vsel %vm498, %v2932, 0
      %v3001 = vsel %vm498, %v2935, 0
      %v3003 = vsel %vm498, %v2937, 0
      %v3005 = vsel %vm498, %v2940, 0
      %v3007 = vsel %vm498, %v2942, 0
      %v3009 = vsel %vm498, %v2945, 0
      %v3011 = vsel %vm498, %v2947, 0
      %v3013 = vsel %vm498, %v2950, 0
      %v3015 = vsel %vm498, %v2952, 0
      %v3018 = vsel %vm563, %v362, 0
      %3020 = vmatpush.msra.mxu0 0.0
      %3021 = vmatpush.msra.mxu0 0.0
      %3022 = vmatpush.msra.mxu0 0.0
      %3023 = vmatpush.msra.mxu0 0.0
      %3024 = vmatpush.msra.mxu0 0.0
      %3025 = vmatpush.msra.mxu0 0.0
      %3026 = vmatpush.msra.mxu0 0.0
      %3027 = vmatpush.msra.mxu0 0.0
      %3028 = vmatpush.msra.mxu0 0.0
      %3029 = vmatpush.msra.mxu0 0.0
      %3030 = vmatpush.msra.mxu0 0.0
      %3031 = vmatpush.msra.mxu0 0.0
      %3032 = vmatpush.msra.mxu0 0.0
      %3033 = vmatpush.msra.mxu0 0.0
      %3034 = vmatpush.msra.mxu0 0.0
      %3035 = vmatpush.msra.mxu0 %v3018
      %3036 = vmatmul.f32.gmra.mxu0 %v2953
      %v3037 = vpop.f32.mrf.mxu0
      %v3038 = vadd.f32 0.0, %v3037
      %3039 = vmatmul.f32.gmra.mxu0 %v2955
      %v3040 = vpop.f32.mrf.mxu0
      %v3041 = vadd.f32 0.0, %v3040
      %3042 = vmatmul.f32.gmra.mxu0 %v2957
      %v3043 = vpop.f32.mrf.mxu0
      %v3044 = vadd.f32 0.0, %v3043
      %3045 = vmatmul.f32.gmra.mxu0 %v2959
      %v3046 = vpop.f32.mrf.mxu0
      %v3047 = vadd.f32 0.0, %v3046
      %3048 = vmatmul.f32.gmra.mxu0 %v2961
      %v3049 = vpop.f32.mrf.mxu0
      %v3050 = vadd.f32 0.0, %v3049
      %3051 = vmatmul.f32.gmra.mxu0 %v2963
      %v3052 = vpop.f32.mrf.mxu0
      %v3053 = vadd.f32 0.0, %v3052
      %3054 = vmatmul.f32.gmra.mxu0 %v2965
      %v3055 = vpop.f32.mrf.mxu0
      %v3056 = vadd.f32 0.0, %v3055
      %3057 = vmatmul.f32.gmra.mxu0 %v2967
      %v3058 = vpop.f32.mrf.mxu0
      %v3059 = vadd.f32 0.0, %v3058
      %3060 = vmatmul.f32.gmra.mxu0 %v2969
      %v3061 = vpop.f32.mrf.mxu0
      %v3062 = vadd.f32 0.0, %v3061
      %3063 = vmatmul.f32.gmra.mxu0 %v2971
      %v3064 = vpop.f32.mrf.mxu0
      %v3065 = vadd.f32 0.0, %v3064
      %3066 = vmatmul.f32.gmra.mxu0 %v2973
      %v3067 = vpop.f32.mrf.mxu0
      %v3068 = vadd.f32 0.0, %v3067
      %3069 = vmatmul.f32.gmra.mxu0 %v2975
      %v3070 = vpop.f32.mrf.mxu0
      %v3071 = vadd.f32 0.0, %v3070
      %3072 = vmatmul.f32.gmra.mxu0 %v2977
      %v3073 = vpop.f32.mrf.mxu0
      %v3074 = vadd.f32 0.0, %v3073
      %3075 = vmatmul.f32.gmra.mxu0 %v2979
      %v3076 = vpop.f32.mrf.mxu0
      %v3077 = vadd.f32 0.0, %v3076
      %3078 = vmatmul.f32.gmra.mxu0 %v2981
      %v3079 = vpop.f32.mrf.mxu0
      %v3080 = vadd.f32 0.0, %v3079
      %3081 = vmatmul.f32.gmra.mxu0 %v2983
      %v3082 = vpop.f32.mrf.mxu0
      %v3083 = vadd.f32 0.0, %v3082
      %3084 = vmatmul.f32.gmra.mxu0 %v2985
      %v3085 = vpop.f32.mrf.mxu0
      %v3086 = vadd.f32 0.0, %v3085
      %3087 = vmatmul.f32.gmra.mxu0 %v2987
      %v3088 = vpop.f32.mrf.mxu0
      %v3089 = vadd.f32 0.0, %v3088
      %3090 = vmatmul.f32.gmra.mxu0 %v2989
      %v3091 = vpop.f32.mrf.mxu0
      %v3092 = vadd.f32 0.0, %v3091
      %3093 = vmatmul.f32.gmra.mxu0 %v2991
      %v3094 = vpop.f32.mrf.mxu0
      %v3095 = vadd.f32 0.0, %v3094
      %3096 = vmatmul.f32.gmra.mxu0 %v2993
      %v3097 = vpop.f32.mrf.mxu0
      %v3098 = vadd.f32 0.0, %v3097
      %3099 = vmatmul.f32.gmra.mxu0 %v2995
      %v3100 = vpop.f32.mrf.mxu0
      %v3101 = vadd.f32 0.0, %v3100
      %3102 = vmatmul.f32.gmra.mxu0 %v2997
      %v3103 = vpop.f32.mrf.mxu0
      %v3104 = vadd.f32 0.0, %v3103
      %3105 = vmatmul.f32.gmra.mxu0 %v2999
      %v3106 = vpop.f32.mrf.mxu0
      %v3107 = vadd.f32 0.0, %v3106
      %3108 = vmatmul.f32.gmra.mxu0 %v3001
      %v3109 = vpop.f32.mrf.mxu0
      %v3110 = vadd.f32 0.0, %v3109
      %3111 = vmatmul.f32.gmra.mxu0 %v3003
      %v3112 = vpop.f32.mrf.mxu0
      %v3113 = vadd.f32 0.0, %v3112
      %3114 = vmatmul.f32.gmra.mxu0 %v3005
      %v3115 = vpop.f32.mrf.mxu0
      %v3116 = vadd.f32 0.0, %v3115
      %3117 = vmatmul.f32.gmra.mxu0 %v3007
      %v3118 = vpop.f32.mrf.mxu0
      %v3119 = vadd.f32 0.0, %v3118
      %3120 = vmatmul.f32.gmra.mxu0 %v3009
      %v3121 = vpop.f32.mrf.mxu0
      %v3122 = vadd.f32 0.0, %v3121
      %3123 = vmatmul.f32.gmra.mxu0 %v3011
      %v3124 = vpop.f32.mrf.mxu0
      %v3125 = vadd.f32 0.0, %v3124
      %3126 = vmatmul.f32.gmra.mxu0 %v3013
      %v3127 = vpop.f32.mrf.mxu0
      %v3128 = vadd.f32 0.0, %v3127
      %3129 = vmatmul.f32.gmra.mxu0 %v3015
      %v3130 = vpop.f32.mrf.mxu0
      %v3131 = vadd.f32 0.0, %v3130
      %3132 = vdwg.mxu0
      %v3133 = vadd.f32 %v2762, %v3038
      %v3134 = vadd.f32 %v2765, %v3041
      %v3135 = vadd.f32 %v2768, %v3044
      %v3136 = vadd.f32 %v2771, %v3047
      %v3137 = vadd.f32 %v2774, %v3050
      %v3138 = vadd.f32 %v2777, %v3053
      %v3139 = vadd.f32 %v2780, %v3056
      %v3140 = vadd.f32 %v2783, %v3059
      %v3141 = vadd.f32 %v2786, %v3062
      %v3142 = vadd.f32 %v2789, %v3065
      %v3143 = vadd.f32 %v2792, %v3068
      %v3144 = vadd.f32 %v2795, %v3071
      %v3145 = vadd.f32 %v2798, %v3074
      %v3146 = vadd.f32 %v2801, %v3077
      %v3147 = vadd.f32 %v2804, %v3080
      %v3148 = vadd.f32 %v2807, %v3083
      %v3149 = vadd.f32 %v2810, %v3086
      %v3150 = vadd.f32 %v2813, %v3089
      %v3151 = vadd.f32 %v2816, %v3092
      %v3152 = vadd.f32 %v2819, %v3095
      %v3153 = vadd.f32 %v2822, %v3098
      %v3154 = vadd.f32 %v2825, %v3101
      %v3155 = vadd.f32 %v2828, %v3104
      %v3156 = vadd.f32 %v2831, %v3107
      %v3157 = vadd.f32 %v2834, %v3110
      %v3158 = vadd.f32 %v2837, %v3113
      %v3159 = vadd.f32 %v2840, %v3116
      %v3160 = vadd.f32 %v2843, %v3119
      %v3161 = vadd.f32 %v2846, %v3122
      %v3162 = vadd.f32 %v2849, %v3125
      %v3163 = vadd.f32 %v2852, %v3128
      %v3164 = vadd.f32 %v2855, %v3131
      %v3168 = vrot.slane %v2360, 7
      %v3169 = vrot.slane %v2361, 7
      %v3170 = vsel %vm2416, %v3168, %v3169
      %v3171 = vrot.slane %v2362, 7
      %v3172 = vsel %vm2416, %v3169, %v3171
      %v3173 = vsel %vm498, %v3170, 0
      %v3175 = vsel %vm498, %v3172, 0
      %v3178 = vsel %vm563, %v363, 0
      %3180 = vmatpush.msra.mxu0 0.0
      %3181 = vmatpush.msra.mxu0 0.0
      %3182 = vmatpush.msra.mxu0 0.0
      %3183 = vmatpush.msra.mxu0 0.0
      %3184 = vmatpush.msra.mxu0 0.0
      %3185 = vmatpush.msra.mxu0 0.0
      %3186 = vmatpush.msra.mxu0 0.0
      %3187 = vmatpush.msra.mxu0 0.0
      %3188 = vmatpush.msra.mxu0 0.0
      %3189 = vmatpush.msra.mxu0 0.0
      %3190 = vmatpush.msra.mxu0 0.0
      %3191 = vmatpush.msra.mxu0 0.0
      %3192 = vmatpush.msra.mxu0 0.0
      %3193 = vmatpush.msra.mxu0 0.0
      %3194 = vmatpush.msra.mxu0 0.0
      %3195 = vmatpush.msra.mxu0 %v3178
      %3196 = vmatmul.f32.gmra.mxu0 %v2681
      %v3197 = vpop.f32.mrf.mxu0
      %v3198 = vadd.f32 0.0, %v3197
      %3199 = vmatmul.f32.gmra.mxu0 %v2683
      %v3200 = vpop.f32.mrf.mxu0
      %v3201 = vadd.f32 0.0, %v3200
      %3202 = vmatmul.f32.gmra.mxu0 %v2685
      %v3203 = vpop.f32.mrf.mxu0
      %v3204 = vadd.f32 0.0, %v3203
      %3205 = vmatmul.f32.gmra.mxu0 %v2687
      %v3206 = vpop.f32.mrf.mxu0
      %v3207 = vadd.f32 0.0, %v3206
      %3208 = vmatmul.f32.gmra.mxu0 %v2689
      %v3209 = vpop.f32.mrf.mxu0
      %v3210 = vadd.f32 0.0, %v3209
      %3211 = vmatmul.f32.gmra.mxu0 %v2691
      %v3212 = vpop.f32.mrf.mxu0
      %v3213 = vadd.f32 0.0, %v3212
      %3214 = vmatmul.f32.gmra.mxu0 %v2693
      %v3215 = vpop.f32.mrf.mxu0
      %v3216 = vadd.f32 0.0, %v3215
      %3217 = vmatmul.f32.gmra.mxu0 %v2695
      %v3218 = vpop.f32.mrf.mxu0
      %v3219 = vadd.f32 0.0, %v3218
      %3220 = vmatmul.f32.gmra.mxu0 %v2697
      %v3221 = vpop.f32.mrf.mxu0
      %v3222 = vadd.f32 0.0, %v3221
      %3223 = vmatmul.f32.gmra.mxu0 %v2699
      %v3224 = vpop.f32.mrf.mxu0
      %v3225 = vadd.f32 0.0, %v3224
      %3226 = vmatmul.f32.gmra.mxu0 %v2701
      %v3227 = vpop.f32.mrf.mxu0
      %v3228 = vadd.f32 0.0, %v3227
      %3229 = vmatmul.f32.gmra.mxu0 %v2703
      %v3230 = vpop.f32.mrf.mxu0
      %v3231 = vadd.f32 0.0, %v3230
      %3232 = vmatmul.f32.gmra.mxu0 %v2705
      %v3233 = vpop.f32.mrf.mxu0
      %v3234 = vadd.f32 0.0, %v3233
      %3235 = vmatmul.f32.gmra.mxu0 %v2707
      %v3236 = vpop.f32.mrf.mxu0
      %v3237 = vadd.f32 0.0, %v3236
      %3238 = vmatmul.f32.gmra.mxu0 %v2709
      %v3239 = vpop.f32.mrf.mxu0
      %v3240 = vadd.f32 0.0, %v3239
      %3241 = vmatmul.f32.gmra.mxu0 %v2711
      %v3242 = vpop.f32.mrf.mxu0
      %v3243 = vadd.f32 0.0, %v3242
      %3244 = vmatmul.f32.gmra.mxu0 %v2713
      %v3245 = vpop.f32.mrf.mxu0
      %v3246 = vadd.f32 0.0, %v3245
      %3247 = vmatmul.f32.gmra.mxu0 %v2715
      %v3248 = vpop.f32.mrf.mxu0
      %v3249 = vadd.f32 0.0, %v3248
      %3250 = vmatmul.f32.gmra.mxu0 %v2717
      %v3251 = vpop.f32.mrf.mxu0
      %v3252 = vadd.f32 0.0, %v3251
      %3253 = vmatmul.f32.gmra.mxu0 %v2719
      %v3254 = vpop.f32.mrf.mxu0
      %v3255 = vadd.f32 0.0, %v3254
      %3256 = vmatmul.f32.gmra.mxu0 %v2721
      %v3257 = vpop.f32.mrf.mxu0
      %v3258 = vadd.f32 0.0, %v3257
      %3259 = vmatmul.f32.gmra.mxu0 %v2723
      %v3260 = vpop.f32.mrf.mxu0
      %v3261 = vadd.f32 0.0, %v3260
      %3262 = vmatmul.f32.gmra.mxu0 %v2725
      %v3263 = vpop.f32.mrf.mxu0
      %v3264 = vadd.f32 0.0, %v3263
      %3265 = vmatmul.f32.gmra.mxu0 %v2727
      %v3266 = vpop.f32.mrf.mxu0
      %v3267 = vadd.f32 0.0, %v3266
      %3268 = vmatmul.f32.gmra.mxu0 %v2729
      %v3269 = vpop.f32.mrf.mxu0
      %v3270 = vadd.f32 0.0, %v3269
      %3271 = vmatmul.f32.gmra.mxu0 %v2731
      %v3272 = vpop.f32.mrf.mxu0
      %v3273 = vadd.f32 0.0, %v3272
      %3274 = vmatmul.f32.gmra.mxu0 %v2733
      %v3275 = vpop.f32.mrf.mxu0
      %v3276 = vadd.f32 0.0, %v3275
      %3277 = vmatmul.f32.gmra.mxu0 %v2735
      %v3278 = vpop.f32.mrf.mxu0
      %v3279 = vadd.f32 0.0, %v3278
      %3280 = vmatmul.f32.gmra.mxu0 %v2737
      %v3281 = vpop.f32.mrf.mxu0
      %v3282 = vadd.f32 0.0, %v3281
      %3283 = vmatmul.f32.gmra.mxu0 %v2739
      %v3284 = vpop.f32.mrf.mxu0
      %v3285 = vadd.f32 0.0, %v3284
      %3286 = vmatmul.f32.gmra.mxu0 %v3173
      %v3287 = vpop.f32.mrf.mxu0
      %v3288 = vadd.f32 0.0, %v3287
      %3289 = vmatmul.f32.gmra.mxu0 %v3175
      %v3290 = vpop.f32.mrf.mxu0
      %v3291 = vadd.f32 0.0, %v3290
      %3292 = vdwg.mxu0
      %v3293 = vadd.f32 %v3133, %v3198
      %v3294 = vadd.f32 %v3134, %v3201
      %v3295 = vadd.f32 %v3135, %v3204
      %v3296 = vadd.f32 %v3136, %v3207
      %v3297 = vadd.f32 %v3137, %v3210
      %v3298 = vadd.f32 %v3138, %v3213
      %v3299 = vadd.f32 %v3139, %v3216
      %v3300 = vadd.f32 %v3140, %v3219
      %v3301 = vadd.f32 %v3141, %v3222
      %v3302 = vadd.f32 %v3142, %v3225
      %v3303 = vadd.f32 %v3143, %v3228
      %v3304 = vadd.f32 %v3144, %v3231
      %v3305 = vadd.f32 %v3145, %v3234
      %v3306 = vadd.f32 %v3146, %v3237
      %v3307 = vadd.f32 %v3147, %v3240
      %v3308 = vadd.f32 %v3148, %v3243
      %v3309 = vadd.f32 %v3149, %v3246
      %v3310 = vadd.f32 %v3150, %v3249
      %v3311 = vadd.f32 %v3151, %v3252
      %v3312 = vadd.f32 %v3152, %v3255
      %v3313 = vadd.f32 %v3153, %v3258
      %v3314 = vadd.f32 %v3154, %v3261
      %v3315 = vadd.f32 %v3155, %v3264
      %v3316 = vadd.f32 %v3156, %v3267
      %v3317 = vadd.f32 %v3157, %v3270
      %v3318 = vadd.f32 %v3158, %v3273
      %v3319 = vadd.f32 %v3159, %v3276
      %v3320 = vadd.f32 %v3160, %v3279
      %v3321 = vadd.f32 %v3161, %v3282
      %v3322 = vadd.f32 %v3162, %v3285
      %v3323 = vadd.f32 %v3163, %v3288
      %v3324 = vadd.f32 %v3164, %v3291
      %v3325 = vsel %vm498, %v2361, 0
      %v3327 = vsel %vm498, %v2362, 0
      %v3330 = vsel %vm563, %v364, 0
      %3332 = vmatpush.msra.mxu0 0.0
      %3333 = vmatpush.msra.mxu0 0.0
      %3334 = vmatpush.msra.mxu0 0.0
      %3335 = vmatpush.msra.mxu0 0.0
      %3336 = vmatpush.msra.mxu0 0.0
      %3337 = vmatpush.msra.mxu0 0.0
      %3338 = vmatpush.msra.mxu0 0.0
      %3339 = vmatpush.msra.mxu0 0.0
      %3340 = vmatpush.msra.mxu0 0.0
      %3341 = vmatpush.msra.mxu0 0.0
      %3342 = vmatpush.msra.mxu0 0.0
      %3343 = vmatpush.msra.mxu0 0.0
      %3344 = vmatpush.msra.mxu0 0.0
      %3345 = vmatpush.msra.mxu0 0.0
      %3346 = vmatpush.msra.mxu0 0.0
      %3347 = vmatpush.msra.mxu0 %v3330
      %3348 = vmatmul.f32.gmra.mxu0 %v2501
      %v3349 = vpop.f32.mrf.mxu0
      %v3350 = vadd.f32 0.0, %v3349
      %3351 = vmatmul.f32.gmra.mxu0 %v2503
      %v3352 = vpop.f32.mrf.mxu0
      %v3353 = vadd.f32 0.0, %v3352
      %3354 = vmatmul.f32.gmra.mxu0 %v2505
      %v3355 = vpop.f32.mrf.mxu0
      %v3356 = vadd.f32 0.0, %v3355
      %3357 = vmatmul.f32.gmra.mxu0 %v2507
      %v3358 = vpop.f32.mrf.mxu0
      %v3359 = vadd.f32 0.0, %v3358
      %3360 = vmatmul.f32.gmra.mxu0 %v2509
      %v3361 = vpop.f32.mrf.mxu0
      %v3362 = vadd.f32 0.0, %v3361
      %3363 = vmatmul.f32.gmra.mxu0 %v2511
      %v3364 = vpop.f32.mrf.mxu0
      %v3365 = vadd.f32 0.0, %v3364
      %3366 = vmatmul.f32.gmra.mxu0 %v2513
      %v3367 = vpop.f32.mrf.mxu0
      %v3368 = vadd.f32 0.0, %v3367
      %3369 = vmatmul.f32.gmra.mxu0 %v2515
      %v3370 = vpop.f32.mrf.mxu0
      %v3371 = vadd.f32 0.0, %v3370
      %3372 = vmatmul.f32.gmra.mxu0 %v2517
      %v3373 = vpop.f32.mrf.mxu0
      %v3374 = vadd.f32 0.0, %v3373
      %3375 = vmatmul.f32.gmra.mxu0 %v2519
      %v3376 = vpop.f32.mrf.mxu0
      %v3377 = vadd.f32 0.0, %v3376
      %3378 = vmatmul.f32.gmra.mxu0 %v2521
      %v3379 = vpop.f32.mrf.mxu0
      %v3380 = vadd.f32 0.0, %v3379
      %3381 = vmatmul.f32.gmra.mxu0 %v2523
      %v3382 = vpop.f32.mrf.mxu0
      %v3383 = vadd.f32 0.0, %v3382
      %3384 = vmatmul.f32.gmra.mxu0 %v2525
      %v3385 = vpop.f32.mrf.mxu0
      %v3386 = vadd.f32 0.0, %v3385
      %3387 = vmatmul.f32.gmra.mxu0 %v2527
      %v3388 = vpop.f32.mrf.mxu0
      %v3389 = vadd.f32 0.0, %v3388
      %3390 = vmatmul.f32.gmra.mxu0 %v2529
      %v3391 = vpop.f32.mrf.mxu0
      %v3392 = vadd.f32 0.0, %v3391
      %3393 = vmatmul.f32.gmra.mxu0 %v2531
      %v3394 = vpop.f32.mrf.mxu0
      %v3395 = vadd.f32 0.0, %v3394
      %3396 = vmatmul.f32.gmra.mxu0 %v2533
      %v3397 = vpop.f32.mrf.mxu0
      %v3398 = vadd.f32 0.0, %v3397
      %3399 = vmatmul.f32.gmra.mxu0 %v2535
      %v3400 = vpop.f32.mrf.mxu0
      %v3401 = vadd.f32 0.0, %v3400
      %3402 = vmatmul.f32.gmra.mxu0 %v2537
      %v3403 = vpop.f32.mrf.mxu0
      %v3404 = vadd.f32 0.0, %v3403
      %3405 = vmatmul.f32.gmra.mxu0 %v2539
      %v3406 = vpop.f32.mrf.mxu0
      %v3407 = vadd.f32 0.0, %v3406
      %3408 = vmatmul.f32.gmra.mxu0 %v2541
      %v3409 = vpop.f32.mrf.mxu0
      %v3410 = vadd.f32 0.0, %v3409
      %3411 = vmatmul.f32.gmra.mxu0 %v2543
      %v3412 = vpop.f32.mrf.mxu0
      %v3413 = vadd.f32 0.0, %v3412
      %3414 = vmatmul.f32.gmra.mxu0 %v2545
      %v3415 = vpop.f32.mrf.mxu0
      %v3416 = vadd.f32 0.0, %v3415
      %3417 = vmatmul.f32.gmra.mxu0 %v2547
      %v3418 = vpop.f32.mrf.mxu0
      %v3419 = vadd.f32 0.0, %v3418
      %3420 = vmatmul.f32.gmra.mxu0 %v2549
      %v3421 = vpop.f32.mrf.mxu0
      %v3422 = vadd.f32 0.0, %v3421
      %3423 = vmatmul.f32.gmra.mxu0 %v2551
      %v3424 = vpop.f32.mrf.mxu0
      %v3425 = vadd.f32 0.0, %v3424
      %3426 = vmatmul.f32.gmra.mxu0 %v2553
      %v3427 = vpop.f32.mrf.mxu0
      %v3428 = vadd.f32 0.0, %v3427
      %3429 = vmatmul.f32.gmra.mxu0 %v2555
      %v3430 = vpop.f32.mrf.mxu0
      %v3431 = vadd.f32 0.0, %v3430
      %3432 = vmatmul.f32.gmra.mxu0 %v2557
      %v3433 = vpop.f32.mrf.mxu0
      %v3434 = vadd.f32 0.0, %v3433
      %3435 = vmatmul.f32.gmra.mxu0 %v2559
      %v3436 = vpop.f32.mrf.mxu0
      %v3437 = vadd.f32 0.0, %v3436
      %3438 = vmatmul.f32.gmra.mxu0 %v3325
      %v3439 = vpop.f32.mrf.mxu0
      %v3440 = vadd.f32 0.0, %v3439
      %3441 = vmatmul.f32.gmra.mxu0 %v3327
      %v3442 = vpop.f32.mrf.mxu0
      %v3443 = vadd.f32 0.0, %v3442
      %3444 = vdwg.mxu0
      %v3445 = vadd.f32 %v3293, %v3350
      %v3446 = vadd.f32 %v3294, %v3353
      %v3447 = vadd.f32 %v3295, %v3356
      %v3448 = vadd.f32 %v3296, %v3359
      %v3449 = vadd.f32 %v3297, %v3362
      %v3450 = vadd.f32 %v3298, %v3365
      %v3451 = vadd.f32 %v3299, %v3368
      %v3452 = vadd.f32 %v3300, %v3371
      %v3453 = vadd.f32 %v3301, %v3374
      %v3454 = vadd.f32 %v3302, %v3377
      %v3455 = vadd.f32 %v3303, %v3380
      %v3456 = vadd.f32 %v3304, %v3383
      %v3457 = vadd.f32 %v3305, %v3386
      %v3458 = vadd.f32 %v3306, %v3389
      %v3459 = vadd.f32 %v3307, %v3392
      %v3460 = vadd.f32 %v3308, %v3395
      %v3461 = vadd.f32 %v3309, %v3398
      %v3462 = vadd.f32 %v3310, %v3401
      %v3463 = vadd.f32 %v3311, %v3404
      %v3464 = vadd.f32 %v3312, %v3407
      %v3465 = vadd.f32 %v3313, %v3410
      %v3466 = vadd.f32 %v3314, %v3413
      %v3467 = vadd.f32 %v3315, %v3416
      %v3468 = vadd.f32 %v3316, %v3419
      %v3469 = vadd.f32 %v3317, %v3422
      %v3470 = vadd.f32 %v3318, %v3425
      %v3471 = vadd.f32 %v3319, %v3428
      %v3472 = vadd.f32 %v3320, %v3431
      %v3473 = vadd.f32 %v3321, %v3434
      %v3474 = vadd.f32 %v3322, %v3437
      %v3475 = vadd.f32 %v3323, %v3440
      %v3476 = vadd.f32 %v3324, %v3443
      %v3478 = vrot.slane %v2361, 1
      %v3479 = vrot.slane %v2362, 1
      %v3480 = vsel %vm417, %v3478, %v3479
      %v3481 = vrot.slane %v2363, 1
      %v3482 = vsel %vm417, %v3479, %v3481
      %v3483 = vsel %vm498, %v3480, 0
      %v3485 = vsel %vm498, %v3482, 0
      %v3488 = vsel %vm563, %v365, 0
      %3490 = vmatpush.msra.mxu0 0.0
      %3491 = vmatpush.msra.mxu0 0.0
      %3492 = vmatpush.msra.mxu0 0.0
      %3493 = vmatpush.msra.mxu0 0.0
      %3494 = vmatpush.msra.mxu0 0.0
      %3495 = vmatpush.msra.mxu0 0.0
      %3496 = vmatpush.msra.mxu0 0.0
      %3497 = vmatpush.msra.mxu0 0.0
      %3498 = vmatpush.msra.mxu0 0.0
      %3499 = vmatpush.msra.mxu0 0.0
      %3500 = vmatpush.msra.mxu0 0.0
      %3501 = vmatpush.msra.mxu0 0.0
      %3502 = vmatpush.msra.mxu0 0.0
      %3503 = vmatpush.msra.mxu0 0.0
      %3504 = vmatpush.msra.mxu0 0.0
      %3505 = vmatpush.msra.mxu0 %v3488
      %3506 = vmatmul.f32.gmra.mxu0 %v2957
      %v3507 = vpop.f32.mrf.mxu0
      %v3508 = vadd.f32 0.0, %v3507
      %3509 = vmatmul.f32.gmra.mxu0 %v2959
      %v3510 = vpop.f32.mrf.mxu0
      %v3511 = vadd.f32 0.0, %v3510
      %3512 = vmatmul.f32.gmra.mxu0 %v2961
      %v3513 = vpop.f32.mrf.mxu0
      %v3514 = vadd.f32 0.0, %v3513
      %3515 = vmatmul.f32.gmra.mxu0 %v2963
      %v3516 = vpop.f32.mrf.mxu0
      %v3517 = vadd.f32 0.0, %v3516
      %3518 = vmatmul.f32.gmra.mxu0 %v2965
      %v3519 = vpop.f32.mrf.mxu0
      %v3520 = vadd.f32 0.0, %v3519
      %3521 = vmatmul.f32.gmra.mxu0 %v2967
      %v3522 = vpop.f32.mrf.mxu0
      %v3523 = vadd.f32 0.0, %v3522
      %3524 = vmatmul.f32.gmra.mxu0 %v2969
      %v3525 = vpop.f32.mrf.mxu0
      %v3526 = vadd.f32 0.0, %v3525
      %3527 = vmatmul.f32.gmra.mxu0 %v2971
      %v3528 = vpop.f32.mrf.mxu0
      %v3529 = vadd.f32 0.0, %v3528
      %3530 = vmatmul.f32.gmra.mxu0 %v2973
      %v3531 = vpop.f32.mrf.mxu0
      %v3532 = vadd.f32 0.0, %v3531
      %3533 = vmatmul.f32.gmra.mxu0 %v2975
      %v3534 = vpop.f32.mrf.mxu0
      %v3535 = vadd.f32 0.0, %v3534
      %3536 = vmatmul.f32.gmra.mxu0 %v2977
      %v3537 = vpop.f32.mrf.mxu0
      %v3538 = vadd.f32 0.0, %v3537
      %3539 = vmatmul.f32.gmra.mxu0 %v2979
      %v3540 = vpop.f32.mrf.mxu0
      %v3541 = vadd.f32 0.0, %v3540
      %3542 = vmatmul.f32.gmra.mxu0 %v2981
      %v3543 = vpop.f32.mrf.mxu0
      %v3544 = vadd.f32 0.0, %v3543
      %3545 = vmatmul.f32.gmra.mxu0 %v2983
      %v3546 = vpop.f32.mrf.mxu0
      %v3547 = vadd.f32 0.0, %v3546
      %3548 = vmatmul.f32.gmra.mxu0 %v2985
      %v3549 = vpop.f32.mrf.mxu0
      %v3550 = vadd.f32 0.0, %v3549
      %3551 = vmatmul.f32.gmra.mxu0 %v2987
      %v3552 = vpop.f32.mrf.mxu0
      %v3553 = vadd.f32 0.0, %v3552
      %3554 = vmatmul.f32.gmra.mxu0 %v2989
      %v3555 = vpop.f32.mrf.mxu0
      %v3556 = vadd.f32 0.0, %v3555
      %3557 = vmatmul.f32.gmra.mxu0 %v2991
      %v3558 = vpop.f32.mrf.mxu0
      %v3559 = vadd.f32 0.0, %v3558
      %3560 = vmatmul.f32.gmra.mxu0 %v2993
      %v3561 = vpop.f32.mrf.mxu0
      %v3562 = vadd.f32 0.0, %v3561
      %3563 = vmatmul.f32.gmra.mxu0 %v2995
      %v3564 = vpop.f32.mrf.mxu0
      %v3565 = vadd.f32 0.0, %v3564
      %3566 = vmatmul.f32.gmra.mxu0 %v2997
      %v3567 = vpop.f32.mrf.mxu0
      %v3568 = vadd.f32 0.0, %v3567
      %3569 = vmatmul.f32.gmra.mxu0 %v2999
      %v3570 = vpop.f32.mrf.mxu0
      %v3571 = vadd.f32 0.0, %v3570
      %3572 = vmatmul.f32.gmra.mxu0 %v3001
      %v3573 = vpop.f32.mrf.mxu0
      %v3574 = vadd.f32 0.0, %v3573
      %3575 = vmatmul.f32.gmra.mxu0 %v3003
      %v3576 = vpop.f32.mrf.mxu0
      %v3577 = vadd.f32 0.0, %v3576
      %3578 = vmatmul.f32.gmra.mxu0 %v3005
      %v3579 = vpop.f32.mrf.mxu0
      %v3580 = vadd.f32 0.0, %v3579
      %3581 = vmatmul.f32.gmra.mxu0 %v3007
      %v3582 = vpop.f32.mrf.mxu0
      %v3583 = vadd.f32 0.0, %v3582
      %3584 = vmatmul.f32.gmra.mxu0 %v3009
      %v3585 = vpop.f32.mrf.mxu0
      %v3586 = vadd.f32 0.0, %v3585
      %3587 = vmatmul.f32.gmra.mxu0 %v3011
      %v3588 = vpop.f32.mrf.mxu0
      %v3589 = vadd.f32 0.0, %v3588
      %3590 = vmatmul.f32.gmra.mxu0 %v3013
      %v3591 = vpop.f32.mrf.mxu0
      %v3592 = vadd.f32 0.0, %v3591
      %3593 = vmatmul.f32.gmra.mxu0 %v3015
      %v3594 = vpop.f32.mrf.mxu0
      %v3595 = vadd.f32 0.0, %v3594
      %3596 = vmatmul.f32.gmra.mxu0 %v3483
      %v3597 = vpop.f32.mrf.mxu0
      %v3598 = vadd.f32 0.0, %v3597
      %3599 = vmatmul.f32.gmra.mxu0 %v3485
      %v3600 = vpop.f32.mrf.mxu0
      %v3601 = vadd.f32 0.0, %v3600
      %3602 = vdwg.mxu0
      %v3603 = vadd.f32 %v3445, %v3508
      %v3604 = vadd.f32 %v3446, %v3511
      %v3605 = vadd.f32 %v3447, %v3514
      %v3606 = vadd.f32 %v3448, %v3517
      %v3607 = vadd.f32 %v3449, %v3520
      %v3608 = vadd.f32 %v3450, %v3523
      %v3609 = vadd.f32 %v3451, %v3526
      %v3610 = vadd.f32 %v3452, %v3529
      %v3611 = vadd.f32 %v3453, %v3532
      %v3612 = vadd.f32 %v3454, %v3535
      %v3613 = vadd.f32 %v3455, %v3538
      %v3614 = vadd.f32 %v3456, %v3541
      %v3615 = vadd.f32 %v3457, %v3544
      %v3616 = vadd.f32 %v3458, %v3547
      %v3617 = vadd.f32 %v3459, %v3550
      %v3618 = vadd.f32 %v3460, %v3553
      %v3619 = vadd.f32 %v3461, %v3556
      %v3620 = vadd.f32 %v3462, %v3559
      %v3621 = vadd.f32 %v3463, %v3562
      %v3622 = vadd.f32 %v3464, %v3565
      %v3623 = vadd.f32 %v3465, %v3568
      %v3624 = vadd.f32 %v3466, %v3571
      %v3625 = vadd.f32 %v3467, %v3574
      %v3626 = vadd.f32 %v3468, %v3577
      %v3627 = vadd.f32 %v3469, %v3580
      %v3628 = vadd.f32 %v3470, %v3583
      %v3629 = vadd.f32 %v3471, %v3586
      %v3630 = vadd.f32 %v3472, %v3589
      %v3631 = vadd.f32 %v3473, %v3592
      %v3632 = vadd.f32 %v3474, %v3595
      %v3633 = vadd.f32 %v3475, %v3598
      %v3634 = vadd.f32 %v3476, %v3601
      %v3638 = vrot.slane %v2364, 7
      %v3639 = vrot.slane %v2365, 7
      %v3640 = vsel %vm2416, %v3638, %v3639
      %v3641 = vrot.slane %v2366, 7
      %v3642 = vsel %vm2416, %v3639, %v3641
      %v3643 = vsel %vm498, %v3640, 0
      %v3645 = vsel %vm498, %v3642, 0
      %v3648 = vsel %vm563, %v366, 0
      %3650 = vmatpush.msra.mxu0 0.0
      %3651 = vmatpush.msra.mxu0 0.0
      %3652 = vmatpush.msra.mxu0 0.0
      %3653 = vmatpush.msra.mxu0 0.0
      %3654 = vmatpush.msra.mxu0 0.0
      %3655 = vmatpush.msra.mxu0 0.0
      %3656 = vmatpush.msra.mxu0 0.0
      %3657 = vmatpush.msra.mxu0 0.0
      %3658 = vmatpush.msra.mxu0 0.0
      %3659 = vmatpush.msra.mxu0 0.0
      %3660 = vmatpush.msra.mxu0 0.0
      %3661 = vmatpush.msra.mxu0 0.0
      %3662 = vmatpush.msra.mxu0 0.0
      %3663 = vmatpush.msra.mxu0 0.0
      %3664 = vmatpush.msra.mxu0 0.0
      %3665 = vmatpush.msra.mxu0 %v3648
      %3666 = vmatmul.f32.gmra.mxu0 %v2685
      %v3667 = vpop.f32.mrf.mxu0
      %v3668 = vadd.f32 0.0, %v3667
      %3669 = vmatmul.f32.gmra.mxu0 %v2687
      %v3670 = vpop.f32.mrf.mxu0
      %v3671 = vadd.f32 0.0, %v3670
      %3672 = vmatmul.f32.gmra.mxu0 %v2689
      %v3673 = vpop.f32.mrf.mxu0
      %v3674 = vadd.f32 0.0, %v3673
      %3675 = vmatmul.f32.gmra.mxu0 %v2691
      %v3676 = vpop.f32.mrf.mxu0
      %v3677 = vadd.f32 0.0, %v3676
      %3678 = vmatmul.f32.gmra.mxu0 %v2693
      %v3679 = vpop.f32.mrf.mxu0
      %v3680 = vadd.f32 0.0, %v3679
      %3681 = vmatmul.f32.gmra.mxu0 %v2695
      %v3682 = vpop.f32.mrf.mxu0
      %v3683 = vadd.f32 0.0, %v3682
      %3684 = vmatmul.f32.gmra.mxu0 %v2697
      %v3685 = vpop.f32.mrf.mxu0
      %v3686 = vadd.f32 0.0, %v3685
      %3687 = vmatmul.f32.gmra.mxu0 %v2699
      %v3688 = vpop.f32.mrf.mxu0
      %v3689 = vadd.f32 0.0, %v3688
      %3690 = vmatmul.f32.gmra.mxu0 %v2701
      %v3691 = vpop.f32.mrf.mxu0
      %v3692 = vadd.f32 0.0, %v3691
      %3693 = vmatmul.f32.gmra.mxu0 %v2703
      %v3694 = vpop.f32.mrf.mxu0
      %v3695 = vadd.f32 0.0, %v3694
      %3696 = vmatmul.f32.gmra.mxu0 %v2705
      %v3697 = vpop.f32.mrf.mxu0
      %v3698 = vadd.f32 0.0, %v3697
      %3699 = vmatmul.f32.gmra.mxu0 %v2707
      %v3700 = vpop.f32.mrf.mxu0
      %v3701 = vadd.f32 0.0, %v3700
      %3702 = vmatmul.f32.gmra.mxu0 %v2709
      %v3703 = vpop.f32.mrf.mxu0
      %v3704 = vadd.f32 0.0, %v3703
      %3705 = vmatmul.f32.gmra.mxu0 %v2711
      %v3706 = vpop.f32.mrf.mxu0
      %v3707 = vadd.f32 0.0, %v3706
      %3708 = vmatmul.f32.gmra.mxu0 %v2713
      %v3709 = vpop.f32.mrf.mxu0
      %v3710 = vadd.f32 0.0, %v3709
      %3711 = vmatmul.f32.gmra.mxu0 %v2715
      %v3712 = vpop.f32.mrf.mxu0
      %v3713 = vadd.f32 0.0, %v3712
      %3714 = vmatmul.f32.gmra.mxu0 %v2717
      %v3715 = vpop.f32.mrf.mxu0
      %v3716 = vadd.f32 0.0, %v3715
      %3717 = vmatmul.f32.gmra.mxu0 %v2719
      %v3718 = vpop.f32.mrf.mxu0
      %v3719 = vadd.f32 0.0, %v3718
      %3720 = vmatmul.f32.gmra.mxu0 %v2721
      %v3721 = vpop.f32.mrf.mxu0
      %v3722 = vadd.f32 0.0, %v3721
      %3723 = vmatmul.f32.gmra.mxu0 %v2723
      %v3724 = vpop.f32.mrf.mxu0
      %v3725 = vadd.f32 0.0, %v3724
      %3726 = vmatmul.f32.gmra.mxu0 %v2725
      %v3727 = vpop.f32.mrf.mxu0
      %v3728 = vadd.f32 0.0, %v3727
      %3729 = vmatmul.f32.gmra.mxu0 %v2727
      %v3730 = vpop.f32.mrf.mxu0
      %v3731 = vadd.f32 0.0, %v3730
      %3732 = vmatmul.f32.gmra.mxu0 %v2729
      %v3733 = vpop.f32.mrf.mxu0
      %v3734 = vadd.f32 0.0, %v3733
      %3735 = vmatmul.f32.gmra.mxu0 %v2731
      %v3736 = vpop.f32.mrf.mxu0
      %v3737 = vadd.f32 0.0, %v3736
      %3738 = vmatmul.f32.gmra.mxu0 %v2733
      %v3739 = vpop.f32.mrf.mxu0
      %v3740 = vadd.f32 0.0, %v3739
      %3741 = vmatmul.f32.gmra.mxu0 %v2735
      %v3742 = vpop.f32.mrf.mxu0
      %v3743 = vadd.f32 0.0, %v3742
      %3744 = vmatmul.f32.gmra.mxu0 %v2737
      %v3745 = vpop.f32.mrf.mxu0
      %v3746 = vadd.f32 0.0, %v3745
      %3747 = vmatmul.f32.gmra.mxu0 %v2739
      %v3748 = vpop.f32.mrf.mxu0
      %v3749 = vadd.f32 0.0, %v3748
      %3750 = vmatmul.f32.gmra.mxu0 %v3173
      %v3751 = vpop.f32.mrf.mxu0
      %v3752 = vadd.f32 0.0, %v3751
      %3753 = vmatmul.f32.gmra.mxu0 %v3175
      %v3754 = vpop.f32.mrf.mxu0
      %v3755 = vadd.f32 0.0, %v3754
      %3756 = vmatmul.f32.gmra.mxu0 %v3643
      %v3757 = vpop.f32.mrf.mxu0
      %v3758 = vadd.f32 0.0, %v3757
      %3759 = vmatmul.f32.gmra.mxu0 %v3645
      %v3760 = vpop.f32.mrf.mxu0
      %v3761 = vadd.f32 0.0, %v3760
      %3762 = vdwg.mxu0
      %v3763 = vadd.f32 %v3603, %v3668
      %v3764 = vadd.f32 %v3604, %v3671
      %v3765 = vadd.f32 %v3605, %v3674
      %v3766 = vadd.f32 %v3606, %v3677
      %v3767 = vadd.f32 %v3607, %v3680
      %v3768 = vadd.f32 %v3608, %v3683
      %v3769 = vadd.f32 %v3609, %v3686
      %v3770 = vadd.f32 %v3610, %v3689
      %v3771 = vadd.f32 %v3611, %v3692
      %v3772 = vadd.f32 %v3612, %v3695
      %v3773 = vadd.f32 %v3613, %v3698
      %v3774 = vadd.f32 %v3614, %v3701
      %v3775 = vadd.f32 %v3615, %v3704
      %v3776 = vadd.f32 %v3616, %v3707
      %v3777 = vadd.f32 %v3617, %v3710
      %v3778 = vadd.f32 %v3618, %v3713
      %v3779 = vadd.f32 %v3619, %v3716
      %v3780 = vadd.f32 %v3620, %v3719
      %v3781 = vadd.f32 %v3621, %v3722
      %v3782 = vadd.f32 %v3622, %v3725
      %v3783 = vadd.f32 %v3623, %v3728
      %v3784 = vadd.f32 %v3624, %v3731
      %v3785 = vadd.f32 %v3625, %v3734
      %v3786 = vadd.f32 %v3626, %v3737
      %v3787 = vadd.f32 %v3627, %v3740
      %v3788 = vadd.f32 %v3628, %v3743
      %v3789 = vadd.f32 %v3629, %v3746
      %v3790 = vadd.f32 %v3630, %v3749
      %v3791 = vadd.f32 %v3631, %v3752
      %v3792 = vadd.f32 %v3632, %v3755
      %v3793 = vadd.f32 %v3633, %v3758
      %v3794 = vadd.f32 %v3634, %v3761
      %v3795 = vsel %vm498, %v2365, 0
      %v3797 = vsel %vm498, %v2366, 0
      %v3800 = vsel %vm563, %v367, 0
      %3802 = vmatpush.msra.mxu0 0.0
      %3803 = vmatpush.msra.mxu0 0.0
      %3804 = vmatpush.msra.mxu0 0.0
      %3805 = vmatpush.msra.mxu0 0.0
      %3806 = vmatpush.msra.mxu0 0.0
      %3807 = vmatpush.msra.mxu0 0.0
      %3808 = vmatpush.msra.mxu0 0.0
      %3809 = vmatpush.msra.mxu0 0.0
      %3810 = vmatpush.msra.mxu0 0.0
      %3811 = vmatpush.msra.mxu0 0.0
      %3812 = vmatpush.msra.mxu0 0.0
      %3813 = vmatpush.msra.mxu0 0.0
      %3814 = vmatpush.msra.mxu0 0.0
      %3815 = vmatpush.msra.mxu0 0.0
      %3816 = vmatpush.msra.mxu0 0.0
      %3817 = vmatpush.msra.mxu0 %v3800
      %3818 = vmatmul.f32.gmra.mxu0 %v2505
      %v3819 = vpop.f32.mrf.mxu0
      %v3820 = vadd.f32 0.0, %v3819
      %3821 = vmatmul.f32.gmra.mxu0 %v2507
      %v3822 = vpop.f32.mrf.mxu0
      %v3823 = vadd.f32 0.0, %v3822
      %3824 = vmatmul.f32.gmra.mxu0 %v2509
      %v3825 = vpop.f32.mrf.mxu0
      %v3826 = vadd.f32 0.0, %v3825
      %3827 = vmatmul.f32.gmra.mxu0 %v2511
      %v3828 = vpop.f32.mrf.mxu0
      %v3829 = vadd.f32 0.0, %v3828
      %3830 = vmatmul.f32.gmra.mxu0 %v2513
      %v3831 = vpop.f32.mrf.mxu0
      %v3832 = vadd.f32 0.0, %v3831
      %3833 = vmatmul.f32.gmra.mxu0 %v2515
      %v3834 = vpop.f32.mrf.mxu0
      %v3835 = vadd.f32 0.0, %v3834
      %3836 = vmatmul.f32.gmra.mxu0 %v2517
      %v3837 = vpop.f32.mrf.mxu0
      %v3838 = vadd.f32 0.0, %v3837
      %3839 = vmatmul.f32.gmra.mxu0 %v2519
      %v3840 = vpop.f32.mrf.mxu0
      %v3841 = vadd.f32 0.0, %v3840
      %3842 = vmatmul.f32.gmra.mxu0 %v2521
      %v3843 = vpop.f32.mrf.mxu0
      %v3844 = vadd.f32 0.0, %v3843
      %3845 = vmatmul.f32.gmra.mxu0 %v2523
      %v3846 = vpop.f32.mrf.mxu0
      %v3847 = vadd.f32 0.0, %v3846
      %3848 = vmatmul.f32.gmra.mxu0 %v2525
      %v3849 = vpop.f32.mrf.mxu0
      %v3850 = vadd.f32 0.0, %v3849
      %3851 = vmatmul.f32.gmra.mxu0 %v2527
      %v3852 = vpop.f32.mrf.mxu0
      %v3853 = vadd.f32 0.0, %v3852
      %3854 = vmatmul.f32.gmra.mxu0 %v2529
      %v3855 = vpop.f32.mrf.mxu0
      %v3856 = vadd.f32 0.0, %v3855
      %3857 = vmatmul.f32.gmra.mxu0 %v2531
      %v3858 = vpop.f32.mrf.mxu0
      %v3859 = vadd.f32 0.0, %v3858
      %3860 = vmatmul.f32.gmra.mxu0 %v2533
      %v3861 = vpop.f32.mrf.mxu0
      %v3862 = vadd.f32 0.0, %v3861
      %3863 = vmatmul.f32.gmra.mxu0 %v2535
      %v3864 = vpop.f32.mrf.mxu0
      %v3865 = vadd.f32 0.0, %v3864
      %3866 = vmatmul.f32.gmra.mxu0 %v2537
      %v3867 = vpop.f32.mrf.mxu0
      %v3868 = vadd.f32 0.0, %v3867
      %3869 = vmatmul.f32.gmra.mxu0 %v2539
      %v3870 = vpop.f32.mrf.mxu0
      %v3871 = vadd.f32 0.0, %v3870
      %3872 = vmatmul.f32.gmra.mxu0 %v2541
      %v3873 = vpop.f32.mrf.mxu0
      %v3874 = vadd.f32 0.0, %v3873
      %3875 = vmatmul.f32.gmra.mxu0 %v2543
      %v3876 = vpop.f32.mrf.mxu0
      %v3877 = vadd.f32 0.0, %v3876
      %3878 = vmatmul.f32.gmra.mxu0 %v2545
      %v3879 = vpop.f32.mrf.mxu0
      %v3880 = vadd.f32 0.0, %v3879
      %3881 = vmatmul.f32.gmra.mxu0 %v2547
      %v3882 = vpop.f32.mrf.mxu0
      %v3883 = vadd.f32 0.0, %v3882
      %3884 = vmatmul.f32.gmra.mxu0 %v2549
      %v3885 = vpop.f32.mrf.mxu0
      %v3886 = vadd.f32 0.0, %v3885
      %3887 = vmatmul.f32.gmra.mxu0 %v2551
      %v3888 = vpop.f32.mrf.mxu0
      %v3889 = vadd.f32 0.0, %v3888
      %3890 = vmatmul.f32.gmra.mxu0 %v2553
      %v3891 = vpop.f32.mrf.mxu0
      %v3892 = vadd.f32 0.0, %v3891
      %3893 = vmatmul.f32.gmra.mxu0 %v2555
      %v3894 = vpop.f32.mrf.mxu0
      %v3895 = vadd.f32 0.0, %v3894
      %3896 = vmatmul.f32.gmra.mxu0 %v2557
      %v3897 = vpop.f32.mrf.mxu0
      %v3898 = vadd.f32 0.0, %v3897
      %3899 = vmatmul.f32.gmra.mxu0 %v2559
      %v3900 = vpop.f32.mrf.mxu0
      %v3901 = vadd.f32 0.0, %v3900
      %3902 = vmatmul.f32.gmra.mxu0 %v3325
      %v3903 = vpop.f32.mrf.mxu0
      %v3904 = vadd.f32 0.0, %v3903
      %3905 = vmatmul.f32.gmra.mxu0 %v3327
      %v3906 = vpop.f32.mrf.mxu0
      %v3907 = vadd.f32 0.0, %v3906
      %3908 = vmatmul.f32.gmra.mxu0 %v3795
      %v3909 = vpop.f32.mrf.mxu0
      %v3910 = vadd.f32 0.0, %v3909
      %3911 = vmatmul.f32.gmra.mxu0 %v3797
      %v3912 = vpop.f32.mrf.mxu0
      %v3913 = vadd.f32 0.0, %v3912
      %3914 = vdwg.mxu0
      %v3915 = vadd.f32 %v3763, %v3820
      %v3916 = vadd.f32 %v3764, %v3823
      %v3917 = vadd.f32 %v3765, %v3826
      %v3918 = vadd.f32 %v3766, %v3829
      %v3919 = vadd.f32 %v3767, %v3832
      %v3920 = vadd.f32 %v3768, %v3835
      %v3921 = vadd.f32 %v3769, %v3838
      %v3922 = vadd.f32 %v3770, %v3841
      %v3923 = vadd.f32 %v3771, %v3844
      %v3924 = vadd.f32 %v3772, %v3847
      %v3925 = vadd.f32 %v3773, %v3850
      %v3926 = vadd.f32 %v3774, %v3853
      %v3927 = vadd.f32 %v3775, %v3856
      %v3928 = vadd.f32 %v3776, %v3859
      %v3929 = vadd.f32 %v3777, %v3862
      %v3930 = vadd.f32 %v3778, %v3865
      %v3931 = vadd.f32 %v3779, %v3868
      %v3932 = vadd.f32 %v3780, %v3871
      %v3933 = vadd.f32 %v3781, %v3874
      %v3934 = vadd.f32 %v3782, %v3877
      %v3935 = vadd.f32 %v3783, %v3880
      %v3936 = vadd.f32 %v3784, %v3883
      %v3937 = vadd.f32 %v3785, %v3886
      %v3938 = vadd.f32 %v3786, %v3889
      %v3939 = vadd.f32 %v3787, %v3892
      %v3940 = vadd.f32 %v3788, %v3895
      %v3941 = vadd.f32 %v3789, %v3898
      %v3942 = vadd.f32 %v3790, %v3901
      %v3943 = vadd.f32 %v3791, %v3904
      %v3944 = vadd.f32 %v3792, %v3907
      %v3945 = vadd.f32 %v3793, %v3910
      %v3946 = vadd.f32 %v3794, %v3913
      %v3948 = vrot.slane %v2365, 1
      %v3949 = vrot.slane %v2366, 1
      %v3950 = vsel %vm417, %v3948, %v3949
      %v3951 = vrot.slane %v2367, 1
      %v3952 = vsel %vm417, %v3949, %v3951
      %v3953 = vsel %vm498, %v3950, 0
      %v3955 = vsel %vm498, %v3952, 0
      %v3958 = vsel %vm563, %v368, 0
      %3960 = vmatpush.msra.mxu0 0.0
      %3961 = vmatpush.msra.mxu0 0.0
      %3962 = vmatpush.msra.mxu0 0.0
      %3963 = vmatpush.msra.mxu0 0.0
      %3964 = vmatpush.msra.mxu0 0.0
      %3965 = vmatpush.msra.mxu0 0.0
      %3966 = vmatpush.msra.mxu0 0.0
      %3967 = vmatpush.msra.mxu0 0.0
      %3968 = vmatpush.msra.mxu0 0.0
      %3969 = vmatpush.msra.mxu0 0.0
      %3970 = vmatpush.msra.mxu0 0.0
      %3971 = vmatpush.msra.mxu0 0.0
      %3972 = vmatpush.msra.mxu0 0.0
      %3973 = vmatpush.msra.mxu0 0.0
      %3974 = vmatpush.msra.mxu0 0.0
      %3975 = vmatpush.msra.mxu0 %v3958
      %3976 = vmatmul.f32.gmra.mxu0 %v2961
      %v3977 = vpop.f32.mrf.mxu0
      %v3978 = vadd.f32 0.0, %v3977
      %3979 = vmatmul.f32.gmra.mxu0 %v2963
      %v3980 = vpop.f32.mrf.mxu0
      %v3981 = vadd.f32 0.0, %v3980
      %3982 = vmatmul.f32.gmra.mxu0 %v2965
      %v3983 = vpop.f32.mrf.mxu0
      %v3984 = vadd.f32 0.0, %v3983
      %3985 = vmatmul.f32.gmra.mxu0 %v2967
      %v3986 = vpop.f32.mrf.mxu0
      %v3987 = vadd.f32 0.0, %v3986
      %3988 = vmatmul.f32.gmra.mxu0 %v2969
      %v3989 = vpop.f32.mrf.mxu0
      %v3990 = vadd.f32 0.0, %v3989
      %3991 = vmatmul.f32.gmra.mxu0 %v2971
      %v3992 = vpop.f32.mrf.mxu0
      %v3993 = vadd.f32 0.0, %v3992
      %3994 = vmatmul.f32.gmra.mxu0 %v2973
      %v3995 = vpop.f32.mrf.mxu0
      %v3996 = vadd.f32 0.0, %v3995
      %3997 = vmatmul.f32.gmra.mxu0 %v2975
      %v3998 = vpop.f32.mrf.mxu0
      %v3999 = vadd.f32 0.0, %v3998
      %4000 = vmatmul.f32.gmra.mxu0 %v2977
      %v4001 = vpop.f32.mrf.mxu0
      %v4002 = vadd.f32 0.0, %v4001
      %4003 = vmatmul.f32.gmra.mxu0 %v2979
      %v4004 = vpop.f32.mrf.mxu0
      %v4005 = vadd.f32 0.0, %v4004
      %4006 = vmatmul.f32.gmra.mxu0 %v2981
      %v4007 = vpop.f32.mrf.mxu0
      %v4008 = vadd.f32 0.0, %v4007
      %4009 = vmatmul.f32.gmra.mxu0 %v2983
      %v4010 = vpop.f32.mrf.mxu0
      %v4011 = vadd.f32 0.0, %v4010
      %4012 = vmatmul.f32.gmra.mxu0 %v2985
      %v4013 = vpop.f32.mrf.mxu0
      %v4014 = vadd.f32 0.0, %v4013
      %4015 = vmatmul.f32.gmra.mxu0 %v2987
      %v4016 = vpop.f32.mrf.mxu0
      %v4017 = vadd.f32 0.0, %v4016
      %4018 = vmatmul.f32.gmra.mxu0 %v2989
      %v4019 = vpop.f32.mrf.mxu0
      %v4020 = vadd.f32 0.0, %v4019
      %4021 = vmatmul.f32.gmra.mxu0 %v2991
      %v4022 = vpop.f32.mrf.mxu0
      %v4023 = vadd.f32 0.0, %v4022
      %4024 = vmatmul.f32.gmra.mxu0 %v2993
      %v4025 = vpop.f32.mrf.mxu0
      %v4026 = vadd.f32 0.0, %v4025
      %4027 = vmatmul.f32.gmra.mxu0 %v2995
      %v4028 = vpop.f32.mrf.mxu0
      %v4029 = vadd.f32 0.0, %v4028
      %4030 = vmatmul.f32.gmra.mxu0 %v2997
      %v4031 = vpop.f32.mrf.mxu0
      %v4032 = vadd.f32 0.0, %v4031
      %4033 = vmatmul.f32.gmra.mxu0 %v2999
      %v4034 = vpop.f32.mrf.mxu0
      %v4035 = vadd.f32 0.0, %v4034
      %4036 = vmatmul.f32.gmra.mxu0 %v3001
      %v4037 = vpop.f32.mrf.mxu0
      %v4038 = vadd.f32 0.0, %v4037
      %4039 = vmatmul.f32.gmra.mxu0 %v3003
      %v4040 = vpop.f32.mrf.mxu0
      %v4041 = vadd.f32 0.0, %v4040
      %4042 = vmatmul.f32.gmra.mxu0 %v3005
      %v4043 = vpop.f32.mrf.mxu0
      %v4044 = vadd.f32 0.0, %v4043
      %4045 = vmatmul.f32.gmra.mxu0 %v3007
      %v4046 = vpop.f32.mrf.mxu0
      %v4047 = vadd.f32 0.0, %v4046
      %4048 = vmatmul.f32.gmra.mxu0 %v3009
      %v4049 = vpop.f32.mrf.mxu0
      %v4050 = vadd.f32 0.0, %v4049
      %4051 = vmatmul.f32.gmra.mxu0 %v3011
      %v4052 = vpop.f32.mrf.mxu0
      %v4053 = vadd.f32 0.0, %v4052
      %4054 = vmatmul.f32.gmra.mxu0 %v3013
      %v4055 = vpop.f32.mrf.mxu0
      %v4056 = vadd.f32 0.0, %v4055
      %4057 = vmatmul.f32.gmra.mxu0 %v3015
      %v4058 = vpop.f32.mrf.mxu0
      %v4059 = vadd.f32 0.0, %v4058
      %4060 = vmatmul.f32.gmra.mxu0 %v3483
      %v4061 = vpop.f32.mrf.mxu0
      %v4062 = vadd.f32 0.0, %v4061
      %4063 = vmatmul.f32.gmra.mxu0 %v3485
      %v4064 = vpop.f32.mrf.mxu0
      %v4065 = vadd.f32 0.0, %v4064
      %4066 = vmatmul.f32.gmra.mxu0 %v3953
      %v4067 = vpop.f32.mrf.mxu0
      %v4068 = vadd.f32 0.0, %v4067
      %4069 = vmatmul.f32.gmra.mxu0 %v3955
      %v4070 = vpop.f32.mrf.mxu0
      %v4071 = vadd.f32 0.0, %v4070
      %4072 = vdwg.mxu0
      %v4073 = vadd.f32 %v3915, %v3978
      %v4074 = vadd.f32 %v3916, %v3981
      %v4075 = vadd.f32 %v3917, %v3984
      %v4076 = vadd.f32 %v3918, %v3987
      %v4077 = vadd.f32 %v3919, %v3990
      %v4078 = vadd.f32 %v3920, %v3993
      %v4079 = vadd.f32 %v3921, %v3996
      %v4080 = vadd.f32 %v3922, %v3999
      %v4081 = vadd.f32 %v3923, %v4002
      %v4082 = vadd.f32 %v3924, %v4005
      %v4083 = vadd.f32 %v3925, %v4008
      %v4084 = vadd.f32 %v3926, %v4011
      %v4085 = vadd.f32 %v3927, %v4014
      %v4086 = vadd.f32 %v3928, %v4017
      %v4087 = vadd.f32 %v3929, %v4020
      %v4088 = vadd.f32 %v3930, %v4023
      %v4089 = vadd.f32 %v3931, %v4026
      %v4090 = vadd.f32 %v3932, %v4029
      %v4091 = vadd.f32 %v3933, %v4032
      %v4092 = vadd.f32 %v3934, %v4035
      %v4093 = vadd.f32 %v3935, %v4038
      %v4094 = vadd.f32 %v3936, %v4041
      %v4095 = vadd.f32 %v3937, %v4044
      %v4096 = vadd.f32 %v3938, %v4047
      %v4097 = vadd.f32 %v3939, %v4050
      %v4098 = vadd.f32 %v3940, %v4053
      %v4099 = vadd.f32 %v3941, %v4056
      %v4100 = vadd.f32 %v3942, %v4059
      %v4101 = vadd.f32 %v3943, %v4062
      %v4102 = vadd.f32 %v3944, %v4065
      %v4103 = vadd.f32 %v3945, %v4068
      %v4104 = vadd.f32 %v3946, %v4071
      %v4105 = vld [vmem:[%s4] sm:$0x1]
      %v4107 = vperm.slane %v4105, 0
      %v4109 = vadd.f32 %v4073, %v4107
      %v4110 = vadd.f32 %v4074, %v4107
      %v4111 = vadd.f32 %v4075, %v4107
      %v4112 = vadd.f32 %v4076, %v4107
      %v4113 = vadd.f32 %v4077, %v4107
      %v4114 = vadd.f32 %v4078, %v4107
      %v4115 = vadd.f32 %v4079, %v4107
      %v4116 = vadd.f32 %v4080, %v4107
      %v4117 = vadd.f32 %v4081, %v4107
      %v4118 = vadd.f32 %v4082, %v4107
      %v4119 = vadd.f32 %v4083, %v4107
      %v4120 = vadd.f32 %v4084, %v4107
      %v4121 = vadd.f32 %v4085, %v4107
      %v4122 = vadd.f32 %v4086, %v4107
      %v4123 = vadd.f32 %v4087, %v4107
      %v4124 = vadd.f32 %v4088, %v4107
      %v4125 = vadd.f32 %v4089, %v4107
      %v4126 = vadd.f32 %v4090, %v4107
      %v4127 = vadd.f32 %v4091, %v4107
      %v4128 = vadd.f32 %v4092, %v4107
      %v4129 = vadd.f32 %v4093, %v4107
      %v4130 = vadd.f32 %v4094, %v4107
      %v4131 = vadd.f32 %v4095, %v4107
      %v4132 = vadd.f32 %v4096, %v4107
      %v4133 = vadd.f32 %v4097, %v4107
      %v4134 = vadd.f32 %v4098, %v4107
      %v4135 = vadd.f32 %v4099, %v4107
      %v4136 = vadd.f32 %v4100, %v4107
      %v4137 = vadd.f32 %v4101, %v4107
      %v4138 = vadd.f32 %v4102, %v4107
      %v4139 = vadd.f32 %v4103, %v4107
      %v4140 = vadd.f32 %v4104, %v4107
      %v4141 = vadd.f32 %v4109, %v425
      %v4142 = vadd.f32 %v4110, %v427
      %v4143 = vadd.f32 %v4111, %v430
      %v4144 = vadd.f32 %v4112, %v432
      %v4145 = vadd.f32 %v4113, %v435
      %v4146 = vadd.f32 %v4114, %v437
      %v4147 = vadd.f32 %v4115, %v440
      %v4148 = vadd.f32 %v4116, %v442
      %v4149 = vadd.f32 %v4117, %v445
      %v4150 = vadd.f32 %v4118, %v447
      %v4151 = vadd.f32 %v4119, %v450
      %v4152 = vadd.f32 %v4120, %v452
      %v4153 = vadd.f32 %v4121, %v455
      %v4154 = vadd.f32 %v4122, %v457
      %v4155 = vadd.f32 %v4123, %v460
      %v4156 = vadd.f32 %v4124, %v462
      %v4157 = vadd.f32 %v4125, %v465
      %v4158 = vadd.f32 %v4126, %v467
      %v4159 = vadd.f32 %v4127, %v470
      %v4160 = vadd.f32 %v4128, %v472
      %v4161 = vadd.f32 %v4129, %v475
      %v4162 = vadd.f32 %v4130, %v477
      %v4163 = vadd.f32 %v4131, %v480
      %v4164 = vadd.f32 %v4132, %v482
      %v4165 = vadd.f32 %v4133, %v485
      %v4166 = vadd.f32 %v4134, %v487
      %v4167 = vadd.f32 %v4135, %v490
      %v4168 = vadd.f32 %v4136, %v492
      %v4169 = vadd.f32 %v4137, %v495
      %v4170 = vadd.f32 %v4138, %v497
      %v4171 = vadd.f32 %v4139, %v1310
      %v4172 = vadd.f32 %v4140, %v1312
      %v4173 = vmax.f32 %v4141, 0.0
      %v4174 = vmax.f32 %v4142, 0.0
      %v4175 = vmax.f32 %v4143, 0.0
      %v4176 = vmax.f32 %v4144, 0.0
      %v4177 = vmax.f32 %v4145, 0.0
      %v4178 = vmax.f32 %v4146, 0.0
      %v4179 = vmax.f32 %v4147, 0.0
      %v4180 = vmax.f32 %v4148, 0.0
      %v4181 = vmax.f32 %v4149, 0.0
      %v4182 = vmax.f32 %v4150, 0.0
      %v4183 = vmax.f32 %v4151, 0.0
      %v4184 = vmax.f32 %v4152, 0.0
      %v4185 = vmax.f32 %v4153, 0.0
      %v4186 = vmax.f32 %v4154, 0.0
      %v4187 = vmax.f32 %v4155, 0.0
      %v4188 = vmax.f32 %v4156, 0.0
      %v4189 = vmax.f32 %v4157, 0.0
      %v4190 = vmax.f32 %v4158, 0.0
      %v4191 = vmax.f32 %v4159, 0.0
      %v4192 = vmax.f32 %v4160, 0.0
      %v4193 = vmax.f32 %v4161, 0.0
      %v4194 = vmax.f32 %v4162, 0.0
      %v4195 = vmax.f32 %v4163, 0.0
      %v4196 = vmax.f32 %v4164, 0.0
      %v4197 = vmax.f32 %v4165, 0.0
      %v4198 = vmax.f32 %v4166, 0.0
      %v4199 = vmax.f32 %v4167, 0.0
      %v4200 = vmax.f32 %v4168, 0.0
      %v4201 = vmax.f32 %v4169, 0.0
      %v4202 = vmax.f32 %v4170, 0.0
      %v4203 = vmax.f32 %v4171, 0.0
      %v4204 = vmax.f32 %v4172, 0.0
      %v4205 = vpack.c.bf16 %v4173, %v4173
      %v4206 = vpack.c.bf16 %v4174, %v4174
      %v4207 = vpack.c.bf16 %v4175, %v4175
      %v4208 = vpack.c.bf16 %v4176, %v4176
      %v4209 = vpack.c.bf16 %v4177, %v4177
      %v4210 = vpack.c.bf16 %v4178, %v4178
      %v4211 = vpack.c.bf16 %v4179, %v4179
      %v4212 = vpack.c.bf16 %v4180, %v4180
      %v4213 = vpack.c.bf16 %v4181, %v4181
      %v4214 = vpack.c.bf16 %v4182, %v4182
      %v4215 = vpack.c.bf16 %v4183, %v4183
      %v4216 = vpack.c.bf16 %v4184, %v4184
      %v4217 = vpack.c.bf16 %v4185, %v4185
      %v4218 = vpack.c.bf16 %v4186, %v4186
      %v4219 = vpack.c.bf16 %v4187, %v4187
      %v4220 = vpack.c.bf16 %v4188, %v4188
      %v4221 = vpack.c.bf16 %v4189, %v4189
      %v4222 = vpack.c.bf16 %v4190, %v4190
      %v4223 = vpack.c.bf16 %v4191, %v4191
      %v4224 = vpack.c.bf16 %v4192, %v4192
      %v4225 = vpack.c.bf16 %v4193, %v4193
      %v4226 = vpack.c.bf16 %v4194, %v4194
      %v4227 = vpack.c.bf16 %v4195, %v4195
      %v4228 = vpack.c.bf16 %v4196, %v4196
      %v4229 = vpack.c.bf16 %v4197, %v4197
      %v4230 = vpack.c.bf16 %v4198, %v4198
      %v4231 = vpack.c.bf16 %v4199, %v4199
      %v4232 = vpack.c.bf16 %v4200, %v4200
      %v4233 = vpack.c.bf16 %v4201, %v4201
      %v4234 = vpack.c.bf16 %v4202, %v4202
      %v4235 = vpack.c.bf16 %v4203, %v4203
      %v4236 = vpack.c.bf16 %v4204, %v4204
      %vm4237 = vcmask 27648
      %4238 = vst.msk [vmem:[%s224] sm:$0xf] %vm4237, %v4205
      %4239 = vst.msk [vmem:[%s224 + $0x4] sm:$0xf] %vm4237, %v4206
      %4240 = vst.msk [vmem:[%s224 + $0x8] sm:$0xf] %vm4237, %v4207
      %4241 = vst.msk [vmem:[%s224 + $0xc] sm:$0xf] %vm4237, %v4208
      %4242 = vst.msk [vmem:[%s224 + $0x10] sm:$0xf] %vm4237, %v4209
      %4243 = vst.msk [vmem:[%s224 + $0x14] sm:$0xf] %vm4237, %v4210
      %4244 = vst.msk [vmem:[%s224 + $0x18] sm:$0xf] %vm4237, %v4211
      %4245 = vst.msk [vmem:[%s224 + $0x1c] sm:$0xf] %vm4237, %v4212
      %4246 = vst.msk [vmem:[%s224 + $0x20] sm:$0xf] %vm4237, %v4213
      %4247 = vst.msk [vmem:[%s224 + $0x24] sm:$0xf] %vm4237, %v4214
      %4248 = vst.msk [vmem:[%s224 + $0x28] sm:$0xf] %vm4237, %v4215
      %4249 = vst.msk [vmem:[%s224 + $0x2c] sm:$0xf] %vm4237, %v4216
      %4250 = vst.msk [vmem:[%s224 + $0x30] sm:$0xf] %vm4237, %v4217
      %4251 = vst.msk [vmem:[%s224 + $0x34] sm:$0xf] %vm4237, %v4218
      %4252 = vst.msk [vmem:[%s224 + $0x38] sm:$0xf] %vm4237, %v4219
      %4253 = vst.msk [vmem:[%s224 + $0x3c] sm:$0xf] %vm4237, %v4220
      %4254 = vst.msk [vmem:[%s224 + $0x40] sm:$0xf] %vm4237, %v4221
      %4255 = vst.msk [vmem:[%s224 + $0x44] sm:$0xf] %vm4237, %v4222
      %4256 = vst.msk [vmem:[%s224 + $0x48] sm:$0xf] %vm4237, %v4223
      %4257 = vst.msk [vmem:[%s224 + $0x4c] sm:$0xf] %vm4237, %v4224
      %4258 = vst.msk [vmem:[%s224 + $0x50] sm:$0xf] %vm4237, %v4225
      %4259 = vst.msk [vmem:[%s224 + $0x54] sm:$0xf] %vm4237, %v4226
      %4260 = vst.msk [vmem:[%s224 + $0x58] sm:$0xf] %vm4237, %v4227
      %4261 = vst.msk [vmem:[%s224 + $0x5c] sm:$0xf] %vm4237, %v4228
      %4262 = vst.msk [vmem:[%s224 + $0x60] sm:$0xf] %vm4237, %v4229
      %4263 = vst.msk [vmem:[%s224 + $0x64] sm:$0xf] %vm4237, %v4230
      %4264 = vst.msk [vmem:[%s224 + $0x68] sm:$0xf] %vm4237, %v4231
      %4265 = vst.msk [vmem:[%s224 + $0x6c] sm:$0xf] %vm4237, %v4232
      %4266 = vst.msk [vmem:[%s224 + $0x70] sm:$0xf] %vm4237, %v4233
      %4267 = vst.msk [vmem:[%s224 + $0x74] sm:$0xf] %vm4237, %v4234
      %4268 = vst.msk [vmem:[%s224 + $0x78] sm:$0xf] %vm4237, %v4235
      %4269 = vst.msk [vmem:[%s224 + $0x7c] sm:$0xf] %vm4237, %v4236
      %p4270 = scmp.lt.s32.totalorder %s16, 1
      %s4271 = scalar_select %p4270, %s16, 1
      %s4272 = smul.addr %s4271, 32
      %s4273 = smul.addr %s4272, 4
      %s4274 = scalar_lea.vmem %s5, %s4273
      // Predicated region
      $region41: #{model_forward.2} parent=39 // pred_check
        %p4275 = pneg %p144
      $region42: #{model_forward.2} parent=39 // pred_check_branch
        %4277 = sbr.rel (%p4275) target = $region44
      $region43: #{model_forward.2} parent=39 // pred_region
        _
      $region44: #{model_forward.2} parent=39 // pred_fallthru
        _
    $region40: #{model_forward.2} parent=5 // pred_fallthru
      _
    %p4278 = scmp.le.s32.totalorder 2, %s11
    // Predicated region
    $region45: #{model_forward.2} parent=5 // pred_check
      %p4279 = pneg %p4278
    $region46: #{model_forward.2} parent=5 // pred_check_branch
      %4281 = sbr.rel (%p4279) target = $region48
    $region47: #{model_forward.2} parent=5 // pred_region
      %s4282 = ssub.s32 %s11, 2
      // Predicated region
      $region49: #{model_forward.2} parent=47 // pred_check
        %p4283 = pneg %p150
      $region50: #{model_forward.2} parent=47 // pred_check_branch
        %4285 = sbr.rel (%p4283) target = $region52
      $region51: #{model_forward.2} parent=47 // pred_region
        %p4286 = scmp.lt.s32.totalorder %s17, 1
        %s4287 = scalar_select %p4286, %s17, 1
        %s4288 = smul.addr %s4287, 32
        %s4289 = smul.addr %s4288, 4
        %s4290 = scalar_lea.vmem %s5, %s4289
      $region52: #{model_forward.2} parent=47 // pred_fallthru
        _
    $region48: #{model_forward.2} parent=5 // pred_fallthru
      _
  $region6: #{model_forward.2} parent=0 // loop_footer
    %s15 = sadd.s32 1, %s11
  $region7: #{model_forward.2} parent=0 // loop_footer_branch
    %10 = sbr.rel target = $region3
  $region8: #{model_forward.2} parent=0 // loop_exit
    _

</llo_original>
